<compile_context>
chip_gen: v6e
topology: v6e:2x2x1
jax: 0.10.0
libtpu: 0.0.40
codegen_flags: <defaults>
</compile_context>

<pallas_src>
import numpy as np
import jax
import jax.numpy as jnp
from jax.experimental import pallas as pl
from jax.experimental.pallas import tpu as pltpu

# ---------------- static geometry (implied by the module) ----------------
B = 2                      # batch
BB = 2                     # batch elements fused per grid step (== B here)
C_EEG, T = 22, 543         # EEG channels (conv2 kernel height), time samples
F1, D, F2 = 8, 2, 16
DF1 = D * F1               # 16
K1, P1 = 64, 32            # conv1 temporal kernel / padding
TP = T + 2 * P1            # 607  padded conv1 input width
W1 = TP - K1 + 1           # 544
POOL1 = 4
W2 = W1 // POOL1           # 136
K3, P3 = 16, 8             # Conv3 depthwise temporal kernel / padding
W3 = W2 + 2 * P3 - K3 + 1  # 137
POOL2 = 8
W4 = W3 // POOL2           # 17
NCLS = 4
EPS = 1e-5
BM = BB * DF1              # fused rows (batch * channels) = 32


# ------------------------------- kernel ----------------------------------
def eegnet_kernel(xp_ref, w2s_ref, w1e_ref, bb1_ref, p4_ref,
                  w3e_ref, w4s_ref, bb3_ref, wwide_ref, m32_ref,
                  rsum_ref, jsum_ref, bc_ref, out_ref, yp_ref):
    # ---- stage 1: conv1(1x64)+BN1 fused with depthwise conv2(22x1)+BN2 ----
    # Block-diagonal (over the fused batch) spatial contraction on the MXU.
    # The BN1*BN2 scale is pre-folded into w2s rows and the input is pre-padded,
    # so the full padded width lands aligned in scratch with no zeroing.
    yp_ref[...] = jnp.dot(w2s_ref[...], xp_ref[0],
                          preferred_element_type=jnp.float32)       # (BM, 607)
    # 64 temporal taps of conv1 (per-row scalar, rows = batch*channel).
    # Accumulator is seeded with tap 0 (no zeros+add pass).
    # TODO(synk): for large fused batches convert this tap loop to banded-Toeplitz
    # MXU matmuls / bf16 re-accumulation (not worthwhile at B=2).
    acc = w1e_ref[0] * yp_ref[:, 0:W1]
    for k in range(1, K1):
        acc = acc + w1e_ref[k] * yp_ref[:, k:k + W1]
    x1 = acc + bb1_ref[...]
    # ELU.  exp(x)-1 (== expm1 to ~1e-7, far inside test tolerance); the
    # positive-branch exp may overflow to inf but is discarded by the select.
    x1 = jnp.where(x1 > 0, x1, jnp.exp(x1) - 1.0)
    # AvgPool(1,4) and Conv3's zero padding folded into one pooling matrix.
    x2p = jnp.dot(x1, p4_ref[...], preferred_element_type=jnp.float32)  # (BM, 152)

    # ---- stage 2: depthwise(1x16) + 1x1 conv (BN3 scale folded) + ELU ----
    # w3 is laid out tap-major (K3, BM, 1): plain sublane-column reads, no
    # per-tap lane extraction.
    acc3 = w3e_ref[0] * x2p[:, 0:W3]
    for k in range(1, K3):
        acc3 = acc3 + w3e_ref[k] * x2p[:, k:k + W3]
    x3 = jnp.dot(w4s_ref[...], acc3,
                 preferred_element_type=jnp.float32) + bb3_ref[...]     # (BM, 137)
    x3 = jnp.where(x3 > 0, x3, jnp.exp(x3) - 1.0)

    # ---- classifier: AvgPool(1,8) + flatten + Linear, all as small matmuls ----
    # wwide[w, c*4+cls] = (p8 @ wc[c])[w, cls]; the mask keeps only the blocks
    # where the row-channel matches the weight-channel, then two tiny matmuls
    # collapse channel->batch rows and the class interleave -> logits.
    y = jnp.dot(x3, wwide_ref[...], preferred_element_type=jnp.float32)  # (BM, 64)
    s = jnp.dot(rsum_ref[...], y * m32_ref[...],
                preferred_element_type=jnp.float32)                      # (BB, 64)
    logits = jnp.dot(s, jsum_ref[...],
                     preferred_element_type=jnp.float32) + bc_ref[...]   # (BB, 4)
    out_ref[...] = logits[None]


# ------------------------------ wrapper -----------------------------------
def eegnet_forward(x, kp, batch_block=BB):
    """x: (B, 1, 22, T) float32 (NCHW, like PyTorch). Returns (B, 4)."""
    nb = x.shape[0]
    assert nb % batch_block == 0
    g = nb // batch_block
    bm = batch_block * DF1
    xs = x[:, 0, :, :].astype(jnp.float32)                 # (nb, 22, T)
    # Pre-pad the time axis in the wrapper (layout plumbing): the kernel then
    # never writes at a lane-misaligned offset and never zero-fills scratch.
    xp = jnp.pad(xs, ((0, 0), (0, 0), (P1, P1)))           # (nb, 22, 607)
    xp = xp.reshape(g, batch_block * C_EEG, TP)

    grid_spec = pltpu.PrefetchScalarGridSpec(
        num_scalar_prefetch=0,
        grid=(g,),
        in_specs=[
            pl.BlockSpec((1, batch_block * C_EEG, TP), lambda i: (i, 0, 0)),  # x (padded)
            pl.BlockSpec(kp["w2s"].shape, lambda i: (0, 0)),       # block-diag spatial w (BN-scaled)
            pl.BlockSpec(kp["w1e"].shape, lambda i: (0, 0, 0)),    # conv1 taps, tap-major
            pl.BlockSpec(kp["bb1"].shape, lambda i: (0, 0)),       # folded BN1/BN2 bias
            pl.BlockSpec(kp["p4"].shape, lambda i: (0, 0)),        # pool(4) + conv3 pad matrix
            pl.BlockSpec(kp["w3e"].shape, lambda i: (0, 0, 0)),    # conv3 depthwise taps, tap-major
            pl.BlockSpec(kp["w4s"].shape, lambda i: (0, 0)),       # block-diag 1x1 conv (BN3-scaled)
            pl.BlockSpec(kp["bb3"].shape, lambda i: (0, 0)),       # BN3 bias
            pl.BlockSpec(kp["wwide"].shape, lambda i: (0, 0)),     # pool(8) + classifier weight
            pl.BlockSpec(kp["m32"].shape, lambda i: (0, 0)),       # channel-diagonal selector mask
            pl.BlockSpec(kp["rsum"].shape, lambda i: (0, 0)),      # channel->batch row collapse
            pl.BlockSpec(kp["jsum"].shape, lambda i: (0, 0)),      # class-interleave collapse
            pl.BlockSpec(kp["bc"].shape, lambda i: (0, 0)),        # classifier bias
        ],
        out_specs=pl.BlockSpec((1, batch_block, NCLS), lambda i: (i, 0, 0)),
        scratch_shapes=[pltpu.VMEM((bm, TP), jnp.float32)],        # spatially-contracted padded signal
    )
    out = pl.pallas_call(
        eegnet_kernel,
        grid_spec=grid_spec,
        out_shape=jax.ShapeDtypeStruct((g, batch_block, NCLS), jnp.float32),
        compiler_params=pltpu.CompilerParams(dimension_semantics=("parallel",)),
    )(xp, kp["w2s"], kp["w1e"], kp["bb1"], kp["p4"], kp["w3e"], kp["w4s"],
      kp["bb3"], kp["wwide"], kp["m32"], kp["rsum"], kp["jsum"], kp["bc"])
    return out.reshape(nb, NCLS)


# ------------------------ deterministic parameters -------------------------
def make_params():
    key = jax.random.PRNGKey(0)
    ks = jax.random.split(key, 20)
    p = {}
    p["w1"] = 0.10 * jax.random.normal(ks[0], (F1, K1), jnp.float32)
    p["g1"] = 1.0 + 0.1 * jax.random.normal(ks[1], (F1,), jnp.float32)
    p["be1"] = 0.1 * jax.random.normal(ks[2], (F1,), jnp.float32)
    p["mu1"] = 0.1 * jax.random.normal(ks[3], (F1,), jnp.float32)
    p["var1"] = 0.5 + jax.random.uniform(ks[4], (F1,), jnp.float32)
    p["w2"] = 0.20 * jax.random.normal(ks[5], (DF1, C_EEG), jnp.float32)
    p["g2"] = 1.0 + 0.1 * jax.random.normal(ks[6], (DF1,), jnp.float32)
    p["be2"] = 0.1 * jax.random.normal(ks[7], (DF1,), jnp.float32)
    p["mu2"] = 0.1 * jax.random.normal(ks[8], (DF1,), jnp.float32)
    p["var2"] = 0.5 + jax.random.uniform(ks[9], (DF1,), jnp.float32)
    p["w3"] = 0.25 * jax.random.normal(ks[10], (DF1, K3), jnp.float32)
    p["w4"] = 0.25 * jax.random.normal(ks[11], (F2, DF1), jnp.float32)
    p["g3"] = 1.0 + 0.1 * jax.random.normal(ks[12], (F2,), jnp.float32)
    p["be3"] = 0.1 * jax.random.normal(ks[13], (F2,), jnp.float32)
    p["mu3"] = 0.1 * jax.random.normal(ks[14], (F2,), jnp.float32)
    p["var3"] = 0.5 + jax.random.uniform(ks[15], (F2,), jnp.float32)
    p["wcls"] = 0.05 * jax.random.normal(ks[16], (NCLS, F2 * W4), jnp.float32)
    p["bcls"] = 0.05 * jax.random.normal(ks[17], (NCLS,), jnp.float32)
    return p


def fold_kernel_params(p, bb=BB):
    """Fold eval-mode BN into the conv weights, pooling/padding/flatten into
    constant matrices, and tile/block-diagonalize for a fused batch of bb."""
    f64 = lambda a: np.asarray(a, np.float64)
    idx = np.repeat(np.arange(F1), D)                       # conv2 group input map
    w1, w2 = f64(p["w1"]), f64(p["w2"])
    w3, w4 = f64(p["w3"]), f64(p["w4"])
    s1 = f64(p["g1"]) / np.sqrt(f64(p["var1"]) + EPS)
    b1 = f64(p["be1"]) - f64(p["mu1"]) * s1
    s2 = f64(p["g2"]) / np.sqrt(f64(p["var2"]) + EPS)
    b2 = f64(p["be2"]) - f64(p["mu2"]) * s2
    s3 = f64(p["g3"]) / np.sqrt(f64(p["var3"]) + EPS)
    b3 = f64(p["be3"]) - f64(p["mu3"]) * s3
    rowsum = w2.sum(axis=1)
    ab1 = s2 * s1[idx]                                      # BN1*BN2 scale per channel
    bb1 = s2 * b1[idx] * rowsum + b2                        # folded bias

    kp = {}
    # BN scales ride the spatial / 1x1 matmuls (block-diagonal over fused batch).
    kp["w2s"] = jnp.asarray(np.kron(np.eye(bb), ab1[:, None] * w2), jnp.float32)      # (bb*16, bb*22)
    kp["w1e"] = jnp.asarray(np.tile(w1[idx].T[:, :, None], (1, bb, 1)), jnp.float32)  # (64, bb*16, 1)
    kp["bb1"] = jnp.asarray(np.tile(bb1[:, None], (bb, 1)), jnp.float32)              # (bb*16, 1)
    # AvgPool(1,4) and Conv3's zero padding in one matrix (zero columns = padding).
    p4 = np.zeros((W1, W2 + 2 * P3))
    p4[:, P3:P3 + W2] = np.kron(np.eye(W2), np.full((POOL1, 1), 1.0 / POOL1))
    kp["p4"] = jnp.asarray(p4, jnp.float32)                                           # (544, 152)
    kp["w3e"] = jnp.asarray(np.tile(w3.T[:, :, None], (1, bb, 1)), jnp.float32)       # (16, bb*16, 1)
    kp["w4s"] = jnp.asarray(np.kron(np.eye(bb), s3[:, None] * w4), jnp.float32)       # (bb*16, bb*16)
    kp["bb3"] = jnp.asarray(np.tile(b3[:, None], (bb, 1)), jnp.float32)               # (bb*16, 1)
    # AvgPool(1,8) folded into the classifier: wwide[w, c*4+cls] = (p8 @ wc[c])[w, cls]
    p8 = np.zeros((W3, W4))
    p8[:W4 * POOL2] = np.kron(np.eye(W4), np.full((POOL2, 1), 1.0 / POOL2))
    wc = f64(p["wcls"]).reshape(NCLS, F2, W4).transpose(1, 2, 0)                      # (16, 17, 4)
    pwc = np.einsum("wt,ctk->cwk", p8, wc)                                            # (16, 137, 4)
    kp["wwide"] = jnp.asarray(pwc.transpose(1, 0, 2).reshape(W3, F2 * NCLS), jnp.float32)  # (137, 64)
    # Epilogue collapse constants (keep everything on MXU/VPU, no XLU reductions).
    kp["m32"] = jnp.asarray(np.tile(np.kron(np.eye(F2), np.ones((1, NCLS))), (bb, 1)),
                            jnp.float32)                                              # (bb*16, 64)
    kp["rsum"] = jnp.asarray(np.kron(np.eye(bb), np.ones((1, F2))), jnp.float32)      # (bb, bb*16)
    kp["jsum"] = jnp.asarray(np.tile(np.eye(NCLS), (F2, 1)), jnp.float32)             # (64, 4)
    kp["bc"] = jnp.asarray(f64(p["bcls"]).reshape(1, NCLS), jnp.float32)
    return kp


# ---------------------- float64 numpy reference ----------------------------
def ref_forward(x, p):
    x = np.asarray(x, np.float64)[:, 0]                    # (B, 22, T)
    nb = x.shape[0]
    w1, w2 = np.asarray(p["w1"], np.float64), np.asarray(p["w2"], np.float64)
    w3, w4 = np.asarray(p["w3"], np.float64), np.asarray(p["w4"], np.float64)

    def bn(y, g, b, m, v):
        sh = (1, -1) + (1,) * (y.ndim - 2)
        g, b, m, v = [np.asarray(a, np.float64).reshape(sh) for a in (g, b, m, v)]
        return g * (y - m) / np.sqrt(v + EPS) + b

    xpad = np.pad(x, ((0, 0), (0, 0), (P1, P1)))
    o1 = np.zeros((nb, F1, C_EEG, W1))
    for k in range(K1):
        o1 += w1[None, :, None, k:k + 1] * xpad[:, None, :, k:k + W1]
    o1 = bn(o1, p["g1"], p["be1"], p["mu1"], p["var1"])
    idx = np.repeat(np.arange(F1), D)
    o2 = np.einsum("oh,boht->bot", w2, o1[:, idx])
    o2 = bn(o2, p["g2"], p["be2"], p["mu2"], p["var2"])
    o2 = np.where(o2 > 0, o2, np.expm1(o2))
    o2 = o2.reshape(nb, DF1, W2, POOL1).mean(-1)
    o2p = np.pad(o2, ((0, 0), (0, 0), (P3, P3)))
    o3 = np.zeros((nb, DF1, W3))
    for k in range(K3):
        o3 += w3[None, :, k:k + 1] * o2p[:, :, k:k + W3]
    o3 = np.einsum("oi,bit->bot", w4, o3)
    o3 = bn(o3, p["g3"], p["be3"], p["mu3"], p["var3"])
    o3 = np.where(o3 > 0, o3, np.expm1(o3))
    o3 = o3[:, :, :W4 * POOL2].reshape(nb, F2, W4, POOL2).mean(-1)
    flat = o3.reshape(nb, F2 * W4)
    return flat @ np.asarray(p["wcls"], np.float64).T + np.asarray(p["bcls"], np.float64)


# --------------------------------- main -------------------------------------
if __name__ == "__main__":
    params = make_params()
    kp = fold_kernel_params(params, BB)
    x = jax.random.normal(jax.random.fold_in(jax.random.PRNGKey(0), 123),
                          (B, 1, C_EEG, T), jnp.float32)

    out = eegnet_forward(x, kp)
    out = jax.block_until_ready(out)
    assert out.shape == (B, NCLS)

    ref = ref_forward(np.asarray(x), params)
    if not np.allclose(np.asarray(out, np.float64), ref, rtol=2e-3, atol=2e-3):
        err = np.max(np.abs(np.asarray(out, np.float64) - ref))
        raise AssertionError(f"kernel/reference mismatch, max abs err = {err}")
    print("KERNEL_OK")
</pallas_src>

<mosaic_0001>
module attributes {stable_mosaic.version = 11 : i64} {
  func.func @eegnet_kernel(%arg0: i32, %arg1: memref<1x44x607xf32, #tpu.memory_space<vmem>>, %arg2: memref<32x44xf32, #tpu.memory_space<vmem>>, %arg3: memref<64x32x1xf32, #tpu.memory_space<vmem>>, %arg4: memref<32x1xf32, #tpu.memory_space<vmem>>, %arg5: memref<544x152xf32, #tpu.memory_space<vmem>>, %arg6: memref<16x32x1xf32, #tpu.memory_space<vmem>>, %arg7: memref<32x32xf32, #tpu.memory_space<vmem>>, %arg8: memref<32x1xf32, #tpu.memory_space<vmem>>, %arg9: memref<137x64xf32, #tpu.memory_space<vmem>>, %arg10: memref<32x64xf32, #tpu.memory_space<vmem>>, %arg11: memref<2x32xf32, #tpu.memory_space<vmem>>, %arg12: memref<64x4xf32, #tpu.memory_space<vmem>>, %arg13: memref<1x4xf32, #tpu.memory_space<vmem>>, %arg14: memref<1x2x4xf32, #tpu.memory_space<vmem>>, %arg15: memref<32x607xf32, #tpu.memory_space<vmem>>) attributes {dimension_semantics = [#tpu.dimension_semantics<parallel>], iteration_bounds = array<i64: 1>, scalar_prefetch = 0 : i64, scratch_operands = 1 : i64, tpu.core_type = #tpu.core_type<tc>, window_params = [{transform_indices = @transform_0, window_bounds = array<i64: 1, 44, 607>}, {pipeline_mode = #tpu.pipeline_mode<synchronous>, transform_indices = @transform_1, window_bounds = array<i64: 32, 44>}, {pipeline_mode = #tpu.pipeline_mode<synchronous>, transform_indices = @transform_2, window_bounds = array<i64: 64, 32, 1>}, {pipeline_mode = #tpu.pipeline_mode<synchronous>, transform_indices = @transform_3, window_bounds = array<i64: 32, 1>}, {pipeline_mode = #tpu.pipeline_mode<synchronous>, transform_indices = @transform_4, window_bounds = array<i64: 544, 152>}, {pipeline_mode = #tpu.pipeline_mode<synchronous>, transform_indices = @transform_5, window_bounds = array<i64: 16, 32, 1>}, {pipeline_mode = #tpu.pipeline_mode<synchronous>, transform_indices = @transform_6, window_bounds = array<i64: 32, 32>}, {pipeline_mode = #tpu.pipeline_mode<synchronous>, transform_indices = @transform_7, window_bounds = array<i64: 32, 1>}, {pipeline_mode = #tpu.pipeline_mode<synchronous>, transform_indices = @transform_8, window_bounds = array<i64: 137, 64>}, {pipeline_mode = #tpu.pipeline_mode<synchronous>, transform_indices = @transform_9, window_bounds = array<i64: 32, 64>}, {pipeline_mode = #tpu.pipeline_mode<synchronous>, transform_indices = @transform_10, window_bounds = array<i64: 2, 32>}, {pipeline_mode = #tpu.pipeline_mode<synchronous>, transform_indices = @transform_11, window_bounds = array<i64: 64, 4>}, {pipeline_mode = #tpu.pipeline_mode<synchronous>, transform_indices = @transform_12, window_bounds = array<i64: 1, 4>}, {transform_indices = @transform_13, window_bounds = array<i64: 1, 2, 4>}]} {
    %c0 = arith.constant 0 : index
    %c0_0 = arith.constant 0 : index
    %0 = vector.load %arg2[%c0, %c0_0] : memref<32x44xf32, #tpu.memory_space<vmem>>, vector<32x44xf32>
    %c0_1 = arith.constant 0 : index
    %c0_2 = arith.constant 0 : index
    %c0_3 = arith.constant 0 : index
    %1 = vector.load %arg1[%c0_1, %c0_2, %c0_3] : memref<1x44x607xf32, #tpu.memory_space<vmem>>, vector<1x44x607xf32>
    %2 = vector.shape_cast %1 : vector<1x44x607xf32> to vector<44x607xf32>
    %cst = arith.constant dense<0.000000e+00> : vector<32x607xf32>
    %3 = tpu.matmul %0, %2, %cst {dimension_numbers = #tpu.dot_dimension_numbers<[1], [0], [0], [1], [0, 0, 1, 1], [], []>} : vector<32x44xf32>, vector<44x607xf32>, vector<32x607xf32> -> vector<32x607xf32>
    %c0_4 = arith.constant 0 : index
    %c0_5 = arith.constant 0 : index
    %4 = vector.load %arg15[%c0_4, %c0_5] : memref<32x607xf32, #tpu.memory_space<vmem>>, vector<32x607xf32>
    tpu.vector_store %arg15[%c0_4, %c0_5], %3 {strides = array<i32>} : memref<32x607xf32, #tpu.memory_space<vmem>>, vector<32x607xf32>,
    %c0_6 = arith.constant 0 : index
    %c0_7 = arith.constant 0 : index
    %c0_8 = arith.constant 0 : index
    %5 = vector.load %arg3[%c0_6, %c0_7, %c0_8] : memref<64x32x1xf32, #tpu.memory_space<vmem>>, vector<1x32x1xf32>
    %6 = vector.shape_cast %5 : vector<1x32x1xf32> to vector<32x1xf32>
    %c0_9 = arith.constant 0 : index
    %c0_10 = arith.constant 0 : index
    %7 = vector.load %arg15[%c0_9, %c0_10] : memref<32x607xf32, #tpu.memory_space<vmem>>, vector<32x544xf32>
    %8 = vector.broadcast %6 : vector<32x1xf32> to vector<32x544xf32>
    %9 = arith.mulf %8, %7 : vector<32x544xf32>
    %c1 = arith.constant 1 : index
    %c0_11 = arith.constant 0 : index
    %c0_12 = arith.constant 0 : index
    %10 = vector.load %arg3[%c1, %c0_11, %c0_12] : memref<64x32x1xf32, #tpu.memory_space<vmem>>, vector<1x32x1xf32>
    %11 = vector.shape_cast %10 : vector<1x32x1xf32> to vector<32x1xf32>
    %c0_13 = arith.constant 0 : index
    %c1_14 = arith.constant 1 : index
    %12 = vector.load %arg15[%c0_13, %c1_14] : memref<32x607xf32, #tpu.memory_space<vmem>>, vector<32x544xf32>
    %13 = vector.broadcast %11 : vector<32x1xf32> to vector<32x544xf32>
    %14 = arith.mulf %13, %12 : vector<32x544xf32>
    %15 = arith.addf %9, %14 : vector<32x544xf32>
    %c2 = arith.constant 2 : index
    %c0_15 = arith.constant 0 : index
    %c0_16 = arith.constant 0 : index
    %16 = vector.load %arg3[%c2, %c0_15, %c0_16] : memref<64x32x1xf32, #tpu.memory_space<vmem>>, vector<1x32x1xf32>
    %17 = vector.shape_cast %16 : vector<1x32x1xf32> to vector<32x1xf32>
    %c0_17 = arith.constant 0 : index
    %c2_18 = arith.constant 2 : index
    %18 = vector.load %arg15[%c0_17, %c2_18] : memref<32x607xf32, #tpu.memory_space<vmem>>, vector<32x544xf32>
    %19 = vector.broadcast %17 : vector<32x1xf32> to vector<32x544xf32>
    %20 = arith.mulf %19, %18 : vector<32x544xf32>
    %21 = arith.addf %15, %20 : vector<32x544xf32>
    %c3 = arith.constant 3 : index
    %c0_19 = arith.constant 0 : index
    %c0_20 = arith.constant 0 : index
    %22 = vector.load %arg3[%c3, %c0_19, %c0_20] : memref<64x32x1xf32, #tpu.memory_space<vmem>>, vector<1x32x1xf32>
    %23 = vector.shape_cast %22 : vector<1x32x1xf32> to vector<32x1xf32>
    %c0_21 = arith.constant 0 : index
    %c3_22 = arith.constant 3 : index
    %24 = vector.load %arg15[%c0_21, %c3_22] : memref<32x607xf32, #tpu.memory_space<vmem>>, vector<32x544xf32>
    %25 = vector.broadcast %23 : vector<32x1xf32> to vector<32x544xf32>
    %26 = arith.mulf %25, %24 : vector<32x544xf32>
    %27 = arith.addf %21, %26 : vector<32x544xf32>
    %c4 = arith.constant 4 : index
    %c0_23 = arith.constant 0 : index
    %c0_24 = arith.constant 0 : index
    %28 = vector.load %arg3[%c4, %c0_23, %c0_24] : memref<64x32x1xf32, #tpu.memory_space<vmem>>, vector<1x32x1xf32>
    %29 = vector.shape_cast %28 : vector<1x32x1xf32> to vector<32x1xf32>
    %c0_25 = arith.constant 0 : index
    %c4_26 = arith.constant 4 : index
    %30 = vector.load %arg15[%c0_25, %c4_26] : memref<32x607xf32, #tpu.memory_space<vmem>>, vector<32x544xf32>
    %31 = vector.broadcast %29 : vector<32x1xf32> to vector<32x544xf32>
    %32 = arith.mulf %31, %30 : vector<32x544xf32>
    %33 = arith.addf %27, %32 : vector<32x544xf32>
    %c5 = arith.constant 5 : index
    %c0_27 = arith.constant 0 : index
    %c0_28 = arith.constant 0 : index
    %34 = vector.load %arg3[%c5, %c0_27, %c0_28] : memref<64x32x1xf32, #tpu.memory_space<vmem>>, vector<1x32x1xf32>
    %35 = vector.shape_cast %34 : vector<1x32x1xf32> to vector<32x1xf32>
    %c0_29 = arith.constant 0 : index
    %c5_30 = arith.constant 5 : index
    %36 = vector.load %arg15[%c0_29, %c5_30] : memref<32x607xf32, #tpu.memory_space<vmem>>, vector<32x544xf32>
    %37 = vector.broadcast %35 : vector<32x1xf32> to vector<32x544xf32>
    %38 = arith.mulf %37, %36 : vector<32x544xf32>
    %39 = arith.addf %33, %38 : vector<32x544xf32>
    %c6 = arith.constant 6 : index
    %c0_31 = arith.constant 0 : index
    %c0_32 = arith.constant 0 : index
    %40 = vector.load %arg3[%c6, %c0_31, %c0_32] : memref<64x32x1xf32, #tpu.memory_space<vmem>>, vector<1x32x1xf32>
    %41 = vector.shape_cast %40 : vector<1x32x1xf32> to vector<32x1xf32>
    %c0_33 = arith.constant 0 : index
    %c6_34 = arith.constant 6 : index
    %42 = vector.load %arg15[%c0_33, %c6_34] : memref<32x607xf32, #tpu.memory_space<vmem>>, vector<32x544xf32>
    %43 = vector.broadcast %41 : vector<32x1xf32> to vector<32x544xf32>
    %44 = arith.mulf %43, %42 : vector<32x544xf32>
    %45 = arith.addf %39, %44 : vector<32x544xf32>
    %c7 = arith.constant 7 : index
    %c0_35 = arith.constant 0 : index
    %c0_36 = arith.constant 0 : index
    %46 = vector.load %arg3[%c7, %c0_35, %c0_36] : memref<64x32x1xf32, #tpu.memory_space<vmem>>, vector<1x32x1xf32>
    %47 = vector.shape_cast %46 : vector<1x32x1xf32> to vector<32x1xf32>
    %c0_37 = arith.constant 0 : index
    %c7_38 = arith.constant 7 : index
    %48 = vector.load %arg15[%c0_37, %c7_38] : memref<32x607xf32, #tpu.memory_space<vmem>>, vector<32x544xf32>
    %49 = vector.broadcast %47 : vector<32x1xf32> to vector<32x544xf32>
    %50 = arith.mulf %49, %48 : vector<32x544xf32>
    %51 = arith.addf %45, %50 : vector<32x544xf32>
    %c8 = arith.constant 8 : index
    %c0_39 = arith.constant 0 : index
    %c0_40 = arith.constant 0 : index
    %52 = vector.load %arg3[%c8, %c0_39, %c0_40] : memref<64x32x1xf32, #tpu.memory_space<vmem>>, vector<1x32x1xf32>
    %53 = vector.shape_cast %52 : vector<1x32x1xf32> to vector<32x1xf32>
    %c0_41 = arith.constant 0 : index
    %c8_42 = arith.constant 8 : index
    %54 = vector.load %arg15[%c0_41, %c8_42] : memref<32x607xf32, #tpu.memory_space<vmem>>, vector<32x544xf32>
    %55 = vector.broadcast %53 : vector<32x1xf32> to vector<32x544xf32>
    %56 = arith.mulf %55, %54 : vector<32x544xf32>
    %57 = arith.addf %51, %56 : vector<32x544xf32>
    %c9 = arith.constant 9 : index
    %c0_43 = arith.constant 0 : index
    %c0_44 = arith.constant 0 : index
    %58 = vector.load %arg3[%c9, %c0_43, %c0_44] : memref<64x32x1xf32, #tpu.memory_space<vmem>>, vector<1x32x1xf32>
    %59 = vector.shape_cast %58 : vector<1x32x1xf32> to vector<32x1xf32>
    %c0_45 = arith.constant 0 : index
    %c9_46 = arith.constant 9 : index
    %60 = vector.load %arg15[%c0_45, %c9_46] : memref<32x607xf32, #tpu.memory_space<vmem>>, vector<32x544xf32>
    %61 = vector.broadcast %59 : vector<32x1xf32> to vector<32x544xf32>
    %62 = arith.mulf %61, %60 : vector<32x544xf32>
    %63 = arith.addf %57, %62 : vector<32x544xf32>
    %c10 = arith.constant 10 : index
    %c0_47 = arith.constant 0 : index
    %c0_48 = arith.constant 0 : index
    %64 = vector.load %arg3[%c10, %c0_47, %c0_48] : memref<64x32x1xf32, #tpu.memory_space<vmem>>, vector<1x32x1xf32>
    %65 = vector.shape_cast %64 : vector<1x32x1xf32> to vector<32x1xf32>
    %c0_49 = arith.constant 0 : index
    %c10_50 = arith.constant 10 : index
    %66 = vector.load %arg15[%c0_49, %c10_50] : memref<32x607xf32, #tpu.memory_space<vmem>>, vector<32x544xf32>
    %67 = vector.broadcast %65 : vector<32x1xf32> to vector<32x544xf32>
    %68 = arith.mulf %67, %66 : vector<32x544xf32>
    %69 = arith.addf %63, %68 : vector<32x544xf32>
    %c11 = arith.constant 11 : index
    %c0_51 = arith.constant 0 : index
    %c0_52 = arith.constant 0 : index
    %70 = vector.load %arg3[%c11, %c0_51, %c0_52] : memref<64x32x1xf32, #tpu.memory_space<vmem>>, vector<1x32x1xf32>
    %71 = vector.shape_cast %70 : vector<1x32x1xf32> to vector<32x1xf32>
    %c0_53 = arith.constant 0 : index
    %c11_54 = arith.constant 11 : index
    %72 = vector.load %arg15[%c0_53, %c11_54] : memref<32x607xf32, #tpu.memory_space<vmem>>, vector<32x544xf32>
    %73 = vector.broadcast %71 : vector<32x1xf32> to vector<32x544xf32>
    %74 = arith.mulf %73, %72 : vector<32x544xf32>
    %75 = arith.addf %69, %74 : vector<32x544xf32>
    %c12 = arith.constant 12 : index
    %c0_55 = arith.constant 0 : index
    %c0_56 = arith.constant 0 : index
    %76 = vector.load %arg3[%c12, %c0_55, %c0_56] : memref<64x32x1xf32, #tpu.memory_space<vmem>>, vector<1x32x1xf32>
    %77 = vector.shape_cast %76 : vector<1x32x1xf32> to vector<32x1xf32>
    %c0_57 = arith.constant 0 : index
    %c12_58 = arith.constant 12 : index
    %78 = vector.load %arg15[%c0_57, %c12_58] : memref<32x607xf32, #tpu.memory_space<vmem>>, vector<32x544xf32>
    %79 = vector.broadcast %77 : vector<32x1xf32> to vector<32x544xf32>
    %80 = arith.mulf %79, %78 : vector<32x544xf32>
    %81 = arith.addf %75, %80 : vector<32x544xf32>
    %c13 = arith.constant 13 : index
    %c0_59 = arith.constant 0 : index
    %c0_60 = arith.constant 0 : index
    %82 = vector.load %arg3[%c13, %c0_59, %c0_60] : memref<64x32x1xf32, #tpu.memory_space<vmem>>, vector<1x32x1xf32>
    %83 = vector.shape_cast %82 : vector<1x32x1xf32> to vector<32x1xf32>
    %c0_61 = arith.constant 0 : index
    %c13_62 = arith.constant 13 : index
    %84 = vector.load %arg15[%c0_61, %c13_62] : memref<32x607xf32, #tpu.memory_space<vmem>>, vector<32x544xf32>
    %85 = vector.broadcast %83 : vector<32x1xf32> to vector<32x544xf32>
    %86 = arith.mulf %85, %84 : vector<32x544xf32>
    %87 = arith.addf %81, %86 : vector<32x544xf32>
    %c14 = arith.constant 14 : index
    %c0_63 = arith.constant 0 : index
    %c0_64 = arith.constant 0 : index
    %88 = vector.load %arg3[%c14, %c0_63, %c0_64] : memref<64x32x1xf32, #tpu.memory_space<vmem>>, vector<1x32x1xf32>
    %89 = vector.shape_cast %88 : vector<1x32x1xf32> to vector<32x1xf32>
    %c0_65 = arith.constant 0 : index
    %c14_66 = arith.constant 14 : index
    %90 = vector.load %arg15[%c0_65, %c14_66] : memref<32x607xf32, #tpu.memory_space<vmem>>, vector<32x544xf32>
    %91 = vector.broadcast %89 : vector<32x1xf32> to vector<32x544xf32>
    %92 = arith.mulf %91, %90 : vector<32x544xf32>
    %93 = arith.addf %87, %92 : vector<32x544xf32>
    %c15 = arith.constant 15 : index
    %c0_67 = arith.constant 0 : index
    %c0_68 = arith.constant 0 : index
    %94 = vector.load %arg3[%c15, %c0_67, %c0_68] : memref<64x32x1xf32, #tpu.memory_space<vmem>>, vector<1x32x1xf32>
    %95 = vector.shape_cast %94 : vector<1x32x1xf32> to vector<32x1xf32>
    %c0_69 = arith.constant 0 : index
    %c15_70 = arith.constant 15 : index
    %96 = vector.load %arg15[%c0_69, %c15_70] : memref<32x607xf32, #tpu.memory_space<vmem>>, vector<32x544xf32>
    %97 = vector.broadcast %95 : vector<32x1xf32> to vector<32x544xf32>
    %98 = arith.mulf %97, %96 : vector<32x544xf32>
    %99 = arith.addf %93, %98 : vector<32x544xf32>
    %c16 = arith.constant 16 : index
    %c0_71 = arith.constant 0 : index
    %c0_72 = arith.constant 0 : index
    %100 = vector.load %arg3[%c16, %c0_71, %c0_72] : memref<64x32x1xf32, #tpu.memory_space<vmem>>, vector<1x32x1xf32>
    %101 = vector.shape_cast %100 : vector<1x32x1xf32> to vector<32x1xf32>
    %c0_73 = arith.constant 0 : index
    %c16_74 = arith.constant 16 : index
    %102 = vector.load %arg15[%c0_73, %c16_74] : memref<32x607xf32, #tpu.memory_space<vmem>>, vector<32x544xf32>
    %103 = vector.broadcast %101 : vector<32x1xf32> to vector<32x544xf32>
    %104 = arith.mulf %103, %102 : vector<32x544xf32>
    %105 = arith.addf %99, %104 : vector<32x544xf32>
    %c17 = arith.constant 17 : index
    %c0_75 = arith.constant 0 : index
    %c0_76 = arith.constant 0 : index
    %106 = vector.load %arg3[%c17, %c0_75, %c0_76] : memref<64x32x1xf32, #tpu.memory_space<vmem>>, vector<1x32x1xf32>
    %107 = vector.shape_cast %106 : vector<1x32x1xf32> to vector<32x1xf32>
    %c0_77 = arith.constant 0 : index
    %c17_78 = arith.constant 17 : index
    %108 = vector.load %arg15[%c0_77, %c17_78] : memref<32x607xf32, #tpu.memory_space<vmem>>, vector<32x544xf32>
    %109 = vector.broadcast %107 : vector<32x1xf32> to vector<32x544xf32>
    %110 = arith.mulf %109, %108 : vector<32x544xf32>
    %111 = arith.addf %105, %110 : vector<32x544xf32>
    %c18 = arith.constant 18 : index
    %c0_79 = arith.constant 0 : index
    %c0_80 = arith.constant 0 : index
    %112 = vector.load %arg3[%c18, %c0_79, %c0_80] : memref<64x32x1xf32, #tpu.memory_space<vmem>>, vector<1x32x1xf32>
    %113 = vector.shape_cast %112 : vector<1x32x1xf32> to vector<32x1xf32>
    %c0_81 = arith.constant 0 : index
    %c18_82 = arith.constant 18 : index
    %114 = vector.load %arg15[%c0_81, %c18_82] : memref<32x607xf32, #tpu.memory_space<vmem>>, vector<32x544xf32>
    %115 = vector.broadcast %113 : vector<32x1xf32> to vector<32x544xf32>
    %116 = arith.mulf %115, %114 : vector<32x544xf32>
    %117 = arith.addf %111, %116 : vector<32x544xf32>
    %c19 = arith.constant 19 : index
    %c0_83 = arith.constant 0 : index
    %c0_84 = arith.constant 0 : index
    %118 = vector.load %arg3[%c19, %c0_83, %c0_84] : memref<64x32x1xf32, #tpu.memory_space<vmem>>, vector<1x32x1xf32>
    %119 = vector.shape_cast %118 : vector<1x32x1xf32> to vector<32x1xf32>
    %c0_85 = arith.constant 0 : index
    %c19_86 = arith.constant 19 : index
    %120 = vector.load %arg15[%c0_85, %c19_86] : memref<32x607xf32, #tpu.memory_space<vmem>>, vector<32x544xf32>
    %121 = vector.broadcast %119 : vector<32x1xf32> to vector<32x544xf32>
    %122 = arith.mulf %121, %120 : vector<32x544xf32>
    %123 = arith.addf %117, %122 : vector<32x544xf32>
    %c20 = arith.constant 20 : index
    %c0_87 = arith.constant 0 : index
    %c0_88 = arith.constant 0 : index
    %124 = vector.load %arg3[%c20, %c0_87, %c0_88] : memref<64x32x1xf32, #tpu.memory_space<vmem>>, vector<1x32x1xf32>
    %125 = vector.shape_cast %124 : vector<1x32x1xf32> to vector<32x1xf32>
    %c0_89 = arith.constant 0 : index
    %c20_90 = arith.constant 20 : index
    %126 = vector.load %arg15[%c0_89, %c20_90] : memref<32x607xf32, #tpu.memory_space<vmem>>, vector<32x544xf32>
    %127 = vector.broadcast %125 : vector<32x1xf32> to vector<32x544xf32>
    %128 = arith.mulf %127, %126 : vector<32x544xf32>
    %129 = arith.addf %123, %128 : vector<32x544xf32>
    %c21 = arith.constant 21 : index
    %c0_91 = arith.constant 0 : index
    %c0_92 = arith.constant 0 : index
    %130 = vector.load %arg3[%c21, %c0_91, %c0_92] : memref<64x32x1xf32, #tpu.memory_space<vmem>>, vector<1x32x1xf32>
    %131 = vector.shape_cast %130 : vector<1x32x1xf32> to vector<32x1xf32>
    %c0_93 = arith.constant 0 : index
    %c21_94 = arith.constant 21 : index
    %132 = vector.load %arg15[%c0_93, %c21_94] : memref<32x607xf32, #tpu.memory_space<vmem>>, vector<32x544xf32>
    %133 = vector.broadcast %131 : vector<32x1xf32> to vector<32x544xf32>
    %134 = arith.mulf %133, %132 : vector<32x544xf32>
    %135 = arith.addf %129, %134 : vector<32x544xf32>
    %c22 = arith.constant 22 : index
    %c0_95 = arith.constant 0 : index
    %c0_96 = arith.constant 0 : index
    %136 = vector.load %arg3[%c22, %c0_95, %c0_96] : memref<64x32x1xf32, #tpu.memory_space<vmem>>, vector<1x32x1xf32>
    %137 = vector.shape_cast %136 : vector<1x32x1xf32> to vector<32x1xf32>
    %c0_97 = arith.constant 0 : index
    %c22_98 = arith.constant 22 : index
    %138 = vector.load %arg15[%c0_97, %c22_98] : memref<32x607xf32, #tpu.memory_space<vmem>>, vector<32x544xf32>
    %139 = vector.broadcast %137 : vector<32x1xf32> to vector<32x544xf32>
    %140 = arith.mulf %139, %138 : vector<32x544xf32>
    %141 = arith.addf %135, %140 : vector<32x544xf32>
    %c23 = arith.constant 23 : index
    %c0_99 = arith.constant 0 : index
    %c0_100 = arith.constant 0 : index
    %142 = vector.load %arg3[%c23, %c0_99, %c0_100] : memref<64x32x1xf32, #tpu.memory_space<vmem>>, vector<1x32x1xf32>
    %143 = vector.shape_cast %142 : vector<1x32x1xf32> to vector<32x1xf32>
    %c0_101 = arith.constant 0 : index
    %c23_102 = arith.constant 23 : index
    %144 = vector.load %arg15[%c0_101, %c23_102] : memref<32x607xf32, #tpu.memory_space<vmem>>, vector<32x544xf32>
    %145 = vector.broadcast %143 : vector<32x1xf32> to vector<32x544xf32>
    %146 = arith.mulf %145, %144 : vector<32x544xf32>
    %147 = arith.addf %141, %146 : vector<32x544xf32>
    %c24 = arith.constant 24 : index
    %c0_103 = arith.constant 0 : index
    %c0_104 = arith.constant 0 : index
    %148 = vector.load %arg3[%c24, %c0_103, %c0_104] : memref<64x32x1xf32, #tpu.memory_space<vmem>>, vector<1x32x1xf32>
    %149 = vector.shape_cast %148 : vector<1x32x1xf32> to vector<32x1xf32>
    %c0_105 = arith.constant 0 : index
    %c24_106 = arith.constant 24 : index
    %150 = vector.load %arg15[%c0_105, %c24_106] : memref<32x607xf32, #tpu.memory_space<vmem>>, vector<32x544xf32>
    %151 = vector.broadcast %149 : vector<32x1xf32> to vector<32x544xf32>
    %152 = arith.mulf %151, %150 : vector<32x544xf32>
    %153 = arith.addf %147, %152 : vector<32x544xf32>
    %c25 = arith.constant 25 : index
    %c0_107 = arith.constant 0 : index
    %c0_108 = arith.constant 0 : index
    %154 = vector.load %arg3[%c25, %c0_107, %c0_108] : memref<64x32x1xf32, #tpu.memory_space<vmem>>, vector<1x32x1xf32>
    %155 = vector.shape_cast %154 : vector<1x32x1xf32> to vector<32x1xf32>
    %c0_109 = arith.constant 0 : index
    %c25_110 = arith.constant 25 : index
    %156 = vector.load %arg15[%c0_109, %c25_110] : memref<32x607xf32, #tpu.memory_space<vmem>>, vector<32x544xf32>
    %157 = vector.broadcast %155 : vector<32x1xf32> to vector<32x544xf32>
    %158 = arith.mulf %157, %156 : vector<32x544xf32>
    %159 = arith.addf %153, %158 : vector<32x544xf32>
    %c26 = arith.constant 26 : index
    %c0_111 = arith.constant 0 : index
    %c0_112 = arith.constant 0 : index
    %160 = vector.load %arg3[%c26, %c0_111, %c0_112] : memref<64x32x1xf32, #tpu.memory_space<vmem>>, vector<1x32x1xf32>
    %161 = vector.shape_cast %160 : vector<1x32x1xf32> to vector<32x1xf32>
    %c0_113 = arith.constant 0 : index
    %c26_114 = arith.constant 26 : index
    %162 = vector.load %arg15[%c0_113, %c26_114] : memref<32x607xf32, #tpu.memory_space<vmem>>, vector<32x544xf32>
    %163 = vector.broadcast %161 : vector<32x1xf32> to vector<32x544xf32>
    %164 = arith.mulf %163, %162 : vector<32x544xf32>
    %165 = arith.addf %159, %164 : vector<32x544xf32>
    %c27 = arith.constant 27 : index
    %c0_115 = arith.constant 0 : index
    %c0_116 = arith.constant 0 : index
    %166 = vector.load %arg3[%c27, %c0_115, %c0_116] : memref<64x32x1xf32, #tpu.memory_space<vmem>>, vector<1x32x1xf32>
    %167 = vector.shape_cast %166 : vector<1x32x1xf32> to vector<32x1xf32>
    %c0_117 = arith.constant 0 : index
    %c27_118 = arith.constant 27 : index
    %168 = vector.load %arg15[%c0_117, %c27_118] : memref<32x607xf32, #tpu.memory_space<vmem>>, vector<32x544xf32>
    %169 = vector.broadcast %167 : vector<32x1xf32> to vector<32x544xf32>
    %170 = arith.mulf %169, %168 : vector<32x544xf32>
    %171 = arith.addf %165, %170 : vector<32x544xf32>
    %c28 = arith.constant 28 : index
    %c0_119 = arith.constant 0 : index
    %c0_120 = arith.constant 0 : index
    %172 = vector.load %arg3[%c28, %c0_119, %c0_120] : memref<64x32x1xf32, #tpu.memory_space<vmem>>, vector<1x32x1xf32>
    %173 = vector.shape_cast %172 : vector<1x32x1xf32> to vector<32x1xf32>
    %c0_121 = arith.constant 0 : index
    %c28_122 = arith.constant 28 : index
    %174 = vector.load %arg15[%c0_121, %c28_122] : memref<32x607xf32, #tpu.memory_space<vmem>>, vector<32x544xf32>
    %175 = vector.broadcast %173 : vector<32x1xf32> to vector<32x544xf32>
    %176 = arith.mulf %175, %174 : vector<32x544xf32>
    %177 = arith.addf %171, %176 : vector<32x544xf32>
    %c29 = arith.constant 29 : index
    %c0_123 = arith.constant 0 : index
    %c0_124 = arith.constant 0 : index
    %178 = vector.load %arg3[%c29, %c0_123, %c0_124] : memref<64x32x1xf32, #tpu.memory_space<vmem>>, vector<1x32x1xf32>
    %179 = vector.shape_cast %178 : vector<1x32x1xf32> to vector<32x1xf32>
    %c0_125 = arith.constant 0 : index
    %c29_126 = arith.constant 29 : index
    %180 = vector.load %arg15[%c0_125, %c29_126] : memref<32x607xf32, #tpu.memory_space<vmem>>, vector<32x544xf32>
    %181 = vector.broadcast %179 : vector<32x1xf32> to vector<32x544xf32>
    %182 = arith.mulf %181, %180 : vector<32x544xf32>
    %183 = arith.addf %177, %182 : vector<32x544xf32>
    %c30 = arith.constant 30 : index
    %c0_127 = arith.constant 0 : index
    %c0_128 = arith.constant 0 : index
    %184 = vector.load %arg3[%c30, %c0_127, %c0_128] : memref<64x32x1xf32, #tpu.memory_space<vmem>>, vector<1x32x1xf32>
    %185 = vector.shape_cast %184 : vector<1x32x1xf32> to vector<32x1xf32>
    %c0_129 = arith.constant 0 : index
    %c30_130 = arith.constant 30 : index
    %186 = vector.load %arg15[%c0_129, %c30_130] : memref<32x607xf32, #tpu.memory_space<vmem>>, vector<32x544xf32>
    %187 = vector.broadcast %185 : vector<32x1xf32> to vector<32x544xf32>
    %188 = arith.mulf %187, %186 : vector<32x544xf32>
    %189 = arith.addf %183, %188 : vector<32x544xf32>
    %c31 = arith.constant 31 : index
    %c0_131 = arith.constant 0 : index
    %c0_132 = arith.constant 0 : index
    %190 = vector.load %arg3[%c31, %c0_131, %c0_132] : memref<64x32x1xf32, #tpu.memory_space<vmem>>, vector<1x32x1xf32>
    %191 = vector.shape_cast %190 : vector<1x32x1xf32> to vector<32x1xf32>
    %c0_133 = arith.constant 0 : index
    %c31_134 = arith.constant 31 : index
    %192 = vector.load %arg15[%c0_133, %c31_134] : memref<32x607xf32, #tpu.memory_space<vmem>>, vector<32x544xf32>
    %193 = vector.broadcast %191 : vector<32x1xf32> to vector<32x544xf32>
    %194 = arith.mulf %193, %192 : vector<32x544xf32>
    %195 = arith.addf %189, %194 : vector<32x544xf32>
    %c32 = arith.constant 32 : index
    %c0_135 = arith.constant 0 : index
    %c0_136 = arith.constant 0 : index
    %196 = vector.load %arg3[%c32, %c0_135, %c0_136] : memref<64x32x1xf32, #tpu.memory_space<vmem>>, vector<1x32x1xf32>
    %197 = vector.shape_cast %196 : vector<1x32x1xf32> to vector<32x1xf32>
    %c0_137 = arith.constant 0 : index
    %c32_138 = arith.constant 32 : index
    %198 = vector.load %arg15[%c0_137, %c32_138] : memref<32x607xf32, #tpu.memory_space<vmem>>, vector<32x544xf32>
    %199 = vector.broadcast %197 : vector<32x1xf32> to vector<32x544xf32>
    %200 = arith.mulf %199, %198 : vector<32x544xf32>
    %201 = arith.addf %195, %200 : vector<32x544xf32>
    %c33 = arith.constant 33 : index
    %c0_139 = arith.constant 0 : index
    %c0_140 = arith.constant 0 : index
    %202 = vector.load %arg3[%c33, %c0_139, %c0_140] : memref<64x32x1xf32, #tpu.memory_space<vmem>>, vector<1x32x1xf32>
    %203 = vector.shape_cast %202 : vector<1x32x1xf32> to vector<32x1xf32>
    %c0_141 = arith.constant 0 : index
    %c33_142 = arith.constant 33 : index
    %204 = vector.load %arg15[%c0_141, %c33_142] : memref<32x607xf32, #tpu.memory_space<vmem>>, vector<32x544xf32>
    %205 = vector.broadcast %203 : vector<32x1xf32> to vector<32x544xf32>
    %206 = arith.mulf %205, %204 : vector<32x544xf32>
    %207 = arith.addf %201, %206 : vector<32x544xf32>
    %c34 = arith.constant 34 : index
    %c0_143 = arith.constant 0 : index
    %c0_144 = arith.constant 0 : index
    %208 = vector.load %arg3[%c34, %c0_143, %c0_144] : memref<64x32x1xf32, #tpu.memory_space<vmem>>, vector<1x32x1xf32>
    %209 = vector.shape_cast %208 : vector<1x32x1xf32> to vector<32x1xf32>
    %c0_145 = arith.constant 0 : index
    %c34_146 = arith.constant 34 : index
    %210 = vector.load %arg15[%c0_145, %c34_146] : memref<32x607xf32, #tpu.memory_space<vmem>>, vector<32x544xf32>
    %211 = vector.broadcast %209 : vector<32x1xf32> to vector<32x544xf32>
    %212 = arith.mulf %211, %210 : vector<32x544xf32>
    %213 = arith.addf %207, %212 : vector<32x544xf32>
    %c35 = arith.constant 35 : index
    %c0_147 = arith.constant 0 : index
    %c0_148 = arith.constant 0 : index
    %214 = vector.load %arg3[%c35, %c0_147, %c0_148] : memref<64x32x1xf32, #tpu.memory_space<vmem>>, vector<1x32x1xf32>
    %215 = vector.shape_cast %214 : vector<1x32x1xf32> to vector<32x1xf32>
    %c0_149 = arith.constant 0 : index
    %c35_150 = arith.constant 35 : index
    %216 = vector.load %arg15[%c0_149, %c35_150] : memref<32x607xf32, #tpu.memory_space<vmem>>, vector<32x544xf32>
    %217 = vector.broadcast %215 : vector<32x1xf32> to vector<32x544xf32>
    %218 = arith.mulf %217, %216 : vector<32x544xf32>
    %219 = arith.addf %213, %218 : vector<32x544xf32>
    %c36 = arith.constant 36 : index
    %c0_151 = arith.constant 0 : index
    %c0_152 = arith.constant 0 : index
    %220 = vector.load %arg3[%c36, %c0_151, %c0_152] : memref<64x32x1xf32, #tpu.memory_space<vmem>>, vector<1x32x1xf32>
    %221 = vector.shape_cast %220 : vector<1x32x1xf32> to vector<32x1xf32>
    %c0_153 = arith.constant 0 : index
    %c36_154 = arith.constant 36 : index
    %222 = vector.load %arg15[%c0_153, %c36_154] : memref<32x607xf32, #tpu.memory_space<vmem>>, vector<32x544xf32>
    %223 = vector.broadcast %221 : vector<32x1xf32> to vector<32x544xf32>
    %224 = arith.mulf %223, %222 : vector<32x544xf32>
    %225 = arith.addf %219, %224 : vector<32x544xf32>
    %c37 = arith.constant 37 : index
    %c0_155 = arith.constant 0 : index
    %c0_156 = arith.constant 0 : index
    %226 = vector.load %arg3[%c37, %c0_155, %c0_156] : memref<64x32x1xf32, #tpu.memory_space<vmem>>, vector<1x32x1xf32>
    %227 = vector.shape_cast %226 : vector<1x32x1xf32> to vector<32x1xf32>
    %c0_157 = arith.constant 0 : index
    %c37_158 = arith.constant 37 : index
    %228 = vector.load %arg15[%c0_157, %c37_158] : memref<32x607xf32, #tpu.memory_space<vmem>>, vector<32x544xf32>
    %229 = vector.broadcast %227 : vector<32x1xf32> to vector<32x544xf32>
    %230 = arith.mulf %229, %228 : vector<32x544xf32>
    %231 = arith.addf %225, %230 : vector<32x544xf32>
    %c38 = arith.constant 38 : index
    %c0_159 = arith.constant 0 : index
    %c0_160 = arith.constant 0 : index
    %232 = vector.load %arg3[%c38, %c0_159, %c0_160] : memref<64x32x1xf32, #tpu.memory_space<vmem>>, vector<1x32x1xf32>
    %233 = vector.shape_cast %232 : vector<1x32x1xf32> to vector<32x1xf32>
    %c0_161 = arith.constant 0 : index
    %c38_162 = arith.constant 38 : index
    %234 = vector.load %arg15[%c0_161, %c38_162] : memref<32x607xf32, #tpu.memory_space<vmem>>, vector<32x544xf32>
    %235 = vector.broadcast %233 : vector<32x1xf32> to vector<32x544xf32>
    %236 = arith.mulf %235, %234 : vector<32x544xf32>
    %237 = arith.addf %231, %236 : vector<32x544xf32>
    %c39 = arith.constant 39 : index
    %c0_163 = arith.constant 0 : index
    %c0_164 = arith.constant 0 : index
    %238 = vector.load %arg3[%c39, %c0_163, %c0_164] : memref<64x32x1xf32, #tpu.memory_space<vmem>>, vector<1x32x1xf32>
    %239 = vector.shape_cast %238 : vector<1x32x1xf32> to vector<32x1xf32>
    %c0_165 = arith.constant 0 : index
    %c39_166 = arith.constant 39 : index
    %240 = vector.load %arg15[%c0_165, %c39_166] : memref<32x607xf32, #tpu.memory_space<vmem>>, vector<32x544xf32>
    %241 = vector.broadcast %239 : vector<32x1xf32> to vector<32x544xf32>
    %242 = arith.mulf %241, %240 : vector<32x544xf32>
    %243 = arith.addf %237, %242 : vector<32x544xf32>
    %c40 = arith.constant 40 : index
    %c0_167 = arith.constant 0 : index
    %c0_168 = arith.constant 0 : index
    %244 = vector.load %arg3[%c40, %c0_167, %c0_168] : memref<64x32x1xf32, #tpu.memory_space<vmem>>, vector<1x32x1xf32>
    %245 = vector.shape_cast %244 : vector<1x32x1xf32> to vector<32x1xf32>
    %c0_169 = arith.constant 0 : index
    %c40_170 = arith.constant 40 : index
    %246 = vector.load %arg15[%c0_169, %c40_170] : memref<32x607xf32, #tpu.memory_space<vmem>>, vector<32x544xf32>
    %247 = vector.broadcast %245 : vector<32x1xf32> to vector<32x544xf32>
    %248 = arith.mulf %247, %246 : vector<32x544xf32>
    %249 = arith.addf %243, %248 : vector<32x544xf32>
    %c41 = arith.constant 41 : index
    %c0_171 = arith.constant 0 : index
    %c0_172 = arith.constant 0 : index
    %250 = vector.load %arg3[%c41, %c0_171, %c0_172] : memref<64x32x1xf32, #tpu.memory_space<vmem>>, vector<1x32x1xf32>
    %251 = vector.shape_cast %250 : vector<1x32x1xf32> to vector<32x1xf32>
    %c0_173 = arith.constant 0 : index
    %c41_174 = arith.constant 41 : index
    %252 = vector.load %arg15[%c0_173, %c41_174] : memref<32x607xf32, #tpu.memory_space<vmem>>, vector<32x544xf32>
    %253 = vector.broadcast %251 : vector<32x1xf32> to vector<32x544xf32>
    %254 = arith.mulf %253, %252 : vector<32x544xf32>
    %255 = arith.addf %249, %254 : vector<32x544xf32>
    %c42 = arith.constant 42 : index
    %c0_175 = arith.constant 0 : index
    %c0_176 = arith.constant 0 : index
    %256 = vector.load %arg3[%c42, %c0_175, %c0_176] : memref<64x32x1xf32, #tpu.memory_space<vmem>>, vector<1x32x1xf32>
    %257 = vector.shape_cast %256 : vector<1x32x1xf32> to vector<32x1xf32>
    %c0_177 = arith.constant 0 : index
    %c42_178 = arith.constant 42 : index
    %258 = vector.load %arg15[%c0_177, %c42_178] : memref<32x607xf32, #tpu.memory_space<vmem>>, vector<32x544xf32>
    %259 = vector.broadcast %257 : vector<32x1xf32> to vector<32x544xf32>
    %260 = arith.mulf %259, %258 : vector<32x544xf32>
    %261 = arith.addf %255, %260 : vector<32x544xf32>
    %c43 = arith.constant 43 : index
    %c0_179 = arith.constant 0 : index
    %c0_180 = arith.constant 0 : index
    %262 = vector.load %arg3[%c43, %c0_179, %c0_180] : memref<64x32x1xf32, #tpu.memory_space<vmem>>, vector<1x32x1xf32>
    %263 = vector.shape_cast %262 : vector<1x32x1xf32> to vector<32x1xf32>
    %c0_181 = arith.constant 0 : index
    %c43_182 = arith.constant 43 : index
    %264 = vector.load %arg15[%c0_181, %c43_182] : memref<32x607xf32, #tpu.memory_space<vmem>>, vector<32x544xf32>
    %265 = vector.broadcast %263 : vector<32x1xf32> to vector<32x544xf32>
    %266 = arith.mulf %265, %264 : vector<32x544xf32>
    %267 = arith.addf %261, %266 : vector<32x544xf32>
    %c44 = arith.constant 44 : index
    %c0_183 = arith.constant 0 : index
    %c0_184 = arith.constant 0 : index
    %268 = vector.load %arg3[%c44, %c0_183, %c0_184] : memref<64x32x1xf32, #tpu.memory_space<vmem>>, vector<1x32x1xf32>
    %269 = vector.shape_cast %268 : vector<1x32x1xf32> to vector<32x1xf32>
    %c0_185 = arith.constant 0 : index
    %c44_186 = arith.constant 44 : index
    %270 = vector.load %arg15[%c0_185, %c44_186] : memref<32x607xf32, #tpu.memory_space<vmem>>, vector<32x544xf32>
    %271 = vector.broadcast %269 : vector<32x1xf32> to vector<32x544xf32>
    %272 = arith.mulf %271, %270 : vector<32x544xf32>
    %273 = arith.addf %267, %272 : vector<32x544xf32>
    %c45 = arith.constant 45 : index
    %c0_187 = arith.constant 0 : index
    %c0_188 = arith.constant 0 : index
    %274 = vector.load %arg3[%c45, %c0_187, %c0_188] : memref<64x32x1xf32, #tpu.memory_space<vmem>>, vector<1x32x1xf32>
    %275 = vector.shape_cast %274 : vector<1x32x1xf32> to vector<32x1xf32>
    %c0_189 = arith.constant 0 : index
    %c45_190 = arith.constant 45 : index
    %276 = vector.load %arg15[%c0_189, %c45_190] : memref<32x607xf32, #tpu.memory_space<vmem>>, vector<32x544xf32>
    %277 = vector.broadcast %275 : vector<32x1xf32> to vector<32x544xf32>
    %278 = arith.mulf %277, %276 : vector<32x544xf32>
    %279 = arith.addf %273, %278 : vector<32x544xf32>
    %c46 = arith.constant 46 : index
    %c0_191 = arith.constant 0 : index
    %c0_192 = arith.constant 0 : index
    %280 = vector.load %arg3[%c46, %c0_191, %c0_192] : memref<64x32x1xf32, #tpu.memory_space<vmem>>, vector<1x32x1xf32>
    %281 = vector.shape_cast %280 : vector<1x32x1xf32> to vector<32x1xf32>
    %c0_193 = arith.constant 0 : index
    %c46_194 = arith.constant 46 : index
    %282 = vector.load %arg15[%c0_193, %c46_194] : memref<32x607xf32, #tpu.memory_space<vmem>>, vector<32x544xf32>
    %283 = vector.broadcast %281 : vector<32x1xf32> to vector<32x544xf32>
    %284 = arith.mulf %283, %282 : vector<32x544xf32>
    %285 = arith.addf %279, %284 : vector<32x544xf32>
    %c47 = arith.constant 47 : index
    %c0_195 = arith.constant 0 : index
    %c0_196 = arith.constant 0 : index
    %286 = vector.load %arg3[%c47, %c0_195, %c0_196] : memref<64x32x1xf32, #tpu.memory_space<vmem>>, vector<1x32x1xf32>
    %287 = vector.shape_cast %286 : vector<1x32x1xf32> to vector<32x1xf32>
    %c0_197 = arith.constant 0 : index
    %c47_198 = arith.constant 47 : index
    %288 = vector.load %arg15[%c0_197, %c47_198] : memref<32x607xf32, #tpu.memory_space<vmem>>, vector<32x544xf32>
    %289 = vector.broadcast %287 : vector<32x1xf32> to vector<32x544xf32>
    %290 = arith.mulf %289, %288 : vector<32x544xf32>
    %291 = arith.addf %285, %290 : vector<32x544xf32>
    %c48 = arith.constant 48 : index
    %c0_199 = arith.constant 0 : index
    %c0_200 = arith.constant 0 : index
    %292 = vector.load %arg3[%c48, %c0_199, %c0_200] : memref<64x32x1xf32, #tpu.memory_space<vmem>>, vector<1x32x1xf32>
    %293 = vector.shape_cast %292 : vector<1x32x1xf32> to vector<32x1xf32>
    %c0_201 = arith.constant 0 : index
    %c48_202 = arith.constant 48 : index
    %294 = vector.load %arg15[%c0_201, %c48_202] : memref<32x607xf32, #tpu.memory_space<vmem>>, vector<32x544xf32>
    %295 = vector.broadcast %293 : vector<32x1xf32> to vector<32x544xf32>
    %296 = arith.mulf %295, %294 : vector<32x544xf32>
    %297 = arith.addf %291, %296 : vector<32x544xf32>
    %c49 = arith.constant 49 : index
    %c0_203 = arith.constant 0 : index
    %c0_204 = arith.constant 0 : index
    %298 = vector.load %arg3[%c49, %c0_203, %c0_204] : memref<64x32x1xf32, #tpu.memory_space<vmem>>, vector<1x32x1xf32>
    %299 = vector.shape_cast %298 : vector<1x32x1xf32> to vector<32x1xf32>
    %c0_205 = arith.constant 0 : index
    %c49_206 = arith.constant 49 : index
    %300 = vector.load %arg15[%c0_205, %c49_206] : memref<32x607xf32, #tpu.memory_space<vmem>>, vector<32x544xf32>
    %301 = vector.broadcast %299 : vector<32x1xf32> to vector<32x544xf32>
    %302 = arith.mulf %301, %300 : vector<32x544xf32>
    %303 = arith.addf %297, %302 : vector<32x544xf32>
    %c50 = arith.constant 50 : index
    %c0_207 = arith.constant 0 : index
    %c0_208 = arith.constant 0 : index
    %304 = vector.load %arg3[%c50, %c0_207, %c0_208] : memref<64x32x1xf32, #tpu.memory_space<vmem>>, vector<1x32x1xf32>
    %305 = vector.shape_cast %304 : vector<1x32x1xf32> to vector<32x1xf32>
    %c0_209 = arith.constant 0 : index
    %c50_210 = arith.constant 50 : index
    %306 = vector.load %arg15[%c0_209, %c50_210] : memref<32x607xf32, #tpu.memory_space<vmem>>, vector<32x544xf32>
    %307 = vector.broadcast %305 : vector<32x1xf32> to vector<32x544xf32>
    %308 = arith.mulf %307, %306 : vector<32x544xf32>
    %309 = arith.addf %303, %308 : vector<32x544xf32>
    %c51 = arith.constant 51 : index
    %c0_211 = arith.constant 0 : index
    %c0_212 = arith.constant 0 : index
    %310 = vector.load %arg3[%c51, %c0_211, %c0_212] : memref<64x32x1xf32, #tpu.memory_space<vmem>>, vector<1x32x1xf32>
    %311 = vector.shape_cast %310 : vector<1x32x1xf32> to vector<32x1xf32>
    %c0_213 = arith.constant 0 : index
    %c51_214 = arith.constant 51 : index
    %312 = vector.load %arg15[%c0_213, %c51_214] : memref<32x607xf32, #tpu.memory_space<vmem>>, vector<32x544xf32>
    %313 = vector.broadcast %311 : vector<32x1xf32> to vector<32x544xf32>
    %314 = arith.mulf %313, %312 : vector<32x544xf32>
    %315 = arith.addf %309, %314 : vector<32x544xf32>
    %c52 = arith.constant 52 : index
    %c0_215 = arith.constant 0 : index
    %c0_216 = arith.constant 0 : index
    %316 = vector.load %arg3[%c52, %c0_215, %c0_216] : memref<64x32x1xf32, #tpu.memory_space<vmem>>, vector<1x32x1xf32>
    %317 = vector.shape_cast %316 : vector<1x32x1xf32> to vector<32x1xf32>
    %c0_217 = arith.constant 0 : index
    %c52_218 = arith.constant 52 : index
    %318 = vector.load %arg15[%c0_217, %c52_218] : memref<32x607xf32, #tpu.memory_space<vmem>>, vector<32x544xf32>
    %319 = vector.broadcast %317 : vector<32x1xf32> to vector<32x544xf32>
    %320 = arith.mulf %319, %318 : vector<32x544xf32>
    %321 = arith.addf %315, %320 : vector<32x544xf32>
    %c53 = arith.constant 53 : index
    %c0_219 = arith.constant 0 : index
    %c0_220 = arith.constant 0 : index
    %322 = vector.load %arg3[%c53, %c0_219, %c0_220] : memref<64x32x1xf32, #tpu.memory_space<vmem>>, vector<1x32x1xf32>
    %323 = vector.shape_cast %322 : vector<1x32x1xf32> to vector<32x1xf32>
    %c0_221 = arith.constant 0 : index
    %c53_222 = arith.constant 53 : index
    %324 = vector.load %arg15[%c0_221, %c53_222] : memref<32x607xf32, #tpu.memory_space<vmem>>, vector<32x544xf32>
    %325 = vector.broadcast %323 : vector<32x1xf32> to vector<32x544xf32>
    %326 = arith.mulf %325, %324 : vector<32x544xf32>
    %327 = arith.addf %321, %326 : vector<32x544xf32>
    %c54 = arith.constant 54 : index
    %c0_223 = arith.constant 0 : index
    %c0_224 = arith.constant 0 : index
    %328 = vector.load %arg3[%c54, %c0_223, %c0_224] : memref<64x32x1xf32, #tpu.memory_space<vmem>>, vector<1x32x1xf32>
    %329 = vector.shape_cast %328 : vector<1x32x1xf32> to vector<32x1xf32>
    %c0_225 = arith.constant 0 : index
    %c54_226 = arith.constant 54 : index
    %330 = vector.load %arg15[%c0_225, %c54_226] : memref<32x607xf32, #tpu.memory_space<vmem>>, vector<32x544xf32>
    %331 = vector.broadcast %329 : vector<32x1xf32> to vector<32x544xf32>
    %332 = arith.mulf %331, %330 : vector<32x544xf32>
    %333 = arith.addf %327, %332 : vector<32x544xf32>
    %c55 = arith.constant 55 : index
    %c0_227 = arith.constant 0 : index
    %c0_228 = arith.constant 0 : index
    %334 = vector.load %arg3[%c55, %c0_227, %c0_228] : memref<64x32x1xf32, #tpu.memory_space<vmem>>, vector<1x32x1xf32>
    %335 = vector.shape_cast %334 : vector<1x32x1xf32> to vector<32x1xf32>
    %c0_229 = arith.constant 0 : index
    %c55_230 = arith.constant 55 : index
    %336 = vector.load %arg15[%c0_229, %c55_230] : memref<32x607xf32, #tpu.memory_space<vmem>>, vector<32x544xf32>
    %337 = vector.broadcast %335 : vector<32x1xf32> to vector<32x544xf32>
    %338 = arith.mulf %337, %336 : vector<32x544xf32>
    %339 = arith.addf %333, %338 : vector<32x544xf32>
    %c56 = arith.constant 56 : index
    %c0_231 = arith.constant 0 : index
    %c0_232 = arith.constant 0 : index
    %340 = vector.load %arg3[%c56, %c0_231, %c0_232] : memref<64x32x1xf32, #tpu.memory_space<vmem>>, vector<1x32x1xf32>
    %341 = vector.shape_cast %340 : vector<1x32x1xf32> to vector<32x1xf32>
    %c0_233 = arith.constant 0 : index
    %c56_234 = arith.constant 56 : index
    %342 = vector.load %arg15[%c0_233, %c56_234] : memref<32x607xf32, #tpu.memory_space<vmem>>, vector<32x544xf32>
    %343 = vector.broadcast %341 : vector<32x1xf32> to vector<32x544xf32>
    %344 = arith.mulf %343, %342 : vector<32x544xf32>
    %345 = arith.addf %339, %344 : vector<32x544xf32>
    %c57 = arith.constant 57 : index
    %c0_235 = arith.constant 0 : index
    %c0_236 = arith.constant 0 : index
    %346 = vector.load %arg3[%c57, %c0_235, %c0_236] : memref<64x32x1xf32, #tpu.memory_space<vmem>>, vector<1x32x1xf32>
    %347 = vector.shape_cast %346 : vector<1x32x1xf32> to vector<32x1xf32>
    %c0_237 = arith.constant 0 : index
    %c57_238 = arith.constant 57 : index
    %348 = vector.load %arg15[%c0_237, %c57_238] : memref<32x607xf32, #tpu.memory_space<vmem>>, vector<32x544xf32>
    %349 = vector.broadcast %347 : vector<32x1xf32> to vector<32x544xf32>
    %350 = arith.mulf %349, %348 : vector<32x544xf32>
    %351 = arith.addf %345, %350 : vector<32x544xf32>
    %c58 = arith.constant 58 : index
    %c0_239 = arith.constant 0 : index
    %c0_240 = arith.constant 0 : index
    %352 = vector.load %arg3[%c58, %c0_239, %c0_240] : memref<64x32x1xf32, #tpu.memory_space<vmem>>, vector<1x32x1xf32>
    %353 = vector.shape_cast %352 : vector<1x32x1xf32> to vector<32x1xf32>
    %c0_241 = arith.constant 0 : index
    %c58_242 = arith.constant 58 : index
    %354 = vector.load %arg15[%c0_241, %c58_242] : memref<32x607xf32, #tpu.memory_space<vmem>>, vector<32x544xf32>
    %355 = vector.broadcast %353 : vector<32x1xf32> to vector<32x544xf32>
    %356 = arith.mulf %355, %354 : vector<32x544xf32>
    %357 = arith.addf %351, %356 : vector<32x544xf32>
    %c59 = arith.constant 59 : index
    %c0_243 = arith.constant 0 : index
    %c0_244 = arith.constant 0 : index
    %358 = vector.load %arg3[%c59, %c0_243, %c0_244] : memref<64x32x1xf32, #tpu.memory_space<vmem>>, vector<1x32x1xf32>
    %359 = vector.shape_cast %358 : vector<1x32x1xf32> to vector<32x1xf32>
    %c0_245 = arith.constant 0 : index
    %c59_246 = arith.constant 59 : index
    %360 = vector.load %arg15[%c0_245, %c59_246] : memref<32x607xf32, #tpu.memory_space<vmem>>, vector<32x544xf32>
    %361 = vector.broadcast %359 : vector<32x1xf32> to vector<32x544xf32>
    %362 = arith.mulf %361, %360 : vector<32x544xf32>
    %363 = arith.addf %357, %362 : vector<32x544xf32>
    %c60 = arith.constant 60 : index
    %c0_247 = arith.constant 0 : index
    %c0_248 = arith.constant 0 : index
    %364 = vector.load %arg3[%c60, %c0_247, %c0_248] : memref<64x32x1xf32, #tpu.memory_space<vmem>>, vector<1x32x1xf32>
    %365 = vector.shape_cast %364 : vector<1x32x1xf32> to vector<32x1xf32>
    %c0_249 = arith.constant 0 : index
    %c60_250 = arith.constant 60 : index
    %366 = vector.load %arg15[%c0_249, %c60_250] : memref<32x607xf32, #tpu.memory_space<vmem>>, vector<32x544xf32>
    %367 = vector.broadcast %365 : vector<32x1xf32> to vector<32x544xf32>
    %368 = arith.mulf %367, %366 : vector<32x544xf32>
    %369 = arith.addf %363, %368 : vector<32x544xf32>
    %c61 = arith.constant 61 : index
    %c0_251 = arith.constant 0 : index
    %c0_252 = arith.constant 0 : index
    %370 = vector.load %arg3[%c61, %c0_251, %c0_252] : memref<64x32x1xf32, #tpu.memory_space<vmem>>, vector<1x32x1xf32>
    %371 = vector.shape_cast %370 : vector<1x32x1xf32> to vector<32x1xf32>
    %c0_253 = arith.constant 0 : index
    %c61_254 = arith.constant 61 : index
    %372 = vector.load %arg15[%c0_253, %c61_254] : memref<32x607xf32, #tpu.memory_space<vmem>>, vector<32x544xf32>
    %373 = vector.broadcast %371 : vector<32x1xf32> to vector<32x544xf32>
    %374 = arith.mulf %373, %372 : vector<32x544xf32>
    %375 = arith.addf %369, %374 : vector<32x544xf32>
    %c62 = arith.constant 62 : index
    %c0_255 = arith.constant 0 : index
    %c0_256 = arith.constant 0 : index
    %376 = vector.load %arg3[%c62, %c0_255, %c0_256] : memref<64x32x1xf32, #tpu.memory_space<vmem>>, vector<1x32x1xf32>
    %377 = vector.shape_cast %376 : vector<1x32x1xf32> to vector<32x1xf32>
    %c0_257 = arith.constant 0 : index
    %c62_258 = arith.constant 62 : index
    %378 = vector.load %arg15[%c0_257, %c62_258] : memref<32x607xf32, #tpu.memory_space<vmem>>, vector<32x544xf32>
    %379 = vector.broadcast %377 : vector<32x1xf32> to vector<32x544xf32>
    %380 = arith.mulf %379, %378 : vector<32x544xf32>
    %381 = arith.addf %375, %380 : vector<32x544xf32>
    %c63 = arith.constant 63 : index
    %c0_259 = arith.constant 0 : index
    %c0_260 = arith.constant 0 : index
    %382 = vector.load %arg3[%c63, %c0_259, %c0_260] : memref<64x32x1xf32, #tpu.memory_space<vmem>>, vector<1x32x1xf32>
    %383 = vector.shape_cast %382 : vector<1x32x1xf32> to vector<32x1xf32>
    %c0_261 = arith.constant 0 : index
    %c63_262 = arith.constant 63 : index
    %384 = vector.load %arg15[%c0_261, %c63_262] : memref<32x607xf32, #tpu.memory_space<vmem>>, vector<32x544xf32>
    %385 = vector.broadcast %383 : vector<32x1xf32> to vector<32x544xf32>
    %386 = arith.mulf %385, %384 : vector<32x544xf32>
    %387 = arith.addf %381, %386 : vector<32x544xf32>
    %c0_263 = arith.constant 0 : index
    %c0_264 = arith.constant 0 : index
    %388 = vector.load %arg4[%c0_263, %c0_264] : memref<32x1xf32, #tpu.memory_space<vmem>>, vector<32x1xf32>
    %389 = vector.broadcast %388 : vector<32x1xf32> to vector<32x544xf32>
    %390 = arith.addf %387, %389 : vector<32x544xf32>
    %cst_265 = arith.constant 0.000000e+00 : f32
    %391 = vector.broadcast %cst_265 : f32 to vector<32x544xf32>
    %392 = arith.cmpf ogt, %390, %391 : vector<32x544xf32>
    %393 = math.exp %390 : vector<32x544xf32>
    %cst_266 = arith.constant 1.000000e+00 : f32
    %394 = vector.broadcast %cst_266 : f32 to vector<32x544xf32>
    %395 = arith.subf %393, %394 : vector<32x544xf32>
    %396 = arith.select %392, %390, %395 : vector<32x544xi1>, vector<32x544xf32>
    %c0_267 = arith.constant 0 : index
    %c0_268 = arith.constant 0 : index
    %397 = vector.load %arg5[%c0_267, %c0_268] : memref<544x152xf32, #tpu.memory_space<vmem>>, vector<544x152xf32>
    %cst_269 = arith.constant dense<0.000000e+00> : vector<32x152xf32>
    %398 = tpu.matmul %396, %397, %cst_269 {dimension_numbers = #tpu.dot_dimension_numbers<[1], [0], [0], [1], [0, 0, 1, 1], [], []>} : vector<32x544xf32>, vector<544x152xf32>, vector<32x152xf32> -> vector<32x152xf32>
    %c0_270 = arith.constant 0 : index
    %c0_271 = arith.constant 0 : index
    %c0_272 = arith.constant 0 : index
    %399 = vector.load %arg6[%c0_270, %c0_271, %c0_272] : memref<16x32x1xf32, #tpu.memory_space<vmem>>, vector<1x32x1xf32>
    %400 = vector.shape_cast %399 : vector<1x32x1xf32> to vector<32x1xf32>
    %401 = vector.extract_strided_slice %398 {offsets = [0, 0], sizes = [32, 137], strides = [1, 1]} : vector<32x152xf32> to vector<32x137xf32>
    %402 = vector.broadcast %400 : vector<32x1xf32> to vector<32x137xf32>
    %403 = arith.mulf %402, %401 : vector<32x137xf32>
    %c1_273 = arith.constant 1 : index
    %c0_274 = arith.constant 0 : index
    %c0_275 = arith.constant 0 : index
    %404 = vector.load %arg6[%c1_273, %c0_274, %c0_275] : memref<16x32x1xf32, #tpu.memory_space<vmem>>, vector<1x32x1xf32>
    %405 = vector.shape_cast %404 : vector<1x32x1xf32> to vector<32x1xf32>
    %406 = vector.extract_strided_slice %398 {offsets = [0, 1], sizes = [32, 137], strides = [1, 1]} : vector<32x152xf32> to vector<32x137xf32>
    %407 = vector.broadcast %405 : vector<32x1xf32> to vector<32x137xf32>
    %408 = arith.mulf %407, %406 : vector<32x137xf32>
    %409 = arith.addf %403, %408 : vector<32x137xf32>
    %c2_276 = arith.constant 2 : index
    %c0_277 = arith.constant 0 : index
    %c0_278 = arith.constant 0 : index
    %410 = vector.load %arg6[%c2_276, %c0_277, %c0_278] : memref<16x32x1xf32, #tpu.memory_space<vmem>>, vector<1x32x1xf32>
    %411 = vector.shape_cast %410 : vector<1x32x1xf32> to vector<32x1xf32>
    %412 = vector.extract_strided_slice %398 {offsets = [0, 2], sizes = [32, 137], strides = [1, 1]} : vector<32x152xf32> to vector<32x137xf32>
    %413 = vector.broadcast %411 : vector<32x1xf32> to vector<32x137xf32>
    %414 = arith.mulf %413, %412 : vector<32x137xf32>
    %415 = arith.addf %409, %414 : vector<32x137xf32>
    %c3_279 = arith.constant 3 : index
    %c0_280 = arith.constant 0 : index
    %c0_281 = arith.constant 0 : index
    %416 = vector.load %arg6[%c3_279, %c0_280, %c0_281] : memref<16x32x1xf32, #tpu.memory_space<vmem>>, vector<1x32x1xf32>
    %417 = vector.shape_cast %416 : vector<1x32x1xf32> to vector<32x1xf32>
    %418 = vector.extract_strided_slice %398 {offsets = [0, 3], sizes = [32, 137], strides = [1, 1]} : vector<32x152xf32> to vector<32x137xf32>
    %419 = vector.broadcast %417 : vector<32x1xf32> to vector<32x137xf32>
    %420 = arith.mulf %419, %418 : vector<32x137xf32>
    %421 = arith.addf %415, %420 : vector<32x137xf32>
    %c4_282 = arith.constant 4 : index
    %c0_283 = arith.constant 0 : index
    %c0_284 = arith.constant 0 : index
    %422 = vector.load %arg6[%c4_282, %c0_283, %c0_284] : memref<16x32x1xf32, #tpu.memory_space<vmem>>, vector<1x32x1xf32>
    %423 = vector.shape_cast %422 : vector<1x32x1xf32> to vector<32x1xf32>
    %424 = vector.extract_strided_slice %398 {offsets = [0, 4], sizes = [32, 137], strides = [1, 1]} : vector<32x152xf32> to vector<32x137xf32>
    %425 = vector.broadcast %423 : vector<32x1xf32> to vector<32x137xf32>
    %426 = arith.mulf %425, %424 : vector<32x137xf32>
    %427 = arith.addf %421, %426 : vector<32x137xf32>
    %c5_285 = arith.constant 5 : index
    %c0_286 = arith.constant 0 : index
    %c0_287 = arith.constant 0 : index
    %428 = vector.load %arg6[%c5_285, %c0_286, %c0_287] : memref<16x32x1xf32, #tpu.memory_space<vmem>>, vector<1x32x1xf32>
    %429 = vector.shape_cast %428 : vector<1x32x1xf32> to vector<32x1xf32>
    %430 = vector.extract_strided_slice %398 {offsets = [0, 5], sizes = [32, 137], strides = [1, 1]} : vector<32x152xf32> to vector<32x137xf32>
    %431 = vector.broadcast %429 : vector<32x1xf32> to vector<32x137xf32>
    %432 = arith.mulf %431, %430 : vector<32x137xf32>
    %433 = arith.addf %427, %432 : vector<32x137xf32>
    %c6_288 = arith.constant 6 : index
    %c0_289 = arith.constant 0 : index
    %c0_290 = arith.constant 0 : index
    %434 = vector.load %arg6[%c6_288, %c0_289, %c0_290] : memref<16x32x1xf32, #tpu.memory_space<vmem>>, vector<1x32x1xf32>
    %435 = vector.shape_cast %434 : vector<1x32x1xf32> to vector<32x1xf32>
    %436 = vector.extract_strided_slice %398 {offsets = [0, 6], sizes = [32, 137], strides = [1, 1]} : vector<32x152xf32> to vector<32x137xf32>
    %437 = vector.broadcast %435 : vector<32x1xf32> to vector<32x137xf32>
    %438 = arith.mulf %437, %436 : vector<32x137xf32>
    %439 = arith.addf %433, %438 : vector<32x137xf32>
    %c7_291 = arith.constant 7 : index
    %c0_292 = arith.constant 0 : index
    %c0_293 = arith.constant 0 : index
    %440 = vector.load %arg6[%c7_291, %c0_292, %c0_293] : memref<16x32x1xf32, #tpu.memory_space<vmem>>, vector<1x32x1xf32>
    %441 = vector.shape_cast %440 : vector<1x32x1xf32> to vector<32x1xf32>
    %442 = vector.extract_strided_slice %398 {offsets = [0, 7], sizes = [32, 137], strides = [1, 1]} : vector<32x152xf32> to vector<32x137xf32>
    %443 = vector.broadcast %441 : vector<32x1xf32> to vector<32x137xf32>
    %444 = arith.mulf %443, %442 : vector<32x137xf32>
    %445 = arith.addf %439, %444 : vector<32x137xf32>
    %c8_294 = arith.constant 8 : index
    %c0_295 = arith.constant 0 : index
    %c0_296 = arith.constant 0 : index
    %446 = vector.load %arg6[%c8_294, %c0_295, %c0_296] : memref<16x32x1xf32, #tpu.memory_space<vmem>>, vector<1x32x1xf32>
    %447 = vector.shape_cast %446 : vector<1x32x1xf32> to vector<32x1xf32>
    %448 = vector.extract_strided_slice %398 {offsets = [0, 8], sizes = [32, 137], strides = [1, 1]} : vector<32x152xf32> to vector<32x137xf32>
    %449 = vector.broadcast %447 : vector<32x1xf32> to vector<32x137xf32>
    %450 = arith.mulf %449, %448 : vector<32x137xf32>
    %451 = arith.addf %445, %450 : vector<32x137xf32>
    %c9_297 = arith.constant 9 : index
    %c0_298 = arith.constant 0 : index
    %c0_299 = arith.constant 0 : index
    %452 = vector.load %arg6[%c9_297, %c0_298, %c0_299] : memref<16x32x1xf32, #tpu.memory_space<vmem>>, vector<1x32x1xf32>
    %453 = vector.shape_cast %452 : vector<1x32x1xf32> to vector<32x1xf32>
    %454 = vector.extract_strided_slice %398 {offsets = [0, 9], sizes = [32, 137], strides = [1, 1]} : vector<32x152xf32> to vector<32x137xf32>
    %455 = vector.broadcast %453 : vector<32x1xf32> to vector<32x137xf32>
    %456 = arith.mulf %455, %454 : vector<32x137xf32>
    %457 = arith.addf %451, %456 : vector<32x137xf32>
    %c10_300 = arith.constant 10 : index
    %c0_301 = arith.constant 0 : index
    %c0_302 = arith.constant 0 : index
    %458 = vector.load %arg6[%c10_300, %c0_301, %c0_302] : memref<16x32x1xf32, #tpu.memory_space<vmem>>, vector<1x32x1xf32>
    %459 = vector.shape_cast %458 : vector<1x32x1xf32> to vector<32x1xf32>
    %460 = vector.extract_strided_slice %398 {offsets = [0, 10], sizes = [32, 137], strides = [1, 1]} : vector<32x152xf32> to vector<32x137xf32>
    %461 = vector.broadcast %459 : vector<32x1xf32> to vector<32x137xf32>
    %462 = arith.mulf %461, %460 : vector<32x137xf32>
    %463 = arith.addf %457, %462 : vector<32x137xf32>
    %c11_303 = arith.constant 11 : index
    %c0_304 = arith.constant 0 : index
    %c0_305 = arith.constant 0 : index
    %464 = vector.load %arg6[%c11_303, %c0_304, %c0_305] : memref<16x32x1xf32, #tpu.memory_space<vmem>>, vector<1x32x1xf32>
    %465 = vector.shape_cast %464 : vector<1x32x1xf32> to vector<32x1xf32>
    %466 = vector.extract_strided_slice %398 {offsets = [0, 11], sizes = [32, 137], strides = [1, 1]} : vector<32x152xf32> to vector<32x137xf32>
    %467 = vector.broadcast %465 : vector<32x1xf32> to vector<32x137xf32>
    %468 = arith.mulf %467, %466 : vector<32x137xf32>
    %469 = arith.addf %463, %468 : vector<32x137xf32>
    %c12_306 = arith.constant 12 : index
    %c0_307 = arith.constant 0 : index
    %c0_308 = arith.constant 0 : index
    %470 = vector.load %arg6[%c12_306, %c0_307, %c0_308] : memref<16x32x1xf32, #tpu.memory_space<vmem>>, vector<1x32x1xf32>
    %471 = vector.shape_cast %470 : vector<1x32x1xf32> to vector<32x1xf32>
    %472 = vector.extract_strided_slice %398 {offsets = [0, 12], sizes = [32, 137], strides = [1, 1]} : vector<32x152xf32> to vector<32x137xf32>
    %473 = vector.broadcast %471 : vector<32x1xf32> to vector<32x137xf32>
    %474 = arith.mulf %473, %472 : vector<32x137xf32>
    %475 = arith.addf %469, %474 : vector<32x137xf32>
    %c13_309 = arith.constant 13 : index
    %c0_310 = arith.constant 0 : index
    %c0_311 = arith.constant 0 : index
    %476 = vector.load %arg6[%c13_309, %c0_310, %c0_311] : memref<16x32x1xf32, #tpu.memory_space<vmem>>, vector<1x32x1xf32>
    %477 = vector.shape_cast %476 : vector<1x32x1xf32> to vector<32x1xf32>
    %478 = vector.extract_strided_slice %398 {offsets = [0, 13], sizes = [32, 137], strides = [1, 1]} : vector<32x152xf32> to vector<32x137xf32>
    %479 = vector.broadcast %477 : vector<32x1xf32> to vector<32x137xf32>
    %480 = arith.mulf %479, %478 : vector<32x137xf32>
    %481 = arith.addf %475, %480 : vector<32x137xf32>
    %c14_312 = arith.constant 14 : index
    %c0_313 = arith.constant 0 : index
    %c0_314 = arith.constant 0 : index
    %482 = vector.load %arg6[%c14_312, %c0_313, %c0_314] : memref<16x32x1xf32, #tpu.memory_space<vmem>>, vector<1x32x1xf32>
    %483 = vector.shape_cast %482 : vector<1x32x1xf32> to vector<32x1xf32>
    %484 = vector.extract_strided_slice %398 {offsets = [0, 14], sizes = [32, 137], strides = [1, 1]} : vector<32x152xf32> to vector<32x137xf32>
    %485 = vector.broadcast %483 : vector<32x1xf32> to vector<32x137xf32>
    %486 = arith.mulf %485, %484 : vector<32x137xf32>
    %487 = arith.addf %481, %486 : vector<32x137xf32>
    %c15_315 = arith.constant 15 : index
    %c0_316 = arith.constant 0 : index
    %c0_317 = arith.constant 0 : index
    %488 = vector.load %arg6[%c15_315, %c0_316, %c0_317] : memref<16x32x1xf32, #tpu.memory_space<vmem>>, vector<1x32x1xf32>
    %489 = vector.shape_cast %488 : vector<1x32x1xf32> to vector<32x1xf32>
    %490 = vector.extract_strided_slice %398 {offsets = [0, 15], sizes = [32, 137], strides = [1, 1]} : vector<32x152xf32> to vector<32x137xf32>
    %491 = vector.broadcast %489 : vector<32x1xf32> to vector<32x137xf32>
    %492 = arith.mulf %491, %490 : vector<32x137xf32>
    %493 = arith.addf %487, %492 : vector<32x137xf32>
    %c0_318 = arith.constant 0 : index
    %c0_319 = arith.constant 0 : index
    %494 = vector.load %arg7[%c0_318, %c0_319] : memref<32x32xf32, #tpu.memory_space<vmem>>, vector<32x32xf32>
    %cst_320 = arith.constant dense<0.000000e+00> : vector<32x137xf32>
    %495 = tpu.matmul %494, %493, %cst_320 {dimension_numbers = #tpu.dot_dimension_numbers<[1], [0], [0], [1], [0, 0, 1, 1], [], []>} : vector<32x32xf32>, vector<32x137xf32>, vector<32x137xf32> -> vector<32x137xf32>
    %c0_321 = arith.constant 0 : index
    %c0_322 = arith.constant 0 : index
    %496 = vector.load %arg8[%c0_321, %c0_322] : memref<32x1xf32, #tpu.memory_space<vmem>>, vector<32x1xf32>
    %497 = vector.broadcast %496 : vector<32x1xf32> to vector<32x137xf32>
    %498 = arith.addf %495, %497 : vector<32x137xf32>
    %cst_323 = arith.constant 0.000000e+00 : f32
    %499 = vector.broadcast %cst_323 : f32 to vector<32x137xf32>
    %500 = arith.cmpf ogt, %498, %499 : vector<32x137xf32>
    %501 = math.exp %498 : vector<32x137xf32>
    %cst_324 = arith.constant 1.000000e+00 : f32
    %502 = vector.broadcast %cst_324 : f32 to vector<32x137xf32>
    %503 = arith.subf %501, %502 : vector<32x137xf32>
    %504 = arith.select %500, %498, %503 : vector<32x137xi1>, vector<32x137xf32>
    %c0_325 = arith.constant 0 : index
    %c0_326 = arith.constant 0 : index
    %505 = vector.load %arg9[%c0_325, %c0_326] : memref<137x64xf32, #tpu.memory_space<vmem>>, vector<137x64xf32>
    %cst_327 = arith.constant dense<0.000000e+00> : vector<32x64xf32>
    %506 = tpu.matmul %504, %505, %cst_327 {dimension_numbers = #tpu.dot_dimension_numbers<[1], [0], [0], [1], [0, 0, 1, 1], [], []>} : vector<32x137xf32>, vector<137x64xf32>, vector<32x64xf32> -> vector<32x64xf32>
    %c0_328 = arith.constant 0 : index
    %c0_329 = arith.constant 0 : index
    %507 = vector.load %arg11[%c0_328, %c0_329] : memref<2x32xf32, #tpu.memory_space<vmem>>, vector<2x32xf32>
    %c0_330 = arith.constant 0 : index
    %c0_331 = arith.constant 0 : index
    %508 = vector.load %arg10[%c0_330, %c0_331] : memref<32x64xf32, #tpu.memory_space<vmem>>, vector<32x64xf32>
    %509 = arith.mulf %506, %508 : vector<32x64xf32>
    %cst_332 = arith.constant dense<0.000000e+00> : vector<2x64xf32>
    %510 = tpu.matmul %507, %509, %cst_332 {dimension_numbers = #tpu.dot_dimension_numbers<[1], [0], [0], [1], [0, 0, 1, 1], [], []>} : vector<2x32xf32>, vector<32x64xf32>, vector<2x64xf32> -> vector<2x64xf32>
    %c0_333 = arith.constant 0 : index
    %c0_334 = arith.constant 0 : index
    %511 = vector.load %arg12[%c0_333, %c0_334] : memref<64x4xf32, #tpu.memory_space<vmem>>, vector<64x4xf32>
    %cst_335 = arith.constant dense<0.000000e+00> : vector<2x4xf32>
    %512 = tpu.matmul %510, %511, %cst_335 {dimension_numbers = #tpu.dot_dimension_numbers<[1], [0], [0], [1], [0, 0, 1, 1], [], []>} : vector<2x64xf32>, vector<64x4xf32>, vector<2x4xf32> -> vector<2x4xf32>
    %c0_336 = arith.constant 0 : index
    %c0_337 = arith.constant 0 : index
    %513 = vector.load %arg13[%c0_336, %c0_337] : memref<1x4xf32, #tpu.memory_space<vmem>>, vector<1x4xf32>
    %514 = vector.broadcast %513 : vector<1x4xf32> to vector<2x4xf32>
    %515 = arith.addf %512, %514 : vector<2x4xf32>
    %516 = vector.shape_cast %515 : vector<2x4xf32> to vector<1x2x4xf32>
    %c0_338 = arith.constant 0 : index
    %c0_339 = arith.constant 0 : index
    %c0_340 = arith.constant 0 : index
    %517 = vector.load %arg14[%c0_338, %c0_339, %c0_340] : memref<1x2x4xf32, #tpu.memory_space<vmem>>, vector<1x2x4xf32>
    tpu.vector_store %arg14[%c0_338, %c0_339, %c0_340], %516 {strides = array<i32>} : memref<1x2x4xf32, #tpu.memory_space<vmem>>, vector<1x2x4xf32>,
    return
  }
  func.func @transform_0(%arg0: i32) -> (i32, i32, i32) {
    %c0_i32 = arith.constant 0 : i32
    %c0_i32_0 = arith.constant 0 : i32
    %c0_i32_1 = arith.constant 0 : i32
    return %arg0, %c0_i32, %c0_i32_0 : i32, i32, i32
  }
  func.func @transform_1(%arg0: i32) -> (i32, i32) {
    %c0_i32 = arith.constant 0 : i32
    %c0_i32_0 = arith.constant 0 : i32
    %c0_i32_1 = arith.constant 0 : i32
    return %c0_i32, %c0_i32_0 : i32, i32
  }
  func.func @transform_2(%arg0: i32) -> (i32, i32, i32) {
    %c0_i32 = arith.constant 0 : i32
    %c0_i32_0 = arith.constant 0 : i32
    %c0_i32_1 = arith.constant 0 : i32
    %c0_i32_2 = arith.constant 0 : i32
    return %c0_i32, %c0_i32_0, %c0_i32_1 : i32, i32, i32
  }
  func.func @transform_3(%arg0: i32) -> (i32, i32) {
    %c0_i32 = arith.constant 0 : i32
    %c0_i32_0 = arith.constant 0 : i32
    %c0_i32_1 = arith.constant 0 : i32
    return %c0_i32, %c0_i32_0 : i32, i32
  }
  func.func @transform_4(%arg0: i32) -> (i32, i32) {
    %c0_i32 = arith.constant 0 : i32
    %c0_i32_0 = arith.constant 0 : i32
    %c0_i32_1 = arith.constant 0 : i32
    return %c0_i32, %c0_i32_0 : i32, i32
  }
  func.func @transform_5(%arg0: i32) -> (i32, i32, i32) {
    %c0_i32 = arith.constant 0 : i32
    %c0_i32_0 = arith.constant 0 : i32
    %c0_i32_1 = arith.constant 0 : i32
    %c0_i32_2 = arith.constant 0 : i32
    return %c0_i32, %c0_i32_0, %c0_i32_1 : i32, i32, i32
  }
  func.func @transform_6(%arg0: i32) -> (i32, i32) {
    %c0_i32 = arith.constant 0 : i32
    %c0_i32_0 = arith.constant 0 : i32
    %c0_i32_1 = arith.constant 0 : i32
    return %c0_i32, %c0_i32_0 : i32, i32
  }
  func.func @transform_7(%arg0: i32) -> (i32, i32) {
    %c0_i32 = arith.constant 0 : i32
    %c0_i32_0 = arith.constant 0 : i32
    %c0_i32_1 = arith.constant 0 : i32
    return %c0_i32, %c0_i32_0 : i32, i32
  }
  func.func @transform_8(%arg0: i32) -> (i32, i32) {
    %c0_i32 = arith.constant 0 : i32
    %c0_i32_0 = arith.constant 0 : i32
    %c0_i32_1 = arith.constant 0 : i32
    return %c0_i32, %c0_i32_0 : i32, i32
  }
  func.func @transform_9(%arg0: i32) -> (i32, i32) {
    %c0_i32 = arith.constant 0 : i32
    %c0_i32_0 = arith.constant 0 : i32
    %c0_i32_1 = arith.constant 0 : i32
    return %c0_i32, %c0_i32_0 : i32, i32
  }
  func.func @transform_10(%arg0: i32) -> (i32, i32) {
    %c0_i32 = arith.constant 0 : i32
    %c0_i32_0 = arith.constant 0 : i32
    %c0_i32_1 = arith.constant 0 : i32
    return %c0_i32, %c0_i32_0 : i32, i32
  }
  func.func @transform_11(%arg0: i32) -> (i32, i32) {
    %c0_i32 = arith.constant 0 : i32
    %c0_i32_0 = arith.constant 0 : i32
    %c0_i32_1 = arith.constant 0 : i32
    return %c0_i32, %c0_i32_0 : i32, i32
  }
  func.func @transform_12(%arg0: i32) -> (i32, i32) {
    %c0_i32 = arith.constant 0 : i32
    %c0_i32_0 = arith.constant 0 : i32
    %c0_i32_1 = arith.constant 0 : i32
    return %c0_i32, %c0_i32_0 : i32, i32
  }
  func.func @transform_13(%arg0: i32) -> (i32, i32, i32) {
    %c0_i32 = arith.constant 0 : i32
    %c0_i32_0 = arith.constant 0 : i32
    %c0_i32_1 = arith.constant 0 : i32
    return %arg0, %c0_i32, %c0_i32_0 : i32, i32, i32
  }
}

</mosaic_0001>

<llo_original>
// kernel: tpu_custom_call.1
$region0: #{tpu_custom_call.1}
  #allocation0 [shape = 'u32[]', space=smem, size = 0x4, offset = 0x4, fixed_abs, tag = 'smem constant byte address 0x4 - core index']
  #allocation1 [shape = 'u32[144,128]{1,0:T(1,128)}', space=vmem, size = 0x12000, scoped, tag = 'internal scratch']
  #allocation2 [shape = 'f32[32,607]{1,0:T(8,128)}', space=vmem, size = 0x14000, scoped, tag = 'scratch operand']
  %s0 = inlined_call_operand.vmem [shape: f32[1,44,607], index: 0, kind: input, shape index: {}]
  %s1 = inlined_call_operand.vmem [shape: f32[32,44], index: 1, kind: input, shape index: {}]
  %s2 = inlined_call_operand.vmem [shape: f32[64,32,1], index: 2, kind: input, shape index: {}]
  %s3 = inlined_call_operand.vmem [shape: f32[32,1], index: 3, kind: input, shape index: {}]
  %s4 = inlined_call_operand.vmem [shape: f32[544,152], index: 4, kind: input, shape index: {}]
  %s5 = inlined_call_operand.vmem [shape: f32[16,32,1], index: 5, kind: input, shape index: {}]
  %s6 = inlined_call_operand.vmem [shape: f32[32,32], index: 6, kind: input, shape index: {}]
  %s7 = inlined_call_operand.vmem [shape: f32[32,1], index: 7, kind: input, shape index: {}]
  %s8 = inlined_call_operand.vmem [shape: f32[137,64], index: 8, kind: input, shape index: {}]
  %s9 = inlined_call_operand.vmem [shape: f32[32,64], index: 9, kind: input, shape index: {}]
  %s10 = inlined_call_operand.vmem [shape: f32[2,32], index: 10, kind: input, shape index: {}]
  %s11 = inlined_call_operand.vmem [shape: f32[64,4], index: 11, kind: input, shape index: {}]
  %s12 = inlined_call_operand.vmem [shape: f32[1,4], index: 12, kind: input, shape index: {}]
  %s13 = inlined_call_operand.hbm [shape: f32[1,2,4], index: 13, kind: output, shape index: {}]
  %s14 = sld [smem:[#allocation0]]
  $region62: #{tpu_custom_call.1} parent=0
    _
  %s16 = ssub.s32 1, %s14
  %s17 = scalar_select 0, %s16, %s14
  $region1: #{tpu_custom_call.1} parent=0
    #allocation3 [shape = 'u8[1024]{0}', space=vmem, size = 0x400, scoped, tag = 'output window, operand 0, single buffered']
    #allocation4 [shape = 's32[1]{0}', space=sflag, size = 0x4, scoped, tag = 'scoped memory for tpu_custom_call.1']
    %18 = vsyncpa [#allocation4], 0
    // Predicated region
    $region2: #{tpu_custom_call.1} parent=1 // pred_check
      _
    $region3: #{tpu_custom_call.1} parent=1 // pred_check_branch
      %20 = sbr.rel (0) target = $region5
    $region4: #{tpu_custom_call.1} parent=1 // pred_region
      _
    $region5: #{tpu_custom_call.1} parent=1 // pred_fallthru
      _
    // Predicated region
    $region6: #{tpu_custom_call.1} parent=1 // pred_check
      _
    $region7: #{tpu_custom_call.1} parent=1 // pred_check_branch
      %22 = sbr.rel (0) target = $region9
    $region8: #{tpu_custom_call.1} parent=1 // pred_region
      _
    $region9: #{tpu_custom_call.1} parent=1 // pred_fallthru
      _
    // Predicated region
    $region10: #{tpu_custom_call.1} parent=1 // pred_check
      _
    $region11: #{tpu_custom_call.1} parent=1 // pred_check_branch
      %24 = sbr.rel (0) target = $region13
    $region12: #{tpu_custom_call.1} parent=1 // pred_region
      _
    $region13: #{tpu_custom_call.1} parent=1 // pred_fallthru
      _
    // Predicated region
    $region14: #{tpu_custom_call.1} parent=1 // pred_check
      _
    $region15: #{tpu_custom_call.1} parent=1 // pred_check_branch
      %26 = sbr.rel (0) target = $region17
    $region16: #{tpu_custom_call.1} parent=1 // pred_region
      _
    $region17: #{tpu_custom_call.1} parent=1 // pred_fallthru
      _
    // Predicated region
    $region18: #{tpu_custom_call.1} parent=1 // pred_check
      _
    $region19: #{tpu_custom_call.1} parent=1 // pred_check_branch
      %28 = sbr.rel (0) target = $region21
    $region20: #{tpu_custom_call.1} parent=1 // pred_region
      _
    $region21: #{tpu_custom_call.1} parent=1 // pred_fallthru
      _
    // Predicated region
    $region22: #{tpu_custom_call.1} parent=1 // pred_check
      _
    $region23: #{tpu_custom_call.1} parent=1 // pred_check_branch
      %30 = sbr.rel (0) target = $region25
    $region24: #{tpu_custom_call.1} parent=1 // pred_region
      _
    $region25: #{tpu_custom_call.1} parent=1 // pred_fallthru
      _
    // Predicated region
    $region26: #{tpu_custom_call.1} parent=1 // pred_check
      _
    $region27: #{tpu_custom_call.1} parent=1 // pred_check_branch
      %32 = sbr.rel (0) target = $region29
    $region28: #{tpu_custom_call.1} parent=1 // pred_region
      _
    $region29: #{tpu_custom_call.1} parent=1 // pred_fallthru
      _
    // Predicated region
    $region30: #{tpu_custom_call.1} parent=1 // pred_check
      _
    $region31: #{tpu_custom_call.1} parent=1 // pred_check_branch
      %34 = sbr.rel (0) target = $region33
    $region32: #{tpu_custom_call.1} parent=1 // pred_region
      _
    $region33: #{tpu_custom_call.1} parent=1 // pred_fallthru
      _
    // Predicated region
    $region34: #{tpu_custom_call.1} parent=1 // pred_check
      _
    $region35: #{tpu_custom_call.1} parent=1 // pred_check_branch
      %36 = sbr.rel (0) target = $region37
    $region36: #{tpu_custom_call.1} parent=1 // pred_region
      _
    $region37: #{tpu_custom_call.1} parent=1 // pred_fallthru
      _
    // Predicated region
    $region38: #{tpu_custom_call.1} parent=1 // pred_check
      _
    $region39: #{tpu_custom_call.1} parent=1 // pred_check_branch
      %38 = sbr.rel (0) target = $region41
    $region40: #{tpu_custom_call.1} parent=1 // pred_region
      _
    $region41: #{tpu_custom_call.1} parent=1 // pred_fallthru
      _
    // Predicated region
    $region42: #{tpu_custom_call.1} parent=1 // pred_check
      _
    $region43: #{tpu_custom_call.1} parent=1 // pred_check_branch
      %40 = sbr.rel (0) target = $region45
    $region44: #{tpu_custom_call.1} parent=1 // pred_region
      _
    $region45: #{tpu_custom_call.1} parent=1 // pred_fallthru
      _
    // Predicated region
    $region46: #{tpu_custom_call.1} parent=1 // pred_check
      _
    $region47: #{tpu_custom_call.1} parent=1 // pred_check_branch
      %42 = sbr.rel (0) target = $region49
    $region48: #{tpu_custom_call.1} parent=1 // pred_region
      _
    $region49: #{tpu_custom_call.1} parent=1 // pred_fallthru
      _
    // Predicated region
    $region50: #{tpu_custom_call.1} parent=1 // pred_check
      _
    $region51: #{tpu_custom_call.1} parent=1 // pred_check_branch
      %44 = sbr.rel (0) target = $region53
    $region52: #{tpu_custom_call.1} parent=1 // pred_region
      _
    $region53: #{tpu_custom_call.1} parent=1 // pred_fallthru
      _
    %v45 = vld [vmem:[%s1] sm:$0xff]
    %v46 = vld [vmem:[%s1 + $0x8] sm:$0xff]
    %v47 = vld [vmem:[%s1 + $0x10] sm:$0xff]
    %v48 = vld [vmem:[%s1 + $0x18] sm:$0xff]
    %v49 = vld [vmem:[%s0] sm:$0xff]
    %v50 = vld [vmem:[%s0 + $0x8] sm:$0xff]
    %v51 = vld [vmem:[%s0 + $0x10] sm:$0xff]
    %v52 = vld [vmem:[%s0 + $0x18] sm:$0xff]
    %v53 = vld [vmem:[%s0 + $0x20] sm:$0xff]
    %v54 = vld [vmem:[%s0 + $0x28] sm:$0xff]
    %v55 = vld [vmem:[%s0 + $0x30] sm:$0xff]
    %v56 = vld [vmem:[%s0 + $0x38] sm:$0xff]
    %v57 = vld [vmem:[%s0 + $0x40] sm:$0xff]
    %v58 = vld [vmem:[%s0 + $0x48] sm:$0xff]
    %v59 = vld [vmem:[%s0 + $0x50] sm:$0xff]
    %v60 = vld [vmem:[%s0 + $0x58] sm:$0xff]
    %v61 = vld [vmem:[%s0 + $0x60] sm:$0xff]
    %v62 = vld [vmem:[%s0 + $0x68] sm:$0xff]
    %v63 = vld [vmem:[%s0 + $0x70] sm:$0xff]
    %v64 = vld [vmem:[%s0 + $0x78] sm:$0xff]
    %v65 = vld [vmem:[%s0 + $0x80] sm:$0xff]
    %v66 = vld [vmem:[%s0 + $0x88] sm:$0xff]
    %v67 = vld [vmem:[%s0 + $0x90] sm:$0xff]
    %v68 = vld [vmem:[%s0 + $0x98] sm:$0xff]
    %v69 = vld [vmem:[%s0 + $0xa0] sm:$0xff]
    %v70 = vld [vmem:[%s0 + $0xa8] sm:$0xff]
    %v71 = vld [vmem:[%s0 + $0xb0] sm:$0xff]
    %v72 = vld [vmem:[%s0 + $0xb8] sm:$0xff]
    %v73 = vld [vmem:[%s0 + $0xc0] sm:$0xff]
    %v74 = vld [vmem:[%s0 + $0xc8] sm:$0xf]
    %v75 = vld [vmem:[%s0 + $0xd0] sm:$0xf]
    %v76 = vld [vmem:[%s0 + $0xd8] sm:$0xf]
    %v77 = vld [vmem:[%s0 + $0xe0] sm:$0xf]
    %v78 = vld [vmem:[%s0 + $0xe8] sm:$0xf]
    %vm79 = vcmask 359424
    %v81 = vsel %vm79, %v45, 0
    %v84 = vsel %vm79, %v46, 0
    %v87 = vsel %vm79, %v47, 0
    %v90 = vsel %vm79, %v48, 0
    %vm92 = vcmask 1043456
    %v94 = vsel %vm92, %v74, 0
    %v97 = vsel %vm92, %v75, 0
    %v100 = vsel %vm92, %v76, 0
    %v103 = vsel %vm92, %v77, 0
    %v106 = vsel %vm92, %v78, 0
    %108 = vmatprep.subr.mxu0 0.0
    %109 = vmatpush1.msra.mxu0 0.0
    %110 = vmatprep.subr.mxu0 0.0
    %111 = vmatpush1.msra.mxu0 0.0
    %112 = vmatprep.subr.mxu0 0.0
    %113 = vmatpush1.msra.mxu0 0.0
    %114 = vmatprep.subr.mxu0 0.0
    %115 = vmatpush1.msra.mxu0 0.0
    %116 = vmatprep.subr.mxu0 0.0
    %117 = vmatpush1.msra.mxu0 0.0
    %118 = vmatprep.subr.mxu0 0.0
    %119 = vmatpush1.msra.mxu0 0.0
    %120 = vmatprep.subr.mxu0 0.0
    %121 = vmatpush1.msra.mxu0 0.0
    %122 = vmatprep.subr.mxu0 0.0
    %123 = vmatpush1.msra.mxu0 0.0
    %124 = vmatprep.subr.mxu0 0.0
    %125 = vmatpush1.msra.mxu0 0.0
    %126 = vmatprep.subr.mxu0 0.0
    %127 = vmatpush1.msra.mxu0 0.0
    %128 = vmatprep.subr.mxu0 %v97
    %129 = vmatpush1.msra.mxu0 %v94
    %130 = vmatprep.subr.mxu0 %v70
    %131 = vmatpush1.msra.mxu0 %v69
    %132 = vmatprep.subr.mxu0 %v65
    %133 = vmatpush1.msra.mxu0 %v64
    %134 = vmatprep.subr.mxu0 %v60
    %135 = vmatpush1.msra.mxu0 %v59
    %136 = vmatprep.subr.mxu0 %v55
    %137 = vmatpush1.msra.mxu0 %v54
    %138 = vmatprep.subr.mxu0 %v50
    %139 = vmatpush1.msra.mxu0 %v49
    %140 = vmatprep.subr.mxu0 0.0
    %141 = vmatpush2.msra.mxu0 0.0
    %142 = vmatprep.subr.mxu0 0.0
    %143 = vmatpush2.msra.mxu0 0.0
    %144 = vmatprep.subr.mxu0 0.0
    %145 = vmatpush2.msra.mxu0 0.0
    %146 = vmatprep.subr.mxu0 0.0
    %147 = vmatpush2.msra.mxu0 0.0
    %148 = vmatprep.subr.mxu0 0.0
    %149 = vmatpush2.msra.mxu0 0.0
    %150 = vmatprep.subr.mxu0 0.0
    %151 = vmatpush2.msra.mxu0 0.0
    %152 = vmatprep.subr.mxu0 0.0
    %153 = vmatpush2.msra.mxu0 0.0
    %154 = vmatprep.subr.mxu0 0.0
    %155 = vmatpush2.msra.mxu0 0.0
    %156 = vmatprep.subr.mxu0 0.0
    %157 = vmatpush2.msra.mxu0 0.0
    %158 = vmatprep.subr.mxu0 0.0
    %159 = vmatpush2.msra.mxu0 0.0
    %160 = vmatprep.subr.mxu0 0.0
    %161 = vmatpush2.msra.mxu0 0.0
    %162 = vmatprep.subr.mxu0 0.0
    %163 = vmatpush2.msra.mxu0 0.0
    %164 = vmatprep.subr.mxu0 0.0
    %165 = vmatpush2.msra.mxu0 0.0
    %166 = vmatprep.subr.mxu0 0.0
    %167 = vmatpush2.msra.mxu0 0.0
    %168 = vmatprep.subr.mxu0 0.0
    %169 = vmatpush2.msra.mxu0 0.0
    %170 = vmatprep.subr.mxu0 0.0
    %171 = vmatpush2.msra.mxu0 0.0
    %172 = vmatprep.mubr.f32.mxu0 0.0
    %173 = vmatmul.mubr.f32.gmra.mxu0 %v81
    %v174 = vpop.f32.mrf.mxu0
    %v175 = vadd.f32 0.0, %v174
    %v176 = vpop.f32.mrf.mxu0
    %v177 = vadd.f32 0.0, %v176
    %178 = vmatprep.mubr.f32.mxu0 0.0
    %179 = vmatmul.mubr.f32.gmra.mxu0 %v84
    %v180 = vpop.f32.mrf.mxu0
    %v181 = vadd.f32 0.0, %v180
    %v182 = vpop.f32.mrf.mxu0
    %v183 = vadd.f32 0.0, %v182
    %184 = vmatprep.mubr.f32.mxu0 0.0
    %185 = vmatmul.mubr.f32.gmra.mxu0 %v87
    %v186 = vpop.f32.mrf.mxu0
    %v187 = vadd.f32 0.0, %v186
    %v188 = vpop.f32.mrf.mxu0
    %v189 = vadd.f32 0.0, %v188
    %190 = vmatprep.mubr.f32.mxu0 0.0
    %191 = vmatmul.mubr.f32.gmra.mxu0 %v90
    %v192 = vpop.f32.mrf.mxu0
    %v193 = vadd.f32 0.0, %v192
    %v194 = vpop.f32.mrf.mxu0
    %v195 = vadd.f32 0.0, %v194
    %196 = vdwg.mxu0
    %197 = vmatprep.subr.mxu0 0.0
    %198 = vmatpush1.msra.mxu0 0.0
    %199 = vmatprep.subr.mxu0 0.0
    %200 = vmatpush1.msra.mxu0 0.0
    %201 = vmatprep.subr.mxu0 0.0
    %202 = vmatpush1.msra.mxu0 0.0
    %203 = vmatprep.subr.mxu0 0.0
    %204 = vmatpush1.msra.mxu0 0.0
    %205 = vmatprep.subr.mxu0 0.0
    %206 = vmatpush1.msra.mxu0 0.0
    %207 = vmatprep.subr.mxu0 0.0
    %208 = vmatpush1.msra.mxu0 0.0
    %209 = vmatprep.subr.mxu0 0.0
    %210 = vmatpush1.msra.mxu0 0.0
    %211 = vmatprep.subr.mxu0 0.0
    %212 = vmatpush1.msra.mxu0 0.0
    %213 = vmatprep.subr.mxu0 0.0
    %214 = vmatpush1.msra.mxu0 0.0
    %215 = vmatprep.subr.mxu0 0.0
    %216 = vmatpush1.msra.mxu0 0.0
    %217 = vmatprep.subr.mxu0 %v103
    %218 = vmatpush1.msra.mxu0 %v100
    %219 = vmatprep.subr.mxu0 %v72
    %220 = vmatpush1.msra.mxu0 %v71
    %221 = vmatprep.subr.mxu0 %v67
    %222 = vmatpush1.msra.mxu0 %v66
    %223 = vmatprep.subr.mxu0 %v62
    %224 = vmatpush1.msra.mxu0 %v61
    %225 = vmatprep.subr.mxu0 %v57
    %226 = vmatpush1.msra.mxu0 %v56
    %227 = vmatprep.subr.mxu0 %v52
    %228 = vmatpush1.msra.mxu0 %v51
    %229 = vmatprep.subr.mxu0 0.0
    %230 = vmatpush2.msra.mxu0 0.0
    %231 = vmatprep.subr.mxu0 0.0
    %232 = vmatpush2.msra.mxu0 0.0
    %233 = vmatprep.subr.mxu0 0.0
    %234 = vmatpush2.msra.mxu0 0.0
    %235 = vmatprep.subr.mxu0 0.0
    %236 = vmatpush2.msra.mxu0 0.0
    %237 = vmatprep.subr.mxu0 0.0
    %238 = vmatpush2.msra.mxu0 0.0
    %239 = vmatprep.subr.mxu0 0.0
    %240 = vmatpush2.msra.mxu0 0.0
    %241 = vmatprep.subr.mxu0 0.0
    %242 = vmatpush2.msra.mxu0 0.0
    %243 = vmatprep.subr.mxu0 0.0
    %244 = vmatpush2.msra.mxu0 0.0
    %245 = vmatprep.subr.mxu0 0.0
    %246 = vmatpush2.msra.mxu0 0.0
    %247 = vmatprep.subr.mxu0 0.0
    %248 = vmatpush2.msra.mxu0 0.0
    %249 = vmatprep.subr.mxu0 0.0
    %250 = vmatpush2.msra.mxu0 0.0
    %251 = vmatprep.subr.mxu0 0.0
    %252 = vmatpush2.msra.mxu0 0.0
    %253 = vmatprep.subr.mxu0 0.0
    %254 = vmatpush2.msra.mxu0 0.0
    %255 = vmatprep.subr.mxu0 0.0
    %256 = vmatpush2.msra.mxu0 0.0
    %257 = vmatprep.subr.mxu0 0.0
    %258 = vmatpush2.msra.mxu0 0.0
    %259 = vmatprep.subr.mxu0 0.0
    %260 = vmatpush2.msra.mxu0 0.0
    %261 = vmatprep.mubr.f32.mxu0 0.0
    %262 = vmatmul.mubr.f32.gmra.mxu0 %v81
    %v263 = vpop.f32.mrf.mxu0
    %v264 = vadd.f32 0.0, %v263
    %v265 = vpop.f32.mrf.mxu0
    %v266 = vadd.f32 0.0, %v265
    %267 = vmatprep.mubr.f32.mxu0 0.0
    %268 = vmatmul.mubr.f32.gmra.mxu0 %v84
    %v269 = vpop.f32.mrf.mxu0
    %v270 = vadd.f32 0.0, %v269
    %v271 = vpop.f32.mrf.mxu0
    %v272 = vadd.f32 0.0, %v271
    %273 = vmatprep.mubr.f32.mxu0 0.0
    %274 = vmatmul.mubr.f32.gmra.mxu0 %v87
    %v275 = vpop.f32.mrf.mxu0
    %v276 = vadd.f32 0.0, %v275
    %v277 = vpop.f32.mrf.mxu0
    %v278 = vadd.f32 0.0, %v277
    %279 = vmatprep.mubr.f32.mxu0 0.0
    %280 = vmatmul.mubr.f32.gmra.mxu0 %v90
    %v281 = vpop.f32.mrf.mxu0
    %v282 = vadd.f32 0.0, %v281
    %v283 = vpop.f32.mrf.mxu0
    %v284 = vadd.f32 0.0, %v283
    %285 = vdwg.mxu0
    %286 = vmatprep.subr.mxu0 0.0
    %287 = vmatpush1.msra.mxu0 0.0
    %288 = vmatprep.subr.mxu0 0.0
    %289 = vmatpush1.msra.mxu0 0.0
    %290 = vmatprep.subr.mxu0 0.0
    %291 = vmatpush1.msra.mxu0 0.0
    %292 = vmatprep.subr.mxu0 0.0
    %293 = vmatpush1.msra.mxu0 0.0
    %294 = vmatprep.subr.mxu0 0.0
    %295 = vmatpush1.msra.mxu0 0.0
    %296 = vmatprep.subr.mxu0 0.0
    %297 = vmatpush1.msra.mxu0 0.0
    %298 = vmatprep.subr.mxu0 0.0
    %299 = vmatpush1.msra.mxu0 0.0
    %300 = vmatprep.subr.mxu0 0.0
    %301 = vmatpush1.msra.mxu0 0.0
    %302 = vmatprep.subr.mxu0 0.0
    %303 = vmatpush1.msra.mxu0 0.0
    %304 = vmatprep.subr.mxu0 0.0
    %305 = vmatpush1.msra.mxu0 0.0
    %306 = vmatprep.subr.mxu0 0.0
    %307 = vmatpush1.msra.mxu0 %v106
    %308 = vmatprep.subr.mxu0 0.0
    %309 = vmatpush1.msra.mxu0 %v73
    %310 = vmatprep.subr.mxu0 0.0
    %311 = vmatpush1.msra.mxu0 %v68
    %312 = vmatprep.subr.mxu0 0.0
    %313 = vmatpush1.msra.mxu0 %v63
    %314 = vmatprep.subr.mxu0 0.0
    %315 = vmatpush1.msra.mxu0 %v58
    %316 = vmatprep.subr.mxu0 0.0
    %317 = vmatpush1.msra.mxu0 %v53
    %318 = vmatprep.subr.mxu0 0.0
    %319 = vmatpush2.msra.mxu0 0.0
    %320 = vmatprep.subr.mxu0 0.0
    %321 = vmatpush2.msra.mxu0 0.0
    %322 = vmatprep.subr.mxu0 0.0
    %323 = vmatpush2.msra.mxu0 0.0
    %324 = vmatprep.subr.mxu0 0.0
    %325 = vmatpush2.msra.mxu0 0.0
    %326 = vmatprep.subr.mxu0 0.0
    %327 = vmatpush2.msra.mxu0 0.0
    %328 = vmatprep.subr.mxu0 0.0
    %329 = vmatpush2.msra.mxu0 0.0
    %330 = vmatprep.subr.mxu0 0.0
    %331 = vmatpush2.msra.mxu0 0.0
    %332 = vmatprep.subr.mxu0 0.0
    %333 = vmatpush2.msra.mxu0 0.0
    %334 = vmatprep.subr.mxu0 0.0
    %335 = vmatpush2.msra.mxu0 0.0
    %336 = vmatprep.subr.mxu0 0.0
    %337 = vmatpush2.msra.mxu0 0.0
    %338 = vmatprep.subr.mxu0 0.0
    %339 = vmatpush2.msra.mxu0 0.0
    %340 = vmatprep.subr.mxu0 0.0
    %341 = vmatpush2.msra.mxu0 0.0
    %342 = vmatprep.subr.mxu0 0.0
    %343 = vmatpush2.msra.mxu0 0.0
    %344 = vmatprep.subr.mxu0 0.0
    %345 = vmatpush2.msra.mxu0 0.0
    %346 = vmatprep.subr.mxu0 0.0
    %347 = vmatpush2.msra.mxu0 0.0
    %348 = vmatprep.subr.mxu0 0.0
    %349 = vmatpush2.msra.mxu0 0.0
    %350 = vmatprep.mubr.f32.mxu0 0.0
    %351 = vmatmul.mubr.f32.gmra.mxu0 %v81
    %v352 = vpop.f32.mrf.mxu0
    %v353 = vadd.f32 0.0, %v352
    %v354 = vpop.f32.mrf.mxu0
    %355 = vmatprep.mubr.f32.mxu0 0.0
    %356 = vmatmul.mubr.f32.gmra.mxu0 %v84
    %v357 = vpop.f32.mrf.mxu0
    %v358 = vadd.f32 0.0, %v357
    %v359 = vpop.f32.mrf.mxu0
    %360 = vmatprep.mubr.f32.mxu0 0.0
    %361 = vmatmul.mubr.f32.gmra.mxu0 %v87
    %v362 = vpop.f32.mrf.mxu0
    %v363 = vadd.f32 0.0, %v362
    %v364 = vpop.f32.mrf.mxu0
    %365 = vmatprep.mubr.f32.mxu0 0.0
    %366 = vmatmul.mubr.f32.gmra.mxu0 %v90
    %v367 = vpop.f32.mrf.mxu0
    %v368 = vadd.f32 0.0, %v367
    %v369 = vpop.f32.mrf.mxu0
    %370 = vdwg.mxu0
    %371 = vst [vmem:[#allocation2] sm:$0xff] %v175
    %372 = vst [vmem:[#allocation2 + $0x8] sm:$0xff] %v177
    %373 = vst [vmem:[#allocation2 + $0x10] sm:$0xff] %v264
    %374 = vst [vmem:[#allocation2 + $0x18] sm:$0xff] %v266
    %vm375 = vcmask 777216
    %376 = vst.msk [vmem:[#allocation2 + $0x20] sm:$0xff] %vm375, %v353
    %377 = vst [vmem:[#allocation2 + $0x28] sm:$0xff] %v181
    %378 = vst [vmem:[#allocation2 + $0x30] sm:$0xff] %v183
    %379 = vst [vmem:[#allocation2 + $0x38] sm:$0xff] %v270
    %380 = vst [vmem:[#allocation2 + $0x40] sm:$0xff] %v272
    %381 = vst.msk [vmem:[#allocation2 + $0x48] sm:$0xff] %vm375, %v358
    %382 = vst [vmem:[#allocation2 + $0x50] sm:$0xff] %v187
    %383 = vst [vmem:[#allocation2 + $0x58] sm:$0xff] %v189
    %384 = vst [vmem:[#allocation2 + $0x60] sm:$0xff] %v276
    %385 = vst [vmem:[#allocation2 + $0x68] sm:$0xff] %v278
    %386 = vst.msk [vmem:[#allocation2 + $0x70] sm:$0xff] %vm375, %v363
    %387 = vst [vmem:[#allocation2 + $0x78] sm:$0xff] %v193
    %388 = vst [vmem:[#allocation2 + $0x80] sm:$0xff] %v195
    %389 = vst [vmem:[#allocation2 + $0x88] sm:$0xff] %v282
    %390 = vst [vmem:[#allocation2 + $0x90] sm:$0xff] %v284
    %391 = vst.msk [vmem:[#allocation2 + $0x98] sm:$0xff] %vm375, %v368
    %v392 = vld [vmem:[%s2] sm:$0xff]
    %v393 = vld [vmem:[%s2 + $0x8] sm:$0xff]
    %v394 = vld [vmem:[%s2 + $0x10] sm:$0xff]
    %v395 = vld [vmem:[%s2 + $0x18] sm:$0xff]
    %v396 = vld [vmem:[#allocation2] sm:$0xff]
    %v397 = vld [vmem:[#allocation2 + $0x8] sm:$0xff]
    %v398 = vld [vmem:[#allocation2 + $0x10] sm:$0xff]
    %v399 = vld [vmem:[#allocation2 + $0x18] sm:$0xff]
    %v400 = vld [vmem:[#allocation2 + $0x20] sm:$0xff]
    %v401 = vld [vmem:[#allocation2 + $0x28] sm:$0xff]
    %v402 = vld [vmem:[#allocation2 + $0x30] sm:$0xff]
    %v403 = vld [vmem:[#allocation2 + $0x38] sm:$0xff]
    %v404 = vld [vmem:[#allocation2 + $0x40] sm:$0xff]
    %v405 = vld [vmem:[#allocation2 + $0x48] sm:$0xff]
    %v406 = vld [vmem:[#allocation2 + $0x50] sm:$0xff]
    %v407 = vld [vmem:[#allocation2 + $0x58] sm:$0xff]
    %v408 = vld [vmem:[#allocation2 + $0x60] sm:$0xff]
    %v409 = vld [vmem:[#allocation2 + $0x68] sm:$0xff]
    %v410 = vld [vmem:[#allocation2 + $0x70] sm:$0xff]
    %v411 = vld [vmem:[#allocation2 + $0x78] sm:$0xff]
    %v412 = vld [vmem:[#allocation2 + $0x80] sm:$0xff]
    %v413 = vld [vmem:[#allocation2 + $0x88] sm:$0xff]
    %v414 = vld [vmem:[#allocation2 + $0x90] sm:$0xff]
    %v415 = vld [vmem:[#allocation2 + $0x98] sm:$0xff]
    %417 = vset.pattern.permute.xlu0 0
    %418 = vperm.xlu0 %417, %v392
    %v419 = vpop.permute.xlu0 %418
    %422 = vset.pattern.permute.xlu0 0
    %423 = vperm.xlu0 %422, %v393
    %v424 = vpop.permute.xlu0 %423
    %427 = vset.pattern.permute.xlu0 0
    %428 = vperm.xlu0 %427, %v394
    %v429 = vpop.permute.xlu0 %428
    %432 = vset.pattern.permute.xlu0 0
    %433 = vperm.xlu0 %432, %v395
    %v434 = vpop.permute.xlu0 %433
    %v436 = vmul.f32 %v419, %v396
    %v437 = vmul.f32 %v419, %v397
    %v438 = vmul.f32 %v419, %v398
    %v439 = vmul.f32 %v419, %v399
    %v440 = vmul.f32 %v419, %v400
    %v441 = vmul.f32 %v424, %v401
    %v442 = vmul.f32 %v424, %v402
    %v443 = vmul.f32 %v424, %v403
    %v444 = vmul.f32 %v424, %v404
    %v445 = vmul.f32 %v424, %v405
    %v446 = vmul.f32 %v429, %v406
    %v447 = vmul.f32 %v429, %v407
    %v448 = vmul.f32 %v429, %v408
    %v449 = vmul.f32 %v429, %v409
    %v450 = vmul.f32 %v429, %v410
    %v451 = vmul.f32 %v434, %v411
    %v452 = vmul.f32 %v434, %v412
    %v453 = vmul.f32 %v434, %v413
    %v454 = vmul.f32 %v434, %v414
    %v455 = vmul.f32 %v434, %v415
    %s456 = scalar_lea.vmem %s2, 32
    %v457 = vld [vmem:[%s456] sm:$0xff]
    %v458 = vld [vmem:[%s456 + $0x8] sm:$0xff]
    %v459 = vld [vmem:[%s456 + $0x10] sm:$0xff]
    %v460 = vld [vmem:[%s456 + $0x18] sm:$0xff]
    %462 = vset.pattern.permute.xlu0 0
    %463 = vperm.xlu0 %462, %v457
    %v464 = vpop.permute.xlu0 %463
    %467 = vset.pattern.permute.xlu0 0
    %468 = vperm.xlu0 %467, %v458
    %v469 = vpop.permute.xlu0 %468
    %472 = vset.pattern.permute.xlu0 0
    %473 = vperm.xlu0 %472, %v459
    %v474 = vpop.permute.xlu0 %473
    %477 = vset.pattern.permute.xlu0 0
    %478 = vperm.xlu0 %477, %v460
    %v479 = vpop.permute.xlu0 %478
    %v481 = vmul.f32 %v464, %v396
    %v482 = vmul.f32 %v464, %v397
    %v483 = vmul.f32 %v464, %v398
    %v484 = vmul.f32 %v464, %v399
    %v485 = vmul.f32 %v464, %v400
    %v486 = vmul.f32 %v469, %v401
    %v487 = vmul.f32 %v469, %v402
    %v488 = vmul.f32 %v469, %v403
    %v489 = vmul.f32 %v469, %v404
    %v490 = vmul.f32 %v469, %v405
    %v491 = vmul.f32 %v474, %v406
    %v492 = vmul.f32 %v474, %v407
    %v493 = vmul.f32 %v474, %v408
    %v494 = vmul.f32 %v474, %v409
    %v495 = vmul.f32 %v474, %v410
    %v496 = vmul.f32 %v479, %v411
    %v497 = vmul.f32 %v479, %v412
    %v498 = vmul.f32 %v479, %v413
    %v499 = vmul.f32 %v479, %v414
    %v500 = vmul.f32 %v479, %v415
    %521 = vrot.lane.b32.xlu0 %v481, 127
    %v522 = vpop.permute.xlu0 %521
    %523 = vrot.lane.b32.xlu0 %v482, 127
    %v524 = vpop.permute.xlu0 %523
    %525 = vrot.lane.b32.xlu0 %v483, 127
    %v526 = vpop.permute.xlu0 %525
    %527 = vrot.lane.b32.xlu0 %v484, 127
    %v528 = vpop.permute.xlu0 %527
    %529 = vrot.lane.b32.xlu0 %v485, 127
    %v530 = vpop.permute.xlu0 %529
    %531 = vrot.lane.b32.xlu0 %v486, 127
    %v532 = vpop.permute.xlu0 %531
    %533 = vrot.lane.b32.xlu0 %v487, 127
    %v534 = vpop.permute.xlu0 %533
    %535 = vrot.lane.b32.xlu0 %v488, 127
    %v536 = vpop.permute.xlu0 %535
    %537 = vrot.lane.b32.xlu0 %v489, 127
    %v538 = vpop.permute.xlu0 %537
    %539 = vrot.lane.b32.xlu0 %v490, 127
    %v540 = vpop.permute.xlu0 %539
    %541 = vrot.lane.b32.xlu0 %v491, 127
    %v542 = vpop.permute.xlu0 %541
    %543 = vrot.lane.b32.xlu0 %v492, 127
    %v544 = vpop.permute.xlu0 %543
    %545 = vrot.lane.b32.xlu0 %v493, 127
    %v546 = vpop.permute.xlu0 %545
    %547 = vrot.lane.b32.xlu0 %v494, 127
    %v548 = vpop.permute.xlu0 %547
    %549 = vrot.lane.b32.xlu0 %v495, 127
    %v550 = vpop.permute.xlu0 %549
    %551 = vrot.lane.b32.xlu0 %v496, 127
    %v552 = vpop.permute.xlu0 %551
    %553 = vrot.lane.b32.xlu0 %v497, 127
    %v554 = vpop.permute.xlu0 %553
    %555 = vrot.lane.b32.xlu0 %v498, 127
    %v556 = vpop.permute.xlu0 %555
    %557 = vrot.lane.b32.xlu0 %v499, 127
    %v558 = vpop.permute.xlu0 %557
    %559 = vrot.lane.b32.xlu0 %v500, 127
    %v560 = vpop.permute.xlu0 %559
    %vm561 = vcmask 1039360
    %v562 = vsel %vm561, %v522, %v524
    %v563 = vsel %vm561, %v524, %v526
    %v564 = vsel %vm561, %v526, %v528
    %v565 = vsel %vm561, %v528, %v530
    %v566 = vsel %vm561, %v532, %v534
    %v567 = vsel %vm561, %v534, %v536
    %v568 = vsel %vm561, %v536, %v538
    %v569 = vsel %vm561, %v538, %v540
    %v570 = vsel %vm561, %v542, %v544
    %v571 = vsel %vm561, %v544, %v546
    %v572 = vsel %vm561, %v546, %v548
    %v573 = vsel %vm561, %v548, %v550
    %v574 = vsel %vm561, %v552, %v554
    %v575 = vsel %vm561, %v554, %v556
    %v576 = vsel %vm561, %v556, %v558
    %v577 = vsel %vm561, %v558, %v560
    %v598 = vadd.f32 %v436, %v562
    %v599 = vadd.f32 %v437, %v563
    %v600 = vadd.f32 %v438, %v564
    %v601 = vadd.f32 %v439, %v565
    %v602 = vadd.f32 %v440, %v530
    %v603 = vadd.f32 %v441, %v566
    %v604 = vadd.f32 %v442, %v567
    %v605 = vadd.f32 %v443, %v568
    %v606 = vadd.f32 %v444, %v569
    %v607 = vadd.f32 %v445, %v540
    %v608 = vadd.f32 %v446, %v570
    %v609 = vadd.f32 %v447, %v571
    %v610 = vadd.f32 %v448, %v572
    %v611 = vadd.f32 %v449, %v573
    %v612 = vadd.f32 %v450, %v550
    %v613 = vadd.f32 %v451, %v574
    %v614 = vadd.f32 %v452, %v575
    %v615 = vadd.f32 %v453, %v576
    %v616 = vadd.f32 %v454, %v577
    %v617 = vadd.f32 %v455, %v560
    %s618 = scalar_lea.vmem %s2, 64
    %v619 = vld [vmem:[%s618] sm:$0xff]
    %v620 = vld [vmem:[%s618 + $0x8] sm:$0xff]
    %v621 = vld [vmem:[%s618 + $0x10] sm:$0xff]
    %v622 = vld [vmem:[%s618 + $0x18] sm:$0xff]
    %624 = vset.pattern.permute.xlu0 0
    %625 = vperm.xlu0 %624, %v619
    %v626 = vpop.permute.xlu0 %625
    %629 = vset.pattern.permute.xlu0 0
    %630 = vperm.xlu0 %629, %v620
    %v631 = vpop.permute.xlu0 %630
    %634 = vset.pattern.permute.xlu0 0
    %635 = vperm.xlu0 %634, %v621
    %v636 = vpop.permute.xlu0 %635
    %639 = vset.pattern.permute.xlu0 0
    %640 = vperm.xlu0 %639, %v622
    %v641 = vpop.permute.xlu0 %640
    %v643 = vmul.f32 %v626, %v396
    %v644 = vmul.f32 %v626, %v397
    %v645 = vmul.f32 %v626, %v398
    %v646 = vmul.f32 %v626, %v399
    %v647 = vmul.f32 %v626, %v400
    %v648 = vmul.f32 %v631, %v401
    %v649 = vmul.f32 %v631, %v402
    %v650 = vmul.f32 %v631, %v403
    %v651 = vmul.f32 %v631, %v404
    %v652 = vmul.f32 %v631, %v405
    %v653 = vmul.f32 %v636, %v406
    %v654 = vmul.f32 %v636, %v407
    %v655 = vmul.f32 %v636, %v408
    %v656 = vmul.f32 %v636, %v409
    %v657 = vmul.f32 %v636, %v410
    %v658 = vmul.f32 %v641, %v411
    %v659 = vmul.f32 %v641, %v412
    %v660 = vmul.f32 %v641, %v413
    %v661 = vmul.f32 %v641, %v414
    %v662 = vmul.f32 %v641, %v415
    %683 = vrot.lane.b32.xlu0 %v643, 126
    %v684 = vpop.permute.xlu0 %683
    %685 = vrot.lane.b32.xlu0 %v644, 126
    %v686 = vpop.permute.xlu0 %685
    %687 = vrot.lane.b32.xlu0 %v645, 126
    %v688 = vpop.permute.xlu0 %687
    %689 = vrot.lane.b32.xlu0 %v646, 126
    %v690 = vpop.permute.xlu0 %689
    %691 = vrot.lane.b32.xlu0 %v647, 126
    %v692 = vpop.permute.xlu0 %691
    %693 = vrot.lane.b32.xlu0 %v648, 126
    %v694 = vpop.permute.xlu0 %693
    %695 = vrot.lane.b32.xlu0 %v649, 126
    %v696 = vpop.permute.xlu0 %695
    %697 = vrot.lane.b32.xlu0 %v650, 126
    %v698 = vpop.permute.xlu0 %697
    %699 = vrot.lane.b32.xlu0 %v651, 126
    %v700 = vpop.permute.xlu0 %699
    %701 = vrot.lane.b32.xlu0 %v652, 126
    %v702 = vpop.permute.xlu0 %701
    %703 = vrot.lane.b32.xlu0 %v653, 126
    %v704 = vpop.permute.xlu0 %703
    %705 = vrot.lane.b32.xlu0 %v654, 126
    %v706 = vpop.permute.xlu0 %705
    %707 = vrot.lane.b32.xlu0 %v655, 126
    %v708 = vpop.permute.xlu0 %707
    %709 = vrot.lane.b32.xlu0 %v656, 126
    %v710 = vpop.permute.xlu0 %709
    %711 = vrot.lane.b32.xlu0 %v657, 126
    %v712 = vpop.permute.xlu0 %711
    %713 = vrot.lane.b32.xlu0 %v658, 126
    %v714 = vpop.permute.xlu0 %713
    %715 = vrot.lane.b32.xlu0 %v659, 126
    %v716 = vpop.permute.xlu0 %715
    %717 = vrot.lane.b32.xlu0 %v660, 126
    %v718 = vpop.permute.xlu0 %717
    %719 = vrot.lane.b32.xlu0 %v661, 126
    %v720 = vpop.permute.xlu0 %719
    %721 = vrot.lane.b32.xlu0 %v662, 126
    %v722 = vpop.permute.xlu0 %721
    %vm723 = vcmask 1031168
    %v724 = vsel %vm723, %v684, %v686
    %v725 = vsel %vm723, %v686, %v688
    %v726 = vsel %vm723, %v688, %v690
    %v727 = vsel %vm723, %v690, %v692
    %v728 = vsel %vm723, %v694, %v696
    %v729 = vsel %vm723, %v696, %v698
    %v730 = vsel %vm723, %v698, %v700
    %v731 = vsel %vm723, %v700, %v702
    %v732 = vsel %vm723, %v704, %v706
    %v733 = vsel %vm723, %v706, %v708
    %v734 = vsel %vm723, %v708, %v710
    %v735 = vsel %vm723, %v710, %v712
    %v736 = vsel %vm723, %v714, %v716
    %v737 = vsel %vm723, %v716, %v718
    %v738 = vsel %vm723, %v718, %v720
    %v739 = vsel %vm723, %v720, %v722
    %v760 = vadd.f32 %v598, %v724
    %v761 = vadd.f32 %v599, %v725
    %v762 = vadd.f32 %v600, %v726
    %v763 = vadd.f32 %v601, %v727
    %v764 = vadd.f32 %v602, %v692
    %v765 = vadd.f32 %v603, %v728
    %v766 = vadd.f32 %v604, %v729
    %v767 = vadd.f32 %v605, %v730
    %v768 = vadd.f32 %v606, %v731
    %v769 = vadd.f32 %v607, %v702
    %v770 = vadd.f32 %v608, %v732
    %v771 = vadd.f32 %v609, %v733
    %v772 = vadd.f32 %v610, %v734
    %v773 = vadd.f32 %v611, %v735
    %v774 = vadd.f32 %v612, %v712
    %v775 = vadd.f32 %v613, %v736
    %v776 = vadd.f32 %v614, %v737
    %v777 = vadd.f32 %v615, %v738
    %v778 = vadd.f32 %v616, %v739
    %v779 = vadd.f32 %v617, %v722
    %s780 = scalar_lea.vmem %s2, 96
    %v781 = vld [vmem:[%s780] sm:$0xff]
    %v782 = vld [vmem:[%s780 + $0x8] sm:$0xff]
    %v783 = vld [vmem:[%s780 + $0x10] sm:$0xff]
    %v784 = vld [vmem:[%s780 + $0x18] sm:$0xff]
    %786 = vset.pattern.permute.xlu0 0
    %787 = vperm.xlu0 %786, %v781
    %v788 = vpop.permute.xlu0 %787
    %791 = vset.pattern.permute.xlu0 0
    %792 = vperm.xlu0 %791, %v782
    %v793 = vpop.permute.xlu0 %792
    %796 = vset.pattern.permute.xlu0 0
    %797 = vperm.xlu0 %796, %v783
    %v798 = vpop.permute.xlu0 %797
    %801 = vset.pattern.permute.xlu0 0
    %802 = vperm.xlu0 %801, %v784
    %v803 = vpop.permute.xlu0 %802
    %v805 = vmul.f32 %v788, %v396
    %v806 = vmul.f32 %v788, %v397
    %v807 = vmul.f32 %v788, %v398
    %v808 = vmul.f32 %v788, %v399
    %v809 = vmul.f32 %v788, %v400
    %v810 = vmul.f32 %v793, %v401
    %v811 = vmul.f32 %v793, %v402
    %v812 = vmul.f32 %v793, %v403
    %v813 = vmul.f32 %v793, %v404
    %v814 = vmul.f32 %v793, %v405
    %v815 = vmul.f32 %v798, %v406
    %v816 = vmul.f32 %v798, %v407
    %v817 = vmul.f32 %v798, %v408
    %v818 = vmul.f32 %v798, %v409
    %v819 = vmul.f32 %v798, %v410
    %v820 = vmul.f32 %v803, %v411
    %v821 = vmul.f32 %v803, %v412
    %v822 = vmul.f32 %v803, %v413
    %v823 = vmul.f32 %v803, %v414
    %v824 = vmul.f32 %v803, %v415
    %845 = vrot.lane.b32.xlu0 %v805, 125
    %v846 = vpop.permute.xlu0 %845
    %847 = vrot.lane.b32.xlu0 %v806, 125
    %v848 = vpop.permute.xlu0 %847
    %849 = vrot.lane.b32.xlu0 %v807, 125
    %v850 = vpop.permute.xlu0 %849
    %851 = vrot.lane.b32.xlu0 %v808, 125
    %v852 = vpop.permute.xlu0 %851
    %853 = vrot.lane.b32.xlu0 %v809, 125
    %v854 = vpop.permute.xlu0 %853
    %855 = vrot.lane.b32.xlu0 %v810, 125
    %v856 = vpop.permute.xlu0 %855
    %857 = vrot.lane.b32.xlu0 %v811, 125
    %v858 = vpop.permute.xlu0 %857
    %859 = vrot.lane.b32.xlu0 %v812, 125
    %v860 = vpop.permute.xlu0 %859
    %861 = vrot.lane.b32.xlu0 %v813, 125
    %v862 = vpop.permute.xlu0 %861
    %863 = vrot.lane.b32.xlu0 %v814, 125
    %v864 = vpop.permute.xlu0 %863
    %865 = vrot.lane.b32.xlu0 %v815, 125
    %v866 = vpop.permute.xlu0 %865
    %867 = vrot.lane.b32.xlu0 %v816, 125
    %v868 = vpop.permute.xlu0 %867
    %869 = vrot.lane.b32.xlu0 %v817, 125
    %v870 = vpop.permute.xlu0 %869
    %871 = vrot.lane.b32.xlu0 %v818, 125
    %v872 = vpop.permute.xlu0 %871
    %873 = vrot.lane.b32.xlu0 %v819, 125
    %v874 = vpop.permute.xlu0 %873
    %875 = vrot.lane.b32.xlu0 %v820, 125
    %v876 = vpop.permute.xlu0 %875
    %877 = vrot.lane.b32.xlu0 %v821, 125
    %v878 = vpop.permute.xlu0 %877
    %879 = vrot.lane.b32.xlu0 %v822, 125
    %v880 = vpop.permute.xlu0 %879
    %881 = vrot.lane.b32.xlu0 %v823, 125
    %v882 = vpop.permute.xlu0 %881
    %883 = vrot.lane.b32.xlu0 %v824, 125
    %v884 = vpop.permute.xlu0 %883
    %vm885 = vcmask 1022976
    %v886 = vsel %vm885, %v846, %v848
    %v887 = vsel %vm885, %v848, %v850
    %v888 = vsel %vm885, %v850, %v852
    %v889 = vsel %vm885, %v852, %v854
    %v890 = vsel %vm885, %v856, %v858
    %v891 = vsel %vm885, %v858, %v860
    %v892 = vsel %vm885, %v860, %v862
    %v893 = vsel %vm885, %v862, %v864
    %v894 = vsel %vm885, %v866, %v868
    %v895 = vsel %vm885, %v868, %v870
    %v896 = vsel %vm885, %v870, %v872
    %v897 = vsel %vm885, %v872, %v874
    %v898 = vsel %vm885, %v876, %v878
    %v899 = vsel %vm885, %v878, %v880
    %v900 = vsel %vm885, %v880, %v882
    %v901 = vsel %vm885, %v882, %v884
    %v922 = vadd.f32 %v760, %v886
    %v923 = vadd.f32 %v761, %v887
    %v924 = vadd.f32 %v762, %v888
    %v925 = vadd.f32 %v763, %v889
    %v926 = vadd.f32 %v764, %v854
    %v927 = vadd.f32 %v765, %v890
    %v928 = vadd.f32 %v766, %v891
    %v929 = vadd.f32 %v767, %v892
    %v930 = vadd.f32 %v768, %v893
    %v931 = vadd.f32 %v769, %v864
    %v932 = vadd.f32 %v770, %v894
    %v933 = vadd.f32 %v771, %v895
    %v934 = vadd.f32 %v772, %v896
    %v935 = vadd.f32 %v773, %v897
    %v936 = vadd.f32 %v774, %v874
    %v937 = vadd.f32 %v775, %v898
    %v938 = vadd.f32 %v776, %v899
    %v939 = vadd.f32 %v777, %v900
    %v940 = vadd.f32 %v778, %v901
    %v941 = vadd.f32 %v779, %v884
    %s942 = scalar_lea.vmem %s2, 128
    %v943 = vld [vmem:[%s942] sm:$0xff]
    %v944 = vld [vmem:[%s942 + $0x8] sm:$0xff]
    %v945 = vld [vmem:[%s942 + $0x10] sm:$0xff]
    %v946 = vld [vmem:[%s942 + $0x18] sm:$0xff]
    %948 = vset.pattern.permute.xlu0 0
    %949 = vperm.xlu0 %948, %v943
    %v950 = vpop.permute.xlu0 %949
    %953 = vset.pattern.permute.xlu0 0
    %954 = vperm.xlu0 %953, %v944
    %v955 = vpop.permute.xlu0 %954
    %958 = vset.pattern.permute.xlu0 0
    %959 = vperm.xlu0 %958, %v945
    %v960 = vpop.permute.xlu0 %959
    %963 = vset.pattern.permute.xlu0 0
    %964 = vperm.xlu0 %963, %v946
    %v965 = vpop.permute.xlu0 %964
    %v967 = vmul.f32 %v950, %v396
    %v968 = vmul.f32 %v950, %v397
    %v969 = vmul.f32 %v950, %v398
    %v970 = vmul.f32 %v950, %v399
    %v971 = vmul.f32 %v950, %v400
    %v972 = vmul.f32 %v955, %v401
    %v973 = vmul.f32 %v955, %v402
    %v974 = vmul.f32 %v955, %v403
    %v975 = vmul.f32 %v955, %v404
    %v976 = vmul.f32 %v955, %v405
    %v977 = vmul.f32 %v960, %v406
    %v978 = vmul.f32 %v960, %v407
    %v979 = vmul.f32 %v960, %v408
    %v980 = vmul.f32 %v960, %v409
    %v981 = vmul.f32 %v960, %v410
    %v982 = vmul.f32 %v965, %v411
    %v983 = vmul.f32 %v965, %v412
    %v984 = vmul.f32 %v965, %v413
    %v985 = vmul.f32 %v965, %v414
    %v986 = vmul.f32 %v965, %v415
    %1007 = vrot.lane.b32.xlu0 %v967, 124
    %v1008 = vpop.permute.xlu0 %1007
    %1009 = vrot.lane.b32.xlu0 %v968, 124
    %v1010 = vpop.permute.xlu0 %1009
    %1011 = vrot.lane.b32.xlu0 %v969, 124
    %v1012 = vpop.permute.xlu0 %1011
    %1013 = vrot.lane.b32.xlu0 %v970, 124
    %v1014 = vpop.permute.xlu0 %1013
    %1015 = vrot.lane.b32.xlu0 %v971, 124
    %v1016 = vpop.permute.xlu0 %1015
    %1017 = vrot.lane.b32.xlu0 %v972, 124
    %v1018 = vpop.permute.xlu0 %1017
    %1019 = vrot.lane.b32.xlu0 %v973, 124
    %v1020 = vpop.permute.xlu0 %1019
    %1021 = vrot.lane.b32.xlu0 %v974, 124
    %v1022 = vpop.permute.xlu0 %1021
    %1023 = vrot.lane.b32.xlu0 %v975, 124
    %v1024 = vpop.permute.xlu0 %1023
    %1025 = vrot.lane.b32.xlu0 %v976, 124
    %v1026 = vpop.permute.xlu0 %1025
    %1027 = vrot.lane.b32.xlu0 %v977, 124
    %v1028 = vpop.permute.xlu0 %1027
    %1029 = vrot.lane.b32.xlu0 %v978, 124
    %v1030 = vpop.permute.xlu0 %1029
    %1031 = vrot.lane.b32.xlu0 %v979, 124
    %v1032 = vpop.permute.xlu0 %1031
    %1033 = vrot.lane.b32.xlu0 %v980, 124
    %v1034 = vpop.permute.xlu0 %1033
    %1035 = vrot.lane.b32.xlu0 %v981, 124
    %v1036 = vpop.permute.xlu0 %1035
    %1037 = vrot.lane.b32.xlu0 %v982, 124
    %v1038 = vpop.permute.xlu0 %1037
    %1039 = vrot.lane.b32.xlu0 %v983, 124
    %v1040 = vpop.permute.xlu0 %1039
    %1041 = vrot.lane.b32.xlu0 %v984, 124
    %v1042 = vpop.permute.xlu0 %1041
    %1043 = vrot.lane.b32.xlu0 %v985, 124
    %v1044 = vpop.permute.xlu0 %1043
    %1045 = vrot.lane.b32.xlu0 %v986, 124
    %v1046 = vpop.permute.xlu0 %1045
    %vm1047 = vcmask 1014784
    %v1048 = vsel %vm1047, %v1008, %v1010
    %v1049 = vsel %vm1047, %v1010, %v1012
    %v1050 = vsel %vm1047, %v1012, %v1014
    %v1051 = vsel %vm1047, %v1014, %v1016
    %v1052 = vsel %vm1047, %v1018, %v1020
    %v1053 = vsel %vm1047, %v1020, %v1022
    %v1054 = vsel %vm1047, %v1022, %v1024
    %v1055 = vsel %vm1047, %v1024, %v1026
    %v1056 = vsel %vm1047, %v1028, %v1030
    %v1057 = vsel %vm1047, %v1030, %v1032
    %v1058 = vsel %vm1047, %v1032, %v1034
    %v1059 = vsel %vm1047, %v1034, %v1036
    %v1060 = vsel %vm1047, %v1038, %v1040
    %v1061 = vsel %vm1047, %v1040, %v1042
    %v1062 = vsel %vm1047, %v1042, %v1044
    %v1063 = vsel %vm1047, %v1044, %v1046
    %v1084 = vadd.f32 %v922, %v1048
    %v1085 = vadd.f32 %v923, %v1049
    %v1086 = vadd.f32 %v924, %v1050
    %v1087 = vadd.f32 %v925, %v1051
    %v1088 = vadd.f32 %v926, %v1016
    %v1089 = vadd.f32 %v927, %v1052
    %v1090 = vadd.f32 %v928, %v1053
    %v1091 = vadd.f32 %v929, %v1054
    %v1092 = vadd.f32 %v930, %v1055
    %v1093 = vadd.f32 %v931, %v1026
    %v1094 = vadd.f32 %v932, %v1056
    %v1095 = vadd.f32 %v933, %v1057
    %v1096 = vadd.f32 %v934, %v1058
    %v1097 = vadd.f32 %v935, %v1059
    %v1098 = vadd.f32 %v936, %v1036
    %v1099 = vadd.f32 %v937, %v1060
    %v1100 = vadd.f32 %v938, %v1061
    %v1101 = vadd.f32 %v939, %v1062
    %v1102 = vadd.f32 %v940, %v1063
    %v1103 = vadd.f32 %v941, %v1046
    %s1104 = scalar_lea.vmem %s2, 160
    %v1105 = vld [vmem:[%s1104] sm:$0xff]
    %v1106 = vld [vmem:[%s1104 + $0x8] sm:$0xff]
    %v1107 = vld [vmem:[%s1104 + $0x10] sm:$0xff]
    %v1108 = vld [vmem:[%s1104 + $0x18] sm:$0xff]
    %1110 = vset.pattern.permute.xlu0 0
    %1111 = vperm.xlu0 %1110, %v1105
    %v1112 = vpop.permute.xlu0 %1111
    %1115 = vset.pattern.permute.xlu0 0
    %1116 = vperm.xlu0 %1115, %v1106
    %v1117 = vpop.permute.xlu0 %1116
    %1120 = vset.pattern.permute.xlu0 0
    %1121 = vperm.xlu0 %1120, %v1107
    %v1122 = vpop.permute.xlu0 %1121
    %1125 = vset.pattern.permute.xlu0 0
    %1126 = vperm.xlu0 %1125, %v1108
    %v1127 = vpop.permute.xlu0 %1126
    %v1129 = vmul.f32 %v1112, %v396
    %v1130 = vmul.f32 %v1112, %v397
    %v1131 = vmul.f32 %v1112, %v398
    %v1132 = vmul.f32 %v1112, %v399
    %v1133 = vmul.f32 %v1112, %v400
    %v1134 = vmul.f32 %v1117, %v401
    %v1135 = vmul.f32 %v1117, %v402
    %v1136 = vmul.f32 %v1117, %v403
    %v1137 = vmul.f32 %v1117, %v404
    %v1138 = vmul.f32 %v1117, %v405
    %v1139 = vmul.f32 %v1122, %v406
    %v1140 = vmul.f32 %v1122, %v407
    %v1141 = vmul.f32 %v1122, %v408
    %v1142 = vmul.f32 %v1122, %v409
    %v1143 = vmul.f32 %v1122, %v410
    %v1144 = vmul.f32 %v1127, %v411
    %v1145 = vmul.f32 %v1127, %v412
    %v1146 = vmul.f32 %v1127, %v413
    %v1147 = vmul.f32 %v1127, %v414
    %v1148 = vmul.f32 %v1127, %v415
    %1169 = vrot.lane.b32.xlu0 %v1129, 123
    %v1170 = vpop.permute.xlu0 %1169
    %1171 = vrot.lane.b32.xlu0 %v1130, 123
    %v1172 = vpop.permute.xlu0 %1171
    %1173 = vrot.lane.b32.xlu0 %v1131, 123
    %v1174 = vpop.permute.xlu0 %1173
    %1175 = vrot.lane.b32.xlu0 %v1132, 123
    %v1176 = vpop.permute.xlu0 %1175
    %1177 = vrot.lane.b32.xlu0 %v1133, 123
    %v1178 = vpop.permute.xlu0 %1177
    %1179 = vrot.lane.b32.xlu0 %v1134, 123
    %v1180 = vpop.permute.xlu0 %1179
    %1181 = vrot.lane.b32.xlu0 %v1135, 123
    %v1182 = vpop.permute.xlu0 %1181
    %1183 = vrot.lane.b32.xlu0 %v1136, 123
    %v1184 = vpop.permute.xlu0 %1183
    %1185 = vrot.lane.b32.xlu0 %v1137, 123
    %v1186 = vpop.permute.xlu0 %1185
    %1187 = vrot.lane.b32.xlu0 %v1138, 123
    %v1188 = vpop.permute.xlu0 %1187
    %1189 = vrot.lane.b32.xlu0 %v1139, 123
    %v1190 = vpop.permute.xlu0 %1189
    %1191 = vrot.lane.b32.xlu0 %v1140, 123
    %v1192 = vpop.permute.xlu0 %1191
    %1193 = vrot.lane.b32.xlu0 %v1141, 123
    %v1194 = vpop.permute.xlu0 %1193
    %1195 = vrot.lane.b32.xlu0 %v1142, 123
    %v1196 = vpop.permute.xlu0 %1195
    %1197 = vrot.lane.b32.xlu0 %v1143, 123
    %v1198 = vpop.permute.xlu0 %1197
    %1199 = vrot.lane.b32.xlu0 %v1144, 123
    %v1200 = vpop.permute.xlu0 %1199
    %1201 = vrot.lane.b32.xlu0 %v1145, 123
    %v1202 = vpop.permute.xlu0 %1201
    %1203 = vrot.lane.b32.xlu0 %v1146, 123
    %v1204 = vpop.permute.xlu0 %1203
    %1205 = vrot.lane.b32.xlu0 %v1147, 123
    %v1206 = vpop.permute.xlu0 %1205
    %1207 = vrot.lane.b32.xlu0 %v1148, 123
    %v1208 = vpop.permute.xlu0 %1207
    %vm1209 = vcmask 1006592
    %v1210 = vsel %vm1209, %v1170, %v1172
    %v1211 = vsel %vm1209, %v1172, %v1174
    %v1212 = vsel %vm1209, %v1174, %v1176
    %v1213 = vsel %vm1209, %v1176, %v1178
    %v1214 = vsel %vm1209, %v1180, %v1182
    %v1215 = vsel %vm1209, %v1182, %v1184
    %v1216 = vsel %vm1209, %v1184, %v1186
    %v1217 = vsel %vm1209, %v1186, %v1188
    %v1218 = vsel %vm1209, %v1190, %v1192
    %v1219 = vsel %vm1209, %v1192, %v1194
    %v1220 = vsel %vm1209, %v1194, %v1196
    %v1221 = vsel %vm1209, %v1196, %v1198
    %v1222 = vsel %vm1209, %v1200, %v1202
    %v1223 = vsel %vm1209, %v1202, %v1204
    %v1224 = vsel %vm1209, %v1204, %v1206
    %v1225 = vsel %vm1209, %v1206, %v1208
    %v1246 = vadd.f32 %v1084, %v1210
    %v1247 = vadd.f32 %v1085, %v1211
    %v1248 = vadd.f32 %v1086, %v1212
    %v1249 = vadd.f32 %v1087, %v1213
    %v1250 = vadd.f32 %v1088, %v1178
    %v1251 = vadd.f32 %v1089, %v1214
    %v1252 = vadd.f32 %v1090, %v1215
    %v1253 = vadd.f32 %v1091, %v1216
    %v1254 = vadd.f32 %v1092, %v1217
    %v1255 = vadd.f32 %v1093, %v1188
    %v1256 = vadd.f32 %v1094, %v1218
    %v1257 = vadd.f32 %v1095, %v1219
    %v1258 = vadd.f32 %v1096, %v1220
    %v1259 = vadd.f32 %v1097, %v1221
    %v1260 = vadd.f32 %v1098, %v1198
    %v1261 = vadd.f32 %v1099, %v1222
    %v1262 = vadd.f32 %v1100, %v1223
    %v1263 = vadd.f32 %v1101, %v1224
    %v1264 = vadd.f32 %v1102, %v1225
    %v1265 = vadd.f32 %v1103, %v1208
    %s1266 = scalar_lea.vmem %s2, 192
    %v1267 = vld [vmem:[%s1266] sm:$0xff]
    %v1268 = vld [vmem:[%s1266 + $0x8] sm:$0xff]
    %v1269 = vld [vmem:[%s1266 + $0x10] sm:$0xff]
    %v1270 = vld [vmem:[%s1266 + $0x18] sm:$0xff]
    %1272 = vset.pattern.permute.xlu0 0
    %1273 = vperm.xlu0 %1272, %v1267
    %v1274 = vpop.permute.xlu0 %1273
    %1277 = vset.pattern.permute.xlu0 0
    %1278 = vperm.xlu0 %1277, %v1268
    %v1279 = vpop.permute.xlu0 %1278
    %1282 = vset.pattern.permute.xlu0 0
    %1283 = vperm.xlu0 %1282, %v1269
    %v1284 = vpop.permute.xlu0 %1283
    %1287 = vset.pattern.permute.xlu0 0
    %1288 = vperm.xlu0 %1287, %v1270
    %v1289 = vpop.permute.xlu0 %1288
    %v1291 = vmul.f32 %v1274, %v396
    %v1292 = vmul.f32 %v1274, %v397
    %v1293 = vmul.f32 %v1274, %v398
    %v1294 = vmul.f32 %v1274, %v399
    %v1295 = vmul.f32 %v1274, %v400
    %v1296 = vmul.f32 %v1279, %v401
    %v1297 = vmul.f32 %v1279, %v402
    %v1298 = vmul.f32 %v1279, %v403
    %v1299 = vmul.f32 %v1279, %v404
    %v1300 = vmul.f32 %v1279, %v405
    %v1301 = vmul.f32 %v1284, %v406
    %v1302 = vmul.f32 %v1284, %v407
    %v1303 = vmul.f32 %v1284, %v408
    %v1304 = vmul.f32 %v1284, %v409
    %v1305 = vmul.f32 %v1284, %v410
    %v1306 = vmul.f32 %v1289, %v411
    %v1307 = vmul.f32 %v1289, %v412
    %v1308 = vmul.f32 %v1289, %v413
    %v1309 = vmul.f32 %v1289, %v414
    %v1310 = vmul.f32 %v1289, %v415
    %1331 = vrot.lane.b32.xlu0 %v1291, 122
    %v1332 = vpop.permute.xlu0 %1331
    %1333 = vrot.lane.b32.xlu0 %v1292, 122
    %v1334 = vpop.permute.xlu0 %1333
    %1335 = vrot.lane.b32.xlu0 %v1293, 122
    %v1336 = vpop.permute.xlu0 %1335
    %1337 = vrot.lane.b32.xlu0 %v1294, 122
    %v1338 = vpop.permute.xlu0 %1337
    %1339 = vrot.lane.b32.xlu0 %v1295, 122
    %v1340 = vpop.permute.xlu0 %1339
    %1341 = vrot.lane.b32.xlu0 %v1296, 122
    %v1342 = vpop.permute.xlu0 %1341
    %1343 = vrot.lane.b32.xlu0 %v1297, 122
    %v1344 = vpop.permute.xlu0 %1343
    %1345 = vrot.lane.b32.xlu0 %v1298, 122
    %v1346 = vpop.permute.xlu0 %1345
    %1347 = vrot.lane.b32.xlu0 %v1299, 122
    %v1348 = vpop.permute.xlu0 %1347
    %1349 = vrot.lane.b32.xlu0 %v1300, 122
    %v1350 = vpop.permute.xlu0 %1349
    %1351 = vrot.lane.b32.xlu0 %v1301, 122
    %v1352 = vpop.permute.xlu0 %1351
    %1353 = vrot.lane.b32.xlu0 %v1302, 122
    %v1354 = vpop.permute.xlu0 %1353
    %1355 = vrot.lane.b32.xlu0 %v1303, 122
    %v1356 = vpop.permute.xlu0 %1355
    %1357 = vrot.lane.b32.xlu0 %v1304, 122
    %v1358 = vpop.permute.xlu0 %1357
    %1359 = vrot.lane.b32.xlu0 %v1305, 122
    %v1360 = vpop.permute.xlu0 %1359
    %1361 = vrot.lane.b32.xlu0 %v1306, 122
    %v1362 = vpop.permute.xlu0 %1361
    %1363 = vrot.lane.b32.xlu0 %v1307, 122
    %v1364 = vpop.permute.xlu0 %1363
    %1365 = vrot.lane.b32.xlu0 %v1308, 122
    %v1366 = vpop.permute.xlu0 %1365
    %1367 = vrot.lane.b32.xlu0 %v1309, 122
    %v1368 = vpop.permute.xlu0 %1367
    %1369 = vrot.lane.b32.xlu0 %v1310, 122
    %v1370 = vpop.permute.xlu0 %1369
    %vm1371 = vcmask 998400
    %v1372 = vsel %vm1371, %v1332, %v1334
    %v1373 = vsel %vm1371, %v1334, %v1336
    %v1374 = vsel %vm1371, %v1336, %v1338
    %v1375 = vsel %vm1371, %v1338, %v1340
    %v1376 = vsel %vm1371, %v1342, %v1344
    %v1377 = vsel %vm1371, %v1344, %v1346
    %v1378 = vsel %vm1371, %v1346, %v1348
    %v1379 = vsel %vm1371, %v1348, %v1350
    %v1380 = vsel %vm1371, %v1352, %v1354
    %v1381 = vsel %vm1371, %v1354, %v1356
    %v1382 = vsel %vm1371, %v1356, %v1358
    %v1383 = vsel %vm1371, %v1358, %v1360
    %v1384 = vsel %vm1371, %v1362, %v1364
    %v1385 = vsel %vm1371, %v1364, %v1366
    %v1386 = vsel %vm1371, %v1366, %v1368
    %v1387 = vsel %vm1371, %v1368, %v1370
    %v1408 = vadd.f32 %v1246, %v1372
    %v1409 = vadd.f32 %v1247, %v1373
    %v1410 = vadd.f32 %v1248, %v1374
    %v1411 = vadd.f32 %v1249, %v1375
    %v1412 = vadd.f32 %v1250, %v1340
    %v1413 = vadd.f32 %v1251, %v1376
    %v1414 = vadd.f32 %v1252, %v1377
    %v1415 = vadd.f32 %v1253, %v1378
    %v1416 = vadd.f32 %v1254, %v1379
    %v1417 = vadd.f32 %v1255, %v1350
    %v1418 = vadd.f32 %v1256, %v1380
    %v1419 = vadd.f32 %v1257, %v1381
    %v1420 = vadd.f32 %v1258, %v1382
    %v1421 = vadd.f32 %v1259, %v1383
    %v1422 = vadd.f32 %v1260, %v1360
    %v1423 = vadd.f32 %v1261, %v1384
    %v1424 = vadd.f32 %v1262, %v1385
    %v1425 = vadd.f32 %v1263, %v1386
    %v1426 = vadd.f32 %v1264, %v1387
    %v1427 = vadd.f32 %v1265, %v1370
    %s1428 = scalar_lea.vmem %s2, 224
    %v1429 = vld [vmem:[%s1428] sm:$0xff]
    %v1430 = vld [vmem:[%s1428 + $0x8] sm:$0xff]
    %v1431 = vld [vmem:[%s1428 + $0x10] sm:$0xff]
    %v1432 = vld [vmem:[%s1428 + $0x18] sm:$0xff]
    %1434 = vset.pattern.permute.xlu0 0
    %1435 = vperm.xlu0 %1434, %v1429
    %v1436 = vpop.permute.xlu0 %1435
    %1439 = vset.pattern.permute.xlu0 0
    %1440 = vperm.xlu0 %1439, %v1430
    %v1441 = vpop.permute.xlu0 %1440
    %1444 = vset.pattern.permute.xlu0 0
    %1445 = vperm.xlu0 %1444, %v1431
    %v1446 = vpop.permute.xlu0 %1445
    %1449 = vset.pattern.permute.xlu0 0
    %1450 = vperm.xlu0 %1449, %v1432
    %v1451 = vpop.permute.xlu0 %1450
    %v1453 = vmul.f32 %v1436, %v396
    %v1454 = vmul.f32 %v1436, %v397
    %v1455 = vmul.f32 %v1436, %v398
    %v1456 = vmul.f32 %v1436, %v399
    %v1457 = vmul.f32 %v1436, %v400
    %v1458 = vmul.f32 %v1441, %v401
    %v1459 = vmul.f32 %v1441, %v402
    %v1460 = vmul.f32 %v1441, %v403
    %v1461 = vmul.f32 %v1441, %v404
    %v1462 = vmul.f32 %v1441, %v405
    %v1463 = vmul.f32 %v1446, %v406
    %v1464 = vmul.f32 %v1446, %v407
    %v1465 = vmul.f32 %v1446, %v408
    %v1466 = vmul.f32 %v1446, %v409
    %v1467 = vmul.f32 %v1446, %v410
    %v1468 = vmul.f32 %v1451, %v411
    %v1469 = vmul.f32 %v1451, %v412
    %v1470 = vmul.f32 %v1451, %v413
    %v1471 = vmul.f32 %v1451, %v414
    %v1472 = vmul.f32 %v1451, %v415
    %1493 = vrot.lane.b32.xlu0 %v1453, 121
    %v1494 = vpop.permute.xlu0 %1493
    %1495 = vrot.lane.b32.xlu0 %v1454, 121
    %v1496 = vpop.permute.xlu0 %1495
    %1497 = vrot.lane.b32.xlu0 %v1455, 121
    %v1498 = vpop.permute.xlu0 %1497
    %1499 = vrot.lane.b32.xlu0 %v1456, 121
    %v1500 = vpop.permute.xlu0 %1499
    %1501 = vrot.lane.b32.xlu0 %v1457, 121
    %v1502 = vpop.permute.xlu0 %1501
    %1503 = vrot.lane.b32.xlu0 %v1458, 121
    %v1504 = vpop.permute.xlu0 %1503
    %1505 = vrot.lane.b32.xlu0 %v1459, 121
    %v1506 = vpop.permute.xlu0 %1505
    %1507 = vrot.lane.b32.xlu0 %v1460, 121
    %v1508 = vpop.permute.xlu0 %1507
    %1509 = vrot.lane.b32.xlu0 %v1461, 121
    %v1510 = vpop.permute.xlu0 %1509
    %1511 = vrot.lane.b32.xlu0 %v1462, 121
    %v1512 = vpop.permute.xlu0 %1511
    %1513 = vrot.lane.b32.xlu0 %v1463, 121
    %v1514 = vpop.permute.xlu0 %1513
    %1515 = vrot.lane.b32.xlu0 %v1464, 121
    %v1516 = vpop.permute.xlu0 %1515
    %1517 = vrot.lane.b32.xlu0 %v1465, 121
    %v1518 = vpop.permute.xlu0 %1517
    %1519 = vrot.lane.b32.xlu0 %v1466, 121
    %v1520 = vpop.permute.xlu0 %1519
    %1521 = vrot.lane.b32.xlu0 %v1467, 121
    %v1522 = vpop.permute.xlu0 %1521
    %1523 = vrot.lane.b32.xlu0 %v1468, 121
    %v1524 = vpop.permute.xlu0 %1523
    %1525 = vrot.lane.b32.xlu0 %v1469, 121
    %v1526 = vpop.permute.xlu0 %1525
    %1527 = vrot.lane.b32.xlu0 %v1470, 121
    %v1528 = vpop.permute.xlu0 %1527
    %1529 = vrot.lane.b32.xlu0 %v1471, 121
    %v1530 = vpop.permute.xlu0 %1529
    %1531 = vrot.lane.b32.xlu0 %v1472, 121
    %v1532 = vpop.permute.xlu0 %1531
    %vm1533 = vcmask 990208
    %v1534 = vsel %vm1533, %v1494, %v1496
    %v1535 = vsel %vm1533, %v1496, %v1498
    %v1536 = vsel %vm1533, %v1498, %v1500
    %v1537 = vsel %vm1533, %v1500, %v1502
    %v1538 = vsel %vm1533, %v1504, %v1506
    %v1539 = vsel %vm1533, %v1506, %v1508
    %v1540 = vsel %vm1533, %v1508, %v1510
    %v1541 = vsel %vm1533, %v1510, %v1512
    %v1542 = vsel %vm1533, %v1514, %v1516
    %v1543 = vsel %vm1533, %v1516, %v1518
    %v1544 = vsel %vm1533, %v1518, %v1520
    %v1545 = vsel %vm1533, %v1520, %v1522
    %v1546 = vsel %vm1533, %v1524, %v1526
    %v1547 = vsel %vm1533, %v1526, %v1528
    %v1548 = vsel %vm1533, %v1528, %v1530
    %v1549 = vsel %vm1533, %v1530, %v1532
    %v1570 = vadd.f32 %v1408, %v1534
    %v1571 = vadd.f32 %v1409, %v1535
    %v1572 = vadd.f32 %v1410, %v1536
    %v1573 = vadd.f32 %v1411, %v1537
    %v1574 = vadd.f32 %v1412, %v1502
    %v1575 = vadd.f32 %v1413, %v1538
    %v1576 = vadd.f32 %v1414, %v1539
    %v1577 = vadd.f32 %v1415, %v1540
    %v1578 = vadd.f32 %v1416, %v1541
    %v1579 = vadd.f32 %v1417, %v1512
    %v1580 = vadd.f32 %v1418, %v1542
    %v1581 = vadd.f32 %v1419, %v1543
    %v1582 = vadd.f32 %v1420, %v1544
    %v1583 = vadd.f32 %v1421, %v1545
    %v1584 = vadd.f32 %v1422, %v1522
    %v1585 = vadd.f32 %v1423, %v1546
    %v1586 = vadd.f32 %v1424, %v1547
    %v1587 = vadd.f32 %v1425, %v1548
    %v1588 = vadd.f32 %v1426, %v1549
    %v1589 = vadd.f32 %v1427, %v1532
    %s1590 = scalar_lea.vmem %s2, 256
    %v1591 = vld [vmem:[%s1590] sm:$0xff]
    %v1592 = vld [vmem:[%s1590 + $0x8] sm:$0xff]
    %v1593 = vld [vmem:[%s1590 + $0x10] sm:$0xff]
    %v1594 = vld [vmem:[%s1590 + $0x18] sm:$0xff]
    %1596 = vset.pattern.permute.xlu0 0
    %1597 = vperm.xlu0 %1596, %v1591
    %v1598 = vpop.permute.xlu0 %1597
    %1601 = vset.pattern.permute.xlu0 0
    %1602 = vperm.xlu0 %1601, %v1592
    %v1603 = vpop.permute.xlu0 %1602
    %1606 = vset.pattern.permute.xlu0 0
    %1607 = vperm.xlu0 %1606, %v1593
    %v1608 = vpop.permute.xlu0 %1607
    %1611 = vset.pattern.permute.xlu0 0
    %1612 = vperm.xlu0 %1611, %v1594
    %v1613 = vpop.permute.xlu0 %1612
    %v1615 = vmul.f32 %v1598, %v396
    %v1616 = vmul.f32 %v1598, %v397
    %v1617 = vmul.f32 %v1598, %v398
    %v1618 = vmul.f32 %v1598, %v399
    %v1619 = vmul.f32 %v1598, %v400
    %v1620 = vmul.f32 %v1603, %v401
    %v1621 = vmul.f32 %v1603, %v402
    %v1622 = vmul.f32 %v1603, %v403
    %v1623 = vmul.f32 %v1603, %v404
    %v1624 = vmul.f32 %v1603, %v405
    %v1625 = vmul.f32 %v1608, %v406
    %v1626 = vmul.f32 %v1608, %v407
    %v1627 = vmul.f32 %v1608, %v408
    %v1628 = vmul.f32 %v1608, %v409
    %v1629 = vmul.f32 %v1608, %v410
    %v1630 = vmul.f32 %v1613, %v411
    %v1631 = vmul.f32 %v1613, %v412
    %v1632 = vmul.f32 %v1613, %v413
    %v1633 = vmul.f32 %v1613, %v414
    %v1634 = vmul.f32 %v1613, %v415
    %1655 = vrot.lane.b32.xlu0 %v1615, 120
    %v1656 = vpop.permute.xlu0 %1655
    %1657 = vrot.lane.b32.xlu0 %v1616, 120
    %v1658 = vpop.permute.xlu0 %1657
    %1659 = vrot.lane.b32.xlu0 %v1617, 120
    %v1660 = vpop.permute.xlu0 %1659
    %1661 = vrot.lane.b32.xlu0 %v1618, 120
    %v1662 = vpop.permute.xlu0 %1661
    %1663 = vrot.lane.b32.xlu0 %v1619, 120
    %v1664 = vpop.permute.xlu0 %1663
    %1665 = vrot.lane.b32.xlu0 %v1620, 120
    %v1666 = vpop.permute.xlu0 %1665
    %1667 = vrot.lane.b32.xlu0 %v1621, 120
    %v1668 = vpop.permute.xlu0 %1667
    %1669 = vrot.lane.b32.xlu0 %v1622, 120
    %v1670 = vpop.permute.xlu0 %1669
    %1671 = vrot.lane.b32.xlu0 %v1623, 120
    %v1672 = vpop.permute.xlu0 %1671
    %1673 = vrot.lane.b32.xlu0 %v1624, 120
    %v1674 = vpop.permute.xlu0 %1673
    %1675 = vrot.lane.b32.xlu0 %v1625, 120
    %v1676 = vpop.permute.xlu0 %1675
    %1677 = vrot.lane.b32.xlu0 %v1626, 120
    %v1678 = vpop.permute.xlu0 %1677
    %1679 = vrot.lane.b32.xlu0 %v1627, 120
    %v1680 = vpop.permute.xlu0 %1679
    %1681 = vrot.lane.b32.xlu0 %v1628, 120
    %v1682 = vpop.permute.xlu0 %1681
    %1683 = vrot.lane.b32.xlu0 %v1629, 120
    %v1684 = vpop.permute.xlu0 %1683
    %1685 = vrot.lane.b32.xlu0 %v1630, 120
    %v1686 = vpop.permute.xlu0 %1685
    %1687 = vrot.lane.b32.xlu0 %v1631, 120
    %v1688 = vpop.permute.xlu0 %1687
    %1689 = vrot.lane.b32.xlu0 %v1632, 120
    %v1690 = vpop.permute.xlu0 %1689
    %1691 = vrot.lane.b32.xlu0 %v1633, 120
    %v1692 = vpop.permute.xlu0 %1691
    %1693 = vrot.lane.b32.xlu0 %v1634, 120
    %v1694 = vpop.permute.xlu0 %1693
    %vm1695 = vcmask 982016
    %v1696 = vsel %vm1695, %v1656, %v1658
    %v1697 = vsel %vm1695, %v1658, %v1660
    %v1698 = vsel %vm1695, %v1660, %v1662
    %v1699 = vsel %vm1695, %v1662, %v1664
    %v1700 = vsel %vm1695, %v1666, %v1668
    %v1701 = vsel %vm1695, %v1668, %v1670
    %v1702 = vsel %vm1695, %v1670, %v1672
    %v1703 = vsel %vm1695, %v1672, %v1674
    %v1704 = vsel %vm1695, %v1676, %v1678
    %v1705 = vsel %vm1695, %v1678, %v1680
    %v1706 = vsel %vm1695, %v1680, %v1682
    %v1707 = vsel %vm1695, %v1682, %v1684
    %v1708 = vsel %vm1695, %v1686, %v1688
    %v1709 = vsel %vm1695, %v1688, %v1690
    %v1710 = vsel %vm1695, %v1690, %v1692
    %v1711 = vsel %vm1695, %v1692, %v1694
    %v1732 = vadd.f32 %v1570, %v1696
    %v1733 = vadd.f32 %v1571, %v1697
    %v1734 = vadd.f32 %v1572, %v1698
    %v1735 = vadd.f32 %v1573, %v1699
    %v1736 = vadd.f32 %v1574, %v1664
    %v1737 = vadd.f32 %v1575, %v1700
    %v1738 = vadd.f32 %v1576, %v1701
    %v1739 = vadd.f32 %v1577, %v1702
    %v1740 = vadd.f32 %v1578, %v1703
    %v1741 = vadd.f32 %v1579, %v1674
    %v1742 = vadd.f32 %v1580, %v1704
    %v1743 = vadd.f32 %v1581, %v1705
    %v1744 = vadd.f32 %v1582, %v1706
    %v1745 = vadd.f32 %v1583, %v1707
    %v1746 = vadd.f32 %v1584, %v1684
    %v1747 = vadd.f32 %v1585, %v1708
    %v1748 = vadd.f32 %v1586, %v1709
    %v1749 = vadd.f32 %v1587, %v1710
    %v1750 = vadd.f32 %v1588, %v1711
    %v1751 = vadd.f32 %v1589, %v1694
    %s1752 = scalar_lea.vmem %s2, 288
    %v1753 = vld [vmem:[%s1752] sm:$0xff]
    %v1754 = vld [vmem:[%s1752 + $0x8] sm:$0xff]
    %v1755 = vld [vmem:[%s1752 + $0x10] sm:$0xff]
    %v1756 = vld [vmem:[%s1752 + $0x18] sm:$0xff]
    %1758 = vset.pattern.permute.xlu0 0
    %1759 = vperm.xlu0 %1758, %v1753
    %v1760 = vpop.permute.xlu0 %1759
    %1763 = vset.pattern.permute.xlu0 0
    %1764 = vperm.xlu0 %1763, %v1754
    %v1765 = vpop.permute.xlu0 %1764
    %1768 = vset.pattern.permute.xlu0 0
    %1769 = vperm.xlu0 %1768, %v1755
    %v1770 = vpop.permute.xlu0 %1769
    %1773 = vset.pattern.permute.xlu0 0
    %1774 = vperm.xlu0 %1773, %v1756
    %v1775 = vpop.permute.xlu0 %1774
    %v1777 = vmul.f32 %v1760, %v396
    %v1778 = vmul.f32 %v1760, %v397
    %v1779 = vmul.f32 %v1760, %v398
    %v1780 = vmul.f32 %v1760, %v399
    %v1781 = vmul.f32 %v1760, %v400
    %v1782 = vmul.f32 %v1765, %v401
    %v1783 = vmul.f32 %v1765, %v402
    %v1784 = vmul.f32 %v1765, %v403
    %v1785 = vmul.f32 %v1765, %v404
    %v1786 = vmul.f32 %v1765, %v405
    %v1787 = vmul.f32 %v1770, %v406
    %v1788 = vmul.f32 %v1770, %v407
    %v1789 = vmul.f32 %v1770, %v408
    %v1790 = vmul.f32 %v1770, %v409
    %v1791 = vmul.f32 %v1770, %v410
    %v1792 = vmul.f32 %v1775, %v411
    %v1793 = vmul.f32 %v1775, %v412
    %v1794 = vmul.f32 %v1775, %v413
    %v1795 = vmul.f32 %v1775, %v414
    %v1796 = vmul.f32 %v1775, %v415
    %1817 = vrot.lane.b32.xlu0 %v1777, 119
    %v1818 = vpop.permute.xlu0 %1817
    %1819 = vrot.lane.b32.xlu0 %v1778, 119
    %v1820 = vpop.permute.xlu0 %1819
    %1821 = vrot.lane.b32.xlu0 %v1779, 119
    %v1822 = vpop.permute.xlu0 %1821
    %1823 = vrot.lane.b32.xlu0 %v1780, 119
    %v1824 = vpop.permute.xlu0 %1823
    %1825 = vrot.lane.b32.xlu0 %v1781, 119
    %v1826 = vpop.permute.xlu0 %1825
    %1827 = vrot.lane.b32.xlu0 %v1782, 119
    %v1828 = vpop.permute.xlu0 %1827
    %1829 = vrot.lane.b32.xlu0 %v1783, 119
    %v1830 = vpop.permute.xlu0 %1829
    %1831 = vrot.lane.b32.xlu0 %v1784, 119
    %v1832 = vpop.permute.xlu0 %1831
    %1833 = vrot.lane.b32.xlu0 %v1785, 119
    %v1834 = vpop.permute.xlu0 %1833
    %1835 = vrot.lane.b32.xlu0 %v1786, 119
    %v1836 = vpop.permute.xlu0 %1835
    %1837 = vrot.lane.b32.xlu0 %v1787, 119
    %v1838 = vpop.permute.xlu0 %1837
    %1839 = vrot.lane.b32.xlu0 %v1788, 119
    %v1840 = vpop.permute.xlu0 %1839
    %1841 = vrot.lane.b32.xlu0 %v1789, 119
    %v1842 = vpop.permute.xlu0 %1841
    %1843 = vrot.lane.b32.xlu0 %v1790, 119
    %v1844 = vpop.permute.xlu0 %1843
    %1845 = vrot.lane.b32.xlu0 %v1791, 119
    %v1846 = vpop.permute.xlu0 %1845
    %1847 = vrot.lane.b32.xlu0 %v1792, 119
    %v1848 = vpop.permute.xlu0 %1847
    %1849 = vrot.lane.b32.xlu0 %v1793, 119
    %v1850 = vpop.permute.xlu0 %1849
    %1851 = vrot.lane.b32.xlu0 %v1794, 119
    %v1852 = vpop.permute.xlu0 %1851
    %1853 = vrot.lane.b32.xlu0 %v1795, 119
    %v1854 = vpop.permute.xlu0 %1853
    %1855 = vrot.lane.b32.xlu0 %v1796, 119
    %v1856 = vpop.permute.xlu0 %1855
    %vm1857 = vcmask 973824
    %v1858 = vsel %vm1857, %v1818, %v1820
    %v1859 = vsel %vm1857, %v1820, %v1822
    %v1860 = vsel %vm1857, %v1822, %v1824
    %v1861 = vsel %vm1857, %v1824, %v1826
    %v1862 = vsel %vm1857, %v1828, %v1830
    %v1863 = vsel %vm1857, %v1830, %v1832
    %v1864 = vsel %vm1857, %v1832, %v1834
    %v1865 = vsel %vm1857, %v1834, %v1836
    %v1866 = vsel %vm1857, %v1838, %v1840
    %v1867 = vsel %vm1857, %v1840, %v1842
    %v1868 = vsel %vm1857, %v1842, %v1844
    %v1869 = vsel %vm1857, %v1844, %v1846
    %v1870 = vsel %vm1857, %v1848, %v1850
    %v1871 = vsel %vm1857, %v1850, %v1852
    %v1872 = vsel %vm1857, %v1852, %v1854
    %v1873 = vsel %vm1857, %v1854, %v1856
    %v1894 = vadd.f32 %v1732, %v1858
    %v1895 = vadd.f32 %v1733, %v1859
    %v1896 = vadd.f32 %v1734, %v1860
    %v1897 = vadd.f32 %v1735, %v1861
    %v1898 = vadd.f32 %v1736, %v1826
    %v1899 = vadd.f32 %v1737, %v1862
    %v1900 = vadd.f32 %v1738, %v1863
    %v1901 = vadd.f32 %v1739, %v1864
    %v1902 = vadd.f32 %v1740, %v1865
    %v1903 = vadd.f32 %v1741, %v1836
    %v1904 = vadd.f32 %v1742, %v1866
    %v1905 = vadd.f32 %v1743, %v1867
    %v1906 = vadd.f32 %v1744, %v1868
    %v1907 = vadd.f32 %v1745, %v1869
    %v1908 = vadd.f32 %v1746, %v1846
    %v1909 = vadd.f32 %v1747, %v1870
    %v1910 = vadd.f32 %v1748, %v1871
    %v1911 = vadd.f32 %v1749, %v1872
    %v1912 = vadd.f32 %v1750, %v1873
    %v1913 = vadd.f32 %v1751, %v1856
    %s1914 = scalar_lea.vmem %s2, 320
    %v1915 = vld [vmem:[%s1914] sm:$0xff]
    %v1916 = vld [vmem:[%s1914 + $0x8] sm:$0xff]
    %v1917 = vld [vmem:[%s1914 + $0x10] sm:$0xff]
    %v1918 = vld [vmem:[%s1914 + $0x18] sm:$0xff]
    %1920 = vset.pattern.permute.xlu0 0
    %1921 = vperm.xlu0 %1920, %v1915
    %v1922 = vpop.permute.xlu0 %1921
    %1925 = vset.pattern.permute.xlu0 0
    %1926 = vperm.xlu0 %1925, %v1916
    %v1927 = vpop.permute.xlu0 %1926
    %1930 = vset.pattern.permute.xlu0 0
    %1931 = vperm.xlu0 %1930, %v1917
    %v1932 = vpop.permute.xlu0 %1931
    %1935 = vset.pattern.permute.xlu0 0
    %1936 = vperm.xlu0 %1935, %v1918
    %v1937 = vpop.permute.xlu0 %1936
    %v1939 = vmul.f32 %v1922, %v396
    %v1940 = vmul.f32 %v1922, %v397
    %v1941 = vmul.f32 %v1922, %v398
    %v1942 = vmul.f32 %v1922, %v399
    %v1943 = vmul.f32 %v1922, %v400
    %v1944 = vmul.f32 %v1927, %v401
    %v1945 = vmul.f32 %v1927, %v402
    %v1946 = vmul.f32 %v1927, %v403
    %v1947 = vmul.f32 %v1927, %v404
    %v1948 = vmul.f32 %v1927, %v405
    %v1949 = vmul.f32 %v1932, %v406
    %v1950 = vmul.f32 %v1932, %v407
    %v1951 = vmul.f32 %v1932, %v408
    %v1952 = vmul.f32 %v1932, %v409
    %v1953 = vmul.f32 %v1932, %v410
    %v1954 = vmul.f32 %v1937, %v411
    %v1955 = vmul.f32 %v1937, %v412
    %v1956 = vmul.f32 %v1937, %v413
    %v1957 = vmul.f32 %v1937, %v414
    %v1958 = vmul.f32 %v1937, %v415
    %1979 = vrot.lane.b32.xlu0 %v1939, 118
    %v1980 = vpop.permute.xlu0 %1979
    %1981 = vrot.lane.b32.xlu0 %v1940, 118
    %v1982 = vpop.permute.xlu0 %1981
    %1983 = vrot.lane.b32.xlu0 %v1941, 118
    %v1984 = vpop.permute.xlu0 %1983
    %1985 = vrot.lane.b32.xlu0 %v1942, 118
    %v1986 = vpop.permute.xlu0 %1985
    %1987 = vrot.lane.b32.xlu0 %v1943, 118
    %v1988 = vpop.permute.xlu0 %1987
    %1989 = vrot.lane.b32.xlu0 %v1944, 118
    %v1990 = vpop.permute.xlu0 %1989
    %1991 = vrot.lane.b32.xlu0 %v1945, 118
    %v1992 = vpop.permute.xlu0 %1991
    %1993 = vrot.lane.b32.xlu0 %v1946, 118
    %v1994 = vpop.permute.xlu0 %1993
    %1995 = vrot.lane.b32.xlu0 %v1947, 118
    %v1996 = vpop.permute.xlu0 %1995
    %1997 = vrot.lane.b32.xlu0 %v1948, 118
    %v1998 = vpop.permute.xlu0 %1997
    %1999 = vrot.lane.b32.xlu0 %v1949, 118
    %v2000 = vpop.permute.xlu0 %1999
    %2001 = vrot.lane.b32.xlu0 %v1950, 118
    %v2002 = vpop.permute.xlu0 %2001
    %2003 = vrot.lane.b32.xlu0 %v1951, 118
    %v2004 = vpop.permute.xlu0 %2003
    %2005 = vrot.lane.b32.xlu0 %v1952, 118
    %v2006 = vpop.permute.xlu0 %2005
    %2007 = vrot.lane.b32.xlu0 %v1953, 118
    %v2008 = vpop.permute.xlu0 %2007
    %2009 = vrot.lane.b32.xlu0 %v1954, 118
    %v2010 = vpop.permute.xlu0 %2009
    %2011 = vrot.lane.b32.xlu0 %v1955, 118
    %v2012 = vpop.permute.xlu0 %2011
    %2013 = vrot.lane.b32.xlu0 %v1956, 118
    %v2014 = vpop.permute.xlu0 %2013
    %2015 = vrot.lane.b32.xlu0 %v1957, 118
    %v2016 = vpop.permute.xlu0 %2015
    %2017 = vrot.lane.b32.xlu0 %v1958, 118
    %v2018 = vpop.permute.xlu0 %2017
    %vm2019 = vcmask 965632
    %v2020 = vsel %vm2019, %v1980, %v1982
    %v2021 = vsel %vm2019, %v1982, %v1984
    %v2022 = vsel %vm2019, %v1984, %v1986
    %v2023 = vsel %vm2019, %v1986, %v1988
    %v2024 = vsel %vm2019, %v1990, %v1992
    %v2025 = vsel %vm2019, %v1992, %v1994
    %v2026 = vsel %vm2019, %v1994, %v1996
    %v2027 = vsel %vm2019, %v1996, %v1998
    %v2028 = vsel %vm2019, %v2000, %v2002
    %v2029 = vsel %vm2019, %v2002, %v2004
    %v2030 = vsel %vm2019, %v2004, %v2006
    %v2031 = vsel %vm2019, %v2006, %v2008
    %v2032 = vsel %vm2019, %v2010, %v2012
    %v2033 = vsel %vm2019, %v2012, %v2014
    %v2034 = vsel %vm2019, %v2014, %v2016
    %v2035 = vsel %vm2019, %v2016, %v2018
    %v2056 = vadd.f32 %v1894, %v2020
    %v2057 = vadd.f32 %v1895, %v2021
    %v2058 = vadd.f32 %v1896, %v2022
    %v2059 = vadd.f32 %v1897, %v2023
    %v2060 = vadd.f32 %v1898, %v1988
    %v2061 = vadd.f32 %v1899, %v2024
    %v2062 = vadd.f32 %v1900, %v2025
    %v2063 = vadd.f32 %v1901, %v2026
    %v2064 = vadd.f32 %v1902, %v2027
    %v2065 = vadd.f32 %v1903, %v1998
    %v2066 = vadd.f32 %v1904, %v2028
    %v2067 = vadd.f32 %v1905, %v2029
    %v2068 = vadd.f32 %v1906, %v2030
    %v2069 = vadd.f32 %v1907, %v2031
    %v2070 = vadd.f32 %v1908, %v2008
    %v2071 = vadd.f32 %v1909, %v2032
    %v2072 = vadd.f32 %v1910, %v2033
    %v2073 = vadd.f32 %v1911, %v2034
    %v2074 = vadd.f32 %v1912, %v2035
    %v2075 = vadd.f32 %v1913, %v2018
    %s2076 = scalar_lea.vmem %s2, 352
    %v2077 = vld [vmem:[%s2076] sm:$0xff]
    %v2078 = vld [vmem:[%s2076 + $0x8] sm:$0xff]
    %v2079 = vld [vmem:[%s2076 + $0x10] sm:$0xff]
    %v2080 = vld [vmem:[%s2076 + $0x18] sm:$0xff]
    %2082 = vset.pattern.permute.xlu0 0
    %2083 = vperm.xlu0 %2082, %v2077
    %v2084 = vpop.permute.xlu0 %2083
    %2087 = vset.pattern.permute.xlu0 0
    %2088 = vperm.xlu0 %2087, %v2078
    %v2089 = vpop.permute.xlu0 %2088
    %2092 = vset.pattern.permute.xlu0 0
    %2093 = vperm.xlu0 %2092, %v2079
    %v2094 = vpop.permute.xlu0 %2093
    %2097 = vset.pattern.permute.xlu0 0
    %2098 = vperm.xlu0 %2097, %v2080
    %v2099 = vpop.permute.xlu0 %2098
    %v2101 = vmul.f32 %v2084, %v396
    %v2102 = vmul.f32 %v2084, %v397
    %v2103 = vmul.f32 %v2084, %v398
    %v2104 = vmul.f32 %v2084, %v399
    %v2105 = vmul.f32 %v2084, %v400
    %v2106 = vmul.f32 %v2089, %v401
    %v2107 = vmul.f32 %v2089, %v402
    %v2108 = vmul.f32 %v2089, %v403
    %v2109 = vmul.f32 %v2089, %v404
    %v2110 = vmul.f32 %v2089, %v405
    %v2111 = vmul.f32 %v2094, %v406
    %v2112 = vmul.f32 %v2094, %v407
    %v2113 = vmul.f32 %v2094, %v408
    %v2114 = vmul.f32 %v2094, %v409
    %v2115 = vmul.f32 %v2094, %v410
    %v2116 = vmul.f32 %v2099, %v411
    %v2117 = vmul.f32 %v2099, %v412
    %v2118 = vmul.f32 %v2099, %v413
    %v2119 = vmul.f32 %v2099, %v414
    %v2120 = vmul.f32 %v2099, %v415
    %2141 = vrot.lane.b32.xlu0 %v2101, 117
    %v2142 = vpop.permute.xlu0 %2141
    %2143 = vrot.lane.b32.xlu0 %v2102, 117
    %v2144 = vpop.permute.xlu0 %2143
    %2145 = vrot.lane.b32.xlu0 %v2103, 117
    %v2146 = vpop.permute.xlu0 %2145
    %2147 = vrot.lane.b32.xlu0 %v2104, 117
    %v2148 = vpop.permute.xlu0 %2147
    %2149 = vrot.lane.b32.xlu0 %v2105, 117
    %v2150 = vpop.permute.xlu0 %2149
    %2151 = vrot.lane.b32.xlu0 %v2106, 117
    %v2152 = vpop.permute.xlu0 %2151
    %2153 = vrot.lane.b32.xlu0 %v2107, 117
    %v2154 = vpop.permute.xlu0 %2153
    %2155 = vrot.lane.b32.xlu0 %v2108, 117
    %v2156 = vpop.permute.xlu0 %2155
    %2157 = vrot.lane.b32.xlu0 %v2109, 117
    %v2158 = vpop.permute.xlu0 %2157
    %2159 = vrot.lane.b32.xlu0 %v2110, 117
    %v2160 = vpop.permute.xlu0 %2159
    %2161 = vrot.lane.b32.xlu0 %v2111, 117
    %v2162 = vpop.permute.xlu0 %2161
    %2163 = vrot.lane.b32.xlu0 %v2112, 117
    %v2164 = vpop.permute.xlu0 %2163
    %2165 = vrot.lane.b32.xlu0 %v2113, 117
    %v2166 = vpop.permute.xlu0 %2165
    %2167 = vrot.lane.b32.xlu0 %v2114, 117
    %v2168 = vpop.permute.xlu0 %2167
    %2169 = vrot.lane.b32.xlu0 %v2115, 117
    %v2170 = vpop.permute.xlu0 %2169
    %2171 = vrot.lane.b32.xlu0 %v2116, 117
    %v2172 = vpop.permute.xlu0 %2171
    %2173 = vrot.lane.b32.xlu0 %v2117, 117
    %v2174 = vpop.permute.xlu0 %2173
    %2175 = vrot.lane.b32.xlu0 %v2118, 117
    %v2176 = vpop.permute.xlu0 %2175
    %2177 = vrot.lane.b32.xlu0 %v2119, 117
    %v2178 = vpop.permute.xlu0 %2177
    %2179 = vrot.lane.b32.xlu0 %v2120, 117
    %v2180 = vpop.permute.xlu0 %2179
    %vm2181 = vcmask 957440
    %v2182 = vsel %vm2181, %v2142, %v2144
    %v2183 = vsel %vm2181, %v2144, %v2146
    %v2184 = vsel %vm2181, %v2146, %v2148
    %v2185 = vsel %vm2181, %v2148, %v2150
    %v2186 = vsel %vm2181, %v2152, %v2154
    %v2187 = vsel %vm2181, %v2154, %v2156
    %v2188 = vsel %vm2181, %v2156, %v2158
    %v2189 = vsel %vm2181, %v2158, %v2160
    %v2190 = vsel %vm2181, %v2162, %v2164
    %v2191 = vsel %vm2181, %v2164, %v2166
    %v2192 = vsel %vm2181, %v2166, %v2168
    %v2193 = vsel %vm2181, %v2168, %v2170
    %v2194 = vsel %vm2181, %v2172, %v2174
    %v2195 = vsel %vm2181, %v2174, %v2176
    %v2196 = vsel %vm2181, %v2176, %v2178
    %v2197 = vsel %vm2181, %v2178, %v2180
    %v2218 = vadd.f32 %v2056, %v2182
    %v2219 = vadd.f32 %v2057, %v2183
    %v2220 = vadd.f32 %v2058, %v2184
    %v2221 = vadd.f32 %v2059, %v2185
    %v2222 = vadd.f32 %v2060, %v2150
    %v2223 = vadd.f32 %v2061, %v2186
    %v2224 = vadd.f32 %v2062, %v2187
    %v2225 = vadd.f32 %v2063, %v2188
    %v2226 = vadd.f32 %v2064, %v2189
    %v2227 = vadd.f32 %v2065, %v2160
    %v2228 = vadd.f32 %v2066, %v2190
    %v2229 = vadd.f32 %v2067, %v2191
    %v2230 = vadd.f32 %v2068, %v2192
    %v2231 = vadd.f32 %v2069, %v2193
    %v2232 = vadd.f32 %v2070, %v2170
    %v2233 = vadd.f32 %v2071, %v2194
    %v2234 = vadd.f32 %v2072, %v2195
    %v2235 = vadd.f32 %v2073, %v2196
    %v2236 = vadd.f32 %v2074, %v2197
    %v2237 = vadd.f32 %v2075, %v2180
    %s2238 = scalar_lea.vmem %s2, 384
    %v2239 = vld [vmem:[%s2238] sm:$0xff]
    %v2240 = vld [vmem:[%s2238 + $0x8] sm:$0xff]
    %v2241 = vld [vmem:[%s2238 + $0x10] sm:$0xff]
    %v2242 = vld [vmem:[%s2238 + $0x18] sm:$0xff]
    %2244 = vset.pattern.permute.xlu0 0
    %2245 = vperm.xlu0 %2244, %v2239
    %v2246 = vpop.permute.xlu0 %2245
    %2249 = vset.pattern.permute.xlu0 0
    %2250 = vperm.xlu0 %2249, %v2240
    %v2251 = vpop.permute.xlu0 %2250
    %2254 = vset.pattern.permute.xlu0 0
    %2255 = vperm.xlu0 %2254, %v2241
    %v2256 = vpop.permute.xlu0 %2255
    %2259 = vset.pattern.permute.xlu0 0
    %2260 = vperm.xlu0 %2259, %v2242
    %v2261 = vpop.permute.xlu0 %2260
    %v2263 = vmul.f32 %v2246, %v396
    %v2264 = vmul.f32 %v2246, %v397
    %v2265 = vmul.f32 %v2246, %v398
    %v2266 = vmul.f32 %v2246, %v399
    %v2267 = vmul.f32 %v2246, %v400
    %v2268 = vmul.f32 %v2251, %v401
    %v2269 = vmul.f32 %v2251, %v402
    %v2270 = vmul.f32 %v2251, %v403
    %v2271 = vmul.f32 %v2251, %v404
    %v2272 = vmul.f32 %v2251, %v405
    %v2273 = vmul.f32 %v2256, %v406
    %v2274 = vmul.f32 %v2256, %v407
    %v2275 = vmul.f32 %v2256, %v408
    %v2276 = vmul.f32 %v2256, %v409
    %v2277 = vmul.f32 %v2256, %v410
    %v2278 = vmul.f32 %v2261, %v411
    %v2279 = vmul.f32 %v2261, %v412
    %v2280 = vmul.f32 %v2261, %v413
    %v2281 = vmul.f32 %v2261, %v414
    %v2282 = vmul.f32 %v2261, %v415
    %2303 = vrot.lane.b32.xlu0 %v2263, 116
    %v2304 = vpop.permute.xlu0 %2303
    %2305 = vrot.lane.b32.xlu0 %v2264, 116
    %v2306 = vpop.permute.xlu0 %2305
    %2307 = vrot.lane.b32.xlu0 %v2265, 116
    %v2308 = vpop.permute.xlu0 %2307
    %2309 = vrot.lane.b32.xlu0 %v2266, 116
    %v2310 = vpop.permute.xlu0 %2309
    %2311 = vrot.lane.b32.xlu0 %v2267, 116
    %v2312 = vpop.permute.xlu0 %2311
    %2313 = vrot.lane.b32.xlu0 %v2268, 116
    %v2314 = vpop.permute.xlu0 %2313
    %2315 = vrot.lane.b32.xlu0 %v2269, 116
    %v2316 = vpop.permute.xlu0 %2315
    %2317 = vrot.lane.b32.xlu0 %v2270, 116
    %v2318 = vpop.permute.xlu0 %2317
    %2319 = vrot.lane.b32.xlu0 %v2271, 116
    %v2320 = vpop.permute.xlu0 %2319
    %2321 = vrot.lane.b32.xlu0 %v2272, 116
    %v2322 = vpop.permute.xlu0 %2321
    %2323 = vrot.lane.b32.xlu0 %v2273, 116
    %v2324 = vpop.permute.xlu0 %2323
    %2325 = vrot.lane.b32.xlu0 %v2274, 116
    %v2326 = vpop.permute.xlu0 %2325
    %2327 = vrot.lane.b32.xlu0 %v2275, 116
    %v2328 = vpop.permute.xlu0 %2327
    %2329 = vrot.lane.b32.xlu0 %v2276, 116
    %v2330 = vpop.permute.xlu0 %2329
    %2331 = vrot.lane.b32.xlu0 %v2277, 116
    %v2332 = vpop.permute.xlu0 %2331
    %2333 = vrot.lane.b32.xlu0 %v2278, 116
    %v2334 = vpop.permute.xlu0 %2333
    %2335 = vrot.lane.b32.xlu0 %v2279, 116
    %v2336 = vpop.permute.xlu0 %2335
    %2337 = vrot.lane.b32.xlu0 %v2280, 116
    %v2338 = vpop.permute.xlu0 %2337
    %2339 = vrot.lane.b32.xlu0 %v2281, 116
    %v2340 = vpop.permute.xlu0 %2339
    %2341 = vrot.lane.b32.xlu0 %v2282, 116
    %v2342 = vpop.permute.xlu0 %2341
    %vm2343 = vcmask 949248
    %v2344 = vsel %vm2343, %v2304, %v2306
    %v2345 = vsel %vm2343, %v2306, %v2308
    %v2346 = vsel %vm2343, %v2308, %v2310
    %v2347 = vsel %vm2343, %v2310, %v2312
    %v2348 = vsel %vm2343, %v2314, %v2316
    %v2349 = vsel %vm2343, %v2316, %v2318
    %v2350 = vsel %vm2343, %v2318, %v2320
    %v2351 = vsel %vm2343, %v2320, %v2322
    %v2352 = vsel %vm2343, %v2324, %v2326
    %v2353 = vsel %vm2343, %v2326, %v2328
    %v2354 = vsel %vm2343, %v2328, %v2330
    %v2355 = vsel %vm2343, %v2330, %v2332
    %v2356 = vsel %vm2343, %v2334, %v2336
    %v2357 = vsel %vm2343, %v2336, %v2338
    %v2358 = vsel %vm2343, %v2338, %v2340
    %v2359 = vsel %vm2343, %v2340, %v2342
    %v2380 = vadd.f32 %v2218, %v2344
    %v2381 = vadd.f32 %v2219, %v2345
    %v2382 = vadd.f32 %v2220, %v2346
    %v2383 = vadd.f32 %v2221, %v2347
    %v2384 = vadd.f32 %v2222, %v2312
    %v2385 = vadd.f32 %v2223, %v2348
    %v2386 = vadd.f32 %v2224, %v2349
    %v2387 = vadd.f32 %v2225, %v2350
    %v2388 = vadd.f32 %v2226, %v2351
    %v2389 = vadd.f32 %v2227, %v2322
    %v2390 = vadd.f32 %v2228, %v2352
    %v2391 = vadd.f32 %v2229, %v2353
    %v2392 = vadd.f32 %v2230, %v2354
    %v2393 = vadd.f32 %v2231, %v2355
    %v2394 = vadd.f32 %v2232, %v2332
    %v2395 = vadd.f32 %v2233, %v2356
    %v2396 = vadd.f32 %v2234, %v2357
    %v2397 = vadd.f32 %v2235, %v2358
    %v2398 = vadd.f32 %v2236, %v2359
    %v2399 = vadd.f32 %v2237, %v2342
    %s2400 = scalar_lea.vmem %s2, 416
    %v2401 = vld [vmem:[%s2400] sm:$0xff]
    %v2402 = vld [vmem:[%s2400 + $0x8] sm:$0xff]
    %v2403 = vld [vmem:[%s2400 + $0x10] sm:$0xff]
    %v2404 = vld [vmem:[%s2400 + $0x18] sm:$0xff]
    %2406 = vset.pattern.permute.xlu0 0
    %2407 = vperm.xlu0 %2406, %v2401
    %v2408 = vpop.permute.xlu0 %2407
    %2411 = vset.pattern.permute.xlu0 0
    %2412 = vperm.xlu0 %2411, %v2402
    %v2413 = vpop.permute.xlu0 %2412
    %2416 = vset.pattern.permute.xlu0 0
    %2417 = vperm.xlu0 %2416, %v2403
    %v2418 = vpop.permute.xlu0 %2417
    %2421 = vset.pattern.permute.xlu0 0
    %2422 = vperm.xlu0 %2421, %v2404
    %v2423 = vpop.permute.xlu0 %2422
    %v2425 = vmul.f32 %v2408, %v396
    %v2426 = vmul.f32 %v2408, %v397
    %v2427 = vmul.f32 %v2408, %v398
    %v2428 = vmul.f32 %v2408, %v399
    %v2429 = vmul.f32 %v2408, %v400
    %v2430 = vmul.f32 %v2413, %v401
    %v2431 = vmul.f32 %v2413, %v402
    %v2432 = vmul.f32 %v2413, %v403
    %v2433 = vmul.f32 %v2413, %v404
    %v2434 = vmul.f32 %v2413, %v405
    %v2435 = vmul.f32 %v2418, %v406
    %v2436 = vmul.f32 %v2418, %v407
    %v2437 = vmul.f32 %v2418, %v408
    %v2438 = vmul.f32 %v2418, %v409
    %v2439 = vmul.f32 %v2418, %v410
    %v2440 = vmul.f32 %v2423, %v411
    %v2441 = vmul.f32 %v2423, %v412
    %v2442 = vmul.f32 %v2423, %v413
    %v2443 = vmul.f32 %v2423, %v414
    %v2444 = vmul.f32 %v2423, %v415
    %2465 = vrot.lane.b32.xlu0 %v2425, 115
    %v2466 = vpop.permute.xlu0 %2465
    %2467 = vrot.lane.b32.xlu0 %v2426, 115
    %v2468 = vpop.permute.xlu0 %2467
    %2469 = vrot.lane.b32.xlu0 %v2427, 115
    %v2470 = vpop.permute.xlu0 %2469
    %2471 = vrot.lane.b32.xlu0 %v2428, 115
    %v2472 = vpop.permute.xlu0 %2471
    %2473 = vrot.lane.b32.xlu0 %v2429, 115
    %v2474 = vpop.permute.xlu0 %2473
    %2475 = vrot.lane.b32.xlu0 %v2430, 115
    %v2476 = vpop.permute.xlu0 %2475
    %2477 = vrot.lane.b32.xlu0 %v2431, 115
    %v2478 = vpop.permute.xlu0 %2477
    %2479 = vrot.lane.b32.xlu0 %v2432, 115
    %v2480 = vpop.permute.xlu0 %2479
    %2481 = vrot.lane.b32.xlu0 %v2433, 115
    %v2482 = vpop.permute.xlu0 %2481
    %2483 = vrot.lane.b32.xlu0 %v2434, 115
    %v2484 = vpop.permute.xlu0 %2483
    %2485 = vrot.lane.b32.xlu0 %v2435, 115
    %v2486 = vpop.permute.xlu0 %2485
    %2487 = vrot.lane.b32.xlu0 %v2436, 115
    %v2488 = vpop.permute.xlu0 %2487
    %2489 = vrot.lane.b32.xlu0 %v2437, 115
    %v2490 = vpop.permute.xlu0 %2489
    %2491 = vrot.lane.b32.xlu0 %v2438, 115
    %v2492 = vpop.permute.xlu0 %2491
    %2493 = vrot.lane.b32.xlu0 %v2439, 115
    %v2494 = vpop.permute.xlu0 %2493
    %2495 = vrot.lane.b32.xlu0 %v2440, 115
    %v2496 = vpop.permute.xlu0 %2495
    %2497 = vrot.lane.b32.xlu0 %v2441, 115
    %v2498 = vpop.permute.xlu0 %2497
    %2499 = vrot.lane.b32.xlu0 %v2442, 115
    %v2500 = vpop.permute.xlu0 %2499
    %2501 = vrot.lane.b32.xlu0 %v2443, 115
    %v2502 = vpop.permute.xlu0 %2501
    %2503 = vrot.lane.b32.xlu0 %v2444, 115
    %v2504 = vpop.permute.xlu0 %2503
    %vm2505 = vcmask 941056
    %v2506 = vsel %vm2505, %v2466, %v2468
    %v2507 = vsel %vm2505, %v2468, %v2470
    %v2508 = vsel %vm2505, %v2470, %v2472
    %v2509 = vsel %vm2505, %v2472, %v2474
    %v2510 = vsel %vm2505, %v2476, %v2478
    %v2511 = vsel %vm2505, %v2478, %v2480
    %v2512 = vsel %vm2505, %v2480, %v2482
    %v2513 = vsel %vm2505, %v2482, %v2484
    %v2514 = vsel %vm2505, %v2486, %v2488
    %v2515 = vsel %vm2505, %v2488, %v2490
    %v2516 = vsel %vm2505, %v2490, %v2492
    %v2517 = vsel %vm2505, %v2492, %v2494
    %v2518 = vsel %vm2505, %v2496, %v2498
    %v2519 = vsel %vm2505, %v2498, %v2500
    %v2520 = vsel %vm2505, %v2500, %v2502
    %v2521 = vsel %vm2505, %v2502, %v2504
    %v2542 = vadd.f32 %v2380, %v2506
    %v2543 = vadd.f32 %v2381, %v2507
    %v2544 = vadd.f32 %v2382, %v2508
    %v2545 = vadd.f32 %v2383, %v2509
    %v2546 = vadd.f32 %v2384, %v2474
    %v2547 = vadd.f32 %v2385, %v2510
    %v2548 = vadd.f32 %v2386, %v2511
    %v2549 = vadd.f32 %v2387, %v2512
    %v2550 = vadd.f32 %v2388, %v2513
    %v2551 = vadd.f32 %v2389, %v2484
    %v2552 = vadd.f32 %v2390, %v2514
    %v2553 = vadd.f32 %v2391, %v2515
    %v2554 = vadd.f32 %v2392, %v2516
    %v2555 = vadd.f32 %v2393, %v2517
    %v2556 = vadd.f32 %v2394, %v2494
    %v2557 = vadd.f32 %v2395, %v2518
    %v2558 = vadd.f32 %v2396, %v2519
    %v2559 = vadd.f32 %v2397, %v2520
    %v2560 = vadd.f32 %v2398, %v2521
    %v2561 = vadd.f32 %v2399, %v2504
    %s2562 = scalar_lea.vmem %s2, 448
    %v2563 = vld [vmem:[%s2562] sm:$0xff]
    %v2564 = vld [vmem:[%s2562 + $0x8] sm:$0xff]
    %v2565 = vld [vmem:[%s2562 + $0x10] sm:$0xff]
    %v2566 = vld [vmem:[%s2562 + $0x18] sm:$0xff]
    %2568 = vset.pattern.permute.xlu0 0
    %2569 = vperm.xlu0 %2568, %v2563
    %v2570 = vpop.permute.xlu0 %2569
    %2573 = vset.pattern.permute.xlu0 0
    %2574 = vperm.xlu0 %2573, %v2564
    %v2575 = vpop.permute.xlu0 %2574
    %2578 = vset.pattern.permute.xlu0 0
    %2579 = vperm.xlu0 %2578, %v2565
    %v2580 = vpop.permute.xlu0 %2579
    %2583 = vset.pattern.permute.xlu0 0
    %2584 = vperm.xlu0 %2583, %v2566
    %v2585 = vpop.permute.xlu0 %2584
    %v2587 = vmul.f32 %v2570, %v396
    %v2588 = vmul.f32 %v2570, %v397
    %v2589 = vmul.f32 %v2570, %v398
    %v2590 = vmul.f32 %v2570, %v399
    %v2591 = vmul.f32 %v2570, %v400
    %v2592 = vmul.f32 %v2575, %v401
    %v2593 = vmul.f32 %v2575, %v402
    %v2594 = vmul.f32 %v2575, %v403
    %v2595 = vmul.f32 %v2575, %v404
    %v2596 = vmul.f32 %v2575, %v405
    %v2597 = vmul.f32 %v2580, %v406
    %v2598 = vmul.f32 %v2580, %v407
    %v2599 = vmul.f32 %v2580, %v408
    %v2600 = vmul.f32 %v2580, %v409
    %v2601 = vmul.f32 %v2580, %v410
    %v2602 = vmul.f32 %v2585, %v411
    %v2603 = vmul.f32 %v2585, %v412
    %v2604 = vmul.f32 %v2585, %v413
    %v2605 = vmul.f32 %v2585, %v414
    %v2606 = vmul.f32 %v2585, %v415
    %2627 = vrot.lane.b32.xlu0 %v2587, 114
    %v2628 = vpop.permute.xlu0 %2627
    %2629 = vrot.lane.b32.xlu0 %v2588, 114
    %v2630 = vpop.permute.xlu0 %2629
    %2631 = vrot.lane.b32.xlu0 %v2589, 114
    %v2632 = vpop.permute.xlu0 %2631
    %2633 = vrot.lane.b32.xlu0 %v2590, 114
    %v2634 = vpop.permute.xlu0 %2633
    %2635 = vrot.lane.b32.xlu0 %v2591, 114
    %v2636 = vpop.permute.xlu0 %2635
    %2637 = vrot.lane.b32.xlu0 %v2592, 114
    %v2638 = vpop.permute.xlu0 %2637
    %2639 = vrot.lane.b32.xlu0 %v2593, 114
    %v2640 = vpop.permute.xlu0 %2639
    %2641 = vrot.lane.b32.xlu0 %v2594, 114
    %v2642 = vpop.permute.xlu0 %2641
    %2643 = vrot.lane.b32.xlu0 %v2595, 114
    %v2644 = vpop.permute.xlu0 %2643
    %2645 = vrot.lane.b32.xlu0 %v2596, 114
    %v2646 = vpop.permute.xlu0 %2645
    %2647 = vrot.lane.b32.xlu0 %v2597, 114
    %v2648 = vpop.permute.xlu0 %2647
    %2649 = vrot.lane.b32.xlu0 %v2598, 114
    %v2650 = vpop.permute.xlu0 %2649
    %2651 = vrot.lane.b32.xlu0 %v2599, 114
    %v2652 = vpop.permute.xlu0 %2651
    %2653 = vrot.lane.b32.xlu0 %v2600, 114
    %v2654 = vpop.permute.xlu0 %2653
    %2655 = vrot.lane.b32.xlu0 %v2601, 114
    %v2656 = vpop.permute.xlu0 %2655
    %2657 = vrot.lane.b32.xlu0 %v2602, 114
    %v2658 = vpop.permute.xlu0 %2657
    %2659 = vrot.lane.b32.xlu0 %v2603, 114
    %v2660 = vpop.permute.xlu0 %2659
    %2661 = vrot.lane.b32.xlu0 %v2604, 114
    %v2662 = vpop.permute.xlu0 %2661
    %2663 = vrot.lane.b32.xlu0 %v2605, 114
    %v2664 = vpop.permute.xlu0 %2663
    %2665 = vrot.lane.b32.xlu0 %v2606, 114
    %v2666 = vpop.permute.xlu0 %2665
    %vm2667 = vcmask 932864
    %v2668 = vsel %vm2667, %v2628, %v2630
    %v2669 = vsel %vm2667, %v2630, %v2632
    %v2670 = vsel %vm2667, %v2632, %v2634
    %v2671 = vsel %vm2667, %v2634, %v2636
    %v2672 = vsel %vm2667, %v2638, %v2640
    %v2673 = vsel %vm2667, %v2640, %v2642
    %v2674 = vsel %vm2667, %v2642, %v2644
    %v2675 = vsel %vm2667, %v2644, %v2646
    %v2676 = vsel %vm2667, %v2648, %v2650
    %v2677 = vsel %vm2667, %v2650, %v2652
    %v2678 = vsel %vm2667, %v2652, %v2654
    %v2679 = vsel %vm2667, %v2654, %v2656
    %v2680 = vsel %vm2667, %v2658, %v2660
    %v2681 = vsel %vm2667, %v2660, %v2662
    %v2682 = vsel %vm2667, %v2662, %v2664
    %v2683 = vsel %vm2667, %v2664, %v2666
    %v2704 = vadd.f32 %v2542, %v2668
    %v2705 = vadd.f32 %v2543, %v2669
    %v2706 = vadd.f32 %v2544, %v2670
    %v2707 = vadd.f32 %v2545, %v2671
    %v2708 = vadd.f32 %v2546, %v2636
    %v2709 = vadd.f32 %v2547, %v2672
    %v2710 = vadd.f32 %v2548, %v2673
    %v2711 = vadd.f32 %v2549, %v2674
    %v2712 = vadd.f32 %v2550, %v2675
    %v2713 = vadd.f32 %v2551, %v2646
    %v2714 = vadd.f32 %v2552, %v2676
    %v2715 = vadd.f32 %v2553, %v2677
    %v2716 = vadd.f32 %v2554, %v2678
    %v2717 = vadd.f32 %v2555, %v2679
    %v2718 = vadd.f32 %v2556, %v2656
    %v2719 = vadd.f32 %v2557, %v2680
    %v2720 = vadd.f32 %v2558, %v2681
    %v2721 = vadd.f32 %v2559, %v2682
    %v2722 = vadd.f32 %v2560, %v2683
    %v2723 = vadd.f32 %v2561, %v2666
    %s2724 = scalar_lea.vmem %s2, 480
    %v2725 = vld [vmem:[%s2724] sm:$0xff]
    %v2726 = vld [vmem:[%s2724 + $0x8] sm:$0xff]
    %v2727 = vld [vmem:[%s2724 + $0x10] sm:$0xff]
    %v2728 = vld [vmem:[%s2724 + $0x18] sm:$0xff]
    %2730 = vset.pattern.permute.xlu0 0
    %2731 = vperm.xlu0 %2730, %v2725
    %v2732 = vpop.permute.xlu0 %2731
    %2735 = vset.pattern.permute.xlu0 0
    %2736 = vperm.xlu0 %2735, %v2726
    %v2737 = vpop.permute.xlu0 %2736
    %2740 = vset.pattern.permute.xlu0 0
    %2741 = vperm.xlu0 %2740, %v2727
    %v2742 = vpop.permute.xlu0 %2741
    %2745 = vset.pattern.permute.xlu0 0
    %2746 = vperm.xlu0 %2745, %v2728
    %v2747 = vpop.permute.xlu0 %2746
    %v2749 = vmul.f32 %v2732, %v396
    %v2750 = vmul.f32 %v2732, %v397
    %v2751 = vmul.f32 %v2732, %v398
    %v2752 = vmul.f32 %v2732, %v399
    %v2753 = vmul.f32 %v2732, %v400
    %v2754 = vmul.f32 %v2737, %v401
    %v2755 = vmul.f32 %v2737, %v402
    %v2756 = vmul.f32 %v2737, %v403
    %v2757 = vmul.f32 %v2737, %v404
    %v2758 = vmul.f32 %v2737, %v405
    %v2759 = vmul.f32 %v2742, %v406
    %v2760 = vmul.f32 %v2742, %v407
    %v2761 = vmul.f32 %v2742, %v408
    %v2762 = vmul.f32 %v2742, %v409
    %v2763 = vmul.f32 %v2742, %v410
    %v2764 = vmul.f32 %v2747, %v411
    %v2765 = vmul.f32 %v2747, %v412
    %v2766 = vmul.f32 %v2747, %v413
    %v2767 = vmul.f32 %v2747, %v414
    %v2768 = vmul.f32 %v2747, %v415
    %2789 = vrot.lane.b32.xlu0 %v2749, 113
    %v2790 = vpop.permute.xlu0 %2789
    %2791 = vrot.lane.b32.xlu0 %v2750, 113
    %v2792 = vpop.permute.xlu0 %2791
    %2793 = vrot.lane.b32.xlu0 %v2751, 113
    %v2794 = vpop.permute.xlu0 %2793
    %2795 = vrot.lane.b32.xlu0 %v2752, 113
    %v2796 = vpop.permute.xlu0 %2795
    %2797 = vrot.lane.b32.xlu0 %v2753, 113
    %v2798 = vpop.permute.xlu0 %2797
    %2799 = vrot.lane.b32.xlu0 %v2754, 113
    %v2800 = vpop.permute.xlu0 %2799
    %2801 = vrot.lane.b32.xlu0 %v2755, 113
    %v2802 = vpop.permute.xlu0 %2801
    %2803 = vrot.lane.b32.xlu0 %v2756, 113
    %v2804 = vpop.permute.xlu0 %2803
    %2805 = vrot.lane.b32.xlu0 %v2757, 113
    %v2806 = vpop.permute.xlu0 %2805
    %2807 = vrot.lane.b32.xlu0 %v2758, 113
    %v2808 = vpop.permute.xlu0 %2807
    %2809 = vrot.lane.b32.xlu0 %v2759, 113
    %v2810 = vpop.permute.xlu0 %2809
    %2811 = vrot.lane.b32.xlu0 %v2760, 113
    %v2812 = vpop.permute.xlu0 %2811
    %2813 = vrot.lane.b32.xlu0 %v2761, 113
    %v2814 = vpop.permute.xlu0 %2813
    %2815 = vrot.lane.b32.xlu0 %v2762, 113
    %v2816 = vpop.permute.xlu0 %2815
    %2817 = vrot.lane.b32.xlu0 %v2763, 113
    %v2818 = vpop.permute.xlu0 %2817
    %2819 = vrot.lane.b32.xlu0 %v2764, 113
    %v2820 = vpop.permute.xlu0 %2819
    %2821 = vrot.lane.b32.xlu0 %v2765, 113
    %v2822 = vpop.permute.xlu0 %2821
    %2823 = vrot.lane.b32.xlu0 %v2766, 113
    %v2824 = vpop.permute.xlu0 %2823
    %2825 = vrot.lane.b32.xlu0 %v2767, 113
    %v2826 = vpop.permute.xlu0 %2825
    %2827 = vrot.lane.b32.xlu0 %v2768, 113
    %v2828 = vpop.permute.xlu0 %2827
    %vm2829 = vcmask 924672
    %v2830 = vsel %vm2829, %v2790, %v2792
    %v2831 = vsel %vm2829, %v2792, %v2794
    %v2832 = vsel %vm2829, %v2794, %v2796
    %v2833 = vsel %vm2829, %v2796, %v2798
    %v2834 = vsel %vm2829, %v2800, %v2802
    %v2835 = vsel %vm2829, %v2802, %v2804
    %v2836 = vsel %vm2829, %v2804, %v2806
    %v2837 = vsel %vm2829, %v2806, %v2808
    %v2838 = vsel %vm2829, %v2810, %v2812
    %v2839 = vsel %vm2829, %v2812, %v2814
    %v2840 = vsel %vm2829, %v2814, %v2816
    %v2841 = vsel %vm2829, %v2816, %v2818
    %v2842 = vsel %vm2829, %v2820, %v2822
    %v2843 = vsel %vm2829, %v2822, %v2824
    %v2844 = vsel %vm2829, %v2824, %v2826
    %v2845 = vsel %vm2829, %v2826, %v2828
    %v2866 = vadd.f32 %v2704, %v2830
    %v2867 = vadd.f32 %v2705, %v2831
    %v2868 = vadd.f32 %v2706, %v2832
    %v2869 = vadd.f32 %v2707, %v2833
    %v2870 = vadd.f32 %v2708, %v2798
    %v2871 = vadd.f32 %v2709, %v2834
    %v2872 = vadd.f32 %v2710, %v2835
    %v2873 = vadd.f32 %v2711, %v2836
    %v2874 = vadd.f32 %v2712, %v2837
    %v2875 = vadd.f32 %v2713, %v2808
    %v2876 = vadd.f32 %v2714, %v2838
    %v2877 = vadd.f32 %v2715, %v2839
    %v2878 = vadd.f32 %v2716, %v2840
    %v2879 = vadd.f32 %v2717, %v2841
    %v2880 = vadd.f32 %v2718, %v2818
    %v2881 = vadd.f32 %v2719, %v2842
    %v2882 = vadd.f32 %v2720, %v2843
    %v2883 = vadd.f32 %v2721, %v2844
    %v2884 = vadd.f32 %v2722, %v2845
    %v2885 = vadd.f32 %v2723, %v2828
    %s2886 = scalar_lea.vmem %s2, 512
    %v2887 = vld [vmem:[%s2886] sm:$0xff]
    %v2888 = vld [vmem:[%s2886 + $0x8] sm:$0xff]
    %v2889 = vld [vmem:[%s2886 + $0x10] sm:$0xff]
    %v2890 = vld [vmem:[%s2886 + $0x18] sm:$0xff]
    %2892 = vset.pattern.permute.xlu0 0
    %2893 = vperm.xlu0 %2892, %v2887
    %v2894 = vpop.permute.xlu0 %2893
    %2897 = vset.pattern.permute.xlu0 0
    %2898 = vperm.xlu0 %2897, %v2888
    %v2899 = vpop.permute.xlu0 %2898
    %2902 = vset.pattern.permute.xlu0 0
    %2903 = vperm.xlu0 %2902, %v2889
    %v2904 = vpop.permute.xlu0 %2903
    %2907 = vset.pattern.permute.xlu0 0
    %2908 = vperm.xlu0 %2907, %v2890
    %v2909 = vpop.permute.xlu0 %2908
    %v2911 = vmul.f32 %v2894, %v396
    %v2912 = vmul.f32 %v2894, %v397
    %v2913 = vmul.f32 %v2894, %v398
    %v2914 = vmul.f32 %v2894, %v399
    %v2915 = vmul.f32 %v2894, %v400
    %v2916 = vmul.f32 %v2899, %v401
    %v2917 = vmul.f32 %v2899, %v402
    %v2918 = vmul.f32 %v2899, %v403
    %v2919 = vmul.f32 %v2899, %v404
    %v2920 = vmul.f32 %v2899, %v405
    %v2921 = vmul.f32 %v2904, %v406
    %v2922 = vmul.f32 %v2904, %v407
    %v2923 = vmul.f32 %v2904, %v408
    %v2924 = vmul.f32 %v2904, %v409
    %v2925 = vmul.f32 %v2904, %v410
    %v2926 = vmul.f32 %v2909, %v411
    %v2927 = vmul.f32 %v2909, %v412
    %v2928 = vmul.f32 %v2909, %v413
    %v2929 = vmul.f32 %v2909, %v414
    %v2930 = vmul.f32 %v2909, %v415
    %2951 = vrot.lane.b32.xlu0 %v2911, 112
    %v2952 = vpop.permute.xlu0 %2951
    %2953 = vrot.lane.b32.xlu0 %v2912, 112
    %v2954 = vpop.permute.xlu0 %2953
    %2955 = vrot.lane.b32.xlu0 %v2913, 112
    %v2956 = vpop.permute.xlu0 %2955
    %2957 = vrot.lane.b32.xlu0 %v2914, 112
    %v2958 = vpop.permute.xlu0 %2957
    %2959 = vrot.lane.b32.xlu0 %v2915, 112
    %v2960 = vpop.permute.xlu0 %2959
    %2961 = vrot.lane.b32.xlu0 %v2916, 112
    %v2962 = vpop.permute.xlu0 %2961
    %2963 = vrot.lane.b32.xlu0 %v2917, 112
    %v2964 = vpop.permute.xlu0 %2963
    %2965 = vrot.lane.b32.xlu0 %v2918, 112
    %v2966 = vpop.permute.xlu0 %2965
    %2967 = vrot.lane.b32.xlu0 %v2919, 112
    %v2968 = vpop.permute.xlu0 %2967
    %2969 = vrot.lane.b32.xlu0 %v2920, 112
    %v2970 = vpop.permute.xlu0 %2969
    %2971 = vrot.lane.b32.xlu0 %v2921, 112
    %v2972 = vpop.permute.xlu0 %2971
    %2973 = vrot.lane.b32.xlu0 %v2922, 112
    %v2974 = vpop.permute.xlu0 %2973
    %2975 = vrot.lane.b32.xlu0 %v2923, 112
    %v2976 = vpop.permute.xlu0 %2975
    %2977 = vrot.lane.b32.xlu0 %v2924, 112
    %v2978 = vpop.permute.xlu0 %2977
    %2979 = vrot.lane.b32.xlu0 %v2925, 112
    %v2980 = vpop.permute.xlu0 %2979
    %2981 = vrot.lane.b32.xlu0 %v2926, 112
    %v2982 = vpop.permute.xlu0 %2981
    %2983 = vrot.lane.b32.xlu0 %v2927, 112
    %v2984 = vpop.permute.xlu0 %2983
    %2985 = vrot.lane.b32.xlu0 %v2928, 112
    %v2986 = vpop.permute.xlu0 %2985
    %2987 = vrot.lane.b32.xlu0 %v2929, 112
    %v2988 = vpop.permute.xlu0 %2987
    %2989 = vrot.lane.b32.xlu0 %v2930, 112
    %v2990 = vpop.permute.xlu0 %2989
    %vm2991 = vcmask 916480
    %v2992 = vsel %vm2991, %v2952, %v2954
    %v2993 = vsel %vm2991, %v2954, %v2956
    %v2994 = vsel %vm2991, %v2956, %v2958
    %v2995 = vsel %vm2991, %v2958, %v2960
    %v2996 = vsel %vm2991, %v2962, %v2964
    %v2997 = vsel %vm2991, %v2964, %v2966
    %v2998 = vsel %vm2991, %v2966, %v2968
    %v2999 = vsel %vm2991, %v2968, %v2970
    %v3000 = vsel %vm2991, %v2972, %v2974
    %v3001 = vsel %vm2991, %v2974, %v2976
    %v3002 = vsel %vm2991, %v2976, %v2978
    %v3003 = vsel %vm2991, %v2978, %v2980
    %v3004 = vsel %vm2991, %v2982, %v2984
    %v3005 = vsel %vm2991, %v2984, %v2986
    %v3006 = vsel %vm2991, %v2986, %v2988
    %v3007 = vsel %vm2991, %v2988, %v2990
    %v3028 = vadd.f32 %v2866, %v2992
    %v3029 = vadd.f32 %v2867, %v2993
    %v3030 = vadd.f32 %v2868, %v2994
    %v3031 = vadd.f32 %v2869, %v2995
    %v3032 = vadd.f32 %v2870, %v2960
    %v3033 = vadd.f32 %v2871, %v2996
    %v3034 = vadd.f32 %v2872, %v2997
    %v3035 = vadd.f32 %v2873, %v2998
    %v3036 = vadd.f32 %v2874, %v2999
    %v3037 = vadd.f32 %v2875, %v2970
    %v3038 = vadd.f32 %v2876, %v3000
    %v3039 = vadd.f32 %v2877, %v3001
    %v3040 = vadd.f32 %v2878, %v3002
    %v3041 = vadd.f32 %v2879, %v3003
    %v3042 = vadd.f32 %v2880, %v2980
    %v3043 = vadd.f32 %v2881, %v3004
    %v3044 = vadd.f32 %v2882, %v3005
    %v3045 = vadd.f32 %v2883, %v3006
    %v3046 = vadd.f32 %v2884, %v3007
    %v3047 = vadd.f32 %v2885, %v2990
    %s3048 = scalar_lea.vmem %s2, 544
    %v3049 = vld [vmem:[%s3048] sm:$0xff]
    %v3050 = vld [vmem:[%s3048 + $0x8] sm:$0xff]
    %v3051 = vld [vmem:[%s3048 + $0x10] sm:$0xff]
    %v3052 = vld [vmem:[%s3048 + $0x18] sm:$0xff]
    %3054 = vset.pattern.permute.xlu0 0
    %3055 = vperm.xlu0 %3054, %v3049
    %v3056 = vpop.permute.xlu0 %3055
    %3059 = vset.pattern.permute.xlu0 0
    %3060 = vperm.xlu0 %3059, %v3050
    %v3061 = vpop.permute.xlu0 %3060
    %3064 = vset.pattern.permute.xlu0 0
    %3065 = vperm.xlu0 %3064, %v3051
    %v3066 = vpop.permute.xlu0 %3065
    %3069 = vset.pattern.permute.xlu0 0
    %3070 = vperm.xlu0 %3069, %v3052
    %v3071 = vpop.permute.xlu0 %3070
    %v3073 = vmul.f32 %v3056, %v396
    %v3074 = vmul.f32 %v3056, %v397
    %v3075 = vmul.f32 %v3056, %v398
    %v3076 = vmul.f32 %v3056, %v399
    %v3077 = vmul.f32 %v3056, %v400
    %v3078 = vmul.f32 %v3061, %v401
    %v3079 = vmul.f32 %v3061, %v402
    %v3080 = vmul.f32 %v3061, %v403
    %v3081 = vmul.f32 %v3061, %v404
    %v3082 = vmul.f32 %v3061, %v405
    %v3083 = vmul.f32 %v3066, %v406
    %v3084 = vmul.f32 %v3066, %v407
    %v3085 = vmul.f32 %v3066, %v408
    %v3086 = vmul.f32 %v3066, %v409
    %v3087 = vmul.f32 %v3066, %v410
    %v3088 = vmul.f32 %v3071, %v411
    %v3089 = vmul.f32 %v3071, %v412
    %v3090 = vmul.f32 %v3071, %v413
    %v3091 = vmul.f32 %v3071, %v414
    %v3092 = vmul.f32 %v3071, %v415
    %3113 = vrot.lane.b32.xlu0 %v3073, 111
    %v3114 = vpop.permute.xlu0 %3113
    %3115 = vrot.lane.b32.xlu0 %v3074, 111
    %v3116 = vpop.permute.xlu0 %3115
    %3117 = vrot.lane.b32.xlu0 %v3075, 111
    %v3118 = vpop.permute.xlu0 %3117
    %3119 = vrot.lane.b32.xlu0 %v3076, 111
    %v3120 = vpop.permute.xlu0 %3119
    %3121 = vrot.lane.b32.xlu0 %v3077, 111
    %v3122 = vpop.permute.xlu0 %3121
    %3123 = vrot.lane.b32.xlu0 %v3078, 111
    %v3124 = vpop.permute.xlu0 %3123
    %3125 = vrot.lane.b32.xlu0 %v3079, 111
    %v3126 = vpop.permute.xlu0 %3125
    %3127 = vrot.lane.b32.xlu0 %v3080, 111
    %v3128 = vpop.permute.xlu0 %3127
    %3129 = vrot.lane.b32.xlu0 %v3081, 111
    %v3130 = vpop.permute.xlu0 %3129
    %3131 = vrot.lane.b32.xlu0 %v3082, 111
    %v3132 = vpop.permute.xlu0 %3131
    %3133 = vrot.lane.b32.xlu0 %v3083, 111
    %v3134 = vpop.permute.xlu0 %3133
    %3135 = vrot.lane.b32.xlu0 %v3084, 111
    %v3136 = vpop.permute.xlu0 %3135
    %3137 = vrot.lane.b32.xlu0 %v3085, 111
    %v3138 = vpop.permute.xlu0 %3137
    %3139 = vrot.lane.b32.xlu0 %v3086, 111
    %v3140 = vpop.permute.xlu0 %3139
    %3141 = vrot.lane.b32.xlu0 %v3087, 111
    %v3142 = vpop.permute.xlu0 %3141
    %3143 = vrot.lane.b32.xlu0 %v3088, 111
    %v3144 = vpop.permute.xlu0 %3143
    %3145 = vrot.lane.b32.xlu0 %v3089, 111
    %v3146 = vpop.permute.xlu0 %3145
    %3147 = vrot.lane.b32.xlu0 %v3090, 111
    %v3148 = vpop.permute.xlu0 %3147
    %3149 = vrot.lane.b32.xlu0 %v3091, 111
    %v3150 = vpop.permute.xlu0 %3149
    %3151 = vrot.lane.b32.xlu0 %v3092, 111
    %v3152 = vpop.permute.xlu0 %3151
    %vm3153 = vcmask 908288
    %v3154 = vsel %vm3153, %v3114, %v3116
    %v3155 = vsel %vm3153, %v3116, %v3118
    %v3156 = vsel %vm3153, %v3118, %v3120
    %v3157 = vsel %vm3153, %v3120, %v3122
    %v3158 = vsel %vm3153, %v3124, %v3126
    %v3159 = vsel %vm3153, %v3126, %v3128
    %v3160 = vsel %vm3153, %v3128, %v3130
    %v3161 = vsel %vm3153, %v3130, %v3132
    %v3162 = vsel %vm3153, %v3134, %v3136
    %v3163 = vsel %vm3153, %v3136, %v3138
    %v3164 = vsel %vm3153, %v3138, %v3140
    %v3165 = vsel %vm3153, %v3140, %v3142
    %v3166 = vsel %vm3153, %v3144, %v3146
    %v3167 = vsel %vm3153, %v3146, %v3148
    %v3168 = vsel %vm3153, %v3148, %v3150
    %v3169 = vsel %vm3153, %v3150, %v3152
    %v3190 = vadd.f32 %v3028, %v3154
    %v3191 = vadd.f32 %v3029, %v3155
    %v3192 = vadd.f32 %v3030, %v3156
    %v3193 = vadd.f32 %v3031, %v3157
    %v3194 = vadd.f32 %v3032, %v3122
    %v3195 = vadd.f32 %v3033, %v3158
    %v3196 = vadd.f32 %v3034, %v3159
    %v3197 = vadd.f32 %v3035, %v3160
    %v3198 = vadd.f32 %v3036, %v3161
    %v3199 = vadd.f32 %v3037, %v3132
    %v3200 = vadd.f32 %v3038, %v3162
    %v3201 = vadd.f32 %v3039, %v3163
    %v3202 = vadd.f32 %v3040, %v3164
    %v3203 = vadd.f32 %v3041, %v3165
    %v3204 = vadd.f32 %v3042, %v3142
    %v3205 = vadd.f32 %v3043, %v3166
    %v3206 = vadd.f32 %v3044, %v3167
    %v3207 = vadd.f32 %v3045, %v3168
    %v3208 = vadd.f32 %v3046, %v3169
    %v3209 = vadd.f32 %v3047, %v3152
    %s3210 = scalar_lea.vmem %s2, 576
    %v3211 = vld [vmem:[%s3210] sm:$0xff]
    %v3212 = vld [vmem:[%s3210 + $0x8] sm:$0xff]
    %v3213 = vld [vmem:[%s3210 + $0x10] sm:$0xff]
    %v3214 = vld [vmem:[%s3210 + $0x18] sm:$0xff]
    %3216 = vset.pattern.permute.xlu0 0
    %3217 = vperm.xlu0 %3216, %v3211
    %v3218 = vpop.permute.xlu0 %3217
    %3221 = vset.pattern.permute.xlu0 0
    %3222 = vperm.xlu0 %3221, %v3212
    %v3223 = vpop.permute.xlu0 %3222
    %3226 = vset.pattern.permute.xlu0 0
    %3227 = vperm.xlu0 %3226, %v3213
    %v3228 = vpop.permute.xlu0 %3227
    %3231 = vset.pattern.permute.xlu0 0
    %3232 = vperm.xlu0 %3231, %v3214
    %v3233 = vpop.permute.xlu0 %3232
    %v3235 = vmul.f32 %v3218, %v396
    %v3236 = vmul.f32 %v3218, %v397
    %v3237 = vmul.f32 %v3218, %v398
    %v3238 = vmul.f32 %v3218, %v399
    %v3239 = vmul.f32 %v3218, %v400
    %v3240 = vmul.f32 %v3223, %v401
    %v3241 = vmul.f32 %v3223, %v402
    %v3242 = vmul.f32 %v3223, %v403
    %v3243 = vmul.f32 %v3223, %v404
    %v3244 = vmul.f32 %v3223, %v405
    %v3245 = vmul.f32 %v3228, %v406
    %v3246 = vmul.f32 %v3228, %v407
    %v3247 = vmul.f32 %v3228, %v408
    %v3248 = vmul.f32 %v3228, %v409
    %v3249 = vmul.f32 %v3228, %v410
    %v3250 = vmul.f32 %v3233, %v411
    %v3251 = vmul.f32 %v3233, %v412
    %v3252 = vmul.f32 %v3233, %v413
    %v3253 = vmul.f32 %v3233, %v414
    %v3254 = vmul.f32 %v3233, %v415
    %3275 = vrot.lane.b32.xlu0 %v3235, 110
    %v3276 = vpop.permute.xlu0 %3275
    %3277 = vrot.lane.b32.xlu0 %v3236, 110
    %v3278 = vpop.permute.xlu0 %3277
    %3279 = vrot.lane.b32.xlu0 %v3237, 110
    %v3280 = vpop.permute.xlu0 %3279
    %3281 = vrot.lane.b32.xlu0 %v3238, 110
    %v3282 = vpop.permute.xlu0 %3281
    %3283 = vrot.lane.b32.xlu0 %v3239, 110
    %v3284 = vpop.permute.xlu0 %3283
    %3285 = vrot.lane.b32.xlu0 %v3240, 110
    %v3286 = vpop.permute.xlu0 %3285
    %3287 = vrot.lane.b32.xlu0 %v3241, 110
    %v3288 = vpop.permute.xlu0 %3287
    %3289 = vrot.lane.b32.xlu0 %v3242, 110
    %v3290 = vpop.permute.xlu0 %3289
    %3291 = vrot.lane.b32.xlu0 %v3243, 110
    %v3292 = vpop.permute.xlu0 %3291
    %3293 = vrot.lane.b32.xlu0 %v3244, 110
    %v3294 = vpop.permute.xlu0 %3293
    %3295 = vrot.lane.b32.xlu0 %v3245, 110
    %v3296 = vpop.permute.xlu0 %3295
    %3297 = vrot.lane.b32.xlu0 %v3246, 110
    %v3298 = vpop.permute.xlu0 %3297
    %3299 = vrot.lane.b32.xlu0 %v3247, 110
    %v3300 = vpop.permute.xlu0 %3299
    %3301 = vrot.lane.b32.xlu0 %v3248, 110
    %v3302 = vpop.permute.xlu0 %3301
    %3303 = vrot.lane.b32.xlu0 %v3249, 110
    %v3304 = vpop.permute.xlu0 %3303
    %3305 = vrot.lane.b32.xlu0 %v3250, 110
    %v3306 = vpop.permute.xlu0 %3305
    %3307 = vrot.lane.b32.xlu0 %v3251, 110
    %v3308 = vpop.permute.xlu0 %3307
    %3309 = vrot.lane.b32.xlu0 %v3252, 110
    %v3310 = vpop.permute.xlu0 %3309
    %3311 = vrot.lane.b32.xlu0 %v3253, 110
    %v3312 = vpop.permute.xlu0 %3311
    %3313 = vrot.lane.b32.xlu0 %v3254, 110
    %v3314 = vpop.permute.xlu0 %3313
    %vm3315 = vcmask 900096
    %v3316 = vsel %vm3315, %v3276, %v3278
    %v3317 = vsel %vm3315, %v3278, %v3280
    %v3318 = vsel %vm3315, %v3280, %v3282
    %v3319 = vsel %vm3315, %v3282, %v3284
    %v3320 = vsel %vm3315, %v3286, %v3288
    %v3321 = vsel %vm3315, %v3288, %v3290
    %v3322 = vsel %vm3315, %v3290, %v3292
    %v3323 = vsel %vm3315, %v3292, %v3294
    %v3324 = vsel %vm3315, %v3296, %v3298
    %v3325 = vsel %vm3315, %v3298, %v3300
    %v3326 = vsel %vm3315, %v3300, %v3302
    %v3327 = vsel %vm3315, %v3302, %v3304
    %v3328 = vsel %vm3315, %v3306, %v3308
    %v3329 = vsel %vm3315, %v3308, %v3310
    %v3330 = vsel %vm3315, %v3310, %v3312
    %v3331 = vsel %vm3315, %v3312, %v3314
    %v3352 = vadd.f32 %v3190, %v3316
    %v3353 = vadd.f32 %v3191, %v3317
    %v3354 = vadd.f32 %v3192, %v3318
    %v3355 = vadd.f32 %v3193, %v3319
    %v3356 = vadd.f32 %v3194, %v3284
    %v3357 = vadd.f32 %v3195, %v3320
    %v3358 = vadd.f32 %v3196, %v3321
    %v3359 = vadd.f32 %v3197, %v3322
    %v3360 = vadd.f32 %v3198, %v3323
    %v3361 = vadd.f32 %v3199, %v3294
    %v3362 = vadd.f32 %v3200, %v3324
    %v3363 = vadd.f32 %v3201, %v3325
    %v3364 = vadd.f32 %v3202, %v3326
    %v3365 = vadd.f32 %v3203, %v3327
    %v3366 = vadd.f32 %v3204, %v3304
    %v3367 = vadd.f32 %v3205, %v3328
    %v3368 = vadd.f32 %v3206, %v3329
    %v3369 = vadd.f32 %v3207, %v3330
    %v3370 = vadd.f32 %v3208, %v3331
    %v3371 = vadd.f32 %v3209, %v3314
    %s3372 = scalar_lea.vmem %s2, 608
    %v3373 = vld [vmem:[%s3372] sm:$0xff]
    %v3374 = vld [vmem:[%s3372 + $0x8] sm:$0xff]
    %v3375 = vld [vmem:[%s3372 + $0x10] sm:$0xff]
    %v3376 = vld [vmem:[%s3372 + $0x18] sm:$0xff]
    %3378 = vset.pattern.permute.xlu0 0
    %3379 = vperm.xlu0 %3378, %v3373
    %v3380 = vpop.permute.xlu0 %3379
    %3383 = vset.pattern.permute.xlu0 0
    %3384 = vperm.xlu0 %3383, %v3374
    %v3385 = vpop.permute.xlu0 %3384
    %3388 = vset.pattern.permute.xlu0 0
    %3389 = vperm.xlu0 %3388, %v3375
    %v3390 = vpop.permute.xlu0 %3389
    %3393 = vset.pattern.permute.xlu0 0
    %3394 = vperm.xlu0 %3393, %v3376
    %v3395 = vpop.permute.xlu0 %3394
    %v3397 = vmul.f32 %v3380, %v396
    %v3398 = vmul.f32 %v3380, %v397
    %v3399 = vmul.f32 %v3380, %v398
    %v3400 = vmul.f32 %v3380, %v399
    %v3401 = vmul.f32 %v3380, %v400
    %v3402 = vmul.f32 %v3385, %v401
    %v3403 = vmul.f32 %v3385, %v402
    %v3404 = vmul.f32 %v3385, %v403
    %v3405 = vmul.f32 %v3385, %v404
    %v3406 = vmul.f32 %v3385, %v405
    %v3407 = vmul.f32 %v3390, %v406
    %v3408 = vmul.f32 %v3390, %v407
    %v3409 = vmul.f32 %v3390, %v408
    %v3410 = vmul.f32 %v3390, %v409
    %v3411 = vmul.f32 %v3390, %v410
    %v3412 = vmul.f32 %v3395, %v411
    %v3413 = vmul.f32 %v3395, %v412
    %v3414 = vmul.f32 %v3395, %v413
    %v3415 = vmul.f32 %v3395, %v414
    %v3416 = vmul.f32 %v3395, %v415
    %3437 = vrot.lane.b32.xlu0 %v3397, 109
    %v3438 = vpop.permute.xlu0 %3437
    %3439 = vrot.lane.b32.xlu0 %v3398, 109
    %v3440 = vpop.permute.xlu0 %3439
    %3441 = vrot.lane.b32.xlu0 %v3399, 109
    %v3442 = vpop.permute.xlu0 %3441
    %3443 = vrot.lane.b32.xlu0 %v3400, 109
    %v3444 = vpop.permute.xlu0 %3443
    %3445 = vrot.lane.b32.xlu0 %v3401, 109
    %v3446 = vpop.permute.xlu0 %3445
    %3447 = vrot.lane.b32.xlu0 %v3402, 109
    %v3448 = vpop.permute.xlu0 %3447
    %3449 = vrot.lane.b32.xlu0 %v3403, 109
    %v3450 = vpop.permute.xlu0 %3449
    %3451 = vrot.lane.b32.xlu0 %v3404, 109
    %v3452 = vpop.permute.xlu0 %3451
    %3453 = vrot.lane.b32.xlu0 %v3405, 109
    %v3454 = vpop.permute.xlu0 %3453
    %3455 = vrot.lane.b32.xlu0 %v3406, 109
    %v3456 = vpop.permute.xlu0 %3455
    %3457 = vrot.lane.b32.xlu0 %v3407, 109
    %v3458 = vpop.permute.xlu0 %3457
    %3459 = vrot.lane.b32.xlu0 %v3408, 109
    %v3460 = vpop.permute.xlu0 %3459
    %3461 = vrot.lane.b32.xlu0 %v3409, 109
    %v3462 = vpop.permute.xlu0 %3461
    %3463 = vrot.lane.b32.xlu0 %v3410, 109
    %v3464 = vpop.permute.xlu0 %3463
    %3465 = vrot.lane.b32.xlu0 %v3411, 109
    %v3466 = vpop.permute.xlu0 %3465
    %3467 = vrot.lane.b32.xlu0 %v3412, 109
    %v3468 = vpop.permute.xlu0 %3467
    %3469 = vrot.lane.b32.xlu0 %v3413, 109
    %v3470 = vpop.permute.xlu0 %3469
    %3471 = vrot.lane.b32.xlu0 %v3414, 109
    %v3472 = vpop.permute.xlu0 %3471
    %3473 = vrot.lane.b32.xlu0 %v3415, 109
    %v3474 = vpop.permute.xlu0 %3473
    %3475 = vrot.lane.b32.xlu0 %v3416, 109
    %v3476 = vpop.permute.xlu0 %3475
    %vm3477 = vcmask 891904
    %v3478 = vsel %vm3477, %v3438, %v3440
    %v3479 = vsel %vm3477, %v3440, %v3442
    %v3480 = vsel %vm3477, %v3442, %v3444
    %v3481 = vsel %vm3477, %v3444, %v3446
    %v3482 = vsel %vm3477, %v3448, %v3450
    %v3483 = vsel %vm3477, %v3450, %v3452
    %v3484 = vsel %vm3477, %v3452, %v3454
    %v3485 = vsel %vm3477, %v3454, %v3456
    %v3486 = vsel %vm3477, %v3458, %v3460
    %v3487 = vsel %vm3477, %v3460, %v3462
    %v3488 = vsel %vm3477, %v3462, %v3464
    %v3489 = vsel %vm3477, %v3464, %v3466
    %v3490 = vsel %vm3477, %v3468, %v3470
    %v3491 = vsel %vm3477, %v3470, %v3472
    %v3492 = vsel %vm3477, %v3472, %v3474
    %v3493 = vsel %vm3477, %v3474, %v3476
    %v3514 = vadd.f32 %v3352, %v3478
    %v3515 = vadd.f32 %v3353, %v3479
    %v3516 = vadd.f32 %v3354, %v3480
    %v3517 = vadd.f32 %v3355, %v3481
    %v3518 = vadd.f32 %v3356, %v3446
    %v3519 = vadd.f32 %v3357, %v3482
    %v3520 = vadd.f32 %v3358, %v3483
    %v3521 = vadd.f32 %v3359, %v3484
    %v3522 = vadd.f32 %v3360, %v3485
    %v3523 = vadd.f32 %v3361, %v3456
    %v3524 = vadd.f32 %v3362, %v3486
    %v3525 = vadd.f32 %v3363, %v3487
    %v3526 = vadd.f32 %v3364, %v3488
    %v3527 = vadd.f32 %v3365, %v3489
    %v3528 = vadd.f32 %v3366, %v3466
    %v3529 = vadd.f32 %v3367, %v3490
    %v3530 = vadd.f32 %v3368, %v3491
    %v3531 = vadd.f32 %v3369, %v3492
    %v3532 = vadd.f32 %v3370, %v3493
    %v3533 = vadd.f32 %v3371, %v3476
    %s3534 = scalar_lea.vmem %s2, 640
    %v3535 = vld [vmem:[%s3534] sm:$0xff]
    %v3536 = vld [vmem:[%s3534 + $0x8] sm:$0xff]
    %v3537 = vld [vmem:[%s3534 + $0x10] sm:$0xff]
    %v3538 = vld [vmem:[%s3534 + $0x18] sm:$0xff]
    %3540 = vset.pattern.permute.xlu0 0
    %3541 = vperm.xlu0 %3540, %v3535
    %v3542 = vpop.permute.xlu0 %3541
    %3545 = vset.pattern.permute.xlu0 0
    %3546 = vperm.xlu0 %3545, %v3536
    %v3547 = vpop.permute.xlu0 %3546
    %3550 = vset.pattern.permute.xlu0 0
    %3551 = vperm.xlu0 %3550, %v3537
    %v3552 = vpop.permute.xlu0 %3551
    %3555 = vset.pattern.permute.xlu0 0
    %3556 = vperm.xlu0 %3555, %v3538
    %v3557 = vpop.permute.xlu0 %3556
    %v3559 = vmul.f32 %v3542, %v396
    %v3560 = vmul.f32 %v3542, %v397
    %v3561 = vmul.f32 %v3542, %v398
    %v3562 = vmul.f32 %v3542, %v399
    %v3563 = vmul.f32 %v3542, %v400
    %v3564 = vmul.f32 %v3547, %v401
    %v3565 = vmul.f32 %v3547, %v402
    %v3566 = vmul.f32 %v3547, %v403
    %v3567 = vmul.f32 %v3547, %v404
    %v3568 = vmul.f32 %v3547, %v405
    %v3569 = vmul.f32 %v3552, %v406
    %v3570 = vmul.f32 %v3552, %v407
    %v3571 = vmul.f32 %v3552, %v408
    %v3572 = vmul.f32 %v3552, %v409
    %v3573 = vmul.f32 %v3552, %v410
    %v3574 = vmul.f32 %v3557, %v411
    %v3575 = vmul.f32 %v3557, %v412
    %v3576 = vmul.f32 %v3557, %v413
    %v3577 = vmul.f32 %v3557, %v414
    %v3578 = vmul.f32 %v3557, %v415
    %3599 = vrot.lane.b32.xlu0 %v3559, 108
    %v3600 = vpop.permute.xlu0 %3599
    %3601 = vrot.lane.b32.xlu0 %v3560, 108
    %v3602 = vpop.permute.xlu0 %3601
    %3603 = vrot.lane.b32.xlu0 %v3561, 108
    %v3604 = vpop.permute.xlu0 %3603
    %3605 = vrot.lane.b32.xlu0 %v3562, 108
    %v3606 = vpop.permute.xlu0 %3605
    %3607 = vrot.lane.b32.xlu0 %v3563, 108
    %v3608 = vpop.permute.xlu0 %3607
    %3609 = vrot.lane.b32.xlu0 %v3564, 108
    %v3610 = vpop.permute.xlu0 %3609
    %3611 = vrot.lane.b32.xlu0 %v3565, 108
    %v3612 = vpop.permute.xlu0 %3611
    %3613 = vrot.lane.b32.xlu0 %v3566, 108
    %v3614 = vpop.permute.xlu0 %3613
    %3615 = vrot.lane.b32.xlu0 %v3567, 108
    %v3616 = vpop.permute.xlu0 %3615
    %3617 = vrot.lane.b32.xlu0 %v3568, 108
    %v3618 = vpop.permute.xlu0 %3617
    %3619 = vrot.lane.b32.xlu0 %v3569, 108
    %v3620 = vpop.permute.xlu0 %3619
    %3621 = vrot.lane.b32.xlu0 %v3570, 108
    %v3622 = vpop.permute.xlu0 %3621
    %3623 = vrot.lane.b32.xlu0 %v3571, 108
    %v3624 = vpop.permute.xlu0 %3623
    %3625 = vrot.lane.b32.xlu0 %v3572, 108
    %v3626 = vpop.permute.xlu0 %3625
    %3627 = vrot.lane.b32.xlu0 %v3573, 108
    %v3628 = vpop.permute.xlu0 %3627
    %3629 = vrot.lane.b32.xlu0 %v3574, 108
    %v3630 = vpop.permute.xlu0 %3629
    %3631 = vrot.lane.b32.xlu0 %v3575, 108
    %v3632 = vpop.permute.xlu0 %3631
    %3633 = vrot.lane.b32.xlu0 %v3576, 108
    %v3634 = vpop.permute.xlu0 %3633
    %3635 = vrot.lane.b32.xlu0 %v3577, 108
    %v3636 = vpop.permute.xlu0 %3635
    %3637 = vrot.lane.b32.xlu0 %v3578, 108
    %v3638 = vpop.permute.xlu0 %3637
    %vm3639 = vcmask 883712
    %v3640 = vsel %vm3639, %v3600, %v3602
    %v3641 = vsel %vm3639, %v3602, %v3604
    %v3642 = vsel %vm3639, %v3604, %v3606
    %v3643 = vsel %vm3639, %v3606, %v3608
    %v3644 = vsel %vm3639, %v3610, %v3612
    %v3645 = vsel %vm3639, %v3612, %v3614
    %v3646 = vsel %vm3639, %v3614, %v3616
    %v3647 = vsel %vm3639, %v3616, %v3618
    %v3648 = vsel %vm3639, %v3620, %v3622
    %v3649 = vsel %vm3639, %v3622, %v3624
    %v3650 = vsel %vm3639, %v3624, %v3626
    %v3651 = vsel %vm3639, %v3626, %v3628
    %v3652 = vsel %vm3639, %v3630, %v3632
    %v3653 = vsel %vm3639, %v3632, %v3634
    %v3654 = vsel %vm3639, %v3634, %v3636
    %v3655 = vsel %vm3639, %v3636, %v3638
    %v3676 = vadd.f32 %v3514, %v3640
    %v3677 = vadd.f32 %v3515, %v3641
    %v3678 = vadd.f32 %v3516, %v3642
    %v3679 = vadd.f32 %v3517, %v3643
    %v3680 = vadd.f32 %v3518, %v3608
    %v3681 = vadd.f32 %v3519, %v3644
    %v3682 = vadd.f32 %v3520, %v3645
    %v3683 = vadd.f32 %v3521, %v3646
    %v3684 = vadd.f32 %v3522, %v3647
    %v3685 = vadd.f32 %v3523, %v3618
    %v3686 = vadd.f32 %v3524, %v3648
    %v3687 = vadd.f32 %v3525, %v3649
    %v3688 = vadd.f32 %v3526, %v3650
    %v3689 = vadd.f32 %v3527, %v3651
    %v3690 = vadd.f32 %v3528, %v3628
    %v3691 = vadd.f32 %v3529, %v3652
    %v3692 = vadd.f32 %v3530, %v3653
    %v3693 = vadd.f32 %v3531, %v3654
    %v3694 = vadd.f32 %v3532, %v3655
    %v3695 = vadd.f32 %v3533, %v3638
    %s3696 = scalar_lea.vmem %s2, 672
    %v3697 = vld [vmem:[%s3696] sm:$0xff]
    %v3698 = vld [vmem:[%s3696 + $0x8] sm:$0xff]
    %v3699 = vld [vmem:[%s3696 + $0x10] sm:$0xff]
    %v3700 = vld [vmem:[%s3696 + $0x18] sm:$0xff]
    %3702 = vset.pattern.permute.xlu0 0
    %3703 = vperm.xlu0 %3702, %v3697
    %v3704 = vpop.permute.xlu0 %3703
    %3707 = vset.pattern.permute.xlu0 0
    %3708 = vperm.xlu0 %3707, %v3698
    %v3709 = vpop.permute.xlu0 %3708
    %3712 = vset.pattern.permute.xlu0 0
    %3713 = vperm.xlu0 %3712, %v3699
    %v3714 = vpop.permute.xlu0 %3713
    %3717 = vset.pattern.permute.xlu0 0
    %3718 = vperm.xlu0 %3717, %v3700
    %v3719 = vpop.permute.xlu0 %3718
    %v3721 = vmul.f32 %v3704, %v396
    %v3722 = vmul.f32 %v3704, %v397
    %v3723 = vmul.f32 %v3704, %v398
    %v3724 = vmul.f32 %v3704, %v399
    %v3725 = vmul.f32 %v3704, %v400
    %v3726 = vmul.f32 %v3709, %v401
    %v3727 = vmul.f32 %v3709, %v402
    %v3728 = vmul.f32 %v3709, %v403
    %v3729 = vmul.f32 %v3709, %v404
    %v3730 = vmul.f32 %v3709, %v405
    %v3731 = vmul.f32 %v3714, %v406
    %v3732 = vmul.f32 %v3714, %v407
    %v3733 = vmul.f32 %v3714, %v408
    %v3734 = vmul.f32 %v3714, %v409
    %v3735 = vmul.f32 %v3714, %v410
    %v3736 = vmul.f32 %v3719, %v411
    %v3737 = vmul.f32 %v3719, %v412
    %v3738 = vmul.f32 %v3719, %v413
    %v3739 = vmul.f32 %v3719, %v414
    %v3740 = vmul.f32 %v3719, %v415
    %3761 = vrot.lane.b32.xlu0 %v3721, 107
    %v3762 = vpop.permute.xlu0 %3761
    %3763 = vrot.lane.b32.xlu0 %v3722, 107
    %v3764 = vpop.permute.xlu0 %3763
    %3765 = vrot.lane.b32.xlu0 %v3723, 107
    %v3766 = vpop.permute.xlu0 %3765
    %3767 = vrot.lane.b32.xlu0 %v3724, 107
    %v3768 = vpop.permute.xlu0 %3767
    %3769 = vrot.lane.b32.xlu0 %v3725, 107
    %v3770 = vpop.permute.xlu0 %3769
    %3771 = vrot.lane.b32.xlu0 %v3726, 107
    %v3772 = vpop.permute.xlu0 %3771
    %3773 = vrot.lane.b32.xlu0 %v3727, 107
    %v3774 = vpop.permute.xlu0 %3773
    %3775 = vrot.lane.b32.xlu0 %v3728, 107
    %v3776 = vpop.permute.xlu0 %3775
    %3777 = vrot.lane.b32.xlu0 %v3729, 107
    %v3778 = vpop.permute.xlu0 %3777
    %3779 = vrot.lane.b32.xlu0 %v3730, 107
    %v3780 = vpop.permute.xlu0 %3779
    %3781 = vrot.lane.b32.xlu0 %v3731, 107
    %v3782 = vpop.permute.xlu0 %3781
    %3783 = vrot.lane.b32.xlu0 %v3732, 107
    %v3784 = vpop.permute.xlu0 %3783
    %3785 = vrot.lane.b32.xlu0 %v3733, 107
    %v3786 = vpop.permute.xlu0 %3785
    %3787 = vrot.lane.b32.xlu0 %v3734, 107
    %v3788 = vpop.permute.xlu0 %3787
    %3789 = vrot.lane.b32.xlu0 %v3735, 107
    %v3790 = vpop.permute.xlu0 %3789
    %3791 = vrot.lane.b32.xlu0 %v3736, 107
    %v3792 = vpop.permute.xlu0 %3791
    %3793 = vrot.lane.b32.xlu0 %v3737, 107
    %v3794 = vpop.permute.xlu0 %3793
    %3795 = vrot.lane.b32.xlu0 %v3738, 107
    %v3796 = vpop.permute.xlu0 %3795
    %3797 = vrot.lane.b32.xlu0 %v3739, 107
    %v3798 = vpop.permute.xlu0 %3797
    %3799 = vrot.lane.b32.xlu0 %v3740, 107
    %v3800 = vpop.permute.xlu0 %3799
    %vm3801 = vcmask 875520
    %v3802 = vsel %vm3801, %v3762, %v3764
    %v3803 = vsel %vm3801, %v3764, %v3766
    %v3804 = vsel %vm3801, %v3766, %v3768
    %v3805 = vsel %vm3801, %v3768, %v3770
    %v3806 = vsel %vm3801, %v3772, %v3774
    %v3807 = vsel %vm3801, %v3774, %v3776
    %v3808 = vsel %vm3801, %v3776, %v3778
    %v3809 = vsel %vm3801, %v3778, %v3780
    %v3810 = vsel %vm3801, %v3782, %v3784
    %v3811 = vsel %vm3801, %v3784, %v3786
    %v3812 = vsel %vm3801, %v3786, %v3788
    %v3813 = vsel %vm3801, %v3788, %v3790
    %v3814 = vsel %vm3801, %v3792, %v3794
    %v3815 = vsel %vm3801, %v3794, %v3796
    %v3816 = vsel %vm3801, %v3796, %v3798
    %v3817 = vsel %vm3801, %v3798, %v3800
    %v3838 = vadd.f32 %v3676, %v3802
    %v3839 = vadd.f32 %v3677, %v3803
    %v3840 = vadd.f32 %v3678, %v3804
    %v3841 = vadd.f32 %v3679, %v3805
    %v3842 = vadd.f32 %v3680, %v3770
    %v3843 = vadd.f32 %v3681, %v3806
    %v3844 = vadd.f32 %v3682, %v3807
    %v3845 = vadd.f32 %v3683, %v3808
    %v3846 = vadd.f32 %v3684, %v3809
    %v3847 = vadd.f32 %v3685, %v3780
    %v3848 = vadd.f32 %v3686, %v3810
    %v3849 = vadd.f32 %v3687, %v3811
    %v3850 = vadd.f32 %v3688, %v3812
    %v3851 = vadd.f32 %v3689, %v3813
    %v3852 = vadd.f32 %v3690, %v3790
    %v3853 = vadd.f32 %v3691, %v3814
    %v3854 = vadd.f32 %v3692, %v3815
    %v3855 = vadd.f32 %v3693, %v3816
    %v3856 = vadd.f32 %v3694, %v3817
    %v3857 = vadd.f32 %v3695, %v3800
    %s3858 = scalar_lea.vmem %s2, 704
    %v3859 = vld [vmem:[%s3858] sm:$0xff]
    %v3860 = vld [vmem:[%s3858 + $0x8] sm:$0xff]
    %v3861 = vld [vmem:[%s3858 + $0x10] sm:$0xff]
    %v3862 = vld [vmem:[%s3858 + $0x18] sm:$0xff]
    %3864 = vset.pattern.permute.xlu0 0
    %3865 = vperm.xlu0 %3864, %v3859
    %v3866 = vpop.permute.xlu0 %3865
    %3869 = vset.pattern.permute.xlu0 0
    %3870 = vperm.xlu0 %3869, %v3860
    %v3871 = vpop.permute.xlu0 %3870
    %3874 = vset.pattern.permute.xlu0 0
    %3875 = vperm.xlu0 %3874, %v3861
    %v3876 = vpop.permute.xlu0 %3875
    %3879 = vset.pattern.permute.xlu0 0
    %3880 = vperm.xlu0 %3879, %v3862
    %v3881 = vpop.permute.xlu0 %3880
    %v3883 = vmul.f32 %v3866, %v396
    %v3884 = vmul.f32 %v3866, %v397
    %v3885 = vmul.f32 %v3866, %v398
    %v3886 = vmul.f32 %v3866, %v399
    %v3887 = vmul.f32 %v3866, %v400
    %v3888 = vmul.f32 %v3871, %v401
    %v3889 = vmul.f32 %v3871, %v402
    %v3890 = vmul.f32 %v3871, %v403
    %v3891 = vmul.f32 %v3871, %v404
    %v3892 = vmul.f32 %v3871, %v405
    %v3893 = vmul.f32 %v3876, %v406
    %v3894 = vmul.f32 %v3876, %v407
    %v3895 = vmul.f32 %v3876, %v408
    %v3896 = vmul.f32 %v3876, %v409
    %v3897 = vmul.f32 %v3876, %v410
    %v3898 = vmul.f32 %v3881, %v411
    %v3899 = vmul.f32 %v3881, %v412
    %v3900 = vmul.f32 %v3881, %v413
    %v3901 = vmul.f32 %v3881, %v414
    %v3902 = vmul.f32 %v3881, %v415
    %3923 = vrot.lane.b32.xlu0 %v3883, 106
    %v3924 = vpop.permute.xlu0 %3923
    %3925 = vrot.lane.b32.xlu0 %v3884, 106
    %v3926 = vpop.permute.xlu0 %3925
    %3927 = vrot.lane.b32.xlu0 %v3885, 106
    %v3928 = vpop.permute.xlu0 %3927
    %3929 = vrot.lane.b32.xlu0 %v3886, 106
    %v3930 = vpop.permute.xlu0 %3929
    %3931 = vrot.lane.b32.xlu0 %v3887, 106
    %v3932 = vpop.permute.xlu0 %3931
    %3933 = vrot.lane.b32.xlu0 %v3888, 106
    %v3934 = vpop.permute.xlu0 %3933
    %3935 = vrot.lane.b32.xlu0 %v3889, 106
    %v3936 = vpop.permute.xlu0 %3935
    %3937 = vrot.lane.b32.xlu0 %v3890, 106
    %v3938 = vpop.permute.xlu0 %3937
    %3939 = vrot.lane.b32.xlu0 %v3891, 106
    %v3940 = vpop.permute.xlu0 %3939
    %3941 = vrot.lane.b32.xlu0 %v3892, 106
    %v3942 = vpop.permute.xlu0 %3941
    %3943 = vrot.lane.b32.xlu0 %v3893, 106
    %v3944 = vpop.permute.xlu0 %3943
    %3945 = vrot.lane.b32.xlu0 %v3894, 106
    %v3946 = vpop.permute.xlu0 %3945
    %3947 = vrot.lane.b32.xlu0 %v3895, 106
    %v3948 = vpop.permute.xlu0 %3947
    %3949 = vrot.lane.b32.xlu0 %v3896, 106
    %v3950 = vpop.permute.xlu0 %3949
    %3951 = vrot.lane.b32.xlu0 %v3897, 106
    %v3952 = vpop.permute.xlu0 %3951
    %3953 = vrot.lane.b32.xlu0 %v3898, 106
    %v3954 = vpop.permute.xlu0 %3953
    %3955 = vrot.lane.b32.xlu0 %v3899, 106
    %v3956 = vpop.permute.xlu0 %3955
    %3957 = vrot.lane.b32.xlu0 %v3900, 106
    %v3958 = vpop.permute.xlu0 %3957
    %3959 = vrot.lane.b32.xlu0 %v3901, 106
    %v3960 = vpop.permute.xlu0 %3959
    %3961 = vrot.lane.b32.xlu0 %v3902, 106
    %v3962 = vpop.permute.xlu0 %3961
    %vm3963 = vcmask 867328
    %v3964 = vsel %vm3963, %v3924, %v3926
    %v3965 = vsel %vm3963, %v3926, %v3928
    %v3966 = vsel %vm3963, %v3928, %v3930
    %v3967 = vsel %vm3963, %v3930, %v3932
    %v3968 = vsel %vm3963, %v3934, %v3936
    %v3969 = vsel %vm3963, %v3936, %v3938
    %v3970 = vsel %vm3963, %v3938, %v3940
    %v3971 = vsel %vm3963, %v3940, %v3942
    %v3972 = vsel %vm3963, %v3944, %v3946
    %v3973 = vsel %vm3963, %v3946, %v3948
    %v3974 = vsel %vm3963, %v3948, %v3950
    %v3975 = vsel %vm3963, %v3950, %v3952
    %v3976 = vsel %vm3963, %v3954, %v3956
    %v3977 = vsel %vm3963, %v3956, %v3958
    %v3978 = vsel %vm3963, %v3958, %v3960
    %v3979 = vsel %vm3963, %v3960, %v3962
    %v4000 = vadd.f32 %v3838, %v3964
    %v4001 = vadd.f32 %v3839, %v3965
    %v4002 = vadd.f32 %v3840, %v3966
    %v4003 = vadd.f32 %v3841, %v3967
    %v4004 = vadd.f32 %v3842, %v3932
    %v4005 = vadd.f32 %v3843, %v3968
    %v4006 = vadd.f32 %v3844, %v3969
    %v4007 = vadd.f32 %v3845, %v3970
    %v4008 = vadd.f32 %v3846, %v3971
    %v4009 = vadd.f32 %v3847, %v3942
    %v4010 = vadd.f32 %v3848, %v3972
    %v4011 = vadd.f32 %v3849, %v3973
    %v4012 = vadd.f32 %v3850, %v3974
    %v4013 = vadd.f32 %v3851, %v3975
    %v4014 = vadd.f32 %v3852, %v3952
    %v4015 = vadd.f32 %v3853, %v3976
    %v4016 = vadd.f32 %v3854, %v3977
    %v4017 = vadd.f32 %v3855, %v3978
    %v4018 = vadd.f32 %v3856, %v3979
    %v4019 = vadd.f32 %v3857, %v3962
    %s4020 = scalar_lea.vmem %s2, 736
    %v4021 = vld [vmem:[%s4020] sm:$0xff]
    %v4022 = vld [vmem:[%s4020 + $0x8] sm:$0xff]
    %v4023 = vld [vmem:[%s4020 + $0x10] sm:$0xff]
    %v4024 = vld [vmem:[%s4020 + $0x18] sm:$0xff]
    %4026 = vset.pattern.permute.xlu0 0
    %4027 = vperm.xlu0 %4026, %v4021
    %v4028 = vpop.permute.xlu0 %4027
    %4031 = vset.pattern.permute.xlu0 0
    %4032 = vperm.xlu0 %4031, %v4022
    %v4033 = vpop.permute.xlu0 %4032
    %4036 = vset.pattern.permute.xlu0 0
    %4037 = vperm.xlu0 %4036, %v4023
    %v4038 = vpop.permute.xlu0 %4037
    %4041 = vset.pattern.permute.xlu0 0
    %4042 = vperm.xlu0 %4041, %v4024
    %v4043 = vpop.permute.xlu0 %4042
    %v4045 = vmul.f32 %v4028, %v396
    %v4046 = vmul.f32 %v4028, %v397
    %v4047 = vmul.f32 %v4028, %v398
    %v4048 = vmul.f32 %v4028, %v399
    %v4049 = vmul.f32 %v4028, %v400
    %v4050 = vmul.f32 %v4033, %v401
    %v4051 = vmul.f32 %v4033, %v402
    %v4052 = vmul.f32 %v4033, %v403
    %v4053 = vmul.f32 %v4033, %v404
    %v4054 = vmul.f32 %v4033, %v405
    %v4055 = vmul.f32 %v4038, %v406
    %v4056 = vmul.f32 %v4038, %v407
    %v4057 = vmul.f32 %v4038, %v408
    %v4058 = vmul.f32 %v4038, %v409
    %v4059 = vmul.f32 %v4038, %v410
    %v4060 = vmul.f32 %v4043, %v411
    %v4061 = vmul.f32 %v4043, %v412
    %v4062 = vmul.f32 %v4043, %v413
    %v4063 = vmul.f32 %v4043, %v414
    %v4064 = vmul.f32 %v4043, %v415
    %4085 = vrot.lane.b32.xlu0 %v4045, 105
    %v4086 = vpop.permute.xlu0 %4085
    %4087 = vrot.lane.b32.xlu0 %v4046, 105
    %v4088 = vpop.permute.xlu0 %4087
    %4089 = vrot.lane.b32.xlu0 %v4047, 105
    %v4090 = vpop.permute.xlu0 %4089
    %4091 = vrot.lane.b32.xlu0 %v4048, 105
    %v4092 = vpop.permute.xlu0 %4091
    %4093 = vrot.lane.b32.xlu0 %v4049, 105
    %v4094 = vpop.permute.xlu0 %4093
    %4095 = vrot.lane.b32.xlu0 %v4050, 105
    %v4096 = vpop.permute.xlu0 %4095
    %4097 = vrot.lane.b32.xlu0 %v4051, 105
    %v4098 = vpop.permute.xlu0 %4097
    %4099 = vrot.lane.b32.xlu0 %v4052, 105
    %v4100 = vpop.permute.xlu0 %4099
    %4101 = vrot.lane.b32.xlu0 %v4053, 105
    %v4102 = vpop.permute.xlu0 %4101
    %4103 = vrot.lane.b32.xlu0 %v4054, 105
    %v4104 = vpop.permute.xlu0 %4103
    %4105 = vrot.lane.b32.xlu0 %v4055, 105
    %v4106 = vpop.permute.xlu0 %4105
    %4107 = vrot.lane.b32.xlu0 %v4056, 105
    %v4108 = vpop.permute.xlu0 %4107
    %4109 = vrot.lane.b32.xlu0 %v4057, 105
    %v4110 = vpop.permute.xlu0 %4109
    %4111 = vrot.lane.b32.xlu0 %v4058, 105
    %v4112 = vpop.permute.xlu0 %4111
    %4113 = vrot.lane.b32.xlu0 %v4059, 105
    %v4114 = vpop.permute.xlu0 %4113
    %4115 = vrot.lane.b32.xlu0 %v4060, 105
    %v4116 = vpop.permute.xlu0 %4115
    %4117 = vrot.lane.b32.xlu0 %v4061, 105
    %v4118 = vpop.permute.xlu0 %4117
    %4119 = vrot.lane.b32.xlu0 %v4062, 105
    %v4120 = vpop.permute.xlu0 %4119
    %4121 = vrot.lane.b32.xlu0 %v4063, 105
    %v4122 = vpop.permute.xlu0 %4121
    %4123 = vrot.lane.b32.xlu0 %v4064, 105
    %v4124 = vpop.permute.xlu0 %4123
    %vm4125 = vcmask 859136
    %v4126 = vsel %vm4125, %v4086, %v4088
    %v4127 = vsel %vm4125, %v4088, %v4090
    %v4128 = vsel %vm4125, %v4090, %v4092
    %v4129 = vsel %vm4125, %v4092, %v4094
    %v4130 = vsel %vm4125, %v4096, %v4098
    %v4131 = vsel %vm4125, %v4098, %v4100
    %v4132 = vsel %vm4125, %v4100, %v4102
    %v4133 = vsel %vm4125, %v4102, %v4104
    %v4134 = vsel %vm4125, %v4106, %v4108
    %v4135 = vsel %vm4125, %v4108, %v4110
    %v4136 = vsel %vm4125, %v4110, %v4112
    %v4137 = vsel %vm4125, %v4112, %v4114
    %v4138 = vsel %vm4125, %v4116, %v4118
    %v4139 = vsel %vm4125, %v4118, %v4120
    %v4140 = vsel %vm4125, %v4120, %v4122
    %v4141 = vsel %vm4125, %v4122, %v4124
    %v4162 = vadd.f32 %v4000, %v4126
    %v4163 = vadd.f32 %v4001, %v4127
    %v4164 = vadd.f32 %v4002, %v4128
    %v4165 = vadd.f32 %v4003, %v4129
    %v4166 = vadd.f32 %v4004, %v4094
    %v4167 = vadd.f32 %v4005, %v4130
    %v4168 = vadd.f32 %v4006, %v4131
    %v4169 = vadd.f32 %v4007, %v4132
    %v4170 = vadd.f32 %v4008, %v4133
    %v4171 = vadd.f32 %v4009, %v4104
    %v4172 = vadd.f32 %v4010, %v4134
    %v4173 = vadd.f32 %v4011, %v4135
    %v4174 = vadd.f32 %v4012, %v4136
    %v4175 = vadd.f32 %v4013, %v4137
    %v4176 = vadd.f32 %v4014, %v4114
    %v4177 = vadd.f32 %v4015, %v4138
    %v4178 = vadd.f32 %v4016, %v4139
    %v4179 = vadd.f32 %v4017, %v4140
    %v4180 = vadd.f32 %v4018, %v4141
    %v4181 = vadd.f32 %v4019, %v4124
    %s4182 = scalar_lea.vmem %s2, 768
    %v4183 = vld [vmem:[%s4182] sm:$0xff]
    %v4184 = vld [vmem:[%s4182 + $0x8] sm:$0xff]
    %v4185 = vld [vmem:[%s4182 + $0x10] sm:$0xff]
    %v4186 = vld [vmem:[%s4182 + $0x18] sm:$0xff]
    %4188 = vset.pattern.permute.xlu0 0
    %4189 = vperm.xlu0 %4188, %v4183
    %v4190 = vpop.permute.xlu0 %4189
    %4193 = vset.pattern.permute.xlu0 0
    %4194 = vperm.xlu0 %4193, %v4184
    %v4195 = vpop.permute.xlu0 %4194
    %4198 = vset.pattern.permute.xlu0 0
    %4199 = vperm.xlu0 %4198, %v4185
    %v4200 = vpop.permute.xlu0 %4199
    %4203 = vset.pattern.permute.xlu0 0
    %4204 = vperm.xlu0 %4203, %v4186
    %v4205 = vpop.permute.xlu0 %4204
    %v4207 = vmul.f32 %v4190, %v396
    %v4208 = vmul.f32 %v4190, %v397
    %v4209 = vmul.f32 %v4190, %v398
    %v4210 = vmul.f32 %v4190, %v399
    %v4211 = vmul.f32 %v4190, %v400
    %v4212 = vmul.f32 %v4195, %v401
    %v4213 = vmul.f32 %v4195, %v402
    %v4214 = vmul.f32 %v4195, %v403
    %v4215 = vmul.f32 %v4195, %v404
    %v4216 = vmul.f32 %v4195, %v405
    %v4217 = vmul.f32 %v4200, %v406
    %v4218 = vmul.f32 %v4200, %v407
    %v4219 = vmul.f32 %v4200, %v408
    %v4220 = vmul.f32 %v4200, %v409
    %v4221 = vmul.f32 %v4200, %v410
    %v4222 = vmul.f32 %v4205, %v411
    %v4223 = vmul.f32 %v4205, %v412
    %v4224 = vmul.f32 %v4205, %v413
    %v4225 = vmul.f32 %v4205, %v414
    %v4226 = vmul.f32 %v4205, %v415
    %4247 = vrot.lane.b32.xlu0 %v4207, 104
    %v4248 = vpop.permute.xlu0 %4247
    %4249 = vrot.lane.b32.xlu0 %v4208, 104
    %v4250 = vpop.permute.xlu0 %4249
    %4251 = vrot.lane.b32.xlu0 %v4209, 104
    %v4252 = vpop.permute.xlu0 %4251
    %4253 = vrot.lane.b32.xlu0 %v4210, 104
    %v4254 = vpop.permute.xlu0 %4253
    %4255 = vrot.lane.b32.xlu0 %v4211, 104
    %v4256 = vpop.permute.xlu0 %4255
    %4257 = vrot.lane.b32.xlu0 %v4212, 104
    %v4258 = vpop.permute.xlu0 %4257
    %4259 = vrot.lane.b32.xlu0 %v4213, 104
    %v4260 = vpop.permute.xlu0 %4259
    %4261 = vrot.lane.b32.xlu0 %v4214, 104
    %v4262 = vpop.permute.xlu0 %4261
    %4263 = vrot.lane.b32.xlu0 %v4215, 104
    %v4264 = vpop.permute.xlu0 %4263
    %4265 = vrot.lane.b32.xlu0 %v4216, 104
    %v4266 = vpop.permute.xlu0 %4265
    %4267 = vrot.lane.b32.xlu0 %v4217, 104
    %v4268 = vpop.permute.xlu0 %4267
    %4269 = vrot.lane.b32.xlu0 %v4218, 104
    %v4270 = vpop.permute.xlu0 %4269
    %4271 = vrot.lane.b32.xlu0 %v4219, 104
    %v4272 = vpop.permute.xlu0 %4271
    %4273 = vrot.lane.b32.xlu0 %v4220, 104
    %v4274 = vpop.permute.xlu0 %4273
    %4275 = vrot.lane.b32.xlu0 %v4221, 104
    %v4276 = vpop.permute.xlu0 %4275
    %4277 = vrot.lane.b32.xlu0 %v4222, 104
    %v4278 = vpop.permute.xlu0 %4277
    %4279 = vrot.lane.b32.xlu0 %v4223, 104
    %v4280 = vpop.permute.xlu0 %4279
    %4281 = vrot.lane.b32.xlu0 %v4224, 104
    %v4282 = vpop.permute.xlu0 %4281
    %4283 = vrot.lane.b32.xlu0 %v4225, 104
    %v4284 = vpop.permute.xlu0 %4283
    %4285 = vrot.lane.b32.xlu0 %v4226, 104
    %v4286 = vpop.permute.xlu0 %4285
    %vm4287 = vcmask 850944
    %v4288 = vsel %vm4287, %v4248, %v4250
    %v4289 = vsel %vm4287, %v4250, %v4252
    %v4290 = vsel %vm4287, %v4252, %v4254
    %v4291 = vsel %vm4287, %v4254, %v4256
    %v4292 = vsel %vm4287, %v4258, %v4260
    %v4293 = vsel %vm4287, %v4260, %v4262
    %v4294 = vsel %vm4287, %v4262, %v4264
    %v4295 = vsel %vm4287, %v4264, %v4266
    %v4296 = vsel %vm4287, %v4268, %v4270
    %v4297 = vsel %vm4287, %v4270, %v4272
    %v4298 = vsel %vm4287, %v4272, %v4274
    %v4299 = vsel %vm4287, %v4274, %v4276
    %v4300 = vsel %vm4287, %v4278, %v4280
    %v4301 = vsel %vm4287, %v4280, %v4282
    %v4302 = vsel %vm4287, %v4282, %v4284
    %v4303 = vsel %vm4287, %v4284, %v4286
    %v4324 = vadd.f32 %v4162, %v4288
    %v4325 = vadd.f32 %v4163, %v4289
    %v4326 = vadd.f32 %v4164, %v4290
    %v4327 = vadd.f32 %v4165, %v4291
    %v4328 = vadd.f32 %v4166, %v4256
    %v4329 = vadd.f32 %v4167, %v4292
    %v4330 = vadd.f32 %v4168, %v4293
    %v4331 = vadd.f32 %v4169, %v4294
    %v4332 = vadd.f32 %v4170, %v4295
    %v4333 = vadd.f32 %v4171, %v4266
    %v4334 = vadd.f32 %v4172, %v4296
    %v4335 = vadd.f32 %v4173, %v4297
    %v4336 = vadd.f32 %v4174, %v4298
    %v4337 = vadd.f32 %v4175, %v4299
    %v4338 = vadd.f32 %v4176, %v4276
    %v4339 = vadd.f32 %v4177, %v4300
    %v4340 = vadd.f32 %v4178, %v4301
    %v4341 = vadd.f32 %v4179, %v4302
    %v4342 = vadd.f32 %v4180, %v4303
    %v4343 = vadd.f32 %v4181, %v4286
    %s4344 = scalar_lea.vmem %s2, 800
    %v4345 = vld [vmem:[%s4344] sm:$0xff]
    %v4346 = vld [vmem:[%s4344 + $0x8] sm:$0xff]
    %v4347 = vld [vmem:[%s4344 + $0x10] sm:$0xff]
    %v4348 = vld [vmem:[%s4344 + $0x18] sm:$0xff]
    %4350 = vset.pattern.permute.xlu0 0
    %4351 = vperm.xlu0 %4350, %v4345
    %v4352 = vpop.permute.xlu0 %4351
    %4355 = vset.pattern.permute.xlu0 0
    %4356 = vperm.xlu0 %4355, %v4346
    %v4357 = vpop.permute.xlu0 %4356
    %4360 = vset.pattern.permute.xlu0 0
    %4361 = vperm.xlu0 %4360, %v4347
    %v4362 = vpop.permute.xlu0 %4361
    %4365 = vset.pattern.permute.xlu0 0
    %4366 = vperm.xlu0 %4365, %v4348
    %v4367 = vpop.permute.xlu0 %4366
    %v4369 = vmul.f32 %v4352, %v396
    %v4370 = vmul.f32 %v4352, %v397
    %v4371 = vmul.f32 %v4352, %v398
    %v4372 = vmul.f32 %v4352, %v399
    %v4373 = vmul.f32 %v4352, %v400
    %v4374 = vmul.f32 %v4357, %v401
    %v4375 = vmul.f32 %v4357, %v402
    %v4376 = vmul.f32 %v4357, %v403
    %v4377 = vmul.f32 %v4357, %v404
    %v4378 = vmul.f32 %v4357, %v405
    %v4379 = vmul.f32 %v4362, %v406
    %v4380 = vmul.f32 %v4362, %v407
    %v4381 = vmul.f32 %v4362, %v408
    %v4382 = vmul.f32 %v4362, %v409
    %v4383 = vmul.f32 %v4362, %v410
    %v4384 = vmul.f32 %v4367, %v411
    %v4385 = vmul.f32 %v4367, %v412
    %v4386 = vmul.f32 %v4367, %v413
    %v4387 = vmul.f32 %v4367, %v414
    %v4388 = vmul.f32 %v4367, %v415
    %4409 = vrot.lane.b32.xlu0 %v4369, 103
    %v4410 = vpop.permute.xlu0 %4409
    %4411 = vrot.lane.b32.xlu0 %v4370, 103
    %v4412 = vpop.permute.xlu0 %4411
    %4413 = vrot.lane.b32.xlu0 %v4371, 103
    %v4414 = vpop.permute.xlu0 %4413
    %4415 = vrot.lane.b32.xlu0 %v4372, 103
    %v4416 = vpop.permute.xlu0 %4415
    %4417 = vrot.lane.b32.xlu0 %v4373, 103
    %v4418 = vpop.permute.xlu0 %4417
    %4419 = vrot.lane.b32.xlu0 %v4374, 103
    %v4420 = vpop.permute.xlu0 %4419
    %4421 = vrot.lane.b32.xlu0 %v4375, 103
    %v4422 = vpop.permute.xlu0 %4421
    %4423 = vrot.lane.b32.xlu0 %v4376, 103
    %v4424 = vpop.permute.xlu0 %4423
    %4425 = vrot.lane.b32.xlu0 %v4377, 103
    %v4426 = vpop.permute.xlu0 %4425
    %4427 = vrot.lane.b32.xlu0 %v4378, 103
    %v4428 = vpop.permute.xlu0 %4427
    %4429 = vrot.lane.b32.xlu0 %v4379, 103
    %v4430 = vpop.permute.xlu0 %4429
    %4431 = vrot.lane.b32.xlu0 %v4380, 103
    %v4432 = vpop.permute.xlu0 %4431
    %4433 = vrot.lane.b32.xlu0 %v4381, 103
    %v4434 = vpop.permute.xlu0 %4433
    %4435 = vrot.lane.b32.xlu0 %v4382, 103
    %v4436 = vpop.permute.xlu0 %4435
    %4437 = vrot.lane.b32.xlu0 %v4383, 103
    %v4438 = vpop.permute.xlu0 %4437
    %4439 = vrot.lane.b32.xlu0 %v4384, 103
    %v4440 = vpop.permute.xlu0 %4439
    %4441 = vrot.lane.b32.xlu0 %v4385, 103
    %v4442 = vpop.permute.xlu0 %4441
    %4443 = vrot.lane.b32.xlu0 %v4386, 103
    %v4444 = vpop.permute.xlu0 %4443
    %4445 = vrot.lane.b32.xlu0 %v4387, 103
    %v4446 = vpop.permute.xlu0 %4445
    %4447 = vrot.lane.b32.xlu0 %v4388, 103
    %v4448 = vpop.permute.xlu0 %4447
    %vm4449 = vcmask 842752
    %v4450 = vsel %vm4449, %v4410, %v4412
    %v4451 = vsel %vm4449, %v4412, %v4414
    %v4452 = vsel %vm4449, %v4414, %v4416
    %v4453 = vsel %vm4449, %v4416, %v4418
    %v4454 = vsel %vm4449, %v4420, %v4422
    %v4455 = vsel %vm4449, %v4422, %v4424
    %v4456 = vsel %vm4449, %v4424, %v4426
    %v4457 = vsel %vm4449, %v4426, %v4428
    %v4458 = vsel %vm4449, %v4430, %v4432
    %v4459 = vsel %vm4449, %v4432, %v4434
    %v4460 = vsel %vm4449, %v4434, %v4436
    %v4461 = vsel %vm4449, %v4436, %v4438
    %v4462 = vsel %vm4449, %v4440, %v4442
    %v4463 = vsel %vm4449, %v4442, %v4444
    %v4464 = vsel %vm4449, %v4444, %v4446
    %v4465 = vsel %vm4449, %v4446, %v4448
    %v4486 = vadd.f32 %v4324, %v4450
    %v4487 = vadd.f32 %v4325, %v4451
    %v4488 = vadd.f32 %v4326, %v4452
    %v4489 = vadd.f32 %v4327, %v4453
    %v4490 = vadd.f32 %v4328, %v4418
    %v4491 = vadd.f32 %v4329, %v4454
    %v4492 = vadd.f32 %v4330, %v4455
    %v4493 = vadd.f32 %v4331, %v4456
    %v4494 = vadd.f32 %v4332, %v4457
    %v4495 = vadd.f32 %v4333, %v4428
    %v4496 = vadd.f32 %v4334, %v4458
    %v4497 = vadd.f32 %v4335, %v4459
    %v4498 = vadd.f32 %v4336, %v4460
    %v4499 = vadd.f32 %v4337, %v4461
    %v4500 = vadd.f32 %v4338, %v4438
    %v4501 = vadd.f32 %v4339, %v4462
    %v4502 = vadd.f32 %v4340, %v4463
    %v4503 = vadd.f32 %v4341, %v4464
    %v4504 = vadd.f32 %v4342, %v4465
    %v4505 = vadd.f32 %v4343, %v4448
    %s4506 = scalar_lea.vmem %s2, 832
    %v4507 = vld [vmem:[%s4506] sm:$0xff]
    %v4508 = vld [vmem:[%s4506 + $0x8] sm:$0xff]
    %v4509 = vld [vmem:[%s4506 + $0x10] sm:$0xff]
    %v4510 = vld [vmem:[%s4506 + $0x18] sm:$0xff]
    %4512 = vset.pattern.permute.xlu0 0
    %4513 = vperm.xlu0 %4512, %v4507
    %v4514 = vpop.permute.xlu0 %4513
    %4517 = vset.pattern.permute.xlu0 0
    %4518 = vperm.xlu0 %4517, %v4508
    %v4519 = vpop.permute.xlu0 %4518
    %4522 = vset.pattern.permute.xlu0 0
    %4523 = vperm.xlu0 %4522, %v4509
    %v4524 = vpop.permute.xlu0 %4523
    %4527 = vset.pattern.permute.xlu0 0
    %4528 = vperm.xlu0 %4527, %v4510
    %v4529 = vpop.permute.xlu0 %4528
    %v4531 = vmul.f32 %v4514, %v396
    %v4532 = vmul.f32 %v4514, %v397
    %v4533 = vmul.f32 %v4514, %v398
    %v4534 = vmul.f32 %v4514, %v399
    %v4535 = vmul.f32 %v4514, %v400
    %v4536 = vmul.f32 %v4519, %v401
    %v4537 = vmul.f32 %v4519, %v402
    %v4538 = vmul.f32 %v4519, %v403
    %v4539 = vmul.f32 %v4519, %v404
    %v4540 = vmul.f32 %v4519, %v405
    %v4541 = vmul.f32 %v4524, %v406
    %v4542 = vmul.f32 %v4524, %v407
    %v4543 = vmul.f32 %v4524, %v408
    %v4544 = vmul.f32 %v4524, %v409
    %v4545 = vmul.f32 %v4524, %v410
    %v4546 = vmul.f32 %v4529, %v411
    %v4547 = vmul.f32 %v4529, %v412
    %v4548 = vmul.f32 %v4529, %v413
    %v4549 = vmul.f32 %v4529, %v414
    %v4550 = vmul.f32 %v4529, %v415
    %4571 = vrot.lane.b32.xlu0 %v4531, 102
    %v4572 = vpop.permute.xlu0 %4571
    %4573 = vrot.lane.b32.xlu0 %v4532, 102
    %v4574 = vpop.permute.xlu0 %4573
    %4575 = vrot.lane.b32.xlu0 %v4533, 102
    %v4576 = vpop.permute.xlu0 %4575
    %4577 = vrot.lane.b32.xlu0 %v4534, 102
    %v4578 = vpop.permute.xlu0 %4577
    %4579 = vrot.lane.b32.xlu0 %v4535, 102
    %v4580 = vpop.permute.xlu0 %4579
    %4581 = vrot.lane.b32.xlu0 %v4536, 102
    %v4582 = vpop.permute.xlu0 %4581
    %4583 = vrot.lane.b32.xlu0 %v4537, 102
    %v4584 = vpop.permute.xlu0 %4583
    %4585 = vrot.lane.b32.xlu0 %v4538, 102
    %v4586 = vpop.permute.xlu0 %4585
    %4587 = vrot.lane.b32.xlu0 %v4539, 102
    %v4588 = vpop.permute.xlu0 %4587
    %4589 = vrot.lane.b32.xlu0 %v4540, 102
    %v4590 = vpop.permute.xlu0 %4589
    %4591 = vrot.lane.b32.xlu0 %v4541, 102
    %v4592 = vpop.permute.xlu0 %4591
    %4593 = vrot.lane.b32.xlu0 %v4542, 102
    %v4594 = vpop.permute.xlu0 %4593
    %4595 = vrot.lane.b32.xlu0 %v4543, 102
    %v4596 = vpop.permute.xlu0 %4595
    %4597 = vrot.lane.b32.xlu0 %v4544, 102
    %v4598 = vpop.permute.xlu0 %4597
    %4599 = vrot.lane.b32.xlu0 %v4545, 102
    %v4600 = vpop.permute.xlu0 %4599
    %4601 = vrot.lane.b32.xlu0 %v4546, 102
    %v4602 = vpop.permute.xlu0 %4601
    %4603 = vrot.lane.b32.xlu0 %v4547, 102
    %v4604 = vpop.permute.xlu0 %4603
    %4605 = vrot.lane.b32.xlu0 %v4548, 102
    %v4606 = vpop.permute.xlu0 %4605
    %4607 = vrot.lane.b32.xlu0 %v4549, 102
    %v4608 = vpop.permute.xlu0 %4607
    %4609 = vrot.lane.b32.xlu0 %v4550, 102
    %v4610 = vpop.permute.xlu0 %4609
    %vm4611 = vcmask 834560
    %v4612 = vsel %vm4611, %v4572, %v4574
    %v4613 = vsel %vm4611, %v4574, %v4576
    %v4614 = vsel %vm4611, %v4576, %v4578
    %v4615 = vsel %vm4611, %v4578, %v4580
    %v4616 = vsel %vm4611, %v4582, %v4584
    %v4617 = vsel %vm4611, %v4584, %v4586
    %v4618 = vsel %vm4611, %v4586, %v4588
    %v4619 = vsel %vm4611, %v4588, %v4590
    %v4620 = vsel %vm4611, %v4592, %v4594
    %v4621 = vsel %vm4611, %v4594, %v4596
    %v4622 = vsel %vm4611, %v4596, %v4598
    %v4623 = vsel %vm4611, %v4598, %v4600
    %v4624 = vsel %vm4611, %v4602, %v4604
    %v4625 = vsel %vm4611, %v4604, %v4606
    %v4626 = vsel %vm4611, %v4606, %v4608
    %v4627 = vsel %vm4611, %v4608, %v4610
    %v4648 = vadd.f32 %v4486, %v4612
    %v4649 = vadd.f32 %v4487, %v4613
    %v4650 = vadd.f32 %v4488, %v4614
    %v4651 = vadd.f32 %v4489, %v4615
    %v4652 = vadd.f32 %v4490, %v4580
    %v4653 = vadd.f32 %v4491, %v4616
    %v4654 = vadd.f32 %v4492, %v4617
    %v4655 = vadd.f32 %v4493, %v4618
    %v4656 = vadd.f32 %v4494, %v4619
    %v4657 = vadd.f32 %v4495, %v4590
    %v4658 = vadd.f32 %v4496, %v4620
    %v4659 = vadd.f32 %v4497, %v4621
    %v4660 = vadd.f32 %v4498, %v4622
    %v4661 = vadd.f32 %v4499, %v4623
    %v4662 = vadd.f32 %v4500, %v4600
    %v4663 = vadd.f32 %v4501, %v4624
    %v4664 = vadd.f32 %v4502, %v4625
    %v4665 = vadd.f32 %v4503, %v4626
    %v4666 = vadd.f32 %v4504, %v4627
    %v4667 = vadd.f32 %v4505, %v4610
    %s4668 = scalar_lea.vmem %s2, 864
    %v4669 = vld [vmem:[%s4668] sm:$0xff]
    %v4670 = vld [vmem:[%s4668 + $0x8] sm:$0xff]
    %v4671 = vld [vmem:[%s4668 + $0x10] sm:$0xff]
    %v4672 = vld [vmem:[%s4668 + $0x18] sm:$0xff]
    %4674 = vset.pattern.permute.xlu0 0
    %4675 = vperm.xlu0 %4674, %v4669
    %v4676 = vpop.permute.xlu0 %4675
    %4679 = vset.pattern.permute.xlu0 0
    %4680 = vperm.xlu0 %4679, %v4670
    %v4681 = vpop.permute.xlu0 %4680
    %4684 = vset.pattern.permute.xlu0 0
    %4685 = vperm.xlu0 %4684, %v4671
    %v4686 = vpop.permute.xlu0 %4685
    %4689 = vset.pattern.permute.xlu0 0
    %4690 = vperm.xlu0 %4689, %v4672
    %v4691 = vpop.permute.xlu0 %4690
    %v4693 = vmul.f32 %v4676, %v396
    %v4694 = vmul.f32 %v4676, %v397
    %v4695 = vmul.f32 %v4676, %v398
    %v4696 = vmul.f32 %v4676, %v399
    %v4697 = vmul.f32 %v4676, %v400
    %v4698 = vmul.f32 %v4681, %v401
    %v4699 = vmul.f32 %v4681, %v402
    %v4700 = vmul.f32 %v4681, %v403
    %v4701 = vmul.f32 %v4681, %v404
    %v4702 = vmul.f32 %v4681, %v405
    %v4703 = vmul.f32 %v4686, %v406
    %v4704 = vmul.f32 %v4686, %v407
    %v4705 = vmul.f32 %v4686, %v408
    %v4706 = vmul.f32 %v4686, %v409
    %v4707 = vmul.f32 %v4686, %v410
    %v4708 = vmul.f32 %v4691, %v411
    %v4709 = vmul.f32 %v4691, %v412
    %v4710 = vmul.f32 %v4691, %v413
    %v4711 = vmul.f32 %v4691, %v414
    %v4712 = vmul.f32 %v4691, %v415
    %4733 = vrot.lane.b32.xlu0 %v4693, 101
    %v4734 = vpop.permute.xlu0 %4733
    %4735 = vrot.lane.b32.xlu0 %v4694, 101
    %v4736 = vpop.permute.xlu0 %4735
    %4737 = vrot.lane.b32.xlu0 %v4695, 101
    %v4738 = vpop.permute.xlu0 %4737
    %4739 = vrot.lane.b32.xlu0 %v4696, 101
    %v4740 = vpop.permute.xlu0 %4739
    %4741 = vrot.lane.b32.xlu0 %v4697, 101
    %v4742 = vpop.permute.xlu0 %4741
    %4743 = vrot.lane.b32.xlu0 %v4698, 101
    %v4744 = vpop.permute.xlu0 %4743
    %4745 = vrot.lane.b32.xlu0 %v4699, 101
    %v4746 = vpop.permute.xlu0 %4745
    %4747 = vrot.lane.b32.xlu0 %v4700, 101
    %v4748 = vpop.permute.xlu0 %4747
    %4749 = vrot.lane.b32.xlu0 %v4701, 101
    %v4750 = vpop.permute.xlu0 %4749
    %4751 = vrot.lane.b32.xlu0 %v4702, 101
    %v4752 = vpop.permute.xlu0 %4751
    %4753 = vrot.lane.b32.xlu0 %v4703, 101
    %v4754 = vpop.permute.xlu0 %4753
    %4755 = vrot.lane.b32.xlu0 %v4704, 101
    %v4756 = vpop.permute.xlu0 %4755
    %4757 = vrot.lane.b32.xlu0 %v4705, 101
    %v4758 = vpop.permute.xlu0 %4757
    %4759 = vrot.lane.b32.xlu0 %v4706, 101
    %v4760 = vpop.permute.xlu0 %4759
    %4761 = vrot.lane.b32.xlu0 %v4707, 101
    %v4762 = vpop.permute.xlu0 %4761
    %4763 = vrot.lane.b32.xlu0 %v4708, 101
    %v4764 = vpop.permute.xlu0 %4763
    %4765 = vrot.lane.b32.xlu0 %v4709, 101
    %v4766 = vpop.permute.xlu0 %4765
    %4767 = vrot.lane.b32.xlu0 %v4710, 101
    %v4768 = vpop.permute.xlu0 %4767
    %4769 = vrot.lane.b32.xlu0 %v4711, 101
    %v4770 = vpop.permute.xlu0 %4769
    %4771 = vrot.lane.b32.xlu0 %v4712, 101
    %v4772 = vpop.permute.xlu0 %4771
    %vm4773 = vcmask 826368
    %v4774 = vsel %vm4773, %v4734, %v4736
    %v4775 = vsel %vm4773, %v4736, %v4738
    %v4776 = vsel %vm4773, %v4738, %v4740
    %v4777 = vsel %vm4773, %v4740, %v4742
    %v4778 = vsel %vm4773, %v4744, %v4746
    %v4779 = vsel %vm4773, %v4746, %v4748
    %v4780 = vsel %vm4773, %v4748, %v4750
    %v4781 = vsel %vm4773, %v4750, %v4752
    %v4782 = vsel %vm4773, %v4754, %v4756
    %v4783 = vsel %vm4773, %v4756, %v4758
    %v4784 = vsel %vm4773, %v4758, %v4760
    %v4785 = vsel %vm4773, %v4760, %v4762
    %v4786 = vsel %vm4773, %v4764, %v4766
    %v4787 = vsel %vm4773, %v4766, %v4768
    %v4788 = vsel %vm4773, %v4768, %v4770
    %v4789 = vsel %vm4773, %v4770, %v4772
    %v4810 = vadd.f32 %v4648, %v4774
    %v4811 = vadd.f32 %v4649, %v4775
    %v4812 = vadd.f32 %v4650, %v4776
    %v4813 = vadd.f32 %v4651, %v4777
    %v4814 = vadd.f32 %v4652, %v4742
    %v4815 = vadd.f32 %v4653, %v4778
    %v4816 = vadd.f32 %v4654, %v4779
    %v4817 = vadd.f32 %v4655, %v4780
    %v4818 = vadd.f32 %v4656, %v4781
    %v4819 = vadd.f32 %v4657, %v4752
    %v4820 = vadd.f32 %v4658, %v4782
    %v4821 = vadd.f32 %v4659, %v4783
    %v4822 = vadd.f32 %v4660, %v4784
    %v4823 = vadd.f32 %v4661, %v4785
    %v4824 = vadd.f32 %v4662, %v4762
    %v4825 = vadd.f32 %v4663, %v4786
    %v4826 = vadd.f32 %v4664, %v4787
    %v4827 = vadd.f32 %v4665, %v4788
    %v4828 = vadd.f32 %v4666, %v4789
    %v4829 = vadd.f32 %v4667, %v4772
    %s4830 = scalar_lea.vmem %s2, 896
    %v4831 = vld [vmem:[%s4830] sm:$0xff]
    %v4832 = vld [vmem:[%s4830 + $0x8] sm:$0xff]
    %v4833 = vld [vmem:[%s4830 + $0x10] sm:$0xff]
    %v4834 = vld [vmem:[%s4830 + $0x18] sm:$0xff]
    %4836 = vset.pattern.permute.xlu0 0
    %4837 = vperm.xlu0 %4836, %v4831
    %v4838 = vpop.permute.xlu0 %4837
    %4841 = vset.pattern.permute.xlu0 0
    %4842 = vperm.xlu0 %4841, %v4832
    %v4843 = vpop.permute.xlu0 %4842
    %4846 = vset.pattern.permute.xlu0 0
    %4847 = vperm.xlu0 %4846, %v4833
    %v4848 = vpop.permute.xlu0 %4847
    %4851 = vset.pattern.permute.xlu0 0
    %4852 = vperm.xlu0 %4851, %v4834
    %v4853 = vpop.permute.xlu0 %4852
    %v4855 = vmul.f32 %v4838, %v396
    %v4856 = vmul.f32 %v4838, %v397
    %v4857 = vmul.f32 %v4838, %v398
    %v4858 = vmul.f32 %v4838, %v399
    %v4859 = vmul.f32 %v4838, %v400
    %v4860 = vmul.f32 %v4843, %v401
    %v4861 = vmul.f32 %v4843, %v402
    %v4862 = vmul.f32 %v4843, %v403
    %v4863 = vmul.f32 %v4843, %v404
    %v4864 = vmul.f32 %v4843, %v405
    %v4865 = vmul.f32 %v4848, %v406
    %v4866 = vmul.f32 %v4848, %v407
    %v4867 = vmul.f32 %v4848, %v408
    %v4868 = vmul.f32 %v4848, %v409
    %v4869 = vmul.f32 %v4848, %v410
    %v4870 = vmul.f32 %v4853, %v411
    %v4871 = vmul.f32 %v4853, %v412
    %v4872 = vmul.f32 %v4853, %v413
    %v4873 = vmul.f32 %v4853, %v414
    %v4874 = vmul.f32 %v4853, %v415
    %4895 = vrot.lane.b32.xlu0 %v4855, 100
    %v4896 = vpop.permute.xlu0 %4895
    %4897 = vrot.lane.b32.xlu0 %v4856, 100
    %v4898 = vpop.permute.xlu0 %4897
    %4899 = vrot.lane.b32.xlu0 %v4857, 100
    %v4900 = vpop.permute.xlu0 %4899
    %4901 = vrot.lane.b32.xlu0 %v4858, 100
    %v4902 = vpop.permute.xlu0 %4901
    %4903 = vrot.lane.b32.xlu0 %v4859, 100
    %v4904 = vpop.permute.xlu0 %4903
    %4905 = vrot.lane.b32.xlu0 %v4860, 100
    %v4906 = vpop.permute.xlu0 %4905
    %4907 = vrot.lane.b32.xlu0 %v4861, 100
    %v4908 = vpop.permute.xlu0 %4907
    %4909 = vrot.lane.b32.xlu0 %v4862, 100
    %v4910 = vpop.permute.xlu0 %4909
    %4911 = vrot.lane.b32.xlu0 %v4863, 100
    %v4912 = vpop.permute.xlu0 %4911
    %4913 = vrot.lane.b32.xlu0 %v4864, 100
    %v4914 = vpop.permute.xlu0 %4913
    %4915 = vrot.lane.b32.xlu0 %v4865, 100
    %v4916 = vpop.permute.xlu0 %4915
    %4917 = vrot.lane.b32.xlu0 %v4866, 100
    %v4918 = vpop.permute.xlu0 %4917
    %4919 = vrot.lane.b32.xlu0 %v4867, 100
    %v4920 = vpop.permute.xlu0 %4919
    %4921 = vrot.lane.b32.xlu0 %v4868, 100
    %v4922 = vpop.permute.xlu0 %4921
    %4923 = vrot.lane.b32.xlu0 %v4869, 100
    %v4924 = vpop.permute.xlu0 %4923
    %4925 = vrot.lane.b32.xlu0 %v4870, 100
    %v4926 = vpop.permute.xlu0 %4925
    %4927 = vrot.lane.b32.xlu0 %v4871, 100
    %v4928 = vpop.permute.xlu0 %4927
    %4929 = vrot.lane.b32.xlu0 %v4872, 100
    %v4930 = vpop.permute.xlu0 %4929
    %4931 = vrot.lane.b32.xlu0 %v4873, 100
    %v4932 = vpop.permute.xlu0 %4931
    %4933 = vrot.lane.b32.xlu0 %v4874, 100
    %v4934 = vpop.permute.xlu0 %4933
    %vm4935 = vcmask 818176
    %v4936 = vsel %vm4935, %v4896, %v4898
    %v4937 = vsel %vm4935, %v4898, %v4900
    %v4938 = vsel %vm4935, %v4900, %v4902
    %v4939 = vsel %vm4935, %v4902, %v4904
    %v4940 = vsel %vm4935, %v4906, %v4908
    %v4941 = vsel %vm4935, %v4908, %v4910
    %v4942 = vsel %vm4935, %v4910, %v4912
    %v4943 = vsel %vm4935, %v4912, %v4914
    %v4944 = vsel %vm4935, %v4916, %v4918
    %v4945 = vsel %vm4935, %v4918, %v4920
    %v4946 = vsel %vm4935, %v4920, %v4922
    %v4947 = vsel %vm4935, %v4922, %v4924
    %v4948 = vsel %vm4935, %v4926, %v4928
    %v4949 = vsel %vm4935, %v4928, %v4930
    %v4950 = vsel %vm4935, %v4930, %v4932
    %v4951 = vsel %vm4935, %v4932, %v4934
    %v4972 = vadd.f32 %v4810, %v4936
    %v4973 = vadd.f32 %v4811, %v4937
    %v4974 = vadd.f32 %v4812, %v4938
    %v4975 = vadd.f32 %v4813, %v4939
    %v4976 = vadd.f32 %v4814, %v4904
    %v4977 = vadd.f32 %v4815, %v4940
    %v4978 = vadd.f32 %v4816, %v4941
    %v4979 = vadd.f32 %v4817, %v4942
    %v4980 = vadd.f32 %v4818, %v4943
    %v4981 = vadd.f32 %v4819, %v4914
    %v4982 = vadd.f32 %v4820, %v4944
    %v4983 = vadd.f32 %v4821, %v4945
    %v4984 = vadd.f32 %v4822, %v4946
    %v4985 = vadd.f32 %v4823, %v4947
    %v4986 = vadd.f32 %v4824, %v4924
    %v4987 = vadd.f32 %v4825, %v4948
    %v4988 = vadd.f32 %v4826, %v4949
    %v4989 = vadd.f32 %v4827, %v4950
    %v4990 = vadd.f32 %v4828, %v4951
    %v4991 = vadd.f32 %v4829, %v4934
    %s4992 = scalar_lea.vmem %s2, 928
    %v4993 = vld [vmem:[%s4992] sm:$0xff]
    %v4994 = vld [vmem:[%s4992 + $0x8] sm:$0xff]
    %v4995 = vld [vmem:[%s4992 + $0x10] sm:$0xff]
    %v4996 = vld [vmem:[%s4992 + $0x18] sm:$0xff]
    %4998 = vset.pattern.permute.xlu0 0
    %4999 = vperm.xlu0 %4998, %v4993
    %v5000 = vpop.permute.xlu0 %4999
    %5003 = vset.pattern.permute.xlu0 0
    %5004 = vperm.xlu0 %5003, %v4994
    %v5005 = vpop.permute.xlu0 %5004
    %5008 = vset.pattern.permute.xlu0 0
    %5009 = vperm.xlu0 %5008, %v4995
    %v5010 = vpop.permute.xlu0 %5009
    %5013 = vset.pattern.permute.xlu0 0
    %5014 = vperm.xlu0 %5013, %v4996
    %v5015 = vpop.permute.xlu0 %5014
    %v5017 = vmul.f32 %v5000, %v396
    %v5018 = vmul.f32 %v5000, %v397
    %v5019 = vmul.f32 %v5000, %v398
    %v5020 = vmul.f32 %v5000, %v399
    %v5021 = vmul.f32 %v5000, %v400
    %v5022 = vmul.f32 %v5005, %v401
    %v5023 = vmul.f32 %v5005, %v402
    %v5024 = vmul.f32 %v5005, %v403
    %v5025 = vmul.f32 %v5005, %v404
    %v5026 = vmul.f32 %v5005, %v405
    %v5027 = vmul.f32 %v5010, %v406
    %v5028 = vmul.f32 %v5010, %v407
    %v5029 = vmul.f32 %v5010, %v408
    %v5030 = vmul.f32 %v5010, %v409
    %v5031 = vmul.f32 %v5010, %v410
    %v5032 = vmul.f32 %v5015, %v411
    %v5033 = vmul.f32 %v5015, %v412
    %v5034 = vmul.f32 %v5015, %v413
    %v5035 = vmul.f32 %v5015, %v414
    %v5036 = vmul.f32 %v5015, %v415
    %5057 = vrot.lane.b32.xlu0 %v5017, 99
    %v5058 = vpop.permute.xlu0 %5057
    %5059 = vrot.lane.b32.xlu0 %v5018, 99
    %v5060 = vpop.permute.xlu0 %5059
    %5061 = vrot.lane.b32.xlu0 %v5019, 99
    %v5062 = vpop.permute.xlu0 %5061
    %5063 = vrot.lane.b32.xlu0 %v5020, 99
    %v5064 = vpop.permute.xlu0 %5063
    %5065 = vrot.lane.b32.xlu0 %v5021, 99
    %v5066 = vpop.permute.xlu0 %5065
    %5067 = vrot.lane.b32.xlu0 %v5022, 99
    %v5068 = vpop.permute.xlu0 %5067
    %5069 = vrot.lane.b32.xlu0 %v5023, 99
    %v5070 = vpop.permute.xlu0 %5069
    %5071 = vrot.lane.b32.xlu0 %v5024, 99
    %v5072 = vpop.permute.xlu0 %5071
    %5073 = vrot.lane.b32.xlu0 %v5025, 99
    %v5074 = vpop.permute.xlu0 %5073
    %5075 = vrot.lane.b32.xlu0 %v5026, 99
    %v5076 = vpop.permute.xlu0 %5075
    %5077 = vrot.lane.b32.xlu0 %v5027, 99
    %v5078 = vpop.permute.xlu0 %5077
    %5079 = vrot.lane.b32.xlu0 %v5028, 99
    %v5080 = vpop.permute.xlu0 %5079
    %5081 = vrot.lane.b32.xlu0 %v5029, 99
    %v5082 = vpop.permute.xlu0 %5081
    %5083 = vrot.lane.b32.xlu0 %v5030, 99
    %v5084 = vpop.permute.xlu0 %5083
    %5085 = vrot.lane.b32.xlu0 %v5031, 99
    %v5086 = vpop.permute.xlu0 %5085
    %5087 = vrot.lane.b32.xlu0 %v5032, 99
    %v5088 = vpop.permute.xlu0 %5087
    %5089 = vrot.lane.b32.xlu0 %v5033, 99
    %v5090 = vpop.permute.xlu0 %5089
    %5091 = vrot.lane.b32.xlu0 %v5034, 99
    %v5092 = vpop.permute.xlu0 %5091
    %5093 = vrot.lane.b32.xlu0 %v5035, 99
    %v5094 = vpop.permute.xlu0 %5093
    %5095 = vrot.lane.b32.xlu0 %v5036, 99
    %v5096 = vpop.permute.xlu0 %5095
    %vm5097 = vcmask 809984
    %v5098 = vsel %vm5097, %v5058, %v5060
    %v5099 = vsel %vm5097, %v5060, %v5062
    %v5100 = vsel %vm5097, %v5062, %v5064
    %v5101 = vsel %vm5097, %v5064, %v5066
    %v5102 = vsel %vm5097, %v5068, %v5070
    %v5103 = vsel %vm5097, %v5070, %v5072
    %v5104 = vsel %vm5097, %v5072, %v5074
    %v5105 = vsel %vm5097, %v5074, %v5076
    %v5106 = vsel %vm5097, %v5078, %v5080
    %v5107 = vsel %vm5097, %v5080, %v5082
    %v5108 = vsel %vm5097, %v5082, %v5084
    %v5109 = vsel %vm5097, %v5084, %v5086
    %v5110 = vsel %vm5097, %v5088, %v5090
    %v5111 = vsel %vm5097, %v5090, %v5092
    %v5112 = vsel %vm5097, %v5092, %v5094
    %v5113 = vsel %vm5097, %v5094, %v5096
    %v5134 = vadd.f32 %v4972, %v5098
    %v5135 = vadd.f32 %v4973, %v5099
    %v5136 = vadd.f32 %v4974, %v5100
    %v5137 = vadd.f32 %v4975, %v5101
    %v5138 = vadd.f32 %v4976, %v5066
    %v5139 = vadd.f32 %v4977, %v5102
    %v5140 = vadd.f32 %v4978, %v5103
    %v5141 = vadd.f32 %v4979, %v5104
    %v5142 = vadd.f32 %v4980, %v5105
    %v5143 = vadd.f32 %v4981, %v5076
    %v5144 = vadd.f32 %v4982, %v5106
    %v5145 = vadd.f32 %v4983, %v5107
    %v5146 = vadd.f32 %v4984, %v5108
    %v5147 = vadd.f32 %v4985, %v5109
    %v5148 = vadd.f32 %v4986, %v5086
    %v5149 = vadd.f32 %v4987, %v5110
    %v5150 = vadd.f32 %v4988, %v5111
    %v5151 = vadd.f32 %v4989, %v5112
    %v5152 = vadd.f32 %v4990, %v5113
    %v5153 = vadd.f32 %v4991, %v5096
    %s5154 = scalar_lea.vmem %s2, 960
    %v5155 = vld [vmem:[%s5154] sm:$0xff]
    %v5156 = vld [vmem:[%s5154 + $0x8] sm:$0xff]
    %v5157 = vld [vmem:[%s5154 + $0x10] sm:$0xff]
    %v5158 = vld [vmem:[%s5154 + $0x18] sm:$0xff]
    %5160 = vset.pattern.permute.xlu0 0
    %5161 = vperm.xlu0 %5160, %v5155
    %v5162 = vpop.permute.xlu0 %5161
    %5165 = vset.pattern.permute.xlu0 0
    %5166 = vperm.xlu0 %5165, %v5156
    %v5167 = vpop.permute.xlu0 %5166
    %5170 = vset.pattern.permute.xlu0 0
    %5171 = vperm.xlu0 %5170, %v5157
    %v5172 = vpop.permute.xlu0 %5171
    %5175 = vset.pattern.permute.xlu0 0
    %5176 = vperm.xlu0 %5175, %v5158
    %v5177 = vpop.permute.xlu0 %5176
    %v5179 = vmul.f32 %v5162, %v396
    %v5180 = vmul.f32 %v5162, %v397
    %v5181 = vmul.f32 %v5162, %v398
    %v5182 = vmul.f32 %v5162, %v399
    %v5183 = vmul.f32 %v5162, %v400
    %v5184 = vmul.f32 %v5167, %v401
    %v5185 = vmul.f32 %v5167, %v402
    %v5186 = vmul.f32 %v5167, %v403
    %v5187 = vmul.f32 %v5167, %v404
    %v5188 = vmul.f32 %v5167, %v405
    %v5189 = vmul.f32 %v5172, %v406
    %v5190 = vmul.f32 %v5172, %v407
    %v5191 = vmul.f32 %v5172, %v408
    %v5192 = vmul.f32 %v5172, %v409
    %v5193 = vmul.f32 %v5172, %v410
    %v5194 = vmul.f32 %v5177, %v411
    %v5195 = vmul.f32 %v5177, %v412
    %v5196 = vmul.f32 %v5177, %v413
    %v5197 = vmul.f32 %v5177, %v414
    %v5198 = vmul.f32 %v5177, %v415
    %5219 = vrot.lane.b32.xlu0 %v5179, 98
    %v5220 = vpop.permute.xlu0 %5219
    %5221 = vrot.lane.b32.xlu0 %v5180, 98
    %v5222 = vpop.permute.xlu0 %5221
    %5223 = vrot.lane.b32.xlu0 %v5181, 98
    %v5224 = vpop.permute.xlu0 %5223
    %5225 = vrot.lane.b32.xlu0 %v5182, 98
    %v5226 = vpop.permute.xlu0 %5225
    %5227 = vrot.lane.b32.xlu0 %v5183, 98
    %v5228 = vpop.permute.xlu0 %5227
    %5229 = vrot.lane.b32.xlu0 %v5184, 98
    %v5230 = vpop.permute.xlu0 %5229
    %5231 = vrot.lane.b32.xlu0 %v5185, 98
    %v5232 = vpop.permute.xlu0 %5231
    %5233 = vrot.lane.b32.xlu0 %v5186, 98
    %v5234 = vpop.permute.xlu0 %5233
    %5235 = vrot.lane.b32.xlu0 %v5187, 98
    %v5236 = vpop.permute.xlu0 %5235
    %5237 = vrot.lane.b32.xlu0 %v5188, 98
    %v5238 = vpop.permute.xlu0 %5237
    %5239 = vrot.lane.b32.xlu0 %v5189, 98
    %v5240 = vpop.permute.xlu0 %5239
    %5241 = vrot.lane.b32.xlu0 %v5190, 98
    %v5242 = vpop.permute.xlu0 %5241
    %5243 = vrot.lane.b32.xlu0 %v5191, 98
    %v5244 = vpop.permute.xlu0 %5243
    %5245 = vrot.lane.b32.xlu0 %v5192, 98
    %v5246 = vpop.permute.xlu0 %5245
    %5247 = vrot.lane.b32.xlu0 %v5193, 98
    %v5248 = vpop.permute.xlu0 %5247
    %5249 = vrot.lane.b32.xlu0 %v5194, 98
    %v5250 = vpop.permute.xlu0 %5249
    %5251 = vrot.lane.b32.xlu0 %v5195, 98
    %v5252 = vpop.permute.xlu0 %5251
    %5253 = vrot.lane.b32.xlu0 %v5196, 98
    %v5254 = vpop.permute.xlu0 %5253
    %5255 = vrot.lane.b32.xlu0 %v5197, 98
    %v5256 = vpop.permute.xlu0 %5255
    %5257 = vrot.lane.b32.xlu0 %v5198, 98
    %v5258 = vpop.permute.xlu0 %5257
    %vm5259 = vcmask 801792
    %v5260 = vsel %vm5259, %v5220, %v5222
    %v5261 = vsel %vm5259, %v5222, %v5224
    %v5262 = vsel %vm5259, %v5224, %v5226
    %v5263 = vsel %vm5259, %v5226, %v5228
    %v5264 = vsel %vm5259, %v5230, %v5232
    %v5265 = vsel %vm5259, %v5232, %v5234
    %v5266 = vsel %vm5259, %v5234, %v5236
    %v5267 = vsel %vm5259, %v5236, %v5238
    %v5268 = vsel %vm5259, %v5240, %v5242
    %v5269 = vsel %vm5259, %v5242, %v5244
    %v5270 = vsel %vm5259, %v5244, %v5246
    %v5271 = vsel %vm5259, %v5246, %v5248
    %v5272 = vsel %vm5259, %v5250, %v5252
    %v5273 = vsel %vm5259, %v5252, %v5254
    %v5274 = vsel %vm5259, %v5254, %v5256
    %v5275 = vsel %vm5259, %v5256, %v5258
    %v5296 = vadd.f32 %v5134, %v5260
    %v5297 = vadd.f32 %v5135, %v5261
    %v5298 = vadd.f32 %v5136, %v5262
    %v5299 = vadd.f32 %v5137, %v5263
    %v5300 = vadd.f32 %v5138, %v5228
    %v5301 = vadd.f32 %v5139, %v5264
    %v5302 = vadd.f32 %v5140, %v5265
    %v5303 = vadd.f32 %v5141, %v5266
    %v5304 = vadd.f32 %v5142, %v5267
    %v5305 = vadd.f32 %v5143, %v5238
    %v5306 = vadd.f32 %v5144, %v5268
    %v5307 = vadd.f32 %v5145, %v5269
    %v5308 = vadd.f32 %v5146, %v5270
    %v5309 = vadd.f32 %v5147, %v5271
    %v5310 = vadd.f32 %v5148, %v5248
    %v5311 = vadd.f32 %v5149, %v5272
    %v5312 = vadd.f32 %v5150, %v5273
    %v5313 = vadd.f32 %v5151, %v5274
    %v5314 = vadd.f32 %v5152, %v5275
    %v5315 = vadd.f32 %v5153, %v5258
    %s5316 = scalar_lea.vmem %s2, 992
    %v5317 = vld [vmem:[%s5316] sm:$0xff]
    %v5318 = vld [vmem:[%s5316 + $0x8] sm:$0xff]
    %v5319 = vld [vmem:[%s5316 + $0x10] sm:$0xff]
    %v5320 = vld [vmem:[%s5316 + $0x18] sm:$0xff]
    %5322 = vset.pattern.permute.xlu0 0
    %5323 = vperm.xlu0 %5322, %v5317
    %v5324 = vpop.permute.xlu0 %5323
    %5327 = vset.pattern.permute.xlu0 0
    %5328 = vperm.xlu0 %5327, %v5318
    %v5329 = vpop.permute.xlu0 %5328
    %5332 = vset.pattern.permute.xlu0 0
    %5333 = vperm.xlu0 %5332, %v5319
    %v5334 = vpop.permute.xlu0 %5333
    %5337 = vset.pattern.permute.xlu0 0
    %5338 = vperm.xlu0 %5337, %v5320
    %v5339 = vpop.permute.xlu0 %5338
    %v5341 = vmul.f32 %v5324, %v396
    %v5342 = vmul.f32 %v5324, %v397
    %v5343 = vmul.f32 %v5324, %v398
    %v5344 = vmul.f32 %v5324, %v399
    %v5345 = vmul.f32 %v5324, %v400
    %v5346 = vmul.f32 %v5329, %v401
    %v5347 = vmul.f32 %v5329, %v402
    %v5348 = vmul.f32 %v5329, %v403
    %v5349 = vmul.f32 %v5329, %v404
    %v5350 = vmul.f32 %v5329, %v405
    %v5351 = vmul.f32 %v5334, %v406
    %v5352 = vmul.f32 %v5334, %v407
    %v5353 = vmul.f32 %v5334, %v408
    %v5354 = vmul.f32 %v5334, %v409
    %v5355 = vmul.f32 %v5334, %v410
    %v5356 = vmul.f32 %v5339, %v411
    %v5357 = vmul.f32 %v5339, %v412
    %v5358 = vmul.f32 %v5339, %v413
    %v5359 = vmul.f32 %v5339, %v414
    %v5360 = vmul.f32 %v5339, %v415
    %5381 = vrot.lane.b32.xlu0 %v5341, 97
    %v5382 = vpop.permute.xlu0 %5381
    %5383 = vrot.lane.b32.xlu0 %v5342, 97
    %v5384 = vpop.permute.xlu0 %5383
    %5385 = vrot.lane.b32.xlu0 %v5343, 97
    %v5386 = vpop.permute.xlu0 %5385
    %5387 = vrot.lane.b32.xlu0 %v5344, 97
    %v5388 = vpop.permute.xlu0 %5387
    %5389 = vrot.lane.b32.xlu0 %v5345, 97
    %v5390 = vpop.permute.xlu0 %5389
    %5391 = vrot.lane.b32.xlu0 %v5346, 97
    %v5392 = vpop.permute.xlu0 %5391
    %5393 = vrot.lane.b32.xlu0 %v5347, 97
    %v5394 = vpop.permute.xlu0 %5393
    %5395 = vrot.lane.b32.xlu0 %v5348, 97
    %v5396 = vpop.permute.xlu0 %5395
    %5397 = vrot.lane.b32.xlu0 %v5349, 97
    %v5398 = vpop.permute.xlu0 %5397
    %5399 = vrot.lane.b32.xlu0 %v5350, 97
    %v5400 = vpop.permute.xlu0 %5399
    %5401 = vrot.lane.b32.xlu0 %v5351, 97
    %v5402 = vpop.permute.xlu0 %5401
    %5403 = vrot.lane.b32.xlu0 %v5352, 97
    %v5404 = vpop.permute.xlu0 %5403
    %5405 = vrot.lane.b32.xlu0 %v5353, 97
    %v5406 = vpop.permute.xlu0 %5405
    %5407 = vrot.lane.b32.xlu0 %v5354, 97
    %v5408 = vpop.permute.xlu0 %5407
    %5409 = vrot.lane.b32.xlu0 %v5355, 97
    %v5410 = vpop.permute.xlu0 %5409
    %5411 = vrot.lane.b32.xlu0 %v5356, 97
    %v5412 = vpop.permute.xlu0 %5411
    %5413 = vrot.lane.b32.xlu0 %v5357, 97
    %v5414 = vpop.permute.xlu0 %5413
    %5415 = vrot.lane.b32.xlu0 %v5358, 97
    %v5416 = vpop.permute.xlu0 %5415
    %5417 = vrot.lane.b32.xlu0 %v5359, 97
    %v5418 = vpop.permute.xlu0 %5417
    %5419 = vrot.lane.b32.xlu0 %v5360, 97
    %v5420 = vpop.permute.xlu0 %5419
    %vm5421 = vcmask 793600
    %v5422 = vsel %vm5421, %v5382, %v5384
    %v5423 = vsel %vm5421, %v5384, %v5386
    %v5424 = vsel %vm5421, %v5386, %v5388
    %v5425 = vsel %vm5421, %v5388, %v5390
    %v5426 = vsel %vm5421, %v5392, %v5394
    %v5427 = vsel %vm5421, %v5394, %v5396
    %v5428 = vsel %vm5421, %v5396, %v5398
    %v5429 = vsel %vm5421, %v5398, %v5400
    %v5430 = vsel %vm5421, %v5402, %v5404
    %v5431 = vsel %vm5421, %v5404, %v5406
    %v5432 = vsel %vm5421, %v5406, %v5408
    %v5433 = vsel %vm5421, %v5408, %v5410
    %v5434 = vsel %vm5421, %v5412, %v5414
    %v5435 = vsel %vm5421, %v5414, %v5416
    %v5436 = vsel %vm5421, %v5416, %v5418
    %v5437 = vsel %vm5421, %v5418, %v5420
    %v5458 = vadd.f32 %v5296, %v5422
    %v5459 = vadd.f32 %v5297, %v5423
    %v5460 = vadd.f32 %v5298, %v5424
    %v5461 = vadd.f32 %v5299, %v5425
    %v5462 = vadd.f32 %v5300, %v5390
    %v5463 = vadd.f32 %v5301, %v5426
    %v5464 = vadd.f32 %v5302, %v5427
    %v5465 = vadd.f32 %v5303, %v5428
    %v5466 = vadd.f32 %v5304, %v5429
    %v5467 = vadd.f32 %v5305, %v5400
    %v5468 = vadd.f32 %v5306, %v5430
    %v5469 = vadd.f32 %v5307, %v5431
    %v5470 = vadd.f32 %v5308, %v5432
    %v5471 = vadd.f32 %v5309, %v5433
    %v5472 = vadd.f32 %v5310, %v5410
    %v5473 = vadd.f32 %v5311, %v5434
    %v5474 = vadd.f32 %v5312, %v5435
    %v5475 = vadd.f32 %v5313, %v5436
    %v5476 = vadd.f32 %v5314, %v5437
    %v5477 = vadd.f32 %v5315, %v5420
    %s5478 = scalar_lea.vmem %s2, 1024
    %v5479 = vld [vmem:[%s5478] sm:$0xff]
    %v5480 = vld [vmem:[%s5478 + $0x8] sm:$0xff]
    %v5481 = vld [vmem:[%s5478 + $0x10] sm:$0xff]
    %v5482 = vld [vmem:[%s5478 + $0x18] sm:$0xff]
    %5484 = vset.pattern.permute.xlu0 0
    %5485 = vperm.xlu0 %5484, %v5479
    %v5486 = vpop.permute.xlu0 %5485
    %5489 = vset.pattern.permute.xlu0 0
    %5490 = vperm.xlu0 %5489, %v5480
    %v5491 = vpop.permute.xlu0 %5490
    %5494 = vset.pattern.permute.xlu0 0
    %5495 = vperm.xlu0 %5494, %v5481
    %v5496 = vpop.permute.xlu0 %5495
    %5499 = vset.pattern.permute.xlu0 0
    %5500 = vperm.xlu0 %5499, %v5482
    %v5501 = vpop.permute.xlu0 %5500
    %v5503 = vmul.f32 %v5486, %v396
    %v5504 = vmul.f32 %v5486, %v397
    %v5505 = vmul.f32 %v5486, %v398
    %v5506 = vmul.f32 %v5486, %v399
    %v5507 = vmul.f32 %v5486, %v400
    %v5508 = vmul.f32 %v5491, %v401
    %v5509 = vmul.f32 %v5491, %v402
    %v5510 = vmul.f32 %v5491, %v403
    %v5511 = vmul.f32 %v5491, %v404
    %v5512 = vmul.f32 %v5491, %v405
    %v5513 = vmul.f32 %v5496, %v406
    %v5514 = vmul.f32 %v5496, %v407
    %v5515 = vmul.f32 %v5496, %v408
    %v5516 = vmul.f32 %v5496, %v409
    %v5517 = vmul.f32 %v5496, %v410
    %v5518 = vmul.f32 %v5501, %v411
    %v5519 = vmul.f32 %v5501, %v412
    %v5520 = vmul.f32 %v5501, %v413
    %v5521 = vmul.f32 %v5501, %v414
    %v5522 = vmul.f32 %v5501, %v415
    %5543 = vrot.lane.b32.xlu0 %v5503, 96
    %v5544 = vpop.permute.xlu0 %5543
    %5545 = vrot.lane.b32.xlu0 %v5504, 96
    %v5546 = vpop.permute.xlu0 %5545
    %5547 = vrot.lane.b32.xlu0 %v5505, 96
    %v5548 = vpop.permute.xlu0 %5547
    %5549 = vrot.lane.b32.xlu0 %v5506, 96
    %v5550 = vpop.permute.xlu0 %5549
    %5551 = vrot.lane.b32.xlu0 %v5507, 96
    %v5552 = vpop.permute.xlu0 %5551
    %5553 = vrot.lane.b32.xlu0 %v5508, 96
    %v5554 = vpop.permute.xlu0 %5553
    %5555 = vrot.lane.b32.xlu0 %v5509, 96
    %v5556 = vpop.permute.xlu0 %5555
    %5557 = vrot.lane.b32.xlu0 %v5510, 96
    %v5558 = vpop.permute.xlu0 %5557
    %5559 = vrot.lane.b32.xlu0 %v5511, 96
    %v5560 = vpop.permute.xlu0 %5559
    %5561 = vrot.lane.b32.xlu0 %v5512, 96
    %v5562 = vpop.permute.xlu0 %5561
    %5563 = vrot.lane.b32.xlu0 %v5513, 96
    %v5564 = vpop.permute.xlu0 %5563
    %5565 = vrot.lane.b32.xlu0 %v5514, 96
    %v5566 = vpop.permute.xlu0 %5565
    %5567 = vrot.lane.b32.xlu0 %v5515, 96
    %v5568 = vpop.permute.xlu0 %5567
    %5569 = vrot.lane.b32.xlu0 %v5516, 96
    %v5570 = vpop.permute.xlu0 %5569
    %5571 = vrot.lane.b32.xlu0 %v5517, 96
    %v5572 = vpop.permute.xlu0 %5571
    %5573 = vrot.lane.b32.xlu0 %v5518, 96
    %v5574 = vpop.permute.xlu0 %5573
    %5575 = vrot.lane.b32.xlu0 %v5519, 96
    %v5576 = vpop.permute.xlu0 %5575
    %5577 = vrot.lane.b32.xlu0 %v5520, 96
    %v5578 = vpop.permute.xlu0 %5577
    %5579 = vrot.lane.b32.xlu0 %v5521, 96
    %v5580 = vpop.permute.xlu0 %5579
    %5581 = vrot.lane.b32.xlu0 %v5522, 96
    %v5582 = vpop.permute.xlu0 %5581
    %vm5583 = vcmask 785408
    %v5584 = vsel %vm5583, %v5544, %v5546
    %v5585 = vsel %vm5583, %v5546, %v5548
    %v5586 = vsel %vm5583, %v5548, %v5550
    %v5587 = vsel %vm5583, %v5550, %v5552
    %v5588 = vsel %vm5583, %v5554, %v5556
    %v5589 = vsel %vm5583, %v5556, %v5558
    %v5590 = vsel %vm5583, %v5558, %v5560
    %v5591 = vsel %vm5583, %v5560, %v5562
    %v5592 = vsel %vm5583, %v5564, %v5566
    %v5593 = vsel %vm5583, %v5566, %v5568
    %v5594 = vsel %vm5583, %v5568, %v5570
    %v5595 = vsel %vm5583, %v5570, %v5572
    %v5596 = vsel %vm5583, %v5574, %v5576
    %v5597 = vsel %vm5583, %v5576, %v5578
    %v5598 = vsel %vm5583, %v5578, %v5580
    %v5599 = vsel %vm5583, %v5580, %v5582
    %v5620 = vadd.f32 %v5458, %v5584
    %v5621 = vadd.f32 %v5459, %v5585
    %v5622 = vadd.f32 %v5460, %v5586
    %v5623 = vadd.f32 %v5461, %v5587
    %v5624 = vadd.f32 %v5462, %v5552
    %v5625 = vadd.f32 %v5463, %v5588
    %v5626 = vadd.f32 %v5464, %v5589
    %v5627 = vadd.f32 %v5465, %v5590
    %v5628 = vadd.f32 %v5466, %v5591
    %v5629 = vadd.f32 %v5467, %v5562
    %v5630 = vadd.f32 %v5468, %v5592
    %v5631 = vadd.f32 %v5469, %v5593
    %v5632 = vadd.f32 %v5470, %v5594
    %v5633 = vadd.f32 %v5471, %v5595
    %v5634 = vadd.f32 %v5472, %v5572
    %v5635 = vadd.f32 %v5473, %v5596
    %v5636 = vadd.f32 %v5474, %v5597
    %v5637 = vadd.f32 %v5475, %v5598
    %v5638 = vadd.f32 %v5476, %v5599
    %v5639 = vadd.f32 %v5477, %v5582
    %s5640 = scalar_lea.vmem %s2, 1056
    %v5641 = vld [vmem:[%s5640] sm:$0xff]
    %v5642 = vld [vmem:[%s5640 + $0x8] sm:$0xff]
    %v5643 = vld [vmem:[%s5640 + $0x10] sm:$0xff]
    %v5644 = vld [vmem:[%s5640 + $0x18] sm:$0xff]
    %5646 = vset.pattern.permute.xlu0 0
    %5647 = vperm.xlu0 %5646, %v5641
    %v5648 = vpop.permute.xlu0 %5647
    %5651 = vset.pattern.permute.xlu0 0
    %5652 = vperm.xlu0 %5651, %v5642
    %v5653 = vpop.permute.xlu0 %5652
    %5656 = vset.pattern.permute.xlu0 0
    %5657 = vperm.xlu0 %5656, %v5643
    %v5658 = vpop.permute.xlu0 %5657
    %5661 = vset.pattern.permute.xlu0 0
    %5662 = vperm.xlu0 %5661, %v5644
    %v5663 = vpop.permute.xlu0 %5662
    %v5665 = vmul.f32 %v5648, %v396
    %v5666 = vmul.f32 %v5648, %v397
    %v5667 = vmul.f32 %v5648, %v398
    %v5668 = vmul.f32 %v5648, %v399
    %v5669 = vmul.f32 %v5648, %v400
    %v5670 = vmul.f32 %v5653, %v401
    %v5671 = vmul.f32 %v5653, %v402
    %v5672 = vmul.f32 %v5653, %v403
    %v5673 = vmul.f32 %v5653, %v404
    %v5674 = vmul.f32 %v5653, %v405
    %v5675 = vmul.f32 %v5658, %v406
    %v5676 = vmul.f32 %v5658, %v407
    %v5677 = vmul.f32 %v5658, %v408
    %v5678 = vmul.f32 %v5658, %v409
    %v5679 = vmul.f32 %v5658, %v410
    %v5680 = vmul.f32 %v5663, %v411
    %v5681 = vmul.f32 %v5663, %v412
    %v5682 = vmul.f32 %v5663, %v413
    %v5683 = vmul.f32 %v5663, %v414
    %v5684 = vmul.f32 %v5663, %v415
    %5705 = vrot.lane.b32.xlu0 %v5665, 95
    %v5706 = vpop.permute.xlu0 %5705
    %5707 = vrot.lane.b32.xlu0 %v5666, 95
    %v5708 = vpop.permute.xlu0 %5707
    %5709 = vrot.lane.b32.xlu0 %v5667, 95
    %v5710 = vpop.permute.xlu0 %5709
    %5711 = vrot.lane.b32.xlu0 %v5668, 95
    %v5712 = vpop.permute.xlu0 %5711
    %5713 = vrot.lane.b32.xlu0 %v5669, 95
    %v5714 = vpop.permute.xlu0 %5713
    %5715 = vrot.lane.b32.xlu0 %v5670, 95
    %v5716 = vpop.permute.xlu0 %5715
    %5717 = vrot.lane.b32.xlu0 %v5671, 95
    %v5718 = vpop.permute.xlu0 %5717
    %5719 = vrot.lane.b32.xlu0 %v5672, 95
    %v5720 = vpop.permute.xlu0 %5719
    %5721 = vrot.lane.b32.xlu0 %v5673, 95
    %v5722 = vpop.permute.xlu0 %5721
    %5723 = vrot.lane.b32.xlu0 %v5674, 95
    %v5724 = vpop.permute.xlu0 %5723
    %5725 = vrot.lane.b32.xlu0 %v5675, 95
    %v5726 = vpop.permute.xlu0 %5725
    %5727 = vrot.lane.b32.xlu0 %v5676, 95
    %v5728 = vpop.permute.xlu0 %5727
    %5729 = vrot.lane.b32.xlu0 %v5677, 95
    %v5730 = vpop.permute.xlu0 %5729
    %5731 = vrot.lane.b32.xlu0 %v5678, 95
    %v5732 = vpop.permute.xlu0 %5731
    %5733 = vrot.lane.b32.xlu0 %v5679, 95
    %v5734 = vpop.permute.xlu0 %5733
    %5735 = vrot.lane.b32.xlu0 %v5680, 95
    %v5736 = vpop.permute.xlu0 %5735
    %5737 = vrot.lane.b32.xlu0 %v5681, 95
    %v5738 = vpop.permute.xlu0 %5737
    %5739 = vrot.lane.b32.xlu0 %v5682, 95
    %v5740 = vpop.permute.xlu0 %5739
    %5741 = vrot.lane.b32.xlu0 %v5683, 95
    %v5742 = vpop.permute.xlu0 %5741
    %5743 = vrot.lane.b32.xlu0 %v5684, 95
    %v5744 = vpop.permute.xlu0 %5743
    %v5745 = vsel %vm375, %v5706, %v5708
    %v5746 = vsel %vm375, %v5708, %v5710
    %v5747 = vsel %vm375, %v5710, %v5712
    %v5748 = vsel %vm375, %v5712, %v5714
    %v5749 = vsel %vm375, %v5716, %v5718
    %v5750 = vsel %vm375, %v5718, %v5720
    %v5751 = vsel %vm375, %v5720, %v5722
    %v5752 = vsel %vm375, %v5722, %v5724
    %v5753 = vsel %vm375, %v5726, %v5728
    %v5754 = vsel %vm375, %v5728, %v5730
    %v5755 = vsel %vm375, %v5730, %v5732
    %v5756 = vsel %vm375, %v5732, %v5734
    %v5757 = vsel %vm375, %v5736, %v5738
    %v5758 = vsel %vm375, %v5738, %v5740
    %v5759 = vsel %vm375, %v5740, %v5742
    %v5760 = vsel %vm375, %v5742, %v5744
    %v5781 = vadd.f32 %v5620, %v5745
    %v5782 = vadd.f32 %v5621, %v5746
    %v5783 = vadd.f32 %v5622, %v5747
    %v5784 = vadd.f32 %v5623, %v5748
    %v5785 = vadd.f32 %v5624, %v5714
    %v5786 = vadd.f32 %v5625, %v5749
    %v5787 = vadd.f32 %v5626, %v5750
    %v5788 = vadd.f32 %v5627, %v5751
    %v5789 = vadd.f32 %v5628, %v5752
    %v5790 = vadd.f32 %v5629, %v5724
    %v5791 = vadd.f32 %v5630, %v5753
    %v5792 = vadd.f32 %v5631, %v5754
    %v5793 = vadd.f32 %v5632, %v5755
    %v5794 = vadd.f32 %v5633, %v5756
    %v5795 = vadd.f32 %v5634, %v5734
    %v5796 = vadd.f32 %v5635, %v5757
    %v5797 = vadd.f32 %v5636, %v5758
    %v5798 = vadd.f32 %v5637, %v5759
    %v5799 = vadd.f32 %v5638, %v5760
    %v5800 = vadd.f32 %v5639, %v5744
    %s5801 = scalar_lea.vmem %s2, 1088
    %v5802 = vld [vmem:[%s5801] sm:$0xff]
    %v5803 = vld [vmem:[%s5801 + $0x8] sm:$0xff]
    %v5804 = vld [vmem:[%s5801 + $0x10] sm:$0xff]
    %v5805 = vld [vmem:[%s5801 + $0x18] sm:$0xff]
    %5807 = vset.pattern.permute.xlu0 0
    %5808 = vperm.xlu0 %5807, %v5802
    %v5809 = vpop.permute.xlu0 %5808
    %5812 = vset.pattern.permute.xlu0 0
    %5813 = vperm.xlu0 %5812, %v5803
    %v5814 = vpop.permute.xlu0 %5813
    %5817 = vset.pattern.permute.xlu0 0
    %5818 = vperm.xlu0 %5817, %v5804
    %v5819 = vpop.permute.xlu0 %5818
    %5822 = vset.pattern.permute.xlu0 0
    %5823 = vperm.xlu0 %5822, %v5805
    %v5824 = vpop.permute.xlu0 %5823
    %v5826 = vmul.f32 %v5809, %v396
    %v5827 = vmul.f32 %v5809, %v397
    %v5828 = vmul.f32 %v5809, %v398
    %v5829 = vmul.f32 %v5809, %v399
    %v5830 = vmul.f32 %v5809, %v400
    %v5831 = vmul.f32 %v5814, %v401
    %v5832 = vmul.f32 %v5814, %v402
    %v5833 = vmul.f32 %v5814, %v403
    %v5834 = vmul.f32 %v5814, %v404
    %v5835 = vmul.f32 %v5814, %v405
    %v5836 = vmul.f32 %v5819, %v406
    %v5837 = vmul.f32 %v5819, %v407
    %v5838 = vmul.f32 %v5819, %v408
    %v5839 = vmul.f32 %v5819, %v409
    %v5840 = vmul.f32 %v5819, %v410
    %v5841 = vmul.f32 %v5824, %v411
    %v5842 = vmul.f32 %v5824, %v412
    %v5843 = vmul.f32 %v5824, %v413
    %v5844 = vmul.f32 %v5824, %v414
    %v5845 = vmul.f32 %v5824, %v415
    %5866 = vrot.lane.b32.xlu0 %v5826, 94
    %v5867 = vpop.permute.xlu0 %5866
    %5868 = vrot.lane.b32.xlu0 %v5827, 94
    %v5869 = vpop.permute.xlu0 %5868
    %5870 = vrot.lane.b32.xlu0 %v5828, 94
    %v5871 = vpop.permute.xlu0 %5870
    %5872 = vrot.lane.b32.xlu0 %v5829, 94
    %v5873 = vpop.permute.xlu0 %5872
    %5874 = vrot.lane.b32.xlu0 %v5830, 94
    %v5875 = vpop.permute.xlu0 %5874
    %5876 = vrot.lane.b32.xlu0 %v5831, 94
    %v5877 = vpop.permute.xlu0 %5876
    %5878 = vrot.lane.b32.xlu0 %v5832, 94
    %v5879 = vpop.permute.xlu0 %5878
    %5880 = vrot.lane.b32.xlu0 %v5833, 94
    %v5881 = vpop.permute.xlu0 %5880
    %5882 = vrot.lane.b32.xlu0 %v5834, 94
    %v5883 = vpop.permute.xlu0 %5882
    %5884 = vrot.lane.b32.xlu0 %v5835, 94
    %v5885 = vpop.permute.xlu0 %5884
    %5886 = vrot.lane.b32.xlu0 %v5836, 94
    %v5887 = vpop.permute.xlu0 %5886
    %5888 = vrot.lane.b32.xlu0 %v5837, 94
    %v5889 = vpop.permute.xlu0 %5888
    %5890 = vrot.lane.b32.xlu0 %v5838, 94
    %v5891 = vpop.permute.xlu0 %5890
    %5892 = vrot.lane.b32.xlu0 %v5839, 94
    %v5893 = vpop.permute.xlu0 %5892
    %5894 = vrot.lane.b32.xlu0 %v5840, 94
    %v5895 = vpop.permute.xlu0 %5894
    %5896 = vrot.lane.b32.xlu0 %v5841, 94
    %v5897 = vpop.permute.xlu0 %5896
    %5898 = vrot.lane.b32.xlu0 %v5842, 94
    %v5899 = vpop.permute.xlu0 %5898
    %5900 = vrot.lane.b32.xlu0 %v5843, 94
    %v5901 = vpop.permute.xlu0 %5900
    %5902 = vrot.lane.b32.xlu0 %v5844, 94
    %v5903 = vpop.permute.xlu0 %5902
    %5904 = vrot.lane.b32.xlu0 %v5845, 94
    %v5905 = vpop.permute.xlu0 %5904
    %vm5906 = vcmask 769024
    %v5907 = vsel %vm5906, %v5867, %v5869
    %v5908 = vsel %vm5906, %v5869, %v5871
    %v5909 = vsel %vm5906, %v5871, %v5873
    %v5910 = vsel %vm5906, %v5873, %v5875
    %v5911 = vsel %vm5906, %v5877, %v5879
    %v5912 = vsel %vm5906, %v5879, %v5881
    %v5913 = vsel %vm5906, %v5881, %v5883
    %v5914 = vsel %vm5906, %v5883, %v5885
    %v5915 = vsel %vm5906, %v5887, %v5889
    %v5916 = vsel %vm5906, %v5889, %v5891
    %v5917 = vsel %vm5906, %v5891, %v5893
    %v5918 = vsel %vm5906, %v5893, %v5895
    %v5919 = vsel %vm5906, %v5897, %v5899
    %v5920 = vsel %vm5906, %v5899, %v5901
    %v5921 = vsel %vm5906, %v5901, %v5903
    %v5922 = vsel %vm5906, %v5903, %v5905
    %v5943 = vadd.f32 %v5781, %v5907
    %v5944 = vadd.f32 %v5782, %v5908
    %v5945 = vadd.f32 %v5783, %v5909
    %v5946 = vadd.f32 %v5784, %v5910
    %v5947 = vadd.f32 %v5785, %v5875
    %v5948 = vadd.f32 %v5786, %v5911
    %v5949 = vadd.f32 %v5787, %v5912
    %v5950 = vadd.f32 %v5788, %v5913
    %v5951 = vadd.f32 %v5789, %v5914
    %v5952 = vadd.f32 %v5790, %v5885
    %v5953 = vadd.f32 %v5791, %v5915
    %v5954 = vadd.f32 %v5792, %v5916
    %v5955 = vadd.f32 %v5793, %v5917
    %v5956 = vadd.f32 %v5794, %v5918
    %v5957 = vadd.f32 %v5795, %v5895
    %v5958 = vadd.f32 %v5796, %v5919
    %v5959 = vadd.f32 %v5797, %v5920
    %v5960 = vadd.f32 %v5798, %v5921
    %v5961 = vadd.f32 %v5799, %v5922
    %v5962 = vadd.f32 %v5800, %v5905
    %s5963 = scalar_lea.vmem %s2, 1120
    %v5964 = vld [vmem:[%s5963] sm:$0xff]
    %v5965 = vld [vmem:[%s5963 + $0x8] sm:$0xff]
    %v5966 = vld [vmem:[%s5963 + $0x10] sm:$0xff]
    %v5967 = vld [vmem:[%s5963 + $0x18] sm:$0xff]
    %5969 = vset.pattern.permute.xlu0 0
    %5970 = vperm.xlu0 %5969, %v5964
    %v5971 = vpop.permute.xlu0 %5970
    %5974 = vset.pattern.permute.xlu0 0
    %5975 = vperm.xlu0 %5974, %v5965
    %v5976 = vpop.permute.xlu0 %5975
    %5979 = vset.pattern.permute.xlu0 0
    %5980 = vperm.xlu0 %5979, %v5966
    %v5981 = vpop.permute.xlu0 %5980
    %5984 = vset.pattern.permute.xlu0 0
    %5985 = vperm.xlu0 %5984, %v5967
    %v5986 = vpop.permute.xlu0 %5985
    %v5988 = vmul.f32 %v5971, %v396
    %v5989 = vmul.f32 %v5971, %v397
    %v5990 = vmul.f32 %v5971, %v398
    %v5991 = vmul.f32 %v5971, %v399
    %v5992 = vmul.f32 %v5971, %v400
    %v5993 = vmul.f32 %v5976, %v401
    %v5994 = vmul.f32 %v5976, %v402
    %v5995 = vmul.f32 %v5976, %v403
    %v5996 = vmul.f32 %v5976, %v404
    %v5997 = vmul.f32 %v5976, %v405
    %v5998 = vmul.f32 %v5981, %v406
    %v5999 = vmul.f32 %v5981, %v407
    %v6000 = vmul.f32 %v5981, %v408
    %v6001 = vmul.f32 %v5981, %v409
    %v6002 = vmul.f32 %v5981, %v410
    %v6003 = vmul.f32 %v5986, %v411
    %v6004 = vmul.f32 %v5986, %v412
    %v6005 = vmul.f32 %v5986, %v413
    %v6006 = vmul.f32 %v5986, %v414
    %v6007 = vmul.f32 %v5986, %v415
    %6028 = vrot.lane.b32.xlu0 %v5988, 93
    %v6029 = vpop.permute.xlu0 %6028
    %6030 = vrot.lane.b32.xlu0 %v5989, 93
    %v6031 = vpop.permute.xlu0 %6030
    %6032 = vrot.lane.b32.xlu0 %v5990, 93
    %v6033 = vpop.permute.xlu0 %6032
    %6034 = vrot.lane.b32.xlu0 %v5991, 93
    %v6035 = vpop.permute.xlu0 %6034
    %6036 = vrot.lane.b32.xlu0 %v5992, 93
    %v6037 = vpop.permute.xlu0 %6036
    %6038 = vrot.lane.b32.xlu0 %v5993, 93
    %v6039 = vpop.permute.xlu0 %6038
    %6040 = vrot.lane.b32.xlu0 %v5994, 93
    %v6041 = vpop.permute.xlu0 %6040
    %6042 = vrot.lane.b32.xlu0 %v5995, 93
    %v6043 = vpop.permute.xlu0 %6042
    %6044 = vrot.lane.b32.xlu0 %v5996, 93
    %v6045 = vpop.permute.xlu0 %6044
    %6046 = vrot.lane.b32.xlu0 %v5997, 93
    %v6047 = vpop.permute.xlu0 %6046
    %6048 = vrot.lane.b32.xlu0 %v5998, 93
    %v6049 = vpop.permute.xlu0 %6048
    %6050 = vrot.lane.b32.xlu0 %v5999, 93
    %v6051 = vpop.permute.xlu0 %6050
    %6052 = vrot.lane.b32.xlu0 %v6000, 93
    %v6053 = vpop.permute.xlu0 %6052
    %6054 = vrot.lane.b32.xlu0 %v6001, 93
    %v6055 = vpop.permute.xlu0 %6054
    %6056 = vrot.lane.b32.xlu0 %v6002, 93
    %v6057 = vpop.permute.xlu0 %6056
    %6058 = vrot.lane.b32.xlu0 %v6003, 93
    %v6059 = vpop.permute.xlu0 %6058
    %6060 = vrot.lane.b32.xlu0 %v6004, 93
    %v6061 = vpop.permute.xlu0 %6060
    %6062 = vrot.lane.b32.xlu0 %v6005, 93
    %v6063 = vpop.permute.xlu0 %6062
    %6064 = vrot.lane.b32.xlu0 %v6006, 93
    %v6065 = vpop.permute.xlu0 %6064
    %6066 = vrot.lane.b32.xlu0 %v6007, 93
    %v6067 = vpop.permute.xlu0 %6066
    %vm6068 = vcmask 760832
    %v6069 = vsel %vm6068, %v6029, %v6031
    %v6070 = vsel %vm6068, %v6031, %v6033
    %v6071 = vsel %vm6068, %v6033, %v6035
    %v6072 = vsel %vm6068, %v6035, %v6037
    %v6073 = vsel %vm6068, %v6039, %v6041
    %v6074 = vsel %vm6068, %v6041, %v6043
    %v6075 = vsel %vm6068, %v6043, %v6045
    %v6076 = vsel %vm6068, %v6045, %v6047
    %v6077 = vsel %vm6068, %v6049, %v6051
    %v6078 = vsel %vm6068, %v6051, %v6053
    %v6079 = vsel %vm6068, %v6053, %v6055
    %v6080 = vsel %vm6068, %v6055, %v6057
    %v6081 = vsel %vm6068, %v6059, %v6061
    %v6082 = vsel %vm6068, %v6061, %v6063
    %v6083 = vsel %vm6068, %v6063, %v6065
    %v6084 = vsel %vm6068, %v6065, %v6067
    %v6105 = vadd.f32 %v5943, %v6069
    %v6106 = vadd.f32 %v5944, %v6070
    %v6107 = vadd.f32 %v5945, %v6071
    %v6108 = vadd.f32 %v5946, %v6072
    %v6109 = vadd.f32 %v5947, %v6037
    %v6110 = vadd.f32 %v5948, %v6073
    %v6111 = vadd.f32 %v5949, %v6074
    %v6112 = vadd.f32 %v5950, %v6075
    %v6113 = vadd.f32 %v5951, %v6076
    %v6114 = vadd.f32 %v5952, %v6047
    %v6115 = vadd.f32 %v5953, %v6077
    %v6116 = vadd.f32 %v5954, %v6078
    %v6117 = vadd.f32 %v5955, %v6079
    %v6118 = vadd.f32 %v5956, %v6080
    %v6119 = vadd.f32 %v5957, %v6057
    %v6120 = vadd.f32 %v5958, %v6081
    %v6121 = vadd.f32 %v5959, %v6082
    %v6122 = vadd.f32 %v5960, %v6083
    %v6123 = vadd.f32 %v5961, %v6084
    %v6124 = vadd.f32 %v5962, %v6067
    %s6125 = scalar_lea.vmem %s2, 1152
    %v6126 = vld [vmem:[%s6125] sm:$0xff]
    %v6127 = vld [vmem:[%s6125 + $0x8] sm:$0xff]
    %v6128 = vld [vmem:[%s6125 + $0x10] sm:$0xff]
    %v6129 = vld [vmem:[%s6125 + $0x18] sm:$0xff]
    %6131 = vset.pattern.permute.xlu0 0
    %6132 = vperm.xlu0 %6131, %v6126
    %v6133 = vpop.permute.xlu0 %6132
    %6136 = vset.pattern.permute.xlu0 0
    %6137 = vperm.xlu0 %6136, %v6127
    %v6138 = vpop.permute.xlu0 %6137
    %6141 = vset.pattern.permute.xlu0 0
    %6142 = vperm.xlu0 %6141, %v6128
    %v6143 = vpop.permute.xlu0 %6142
    %6146 = vset.pattern.permute.xlu0 0
    %6147 = vperm.xlu0 %6146, %v6129
    %v6148 = vpop.permute.xlu0 %6147
    %v6150 = vmul.f32 %v6133, %v396
    %v6151 = vmul.f32 %v6133, %v397
    %v6152 = vmul.f32 %v6133, %v398
    %v6153 = vmul.f32 %v6133, %v399
    %v6154 = vmul.f32 %v6133, %v400
    %v6155 = vmul.f32 %v6138, %v401
    %v6156 = vmul.f32 %v6138, %v402
    %v6157 = vmul.f32 %v6138, %v403
    %v6158 = vmul.f32 %v6138, %v404
    %v6159 = vmul.f32 %v6138, %v405
    %v6160 = vmul.f32 %v6143, %v406
    %v6161 = vmul.f32 %v6143, %v407
    %v6162 = vmul.f32 %v6143, %v408
    %v6163 = vmul.f32 %v6143, %v409
    %v6164 = vmul.f32 %v6143, %v410
    %v6165 = vmul.f32 %v6148, %v411
    %v6166 = vmul.f32 %v6148, %v412
    %v6167 = vmul.f32 %v6148, %v413
    %v6168 = vmul.f32 %v6148, %v414
    %v6169 = vmul.f32 %v6148, %v415
    %6190 = vrot.lane.b32.xlu0 %v6150, 92
    %v6191 = vpop.permute.xlu0 %6190
    %6192 = vrot.lane.b32.xlu0 %v6151, 92
    %v6193 = vpop.permute.xlu0 %6192
    %6194 = vrot.lane.b32.xlu0 %v6152, 92
    %v6195 = vpop.permute.xlu0 %6194
    %6196 = vrot.lane.b32.xlu0 %v6153, 92
    %v6197 = vpop.permute.xlu0 %6196
    %6198 = vrot.lane.b32.xlu0 %v6154, 92
    %v6199 = vpop.permute.xlu0 %6198
    %6200 = vrot.lane.b32.xlu0 %v6155, 92
    %v6201 = vpop.permute.xlu0 %6200
    %6202 = vrot.lane.b32.xlu0 %v6156, 92
    %v6203 = vpop.permute.xlu0 %6202
    %6204 = vrot.lane.b32.xlu0 %v6157, 92
    %v6205 = vpop.permute.xlu0 %6204
    %6206 = vrot.lane.b32.xlu0 %v6158, 92
    %v6207 = vpop.permute.xlu0 %6206
    %6208 = vrot.lane.b32.xlu0 %v6159, 92
    %v6209 = vpop.permute.xlu0 %6208
    %6210 = vrot.lane.b32.xlu0 %v6160, 92
    %v6211 = vpop.permute.xlu0 %6210
    %6212 = vrot.lane.b32.xlu0 %v6161, 92
    %v6213 = vpop.permute.xlu0 %6212
    %6214 = vrot.lane.b32.xlu0 %v6162, 92
    %v6215 = vpop.permute.xlu0 %6214
    %6216 = vrot.lane.b32.xlu0 %v6163, 92
    %v6217 = vpop.permute.xlu0 %6216
    %6218 = vrot.lane.b32.xlu0 %v6164, 92
    %v6219 = vpop.permute.xlu0 %6218
    %6220 = vrot.lane.b32.xlu0 %v6165, 92
    %v6221 = vpop.permute.xlu0 %6220
    %6222 = vrot.lane.b32.xlu0 %v6166, 92
    %v6223 = vpop.permute.xlu0 %6222
    %6224 = vrot.lane.b32.xlu0 %v6167, 92
    %v6225 = vpop.permute.xlu0 %6224
    %6226 = vrot.lane.b32.xlu0 %v6168, 92
    %v6227 = vpop.permute.xlu0 %6226
    %6228 = vrot.lane.b32.xlu0 %v6169, 92
    %v6229 = vpop.permute.xlu0 %6228
    %vm6230 = vcmask 752640
    %v6231 = vsel %vm6230, %v6191, %v6193
    %v6232 = vsel %vm6230, %v6193, %v6195
    %v6233 = vsel %vm6230, %v6195, %v6197
    %v6234 = vsel %vm6230, %v6197, %v6199
    %v6235 = vsel %vm6230, %v6201, %v6203
    %v6236 = vsel %vm6230, %v6203, %v6205
    %v6237 = vsel %vm6230, %v6205, %v6207
    %v6238 = vsel %vm6230, %v6207, %v6209
    %v6239 = vsel %vm6230, %v6211, %v6213
    %v6240 = vsel %vm6230, %v6213, %v6215
    %v6241 = vsel %vm6230, %v6215, %v6217
    %v6242 = vsel %vm6230, %v6217, %v6219
    %v6243 = vsel %vm6230, %v6221, %v6223
    %v6244 = vsel %vm6230, %v6223, %v6225
    %v6245 = vsel %vm6230, %v6225, %v6227
    %v6246 = vsel %vm6230, %v6227, %v6229
    %v6267 = vadd.f32 %v6105, %v6231
    %v6268 = vadd.f32 %v6106, %v6232
    %v6269 = vadd.f32 %v6107, %v6233
    %v6270 = vadd.f32 %v6108, %v6234
    %v6271 = vadd.f32 %v6109, %v6199
    %v6272 = vadd.f32 %v6110, %v6235
    %v6273 = vadd.f32 %v6111, %v6236
    %v6274 = vadd.f32 %v6112, %v6237
    %v6275 = vadd.f32 %v6113, %v6238
    %v6276 = vadd.f32 %v6114, %v6209
    %v6277 = vadd.f32 %v6115, %v6239
    %v6278 = vadd.f32 %v6116, %v6240
    %v6279 = vadd.f32 %v6117, %v6241
    %v6280 = vadd.f32 %v6118, %v6242
    %v6281 = vadd.f32 %v6119, %v6219
    %v6282 = vadd.f32 %v6120, %v6243
    %v6283 = vadd.f32 %v6121, %v6244
    %v6284 = vadd.f32 %v6122, %v6245
    %v6285 = vadd.f32 %v6123, %v6246
    %v6286 = vadd.f32 %v6124, %v6229
    %s6287 = scalar_lea.vmem %s2, 1184
    %v6288 = vld [vmem:[%s6287] sm:$0xff]
    %v6289 = vld [vmem:[%s6287 + $0x8] sm:$0xff]
    %v6290 = vld [vmem:[%s6287 + $0x10] sm:$0xff]
    %v6291 = vld [vmem:[%s6287 + $0x18] sm:$0xff]
    %6293 = vset.pattern.permute.xlu0 0
    %6294 = vperm.xlu0 %6293, %v6288
    %v6295 = vpop.permute.xlu0 %6294
    %6298 = vset.pattern.permute.xlu0 0
    %6299 = vperm.xlu0 %6298, %v6289
    %v6300 = vpop.permute.xlu0 %6299
    %6303 = vset.pattern.permute.xlu0 0
    %6304 = vperm.xlu0 %6303, %v6290
    %v6305 = vpop.permute.xlu0 %6304
    %6308 = vset.pattern.permute.xlu0 0
    %6309 = vperm.xlu0 %6308, %v6291
    %v6310 = vpop.permute.xlu0 %6309
    %v6312 = vmul.f32 %v6295, %v396
    %v6313 = vmul.f32 %v6295, %v397
    %v6314 = vmul.f32 %v6295, %v398
    %v6315 = vmul.f32 %v6295, %v399
    %v6316 = vmul.f32 %v6295, %v400
    %v6317 = vmul.f32 %v6300, %v401
    %v6318 = vmul.f32 %v6300, %v402
    %v6319 = vmul.f32 %v6300, %v403
    %v6320 = vmul.f32 %v6300, %v404
    %v6321 = vmul.f32 %v6300, %v405
    %v6322 = vmul.f32 %v6305, %v406
    %v6323 = vmul.f32 %v6305, %v407
    %v6324 = vmul.f32 %v6305, %v408
    %v6325 = vmul.f32 %v6305, %v409
    %v6326 = vmul.f32 %v6305, %v410
    %v6327 = vmul.f32 %v6310, %v411
    %v6328 = vmul.f32 %v6310, %v412
    %v6329 = vmul.f32 %v6310, %v413
    %v6330 = vmul.f32 %v6310, %v414
    %v6331 = vmul.f32 %v6310, %v415
    %6352 = vrot.lane.b32.xlu0 %v6312, 91
    %v6353 = vpop.permute.xlu0 %6352
    %6354 = vrot.lane.b32.xlu0 %v6313, 91
    %v6355 = vpop.permute.xlu0 %6354
    %6356 = vrot.lane.b32.xlu0 %v6314, 91
    %v6357 = vpop.permute.xlu0 %6356
    %6358 = vrot.lane.b32.xlu0 %v6315, 91
    %v6359 = vpop.permute.xlu0 %6358
    %6360 = vrot.lane.b32.xlu0 %v6316, 91
    %v6361 = vpop.permute.xlu0 %6360
    %6362 = vrot.lane.b32.xlu0 %v6317, 91
    %v6363 = vpop.permute.xlu0 %6362
    %6364 = vrot.lane.b32.xlu0 %v6318, 91
    %v6365 = vpop.permute.xlu0 %6364
    %6366 = vrot.lane.b32.xlu0 %v6319, 91
    %v6367 = vpop.permute.xlu0 %6366
    %6368 = vrot.lane.b32.xlu0 %v6320, 91
    %v6369 = vpop.permute.xlu0 %6368
    %6370 = vrot.lane.b32.xlu0 %v6321, 91
    %v6371 = vpop.permute.xlu0 %6370
    %6372 = vrot.lane.b32.xlu0 %v6322, 91
    %v6373 = vpop.permute.xlu0 %6372
    %6374 = vrot.lane.b32.xlu0 %v6323, 91
    %v6375 = vpop.permute.xlu0 %6374
    %6376 = vrot.lane.b32.xlu0 %v6324, 91
    %v6377 = vpop.permute.xlu0 %6376
    %6378 = vrot.lane.b32.xlu0 %v6325, 91
    %v6379 = vpop.permute.xlu0 %6378
    %6380 = vrot.lane.b32.xlu0 %v6326, 91
    %v6381 = vpop.permute.xlu0 %6380
    %6382 = vrot.lane.b32.xlu0 %v6327, 91
    %v6383 = vpop.permute.xlu0 %6382
    %6384 = vrot.lane.b32.xlu0 %v6328, 91
    %v6385 = vpop.permute.xlu0 %6384
    %6386 = vrot.lane.b32.xlu0 %v6329, 91
    %v6387 = vpop.permute.xlu0 %6386
    %6388 = vrot.lane.b32.xlu0 %v6330, 91
    %v6389 = vpop.permute.xlu0 %6388
    %6390 = vrot.lane.b32.xlu0 %v6331, 91
    %v6391 = vpop.permute.xlu0 %6390
    %vm6392 = vcmask 744448
    %v6393 = vsel %vm6392, %v6353, %v6355
    %v6394 = vsel %vm6392, %v6355, %v6357
    %v6395 = vsel %vm6392, %v6357, %v6359
    %v6396 = vsel %vm6392, %v6359, %v6361
    %v6397 = vsel %vm6392, %v6363, %v6365
    %v6398 = vsel %vm6392, %v6365, %v6367
    %v6399 = vsel %vm6392, %v6367, %v6369
    %v6400 = vsel %vm6392, %v6369, %v6371
    %v6401 = vsel %vm6392, %v6373, %v6375
    %v6402 = vsel %vm6392, %v6375, %v6377
    %v6403 = vsel %vm6392, %v6377, %v6379
    %v6404 = vsel %vm6392, %v6379, %v6381
    %v6405 = vsel %vm6392, %v6383, %v6385
    %v6406 = vsel %vm6392, %v6385, %v6387
    %v6407 = vsel %vm6392, %v6387, %v6389
    %v6408 = vsel %vm6392, %v6389, %v6391
    %v6429 = vadd.f32 %v6267, %v6393
    %v6430 = vadd.f32 %v6268, %v6394
    %v6431 = vadd.f32 %v6269, %v6395
    %v6432 = vadd.f32 %v6270, %v6396
    %v6433 = vadd.f32 %v6271, %v6361
    %v6434 = vadd.f32 %v6272, %v6397
    %v6435 = vadd.f32 %v6273, %v6398
    %v6436 = vadd.f32 %v6274, %v6399
    %v6437 = vadd.f32 %v6275, %v6400
    %v6438 = vadd.f32 %v6276, %v6371
    %v6439 = vadd.f32 %v6277, %v6401
    %v6440 = vadd.f32 %v6278, %v6402
    %v6441 = vadd.f32 %v6279, %v6403
    %v6442 = vadd.f32 %v6280, %v6404
    %v6443 = vadd.f32 %v6281, %v6381
    %v6444 = vadd.f32 %v6282, %v6405
    %v6445 = vadd.f32 %v6283, %v6406
    %v6446 = vadd.f32 %v6284, %v6407
    %v6447 = vadd.f32 %v6285, %v6408
    %v6448 = vadd.f32 %v6286, %v6391
    %s6449 = scalar_lea.vmem %s2, 1216
    %v6450 = vld [vmem:[%s6449] sm:$0xff]
    %v6451 = vld [vmem:[%s6449 + $0x8] sm:$0xff]
    %v6452 = vld [vmem:[%s6449 + $0x10] sm:$0xff]
    %v6453 = vld [vmem:[%s6449 + $0x18] sm:$0xff]
    %6455 = vset.pattern.permute.xlu0 0
    %6456 = vperm.xlu0 %6455, %v6450
    %v6457 = vpop.permute.xlu0 %6456
    %6460 = vset.pattern.permute.xlu0 0
    %6461 = vperm.xlu0 %6460, %v6451
    %v6462 = vpop.permute.xlu0 %6461
    %6465 = vset.pattern.permute.xlu0 0
    %6466 = vperm.xlu0 %6465, %v6452
    %v6467 = vpop.permute.xlu0 %6466
    %6470 = vset.pattern.permute.xlu0 0
    %6471 = vperm.xlu0 %6470, %v6453
    %v6472 = vpop.permute.xlu0 %6471
    %v6474 = vmul.f32 %v6457, %v396
    %v6475 = vmul.f32 %v6457, %v397
    %v6476 = vmul.f32 %v6457, %v398
    %v6477 = vmul.f32 %v6457, %v399
    %v6478 = vmul.f32 %v6457, %v400
    %v6479 = vmul.f32 %v6462, %v401
    %v6480 = vmul.f32 %v6462, %v402
    %v6481 = vmul.f32 %v6462, %v403
    %v6482 = vmul.f32 %v6462, %v404
    %v6483 = vmul.f32 %v6462, %v405
    %v6484 = vmul.f32 %v6467, %v406
    %v6485 = vmul.f32 %v6467, %v407
    %v6486 = vmul.f32 %v6467, %v408
    %v6487 = vmul.f32 %v6467, %v409
    %v6488 = vmul.f32 %v6467, %v410
    %v6489 = vmul.f32 %v6472, %v411
    %v6490 = vmul.f32 %v6472, %v412
    %v6491 = vmul.f32 %v6472, %v413
    %v6492 = vmul.f32 %v6472, %v414
    %v6493 = vmul.f32 %v6472, %v415
    %6514 = vrot.lane.b32.xlu0 %v6474, 90
    %v6515 = vpop.permute.xlu0 %6514
    %6516 = vrot.lane.b32.xlu0 %v6475, 90
    %v6517 = vpop.permute.xlu0 %6516
    %6518 = vrot.lane.b32.xlu0 %v6476, 90
    %v6519 = vpop.permute.xlu0 %6518
    %6520 = vrot.lane.b32.xlu0 %v6477, 90
    %v6521 = vpop.permute.xlu0 %6520
    %6522 = vrot.lane.b32.xlu0 %v6478, 90
    %v6523 = vpop.permute.xlu0 %6522
    %6524 = vrot.lane.b32.xlu0 %v6479, 90
    %v6525 = vpop.permute.xlu0 %6524
    %6526 = vrot.lane.b32.xlu0 %v6480, 90
    %v6527 = vpop.permute.xlu0 %6526
    %6528 = vrot.lane.b32.xlu0 %v6481, 90
    %v6529 = vpop.permute.xlu0 %6528
    %6530 = vrot.lane.b32.xlu0 %v6482, 90
    %v6531 = vpop.permute.xlu0 %6530
    %6532 = vrot.lane.b32.xlu0 %v6483, 90
    %v6533 = vpop.permute.xlu0 %6532
    %6534 = vrot.lane.b32.xlu0 %v6484, 90
    %v6535 = vpop.permute.xlu0 %6534
    %6536 = vrot.lane.b32.xlu0 %v6485, 90
    %v6537 = vpop.permute.xlu0 %6536
    %6538 = vrot.lane.b32.xlu0 %v6486, 90
    %v6539 = vpop.permute.xlu0 %6538
    %6540 = vrot.lane.b32.xlu0 %v6487, 90
    %v6541 = vpop.permute.xlu0 %6540
    %6542 = vrot.lane.b32.xlu0 %v6488, 90
    %v6543 = vpop.permute.xlu0 %6542
    %6544 = vrot.lane.b32.xlu0 %v6489, 90
    %v6545 = vpop.permute.xlu0 %6544
    %6546 = vrot.lane.b32.xlu0 %v6490, 90
    %v6547 = vpop.permute.xlu0 %6546
    %6548 = vrot.lane.b32.xlu0 %v6491, 90
    %v6549 = vpop.permute.xlu0 %6548
    %6550 = vrot.lane.b32.xlu0 %v6492, 90
    %v6551 = vpop.permute.xlu0 %6550
    %6552 = vrot.lane.b32.xlu0 %v6493, 90
    %v6553 = vpop.permute.xlu0 %6552
    %vm6554 = vcmask 736256
    %v6555 = vsel %vm6554, %v6515, %v6517
    %v6556 = vsel %vm6554, %v6517, %v6519
    %v6557 = vsel %vm6554, %v6519, %v6521
    %v6558 = vsel %vm6554, %v6521, %v6523
    %v6559 = vsel %vm6554, %v6525, %v6527
    %v6560 = vsel %vm6554, %v6527, %v6529
    %v6561 = vsel %vm6554, %v6529, %v6531
    %v6562 = vsel %vm6554, %v6531, %v6533
    %v6563 = vsel %vm6554, %v6535, %v6537
    %v6564 = vsel %vm6554, %v6537, %v6539
    %v6565 = vsel %vm6554, %v6539, %v6541
    %v6566 = vsel %vm6554, %v6541, %v6543
    %v6567 = vsel %vm6554, %v6545, %v6547
    %v6568 = vsel %vm6554, %v6547, %v6549
    %v6569 = vsel %vm6554, %v6549, %v6551
    %v6570 = vsel %vm6554, %v6551, %v6553
    %v6591 = vadd.f32 %v6429, %v6555
    %v6592 = vadd.f32 %v6430, %v6556
    %v6593 = vadd.f32 %v6431, %v6557
    %v6594 = vadd.f32 %v6432, %v6558
    %v6595 = vadd.f32 %v6433, %v6523
    %v6596 = vadd.f32 %v6434, %v6559
    %v6597 = vadd.f32 %v6435, %v6560
    %v6598 = vadd.f32 %v6436, %v6561
    %v6599 = vadd.f32 %v6437, %v6562
    %v6600 = vadd.f32 %v6438, %v6533
    %v6601 = vadd.f32 %v6439, %v6563
    %v6602 = vadd.f32 %v6440, %v6564
    %v6603 = vadd.f32 %v6441, %v6565
    %v6604 = vadd.f32 %v6442, %v6566
    %v6605 = vadd.f32 %v6443, %v6543
    %v6606 = vadd.f32 %v6444, %v6567
    %v6607 = vadd.f32 %v6445, %v6568
    %v6608 = vadd.f32 %v6446, %v6569
    %v6609 = vadd.f32 %v6447, %v6570
    %v6610 = vadd.f32 %v6448, %v6553
    %s6611 = scalar_lea.vmem %s2, 1248
    %v6612 = vld [vmem:[%s6611] sm:$0xff]
    %v6613 = vld [vmem:[%s6611 + $0x8] sm:$0xff]
    %v6614 = vld [vmem:[%s6611 + $0x10] sm:$0xff]
    %v6615 = vld [vmem:[%s6611 + $0x18] sm:$0xff]
    %6617 = vset.pattern.permute.xlu0 0
    %6618 = vperm.xlu0 %6617, %v6612
    %v6619 = vpop.permute.xlu0 %6618
    %6622 = vset.pattern.permute.xlu0 0
    %6623 = vperm.xlu0 %6622, %v6613
    %v6624 = vpop.permute.xlu0 %6623
    %6627 = vset.pattern.permute.xlu0 0
    %6628 = vperm.xlu0 %6627, %v6614
    %v6629 = vpop.permute.xlu0 %6628
    %6632 = vset.pattern.permute.xlu0 0
    %6633 = vperm.xlu0 %6632, %v6615
    %v6634 = vpop.permute.xlu0 %6633
    %v6636 = vmul.f32 %v6619, %v396
    %v6637 = vmul.f32 %v6619, %v397
    %v6638 = vmul.f32 %v6619, %v398
    %v6639 = vmul.f32 %v6619, %v399
    %v6640 = vmul.f32 %v6619, %v400
    %v6641 = vmul.f32 %v6624, %v401
    %v6642 = vmul.f32 %v6624, %v402
    %v6643 = vmul.f32 %v6624, %v403
    %v6644 = vmul.f32 %v6624, %v404
    %v6645 = vmul.f32 %v6624, %v405
    %v6646 = vmul.f32 %v6629, %v406
    %v6647 = vmul.f32 %v6629, %v407
    %v6648 = vmul.f32 %v6629, %v408
    %v6649 = vmul.f32 %v6629, %v409
    %v6650 = vmul.f32 %v6629, %v410
    %v6651 = vmul.f32 %v6634, %v411
    %v6652 = vmul.f32 %v6634, %v412
    %v6653 = vmul.f32 %v6634, %v413
    %v6654 = vmul.f32 %v6634, %v414
    %v6655 = vmul.f32 %v6634, %v415
    %6676 = vrot.lane.b32.xlu0 %v6636, 89
    %v6677 = vpop.permute.xlu0 %6676
    %6678 = vrot.lane.b32.xlu0 %v6637, 89
    %v6679 = vpop.permute.xlu0 %6678
    %6680 = vrot.lane.b32.xlu0 %v6638, 89
    %v6681 = vpop.permute.xlu0 %6680
    %6682 = vrot.lane.b32.xlu0 %v6639, 89
    %v6683 = vpop.permute.xlu0 %6682
    %6684 = vrot.lane.b32.xlu0 %v6640, 89
    %v6685 = vpop.permute.xlu0 %6684
    %6686 = vrot.lane.b32.xlu0 %v6641, 89
    %v6687 = vpop.permute.xlu0 %6686
    %6688 = vrot.lane.b32.xlu0 %v6642, 89
    %v6689 = vpop.permute.xlu0 %6688
    %6690 = vrot.lane.b32.xlu0 %v6643, 89
    %v6691 = vpop.permute.xlu0 %6690
    %6692 = vrot.lane.b32.xlu0 %v6644, 89
    %v6693 = vpop.permute.xlu0 %6692
    %6694 = vrot.lane.b32.xlu0 %v6645, 89
    %v6695 = vpop.permute.xlu0 %6694
    %6696 = vrot.lane.b32.xlu0 %v6646, 89
    %v6697 = vpop.permute.xlu0 %6696
    %6698 = vrot.lane.b32.xlu0 %v6647, 89
    %v6699 = vpop.permute.xlu0 %6698
    %6700 = vrot.lane.b32.xlu0 %v6648, 89
    %v6701 = vpop.permute.xlu0 %6700
    %6702 = vrot.lane.b32.xlu0 %v6649, 89
    %v6703 = vpop.permute.xlu0 %6702
    %6704 = vrot.lane.b32.xlu0 %v6650, 89
    %v6705 = vpop.permute.xlu0 %6704
    %6706 = vrot.lane.b32.xlu0 %v6651, 89
    %v6707 = vpop.permute.xlu0 %6706
    %6708 = vrot.lane.b32.xlu0 %v6652, 89
    %v6709 = vpop.permute.xlu0 %6708
    %6710 = vrot.lane.b32.xlu0 %v6653, 89
    %v6711 = vpop.permute.xlu0 %6710
    %6712 = vrot.lane.b32.xlu0 %v6654, 89
    %v6713 = vpop.permute.xlu0 %6712
    %6714 = vrot.lane.b32.xlu0 %v6655, 89
    %v6715 = vpop.permute.xlu0 %6714
    %vm6716 = vcmask 728064
    %v6717 = vsel %vm6716, %v6677, %v6679
    %v6718 = vsel %vm6716, %v6679, %v6681
    %v6719 = vsel %vm6716, %v6681, %v6683
    %v6720 = vsel %vm6716, %v6683, %v6685
    %v6721 = vsel %vm6716, %v6687, %v6689
    %v6722 = vsel %vm6716, %v6689, %v6691
    %v6723 = vsel %vm6716, %v6691, %v6693
    %v6724 = vsel %vm6716, %v6693, %v6695
    %v6725 = vsel %vm6716, %v6697, %v6699
    %v6726 = vsel %vm6716, %v6699, %v6701
    %v6727 = vsel %vm6716, %v6701, %v6703
    %v6728 = vsel %vm6716, %v6703, %v6705
    %v6729 = vsel %vm6716, %v6707, %v6709
    %v6730 = vsel %vm6716, %v6709, %v6711
    %v6731 = vsel %vm6716, %v6711, %v6713
    %v6732 = vsel %vm6716, %v6713, %v6715
    %v6753 = vadd.f32 %v6591, %v6717
    %v6754 = vadd.f32 %v6592, %v6718
    %v6755 = vadd.f32 %v6593, %v6719
    %v6756 = vadd.f32 %v6594, %v6720
    %v6757 = vadd.f32 %v6595, %v6685
    %v6758 = vadd.f32 %v6596, %v6721
    %v6759 = vadd.f32 %v6597, %v6722
    %v6760 = vadd.f32 %v6598, %v6723
    %v6761 = vadd.f32 %v6599, %v6724
    %v6762 = vadd.f32 %v6600, %v6695
    %v6763 = vadd.f32 %v6601, %v6725
    %v6764 = vadd.f32 %v6602, %v6726
    %v6765 = vadd.f32 %v6603, %v6727
    %v6766 = vadd.f32 %v6604, %v6728
    %v6767 = vadd.f32 %v6605, %v6705
    %v6768 = vadd.f32 %v6606, %v6729
    %v6769 = vadd.f32 %v6607, %v6730
    %v6770 = vadd.f32 %v6608, %v6731
    %v6771 = vadd.f32 %v6609, %v6732
    %v6772 = vadd.f32 %v6610, %v6715
    %s6773 = scalar_lea.vmem %s2, 1280
    %v6774 = vld [vmem:[%s6773] sm:$0xff]
    %v6775 = vld [vmem:[%s6773 + $0x8] sm:$0xff]
    %v6776 = vld [vmem:[%s6773 + $0x10] sm:$0xff]
    %v6777 = vld [vmem:[%s6773 + $0x18] sm:$0xff]
    %6779 = vset.pattern.permute.xlu0 0
    %6780 = vperm.xlu0 %6779, %v6774
    %v6781 = vpop.permute.xlu0 %6780
    %6784 = vset.pattern.permute.xlu0 0
    %6785 = vperm.xlu0 %6784, %v6775
    %v6786 = vpop.permute.xlu0 %6785
    %6789 = vset.pattern.permute.xlu0 0
    %6790 = vperm.xlu0 %6789, %v6776
    %v6791 = vpop.permute.xlu0 %6790
    %6794 = vset.pattern.permute.xlu0 0
    %6795 = vperm.xlu0 %6794, %v6777
    %v6796 = vpop.permute.xlu0 %6795
    %v6798 = vmul.f32 %v6781, %v396
    %v6799 = vmul.f32 %v6781, %v397
    %v6800 = vmul.f32 %v6781, %v398
    %v6801 = vmul.f32 %v6781, %v399
    %v6802 = vmul.f32 %v6781, %v400
    %v6803 = vmul.f32 %v6786, %v401
    %v6804 = vmul.f32 %v6786, %v402
    %v6805 = vmul.f32 %v6786, %v403
    %v6806 = vmul.f32 %v6786, %v404
    %v6807 = vmul.f32 %v6786, %v405
    %v6808 = vmul.f32 %v6791, %v406
    %v6809 = vmul.f32 %v6791, %v407
    %v6810 = vmul.f32 %v6791, %v408
    %v6811 = vmul.f32 %v6791, %v409
    %v6812 = vmul.f32 %v6791, %v410
    %v6813 = vmul.f32 %v6796, %v411
    %v6814 = vmul.f32 %v6796, %v412
    %v6815 = vmul.f32 %v6796, %v413
    %v6816 = vmul.f32 %v6796, %v414
    %v6817 = vmul.f32 %v6796, %v415
    %6838 = vrot.lane.b32.xlu0 %v6798, 88
    %v6839 = vpop.permute.xlu0 %6838
    %6840 = vrot.lane.b32.xlu0 %v6799, 88
    %v6841 = vpop.permute.xlu0 %6840
    %6842 = vrot.lane.b32.xlu0 %v6800, 88
    %v6843 = vpop.permute.xlu0 %6842
    %6844 = vrot.lane.b32.xlu0 %v6801, 88
    %v6845 = vpop.permute.xlu0 %6844
    %6846 = vrot.lane.b32.xlu0 %v6802, 88
    %v6847 = vpop.permute.xlu0 %6846
    %6848 = vrot.lane.b32.xlu0 %v6803, 88
    %v6849 = vpop.permute.xlu0 %6848
    %6850 = vrot.lane.b32.xlu0 %v6804, 88
    %v6851 = vpop.permute.xlu0 %6850
    %6852 = vrot.lane.b32.xlu0 %v6805, 88
    %v6853 = vpop.permute.xlu0 %6852
    %6854 = vrot.lane.b32.xlu0 %v6806, 88
    %v6855 = vpop.permute.xlu0 %6854
    %6856 = vrot.lane.b32.xlu0 %v6807, 88
    %v6857 = vpop.permute.xlu0 %6856
    %6858 = vrot.lane.b32.xlu0 %v6808, 88
    %v6859 = vpop.permute.xlu0 %6858
    %6860 = vrot.lane.b32.xlu0 %v6809, 88
    %v6861 = vpop.permute.xlu0 %6860
    %6862 = vrot.lane.b32.xlu0 %v6810, 88
    %v6863 = vpop.permute.xlu0 %6862
    %6864 = vrot.lane.b32.xlu0 %v6811, 88
    %v6865 = vpop.permute.xlu0 %6864
    %6866 = vrot.lane.b32.xlu0 %v6812, 88
    %v6867 = vpop.permute.xlu0 %6866
    %6868 = vrot.lane.b32.xlu0 %v6813, 88
    %v6869 = vpop.permute.xlu0 %6868
    %6870 = vrot.lane.b32.xlu0 %v6814, 88
    %v6871 = vpop.permute.xlu0 %6870
    %6872 = vrot.lane.b32.xlu0 %v6815, 88
    %v6873 = vpop.permute.xlu0 %6872
    %6874 = vrot.lane.b32.xlu0 %v6816, 88
    %v6875 = vpop.permute.xlu0 %6874
    %6876 = vrot.lane.b32.xlu0 %v6817, 88
    %v6877 = vpop.permute.xlu0 %6876
    %vm6878 = vcmask 719872
    %v6879 = vsel %vm6878, %v6839, %v6841
    %v6880 = vsel %vm6878, %v6841, %v6843
    %v6881 = vsel %vm6878, %v6843, %v6845
    %v6882 = vsel %vm6878, %v6845, %v6847
    %v6883 = vsel %vm6878, %v6849, %v6851
    %v6884 = vsel %vm6878, %v6851, %v6853
    %v6885 = vsel %vm6878, %v6853, %v6855
    %v6886 = vsel %vm6878, %v6855, %v6857
    %v6887 = vsel %vm6878, %v6859, %v6861
    %v6888 = vsel %vm6878, %v6861, %v6863
    %v6889 = vsel %vm6878, %v6863, %v6865
    %v6890 = vsel %vm6878, %v6865, %v6867
    %v6891 = vsel %vm6878, %v6869, %v6871
    %v6892 = vsel %vm6878, %v6871, %v6873
    %v6893 = vsel %vm6878, %v6873, %v6875
    %v6894 = vsel %vm6878, %v6875, %v6877
    %v6915 = vadd.f32 %v6753, %v6879
    %v6916 = vadd.f32 %v6754, %v6880
    %v6917 = vadd.f32 %v6755, %v6881
    %v6918 = vadd.f32 %v6756, %v6882
    %v6919 = vadd.f32 %v6757, %v6847
    %v6920 = vadd.f32 %v6758, %v6883
    %v6921 = vadd.f32 %v6759, %v6884
    %v6922 = vadd.f32 %v6760, %v6885
    %v6923 = vadd.f32 %v6761, %v6886
    %v6924 = vadd.f32 %v6762, %v6857
    %v6925 = vadd.f32 %v6763, %v6887
    %v6926 = vadd.f32 %v6764, %v6888
    %v6927 = vadd.f32 %v6765, %v6889
    %v6928 = vadd.f32 %v6766, %v6890
    %v6929 = vadd.f32 %v6767, %v6867
    %v6930 = vadd.f32 %v6768, %v6891
    %v6931 = vadd.f32 %v6769, %v6892
    %v6932 = vadd.f32 %v6770, %v6893
    %v6933 = vadd.f32 %v6771, %v6894
    %v6934 = vadd.f32 %v6772, %v6877
    %s6935 = scalar_lea.vmem %s2, 1312
    %v6936 = vld [vmem:[%s6935] sm:$0xff]
    %v6937 = vld [vmem:[%s6935 + $0x8] sm:$0xff]
    %v6938 = vld [vmem:[%s6935 + $0x10] sm:$0xff]
    %v6939 = vld [vmem:[%s6935 + $0x18] sm:$0xff]
    %6941 = vset.pattern.permute.xlu0 0
    %6942 = vperm.xlu0 %6941, %v6936
    %v6943 = vpop.permute.xlu0 %6942
    %6946 = vset.pattern.permute.xlu0 0
    %6947 = vperm.xlu0 %6946, %v6937
    %v6948 = vpop.permute.xlu0 %6947
    %6951 = vset.pattern.permute.xlu0 0
    %6952 = vperm.xlu0 %6951, %v6938
    %v6953 = vpop.permute.xlu0 %6952
    %6956 = vset.pattern.permute.xlu0 0
    %6957 = vperm.xlu0 %6956, %v6939
    %v6958 = vpop.permute.xlu0 %6957
    %v6960 = vmul.f32 %v6943, %v396
    %v6961 = vmul.f32 %v6943, %v397
    %v6962 = vmul.f32 %v6943, %v398
    %v6963 = vmul.f32 %v6943, %v399
    %v6964 = vmul.f32 %v6943, %v400
    %v6965 = vmul.f32 %v6948, %v401
    %v6966 = vmul.f32 %v6948, %v402
    %v6967 = vmul.f32 %v6948, %v403
    %v6968 = vmul.f32 %v6948, %v404
    %v6969 = vmul.f32 %v6948, %v405
    %v6970 = vmul.f32 %v6953, %v406
    %v6971 = vmul.f32 %v6953, %v407
    %v6972 = vmul.f32 %v6953, %v408
    %v6973 = vmul.f32 %v6953, %v409
    %v6974 = vmul.f32 %v6953, %v410
    %v6975 = vmul.f32 %v6958, %v411
    %v6976 = vmul.f32 %v6958, %v412
    %v6977 = vmul.f32 %v6958, %v413
    %v6978 = vmul.f32 %v6958, %v414
    %v6979 = vmul.f32 %v6958, %v415
    %7000 = vrot.lane.b32.xlu0 %v6960, 87
    %v7001 = vpop.permute.xlu0 %7000
    %7002 = vrot.lane.b32.xlu0 %v6961, 87
    %v7003 = vpop.permute.xlu0 %7002
    %7004 = vrot.lane.b32.xlu0 %v6962, 87
    %v7005 = vpop.permute.xlu0 %7004
    %7006 = vrot.lane.b32.xlu0 %v6963, 87
    %v7007 = vpop.permute.xlu0 %7006
    %7008 = vrot.lane.b32.xlu0 %v6964, 87
    %v7009 = vpop.permute.xlu0 %7008
    %7010 = vrot.lane.b32.xlu0 %v6965, 87
    %v7011 = vpop.permute.xlu0 %7010
    %7012 = vrot.lane.b32.xlu0 %v6966, 87
    %v7013 = vpop.permute.xlu0 %7012
    %7014 = vrot.lane.b32.xlu0 %v6967, 87
    %v7015 = vpop.permute.xlu0 %7014
    %7016 = vrot.lane.b32.xlu0 %v6968, 87
    %v7017 = vpop.permute.xlu0 %7016
    %7018 = vrot.lane.b32.xlu0 %v6969, 87
    %v7019 = vpop.permute.xlu0 %7018
    %7020 = vrot.lane.b32.xlu0 %v6970, 87
    %v7021 = vpop.permute.xlu0 %7020
    %7022 = vrot.lane.b32.xlu0 %v6971, 87
    %v7023 = vpop.permute.xlu0 %7022
    %7024 = vrot.lane.b32.xlu0 %v6972, 87
    %v7025 = vpop.permute.xlu0 %7024
    %7026 = vrot.lane.b32.xlu0 %v6973, 87
    %v7027 = vpop.permute.xlu0 %7026
    %7028 = vrot.lane.b32.xlu0 %v6974, 87
    %v7029 = vpop.permute.xlu0 %7028
    %7030 = vrot.lane.b32.xlu0 %v6975, 87
    %v7031 = vpop.permute.xlu0 %7030
    %7032 = vrot.lane.b32.xlu0 %v6976, 87
    %v7033 = vpop.permute.xlu0 %7032
    %7034 = vrot.lane.b32.xlu0 %v6977, 87
    %v7035 = vpop.permute.xlu0 %7034
    %7036 = vrot.lane.b32.xlu0 %v6978, 87
    %v7037 = vpop.permute.xlu0 %7036
    %7038 = vrot.lane.b32.xlu0 %v6979, 87
    %v7039 = vpop.permute.xlu0 %7038
    %vm7040 = vcmask 711680
    %v7041 = vsel %vm7040, %v7001, %v7003
    %v7042 = vsel %vm7040, %v7003, %v7005
    %v7043 = vsel %vm7040, %v7005, %v7007
    %v7044 = vsel %vm7040, %v7007, %v7009
    %v7045 = vsel %vm7040, %v7011, %v7013
    %v7046 = vsel %vm7040, %v7013, %v7015
    %v7047 = vsel %vm7040, %v7015, %v7017
    %v7048 = vsel %vm7040, %v7017, %v7019
    %v7049 = vsel %vm7040, %v7021, %v7023
    %v7050 = vsel %vm7040, %v7023, %v7025
    %v7051 = vsel %vm7040, %v7025, %v7027
    %v7052 = vsel %vm7040, %v7027, %v7029
    %v7053 = vsel %vm7040, %v7031, %v7033
    %v7054 = vsel %vm7040, %v7033, %v7035
    %v7055 = vsel %vm7040, %v7035, %v7037
    %v7056 = vsel %vm7040, %v7037, %v7039
    %v7077 = vadd.f32 %v6915, %v7041
    %v7078 = vadd.f32 %v6916, %v7042
    %v7079 = vadd.f32 %v6917, %v7043
    %v7080 = vadd.f32 %v6918, %v7044
    %v7081 = vadd.f32 %v6919, %v7009
    %v7082 = vadd.f32 %v6920, %v7045
    %v7083 = vadd.f32 %v6921, %v7046
    %v7084 = vadd.f32 %v6922, %v7047
    %v7085 = vadd.f32 %v6923, %v7048
    %v7086 = vadd.f32 %v6924, %v7019
    %v7087 = vadd.f32 %v6925, %v7049
    %v7088 = vadd.f32 %v6926, %v7050
    %v7089 = vadd.f32 %v6927, %v7051
    %v7090 = vadd.f32 %v6928, %v7052
    %v7091 = vadd.f32 %v6929, %v7029
    %v7092 = vadd.f32 %v6930, %v7053
    %v7093 = vadd.f32 %v6931, %v7054
    %v7094 = vadd.f32 %v6932, %v7055
    %v7095 = vadd.f32 %v6933, %v7056
    %v7096 = vadd.f32 %v6934, %v7039
    %s7097 = scalar_lea.vmem %s2, 1344
    %v7098 = vld [vmem:[%s7097] sm:$0xff]
    %v7099 = vld [vmem:[%s7097 + $0x8] sm:$0xff]
    %v7100 = vld [vmem:[%s7097 + $0x10] sm:$0xff]
    %v7101 = vld [vmem:[%s7097 + $0x18] sm:$0xff]
    %7103 = vset.pattern.permute.xlu0 0
    %7104 = vperm.xlu0 %7103, %v7098
    %v7105 = vpop.permute.xlu0 %7104
    %7108 = vset.pattern.permute.xlu0 0
    %7109 = vperm.xlu0 %7108, %v7099
    %v7110 = vpop.permute.xlu0 %7109
    %7113 = vset.pattern.permute.xlu0 0
    %7114 = vperm.xlu0 %7113, %v7100
    %v7115 = vpop.permute.xlu0 %7114
    %7118 = vset.pattern.permute.xlu0 0
    %7119 = vperm.xlu0 %7118, %v7101
    %v7120 = vpop.permute.xlu0 %7119
    %v7122 = vmul.f32 %v7105, %v396
    %v7123 = vmul.f32 %v7105, %v397
    %v7124 = vmul.f32 %v7105, %v398
    %v7125 = vmul.f32 %v7105, %v399
    %v7126 = vmul.f32 %v7105, %v400
    %v7127 = vmul.f32 %v7110, %v401
    %v7128 = vmul.f32 %v7110, %v402
    %v7129 = vmul.f32 %v7110, %v403
    %v7130 = vmul.f32 %v7110, %v404
    %v7131 = vmul.f32 %v7110, %v405
    %v7132 = vmul.f32 %v7115, %v406
    %v7133 = vmul.f32 %v7115, %v407
    %v7134 = vmul.f32 %v7115, %v408
    %v7135 = vmul.f32 %v7115, %v409
    %v7136 = vmul.f32 %v7115, %v410
    %v7137 = vmul.f32 %v7120, %v411
    %v7138 = vmul.f32 %v7120, %v412
    %v7139 = vmul.f32 %v7120, %v413
    %v7140 = vmul.f32 %v7120, %v414
    %v7141 = vmul.f32 %v7120, %v415
    %7162 = vrot.lane.b32.xlu0 %v7122, 86
    %v7163 = vpop.permute.xlu0 %7162
    %7164 = vrot.lane.b32.xlu0 %v7123, 86
    %v7165 = vpop.permute.xlu0 %7164
    %7166 = vrot.lane.b32.xlu0 %v7124, 86
    %v7167 = vpop.permute.xlu0 %7166
    %7168 = vrot.lane.b32.xlu0 %v7125, 86
    %v7169 = vpop.permute.xlu0 %7168
    %7170 = vrot.lane.b32.xlu0 %v7126, 86
    %v7171 = vpop.permute.xlu0 %7170
    %7172 = vrot.lane.b32.xlu0 %v7127, 86
    %v7173 = vpop.permute.xlu0 %7172
    %7174 = vrot.lane.b32.xlu0 %v7128, 86
    %v7175 = vpop.permute.xlu0 %7174
    %7176 = vrot.lane.b32.xlu0 %v7129, 86
    %v7177 = vpop.permute.xlu0 %7176
    %7178 = vrot.lane.b32.xlu0 %v7130, 86
    %v7179 = vpop.permute.xlu0 %7178
    %7180 = vrot.lane.b32.xlu0 %v7131, 86
    %v7181 = vpop.permute.xlu0 %7180
    %7182 = vrot.lane.b32.xlu0 %v7132, 86
    %v7183 = vpop.permute.xlu0 %7182
    %7184 = vrot.lane.b32.xlu0 %v7133, 86
    %v7185 = vpop.permute.xlu0 %7184
    %7186 = vrot.lane.b32.xlu0 %v7134, 86
    %v7187 = vpop.permute.xlu0 %7186
    %7188 = vrot.lane.b32.xlu0 %v7135, 86
    %v7189 = vpop.permute.xlu0 %7188
    %7190 = vrot.lane.b32.xlu0 %v7136, 86
    %v7191 = vpop.permute.xlu0 %7190
    %7192 = vrot.lane.b32.xlu0 %v7137, 86
    %v7193 = vpop.permute.xlu0 %7192
    %7194 = vrot.lane.b32.xlu0 %v7138, 86
    %v7195 = vpop.permute.xlu0 %7194
    %7196 = vrot.lane.b32.xlu0 %v7139, 86
    %v7197 = vpop.permute.xlu0 %7196
    %7198 = vrot.lane.b32.xlu0 %v7140, 86
    %v7199 = vpop.permute.xlu0 %7198
    %7200 = vrot.lane.b32.xlu0 %v7141, 86
    %v7201 = vpop.permute.xlu0 %7200
    %vm7202 = vcmask 703488
    %v7203 = vsel %vm7202, %v7163, %v7165
    %v7204 = vsel %vm7202, %v7165, %v7167
    %v7205 = vsel %vm7202, %v7167, %v7169
    %v7206 = vsel %vm7202, %v7169, %v7171
    %v7207 = vsel %vm7202, %v7173, %v7175
    %v7208 = vsel %vm7202, %v7175, %v7177
    %v7209 = vsel %vm7202, %v7177, %v7179
    %v7210 = vsel %vm7202, %v7179, %v7181
    %v7211 = vsel %vm7202, %v7183, %v7185
    %v7212 = vsel %vm7202, %v7185, %v7187
    %v7213 = vsel %vm7202, %v7187, %v7189
    %v7214 = vsel %vm7202, %v7189, %v7191
    %v7215 = vsel %vm7202, %v7193, %v7195
    %v7216 = vsel %vm7202, %v7195, %v7197
    %v7217 = vsel %vm7202, %v7197, %v7199
    %v7218 = vsel %vm7202, %v7199, %v7201
    %v7239 = vadd.f32 %v7077, %v7203
    %v7240 = vadd.f32 %v7078, %v7204
    %v7241 = vadd.f32 %v7079, %v7205
    %v7242 = vadd.f32 %v7080, %v7206
    %v7243 = vadd.f32 %v7081, %v7171
    %v7244 = vadd.f32 %v7082, %v7207
    %v7245 = vadd.f32 %v7083, %v7208
    %v7246 = vadd.f32 %v7084, %v7209
    %v7247 = vadd.f32 %v7085, %v7210
    %v7248 = vadd.f32 %v7086, %v7181
    %v7249 = vadd.f32 %v7087, %v7211
    %v7250 = vadd.f32 %v7088, %v7212
    %v7251 = vadd.f32 %v7089, %v7213
    %v7252 = vadd.f32 %v7090, %v7214
    %v7253 = vadd.f32 %v7091, %v7191
    %v7254 = vadd.f32 %v7092, %v7215
    %v7255 = vadd.f32 %v7093, %v7216
    %v7256 = vadd.f32 %v7094, %v7217
    %v7257 = vadd.f32 %v7095, %v7218
    %v7258 = vadd.f32 %v7096, %v7201
    %s7259 = scalar_lea.vmem %s2, 1376
    %v7260 = vld [vmem:[%s7259] sm:$0xff]
    %v7261 = vld [vmem:[%s7259 + $0x8] sm:$0xff]
    %v7262 = vld [vmem:[%s7259 + $0x10] sm:$0xff]
    %v7263 = vld [vmem:[%s7259 + $0x18] sm:$0xff]
    %7265 = vset.pattern.permute.xlu0 0
    %7266 = vperm.xlu0 %7265, %v7260
    %v7267 = vpop.permute.xlu0 %7266
    %7270 = vset.pattern.permute.xlu0 0
    %7271 = vperm.xlu0 %7270, %v7261
    %v7272 = vpop.permute.xlu0 %7271
    %7275 = vset.pattern.permute.xlu0 0
    %7276 = vperm.xlu0 %7275, %v7262
    %v7277 = vpop.permute.xlu0 %7276
    %7280 = vset.pattern.permute.xlu0 0
    %7281 = vperm.xlu0 %7280, %v7263
    %v7282 = vpop.permute.xlu0 %7281
    %v7284 = vmul.f32 %v7267, %v396
    %v7285 = vmul.f32 %v7267, %v397
    %v7286 = vmul.f32 %v7267, %v398
    %v7287 = vmul.f32 %v7267, %v399
    %v7288 = vmul.f32 %v7267, %v400
    %v7289 = vmul.f32 %v7272, %v401
    %v7290 = vmul.f32 %v7272, %v402
    %v7291 = vmul.f32 %v7272, %v403
    %v7292 = vmul.f32 %v7272, %v404
    %v7293 = vmul.f32 %v7272, %v405
    %v7294 = vmul.f32 %v7277, %v406
    %v7295 = vmul.f32 %v7277, %v407
    %v7296 = vmul.f32 %v7277, %v408
    %v7297 = vmul.f32 %v7277, %v409
    %v7298 = vmul.f32 %v7277, %v410
    %v7299 = vmul.f32 %v7282, %v411
    %v7300 = vmul.f32 %v7282, %v412
    %v7301 = vmul.f32 %v7282, %v413
    %v7302 = vmul.f32 %v7282, %v414
    %v7303 = vmul.f32 %v7282, %v415
    %7324 = vrot.lane.b32.xlu0 %v7284, 85
    %v7325 = vpop.permute.xlu0 %7324
    %7326 = vrot.lane.b32.xlu0 %v7285, 85
    %v7327 = vpop.permute.xlu0 %7326
    %7328 = vrot.lane.b32.xlu0 %v7286, 85
    %v7329 = vpop.permute.xlu0 %7328
    %7330 = vrot.lane.b32.xlu0 %v7287, 85
    %v7331 = vpop.permute.xlu0 %7330
    %7332 = vrot.lane.b32.xlu0 %v7288, 85
    %v7333 = vpop.permute.xlu0 %7332
    %7334 = vrot.lane.b32.xlu0 %v7289, 85
    %v7335 = vpop.permute.xlu0 %7334
    %7336 = vrot.lane.b32.xlu0 %v7290, 85
    %v7337 = vpop.permute.xlu0 %7336
    %7338 = vrot.lane.b32.xlu0 %v7291, 85
    %v7339 = vpop.permute.xlu0 %7338
    %7340 = vrot.lane.b32.xlu0 %v7292, 85
    %v7341 = vpop.permute.xlu0 %7340
    %7342 = vrot.lane.b32.xlu0 %v7293, 85
    %v7343 = vpop.permute.xlu0 %7342
    %7344 = vrot.lane.b32.xlu0 %v7294, 85
    %v7345 = vpop.permute.xlu0 %7344
    %7346 = vrot.lane.b32.xlu0 %v7295, 85
    %v7347 = vpop.permute.xlu0 %7346
    %7348 = vrot.lane.b32.xlu0 %v7296, 85
    %v7349 = vpop.permute.xlu0 %7348
    %7350 = vrot.lane.b32.xlu0 %v7297, 85
    %v7351 = vpop.permute.xlu0 %7350
    %7352 = vrot.lane.b32.xlu0 %v7298, 85
    %v7353 = vpop.permute.xlu0 %7352
    %7354 = vrot.lane.b32.xlu0 %v7299, 85
    %v7355 = vpop.permute.xlu0 %7354
    %7356 = vrot.lane.b32.xlu0 %v7300, 85
    %v7357 = vpop.permute.xlu0 %7356
    %7358 = vrot.lane.b32.xlu0 %v7301, 85
    %v7359 = vpop.permute.xlu0 %7358
    %7360 = vrot.lane.b32.xlu0 %v7302, 85
    %v7361 = vpop.permute.xlu0 %7360
    %7362 = vrot.lane.b32.xlu0 %v7303, 85
    %v7363 = vpop.permute.xlu0 %7362
    %vm7364 = vcmask 695296
    %v7365 = vsel %vm7364, %v7325, %v7327
    %v7366 = vsel %vm7364, %v7327, %v7329
    %v7367 = vsel %vm7364, %v7329, %v7331
    %v7368 = vsel %vm7364, %v7331, %v7333
    %v7369 = vsel %vm7364, %v7335, %v7337
    %v7370 = vsel %vm7364, %v7337, %v7339
    %v7371 = vsel %vm7364, %v7339, %v7341
    %v7372 = vsel %vm7364, %v7341, %v7343
    %v7373 = vsel %vm7364, %v7345, %v7347
    %v7374 = vsel %vm7364, %v7347, %v7349
    %v7375 = vsel %vm7364, %v7349, %v7351
    %v7376 = vsel %vm7364, %v7351, %v7353
    %v7377 = vsel %vm7364, %v7355, %v7357
    %v7378 = vsel %vm7364, %v7357, %v7359
    %v7379 = vsel %vm7364, %v7359, %v7361
    %v7380 = vsel %vm7364, %v7361, %v7363
    %v7401 = vadd.f32 %v7239, %v7365
    %v7402 = vadd.f32 %v7240, %v7366
    %v7403 = vadd.f32 %v7241, %v7367
    %v7404 = vadd.f32 %v7242, %v7368
    %v7405 = vadd.f32 %v7243, %v7333
    %v7406 = vadd.f32 %v7244, %v7369
    %v7407 = vadd.f32 %v7245, %v7370
    %v7408 = vadd.f32 %v7246, %v7371
    %v7409 = vadd.f32 %v7247, %v7372
    %v7410 = vadd.f32 %v7248, %v7343
    %v7411 = vadd.f32 %v7249, %v7373
    %v7412 = vadd.f32 %v7250, %v7374
    %v7413 = vadd.f32 %v7251, %v7375
    %v7414 = vadd.f32 %v7252, %v7376
    %v7415 = vadd.f32 %v7253, %v7353
    %v7416 = vadd.f32 %v7254, %v7377
    %v7417 = vadd.f32 %v7255, %v7378
    %v7418 = vadd.f32 %v7256, %v7379
    %v7419 = vadd.f32 %v7257, %v7380
    %v7420 = vadd.f32 %v7258, %v7363
    %s7421 = scalar_lea.vmem %s2, 1408
    %v7422 = vld [vmem:[%s7421] sm:$0xff]
    %v7423 = vld [vmem:[%s7421 + $0x8] sm:$0xff]
    %v7424 = vld [vmem:[%s7421 + $0x10] sm:$0xff]
    %v7425 = vld [vmem:[%s7421 + $0x18] sm:$0xff]
    %7427 = vset.pattern.permute.xlu0 0
    %7428 = vperm.xlu0 %7427, %v7422
    %v7429 = vpop.permute.xlu0 %7428
    %7432 = vset.pattern.permute.xlu0 0
    %7433 = vperm.xlu0 %7432, %v7423
    %v7434 = vpop.permute.xlu0 %7433
    %7437 = vset.pattern.permute.xlu0 0
    %7438 = vperm.xlu0 %7437, %v7424
    %v7439 = vpop.permute.xlu0 %7438
    %7442 = vset.pattern.permute.xlu0 0
    %7443 = vperm.xlu0 %7442, %v7425
    %v7444 = vpop.permute.xlu0 %7443
    %v7446 = vmul.f32 %v7429, %v396
    %v7447 = vmul.f32 %v7429, %v397
    %v7448 = vmul.f32 %v7429, %v398
    %v7449 = vmul.f32 %v7429, %v399
    %v7450 = vmul.f32 %v7429, %v400
    %v7451 = vmul.f32 %v7434, %v401
    %v7452 = vmul.f32 %v7434, %v402
    %v7453 = vmul.f32 %v7434, %v403
    %v7454 = vmul.f32 %v7434, %v404
    %v7455 = vmul.f32 %v7434, %v405
    %v7456 = vmul.f32 %v7439, %v406
    %v7457 = vmul.f32 %v7439, %v407
    %v7458 = vmul.f32 %v7439, %v408
    %v7459 = vmul.f32 %v7439, %v409
    %v7460 = vmul.f32 %v7439, %v410
    %v7461 = vmul.f32 %v7444, %v411
    %v7462 = vmul.f32 %v7444, %v412
    %v7463 = vmul.f32 %v7444, %v413
    %v7464 = vmul.f32 %v7444, %v414
    %v7465 = vmul.f32 %v7444, %v415
    %7486 = vrot.lane.b32.xlu0 %v7446, 84
    %v7487 = vpop.permute.xlu0 %7486
    %7488 = vrot.lane.b32.xlu0 %v7447, 84
    %v7489 = vpop.permute.xlu0 %7488
    %7490 = vrot.lane.b32.xlu0 %v7448, 84
    %v7491 = vpop.permute.xlu0 %7490
    %7492 = vrot.lane.b32.xlu0 %v7449, 84
    %v7493 = vpop.permute.xlu0 %7492
    %7494 = vrot.lane.b32.xlu0 %v7450, 84
    %v7495 = vpop.permute.xlu0 %7494
    %7496 = vrot.lane.b32.xlu0 %v7451, 84
    %v7497 = vpop.permute.xlu0 %7496
    %7498 = vrot.lane.b32.xlu0 %v7452, 84
    %v7499 = vpop.permute.xlu0 %7498
    %7500 = vrot.lane.b32.xlu0 %v7453, 84
    %v7501 = vpop.permute.xlu0 %7500
    %7502 = vrot.lane.b32.xlu0 %v7454, 84
    %v7503 = vpop.permute.xlu0 %7502
    %7504 = vrot.lane.b32.xlu0 %v7455, 84
    %v7505 = vpop.permute.xlu0 %7504
    %7506 = vrot.lane.b32.xlu0 %v7456, 84
    %v7507 = vpop.permute.xlu0 %7506
    %7508 = vrot.lane.b32.xlu0 %v7457, 84
    %v7509 = vpop.permute.xlu0 %7508
    %7510 = vrot.lane.b32.xlu0 %v7458, 84
    %v7511 = vpop.permute.xlu0 %7510
    %7512 = vrot.lane.b32.xlu0 %v7459, 84
    %v7513 = vpop.permute.xlu0 %7512
    %7514 = vrot.lane.b32.xlu0 %v7460, 84
    %v7515 = vpop.permute.xlu0 %7514
    %7516 = vrot.lane.b32.xlu0 %v7461, 84
    %v7517 = vpop.permute.xlu0 %7516
    %7518 = vrot.lane.b32.xlu0 %v7462, 84
    %v7519 = vpop.permute.xlu0 %7518
    %7520 = vrot.lane.b32.xlu0 %v7463, 84
    %v7521 = vpop.permute.xlu0 %7520
    %7522 = vrot.lane.b32.xlu0 %v7464, 84
    %v7523 = vpop.permute.xlu0 %7522
    %7524 = vrot.lane.b32.xlu0 %v7465, 84
    %v7525 = vpop.permute.xlu0 %7524
    %vm7526 = vcmask 687104
    %v7527 = vsel %vm7526, %v7487, %v7489
    %v7528 = vsel %vm7526, %v7489, %v7491
    %v7529 = vsel %vm7526, %v7491, %v7493
    %v7530 = vsel %vm7526, %v7493, %v7495
    %v7531 = vsel %vm7526, %v7497, %v7499
    %v7532 = vsel %vm7526, %v7499, %v7501
    %v7533 = vsel %vm7526, %v7501, %v7503
    %v7534 = vsel %vm7526, %v7503, %v7505
    %v7535 = vsel %vm7526, %v7507, %v7509
    %v7536 = vsel %vm7526, %v7509, %v7511
    %v7537 = vsel %vm7526, %v7511, %v7513
    %v7538 = vsel %vm7526, %v7513, %v7515
    %v7539 = vsel %vm7526, %v7517, %v7519
    %v7540 = vsel %vm7526, %v7519, %v7521
    %v7541 = vsel %vm7526, %v7521, %v7523
    %v7542 = vsel %vm7526, %v7523, %v7525
    %v7563 = vadd.f32 %v7401, %v7527
    %v7564 = vadd.f32 %v7402, %v7528
    %v7565 = vadd.f32 %v7403, %v7529
    %v7566 = vadd.f32 %v7404, %v7530
    %v7567 = vadd.f32 %v7405, %v7495
    %v7568 = vadd.f32 %v7406, %v7531
    %v7569 = vadd.f32 %v7407, %v7532
    %v7570 = vadd.f32 %v7408, %v7533
    %v7571 = vadd.f32 %v7409, %v7534
    %v7572 = vadd.f32 %v7410, %v7505
    %v7573 = vadd.f32 %v7411, %v7535
    %v7574 = vadd.f32 %v7412, %v7536
    %v7575 = vadd.f32 %v7413, %v7537
    %v7576 = vadd.f32 %v7414, %v7538
    %v7577 = vadd.f32 %v7415, %v7515
    %v7578 = vadd.f32 %v7416, %v7539
    %v7579 = vadd.f32 %v7417, %v7540
    %v7580 = vadd.f32 %v7418, %v7541
    %v7581 = vadd.f32 %v7419, %v7542
    %v7582 = vadd.f32 %v7420, %v7525
    %s7583 = scalar_lea.vmem %s2, 1440
    %v7584 = vld [vmem:[%s7583] sm:$0xff]
    %v7585 = vld [vmem:[%s7583 + $0x8] sm:$0xff]
    %v7586 = vld [vmem:[%s7583 + $0x10] sm:$0xff]
    %v7587 = vld [vmem:[%s7583 + $0x18] sm:$0xff]
    %7589 = vset.pattern.permute.xlu0 0
    %7590 = vperm.xlu0 %7589, %v7584
    %v7591 = vpop.permute.xlu0 %7590
    %7594 = vset.pattern.permute.xlu0 0
    %7595 = vperm.xlu0 %7594, %v7585
    %v7596 = vpop.permute.xlu0 %7595
    %7599 = vset.pattern.permute.xlu0 0
    %7600 = vperm.xlu0 %7599, %v7586
    %v7601 = vpop.permute.xlu0 %7600
    %7604 = vset.pattern.permute.xlu0 0
    %7605 = vperm.xlu0 %7604, %v7587
    %v7606 = vpop.permute.xlu0 %7605
    %v7608 = vmul.f32 %v7591, %v396
    %v7609 = vmul.f32 %v7591, %v397
    %v7610 = vmul.f32 %v7591, %v398
    %v7611 = vmul.f32 %v7591, %v399
    %v7612 = vmul.f32 %v7591, %v400
    %v7613 = vmul.f32 %v7596, %v401
    %v7614 = vmul.f32 %v7596, %v402
    %v7615 = vmul.f32 %v7596, %v403
    %v7616 = vmul.f32 %v7596, %v404
    %v7617 = vmul.f32 %v7596, %v405
    %v7618 = vmul.f32 %v7601, %v406
    %v7619 = vmul.f32 %v7601, %v407
    %v7620 = vmul.f32 %v7601, %v408
    %v7621 = vmul.f32 %v7601, %v409
    %v7622 = vmul.f32 %v7601, %v410
    %v7623 = vmul.f32 %v7606, %v411
    %v7624 = vmul.f32 %v7606, %v412
    %v7625 = vmul.f32 %v7606, %v413
    %v7626 = vmul.f32 %v7606, %v414
    %v7627 = vmul.f32 %v7606, %v415
    %7648 = vrot.lane.b32.xlu0 %v7608, 83
    %v7649 = vpop.permute.xlu0 %7648
    %7650 = vrot.lane.b32.xlu0 %v7609, 83
    %v7651 = vpop.permute.xlu0 %7650
    %7652 = vrot.lane.b32.xlu0 %v7610, 83
    %v7653 = vpop.permute.xlu0 %7652
    %7654 = vrot.lane.b32.xlu0 %v7611, 83
    %v7655 = vpop.permute.xlu0 %7654
    %7656 = vrot.lane.b32.xlu0 %v7612, 83
    %v7657 = vpop.permute.xlu0 %7656
    %7658 = vrot.lane.b32.xlu0 %v7613, 83
    %v7659 = vpop.permute.xlu0 %7658
    %7660 = vrot.lane.b32.xlu0 %v7614, 83
    %v7661 = vpop.permute.xlu0 %7660
    %7662 = vrot.lane.b32.xlu0 %v7615, 83
    %v7663 = vpop.permute.xlu0 %7662
    %7664 = vrot.lane.b32.xlu0 %v7616, 83
    %v7665 = vpop.permute.xlu0 %7664
    %7666 = vrot.lane.b32.xlu0 %v7617, 83
    %v7667 = vpop.permute.xlu0 %7666
    %7668 = vrot.lane.b32.xlu0 %v7618, 83
    %v7669 = vpop.permute.xlu0 %7668
    %7670 = vrot.lane.b32.xlu0 %v7619, 83
    %v7671 = vpop.permute.xlu0 %7670
    %7672 = vrot.lane.b32.xlu0 %v7620, 83
    %v7673 = vpop.permute.xlu0 %7672
    %7674 = vrot.lane.b32.xlu0 %v7621, 83
    %v7675 = vpop.permute.xlu0 %7674
    %7676 = vrot.lane.b32.xlu0 %v7622, 83
    %v7677 = vpop.permute.xlu0 %7676
    %7678 = vrot.lane.b32.xlu0 %v7623, 83
    %v7679 = vpop.permute.xlu0 %7678
    %7680 = vrot.lane.b32.xlu0 %v7624, 83
    %v7681 = vpop.permute.xlu0 %7680
    %7682 = vrot.lane.b32.xlu0 %v7625, 83
    %v7683 = vpop.permute.xlu0 %7682
    %7684 = vrot.lane.b32.xlu0 %v7626, 83
    %v7685 = vpop.permute.xlu0 %7684
    %7686 = vrot.lane.b32.xlu0 %v7627, 83
    %v7687 = vpop.permute.xlu0 %7686
    %vm7688 = vcmask 678912
    %v7689 = vsel %vm7688, %v7649, %v7651
    %v7690 = vsel %vm7688, %v7651, %v7653
    %v7691 = vsel %vm7688, %v7653, %v7655
    %v7692 = vsel %vm7688, %v7655, %v7657
    %v7693 = vsel %vm7688, %v7659, %v7661
    %v7694 = vsel %vm7688, %v7661, %v7663
    %v7695 = vsel %vm7688, %v7663, %v7665
    %v7696 = vsel %vm7688, %v7665, %v7667
    %v7697 = vsel %vm7688, %v7669, %v7671
    %v7698 = vsel %vm7688, %v7671, %v7673
    %v7699 = vsel %vm7688, %v7673, %v7675
    %v7700 = vsel %vm7688, %v7675, %v7677
    %v7701 = vsel %vm7688, %v7679, %v7681
    %v7702 = vsel %vm7688, %v7681, %v7683
    %v7703 = vsel %vm7688, %v7683, %v7685
    %v7704 = vsel %vm7688, %v7685, %v7687
    %v7725 = vadd.f32 %v7563, %v7689
    %v7726 = vadd.f32 %v7564, %v7690
    %v7727 = vadd.f32 %v7565, %v7691
    %v7728 = vadd.f32 %v7566, %v7692
    %v7729 = vadd.f32 %v7567, %v7657
    %v7730 = vadd.f32 %v7568, %v7693
    %v7731 = vadd.f32 %v7569, %v7694
    %v7732 = vadd.f32 %v7570, %v7695
    %v7733 = vadd.f32 %v7571, %v7696
    %v7734 = vadd.f32 %v7572, %v7667
    %v7735 = vadd.f32 %v7573, %v7697
    %v7736 = vadd.f32 %v7574, %v7698
    %v7737 = vadd.f32 %v7575, %v7699
    %v7738 = vadd.f32 %v7576, %v7700
    %v7739 = vadd.f32 %v7577, %v7677
    %v7740 = vadd.f32 %v7578, %v7701
    %v7741 = vadd.f32 %v7579, %v7702
    %v7742 = vadd.f32 %v7580, %v7703
    %v7743 = vadd.f32 %v7581, %v7704
    %v7744 = vadd.f32 %v7582, %v7687
    %s7745 = scalar_lea.vmem %s2, 1472
    %v7746 = vld [vmem:[%s7745] sm:$0xff]
    %v7747 = vld [vmem:[%s7745 + $0x8] sm:$0xff]
    %v7748 = vld [vmem:[%s7745 + $0x10] sm:$0xff]
    %v7749 = vld [vmem:[%s7745 + $0x18] sm:$0xff]
    %7751 = vset.pattern.permute.xlu0 0
    %7752 = vperm.xlu0 %7751, %v7746
    %v7753 = vpop.permute.xlu0 %7752
    %7756 = vset.pattern.permute.xlu0 0
    %7757 = vperm.xlu0 %7756, %v7747
    %v7758 = vpop.permute.xlu0 %7757
    %7761 = vset.pattern.permute.xlu0 0
    %7762 = vperm.xlu0 %7761, %v7748
    %v7763 = vpop.permute.xlu0 %7762
    %7766 = vset.pattern.permute.xlu0 0
    %7767 = vperm.xlu0 %7766, %v7749
    %v7768 = vpop.permute.xlu0 %7767
    %v7770 = vmul.f32 %v7753, %v396
    %v7771 = vmul.f32 %v7753, %v397
    %v7772 = vmul.f32 %v7753, %v398
    %v7773 = vmul.f32 %v7753, %v399
    %v7774 = vmul.f32 %v7753, %v400
    %v7775 = vmul.f32 %v7758, %v401
    %v7776 = vmul.f32 %v7758, %v402
    %v7777 = vmul.f32 %v7758, %v403
    %v7778 = vmul.f32 %v7758, %v404
    %v7779 = vmul.f32 %v7758, %v405
    %v7780 = vmul.f32 %v7763, %v406
    %v7781 = vmul.f32 %v7763, %v407
    %v7782 = vmul.f32 %v7763, %v408
    %v7783 = vmul.f32 %v7763, %v409
    %v7784 = vmul.f32 %v7763, %v410
    %v7785 = vmul.f32 %v7768, %v411
    %v7786 = vmul.f32 %v7768, %v412
    %v7787 = vmul.f32 %v7768, %v413
    %v7788 = vmul.f32 %v7768, %v414
    %v7789 = vmul.f32 %v7768, %v415
    %7810 = vrot.lane.b32.xlu0 %v7770, 82
    %v7811 = vpop.permute.xlu0 %7810
    %7812 = vrot.lane.b32.xlu0 %v7771, 82
    %v7813 = vpop.permute.xlu0 %7812
    %7814 = vrot.lane.b32.xlu0 %v7772, 82
    %v7815 = vpop.permute.xlu0 %7814
    %7816 = vrot.lane.b32.xlu0 %v7773, 82
    %v7817 = vpop.permute.xlu0 %7816
    %7818 = vrot.lane.b32.xlu0 %v7774, 82
    %v7819 = vpop.permute.xlu0 %7818
    %7820 = vrot.lane.b32.xlu0 %v7775, 82
    %v7821 = vpop.permute.xlu0 %7820
    %7822 = vrot.lane.b32.xlu0 %v7776, 82
    %v7823 = vpop.permute.xlu0 %7822
    %7824 = vrot.lane.b32.xlu0 %v7777, 82
    %v7825 = vpop.permute.xlu0 %7824
    %7826 = vrot.lane.b32.xlu0 %v7778, 82
    %v7827 = vpop.permute.xlu0 %7826
    %7828 = vrot.lane.b32.xlu0 %v7779, 82
    %v7829 = vpop.permute.xlu0 %7828
    %7830 = vrot.lane.b32.xlu0 %v7780, 82
    %v7831 = vpop.permute.xlu0 %7830
    %7832 = vrot.lane.b32.xlu0 %v7781, 82
    %v7833 = vpop.permute.xlu0 %7832
    %7834 = vrot.lane.b32.xlu0 %v7782, 82
    %v7835 = vpop.permute.xlu0 %7834
    %7836 = vrot.lane.b32.xlu0 %v7783, 82
    %v7837 = vpop.permute.xlu0 %7836
    %7838 = vrot.lane.b32.xlu0 %v7784, 82
    %v7839 = vpop.permute.xlu0 %7838
    %7840 = vrot.lane.b32.xlu0 %v7785, 82
    %v7841 = vpop.permute.xlu0 %7840
    %7842 = vrot.lane.b32.xlu0 %v7786, 82
    %v7843 = vpop.permute.xlu0 %7842
    %7844 = vrot.lane.b32.xlu0 %v7787, 82
    %v7845 = vpop.permute.xlu0 %7844
    %7846 = vrot.lane.b32.xlu0 %v7788, 82
    %v7847 = vpop.permute.xlu0 %7846
    %7848 = vrot.lane.b32.xlu0 %v7789, 82
    %v7849 = vpop.permute.xlu0 %7848
    %vm7850 = vcmask 670720
    %v7851 = vsel %vm7850, %v7811, %v7813
    %v7852 = vsel %vm7850, %v7813, %v7815
    %v7853 = vsel %vm7850, %v7815, %v7817
    %v7854 = vsel %vm7850, %v7817, %v7819
    %v7855 = vsel %vm7850, %v7821, %v7823
    %v7856 = vsel %vm7850, %v7823, %v7825
    %v7857 = vsel %vm7850, %v7825, %v7827
    %v7858 = vsel %vm7850, %v7827, %v7829
    %v7859 = vsel %vm7850, %v7831, %v7833
    %v7860 = vsel %vm7850, %v7833, %v7835
    %v7861 = vsel %vm7850, %v7835, %v7837
    %v7862 = vsel %vm7850, %v7837, %v7839
    %v7863 = vsel %vm7850, %v7841, %v7843
    %v7864 = vsel %vm7850, %v7843, %v7845
    %v7865 = vsel %vm7850, %v7845, %v7847
    %v7866 = vsel %vm7850, %v7847, %v7849
    %v7887 = vadd.f32 %v7725, %v7851
    %v7888 = vadd.f32 %v7726, %v7852
    %v7889 = vadd.f32 %v7727, %v7853
    %v7890 = vadd.f32 %v7728, %v7854
    %v7891 = vadd.f32 %v7729, %v7819
    %v7892 = vadd.f32 %v7730, %v7855
    %v7893 = vadd.f32 %v7731, %v7856
    %v7894 = vadd.f32 %v7732, %v7857
    %v7895 = vadd.f32 %v7733, %v7858
    %v7896 = vadd.f32 %v7734, %v7829
    %v7897 = vadd.f32 %v7735, %v7859
    %v7898 = vadd.f32 %v7736, %v7860
    %v7899 = vadd.f32 %v7737, %v7861
    %v7900 = vadd.f32 %v7738, %v7862
    %v7901 = vadd.f32 %v7739, %v7839
    %v7902 = vadd.f32 %v7740, %v7863
    %v7903 = vadd.f32 %v7741, %v7864
    %v7904 = vadd.f32 %v7742, %v7865
    %v7905 = vadd.f32 %v7743, %v7866
    %v7906 = vadd.f32 %v7744, %v7849
    %s7907 = scalar_lea.vmem %s2, 1504
    %v7908 = vld [vmem:[%s7907] sm:$0xff]
    %v7909 = vld [vmem:[%s7907 + $0x8] sm:$0xff]
    %v7910 = vld [vmem:[%s7907 + $0x10] sm:$0xff]
    %v7911 = vld [vmem:[%s7907 + $0x18] sm:$0xff]
    %7913 = vset.pattern.permute.xlu0 0
    %7914 = vperm.xlu0 %7913, %v7908
    %v7915 = vpop.permute.xlu0 %7914
    %7918 = vset.pattern.permute.xlu0 0
    %7919 = vperm.xlu0 %7918, %v7909
    %v7920 = vpop.permute.xlu0 %7919
    %7923 = vset.pattern.permute.xlu0 0
    %7924 = vperm.xlu0 %7923, %v7910
    %v7925 = vpop.permute.xlu0 %7924
    %7928 = vset.pattern.permute.xlu0 0
    %7929 = vperm.xlu0 %7928, %v7911
    %v7930 = vpop.permute.xlu0 %7929
    %v7932 = vmul.f32 %v7915, %v396
    %v7933 = vmul.f32 %v7915, %v397
    %v7934 = vmul.f32 %v7915, %v398
    %v7935 = vmul.f32 %v7915, %v399
    %v7936 = vmul.f32 %v7915, %v400
    %v7937 = vmul.f32 %v7920, %v401
    %v7938 = vmul.f32 %v7920, %v402
    %v7939 = vmul.f32 %v7920, %v403
    %v7940 = vmul.f32 %v7920, %v404
    %v7941 = vmul.f32 %v7920, %v405
    %v7942 = vmul.f32 %v7925, %v406
    %v7943 = vmul.f32 %v7925, %v407
    %v7944 = vmul.f32 %v7925, %v408
    %v7945 = vmul.f32 %v7925, %v409
    %v7946 = vmul.f32 %v7925, %v410
    %v7947 = vmul.f32 %v7930, %v411
    %v7948 = vmul.f32 %v7930, %v412
    %v7949 = vmul.f32 %v7930, %v413
    %v7950 = vmul.f32 %v7930, %v414
    %v7951 = vmul.f32 %v7930, %v415
    %7972 = vrot.lane.b32.xlu0 %v7932, 81
    %v7973 = vpop.permute.xlu0 %7972
    %7974 = vrot.lane.b32.xlu0 %v7933, 81
    %v7975 = vpop.permute.xlu0 %7974
    %7976 = vrot.lane.b32.xlu0 %v7934, 81
    %v7977 = vpop.permute.xlu0 %7976
    %7978 = vrot.lane.b32.xlu0 %v7935, 81
    %v7979 = vpop.permute.xlu0 %7978
    %7980 = vrot.lane.b32.xlu0 %v7936, 81
    %v7981 = vpop.permute.xlu0 %7980
    %7982 = vrot.lane.b32.xlu0 %v7937, 81
    %v7983 = vpop.permute.xlu0 %7982
    %7984 = vrot.lane.b32.xlu0 %v7938, 81
    %v7985 = vpop.permute.xlu0 %7984
    %7986 = vrot.lane.b32.xlu0 %v7939, 81
    %v7987 = vpop.permute.xlu0 %7986
    %7988 = vrot.lane.b32.xlu0 %v7940, 81
    %v7989 = vpop.permute.xlu0 %7988
    %7990 = vrot.lane.b32.xlu0 %v7941, 81
    %v7991 = vpop.permute.xlu0 %7990
    %7992 = vrot.lane.b32.xlu0 %v7942, 81
    %v7993 = vpop.permute.xlu0 %7992
    %7994 = vrot.lane.b32.xlu0 %v7943, 81
    %v7995 = vpop.permute.xlu0 %7994
    %7996 = vrot.lane.b32.xlu0 %v7944, 81
    %v7997 = vpop.permute.xlu0 %7996
    %7998 = vrot.lane.b32.xlu0 %v7945, 81
    %v7999 = vpop.permute.xlu0 %7998
    %8000 = vrot.lane.b32.xlu0 %v7946, 81
    %v8001 = vpop.permute.xlu0 %8000
    %8002 = vrot.lane.b32.xlu0 %v7947, 81
    %v8003 = vpop.permute.xlu0 %8002
    %8004 = vrot.lane.b32.xlu0 %v7948, 81
    %v8005 = vpop.permute.xlu0 %8004
    %8006 = vrot.lane.b32.xlu0 %v7949, 81
    %v8007 = vpop.permute.xlu0 %8006
    %8008 = vrot.lane.b32.xlu0 %v7950, 81
    %v8009 = vpop.permute.xlu0 %8008
    %8010 = vrot.lane.b32.xlu0 %v7951, 81
    %v8011 = vpop.permute.xlu0 %8010
    %vm8012 = vcmask 662528
    %v8013 = vsel %vm8012, %v7973, %v7975
    %v8014 = vsel %vm8012, %v7975, %v7977
    %v8015 = vsel %vm8012, %v7977, %v7979
    %v8016 = vsel %vm8012, %v7979, %v7981
    %v8017 = vsel %vm8012, %v7983, %v7985
    %v8018 = vsel %vm8012, %v7985, %v7987
    %v8019 = vsel %vm8012, %v7987, %v7989
    %v8020 = vsel %vm8012, %v7989, %v7991
    %v8021 = vsel %vm8012, %v7993, %v7995
    %v8022 = vsel %vm8012, %v7995, %v7997
    %v8023 = vsel %vm8012, %v7997, %v7999
    %v8024 = vsel %vm8012, %v7999, %v8001
    %v8025 = vsel %vm8012, %v8003, %v8005
    %v8026 = vsel %vm8012, %v8005, %v8007
    %v8027 = vsel %vm8012, %v8007, %v8009
    %v8028 = vsel %vm8012, %v8009, %v8011
    %v8049 = vadd.f32 %v7887, %v8013
    %v8050 = vadd.f32 %v7888, %v8014
    %v8051 = vadd.f32 %v7889, %v8015
    %v8052 = vadd.f32 %v7890, %v8016
    %v8053 = vadd.f32 %v7891, %v7981
    %v8054 = vadd.f32 %v7892, %v8017
    %v8055 = vadd.f32 %v7893, %v8018
    %v8056 = vadd.f32 %v7894, %v8019
    %v8057 = vadd.f32 %v7895, %v8020
    %v8058 = vadd.f32 %v7896, %v7991
    %v8059 = vadd.f32 %v7897, %v8021
    %v8060 = vadd.f32 %v7898, %v8022
    %v8061 = vadd.f32 %v7899, %v8023
    %v8062 = vadd.f32 %v7900, %v8024
    %v8063 = vadd.f32 %v7901, %v8001
    %v8064 = vadd.f32 %v7902, %v8025
    %v8065 = vadd.f32 %v7903, %v8026
    %v8066 = vadd.f32 %v7904, %v8027
    %v8067 = vadd.f32 %v7905, %v8028
    %v8068 = vadd.f32 %v7906, %v8011
    %s8069 = scalar_lea.vmem %s2, 1536
    %v8070 = vld [vmem:[%s8069] sm:$0xff]
    %v8071 = vld [vmem:[%s8069 + $0x8] sm:$0xff]
    %v8072 = vld [vmem:[%s8069 + $0x10] sm:$0xff]
    %v8073 = vld [vmem:[%s8069 + $0x18] sm:$0xff]
    %8075 = vset.pattern.permute.xlu0 0
    %8076 = vperm.xlu0 %8075, %v8070
    %v8077 = vpop.permute.xlu0 %8076
    %8080 = vset.pattern.permute.xlu0 0
    %8081 = vperm.xlu0 %8080, %v8071
    %v8082 = vpop.permute.xlu0 %8081
    %8085 = vset.pattern.permute.xlu0 0
    %8086 = vperm.xlu0 %8085, %v8072
    %v8087 = vpop.permute.xlu0 %8086
    %8090 = vset.pattern.permute.xlu0 0
    %8091 = vperm.xlu0 %8090, %v8073
    %v8092 = vpop.permute.xlu0 %8091
    %v8094 = vmul.f32 %v8077, %v396
    %v8095 = vmul.f32 %v8077, %v397
    %v8096 = vmul.f32 %v8077, %v398
    %v8097 = vmul.f32 %v8077, %v399
    %v8098 = vmul.f32 %v8077, %v400
    %v8099 = vmul.f32 %v8082, %v401
    %v8100 = vmul.f32 %v8082, %v402
    %v8101 = vmul.f32 %v8082, %v403
    %v8102 = vmul.f32 %v8082, %v404
    %v8103 = vmul.f32 %v8082, %v405
    %v8104 = vmul.f32 %v8087, %v406
    %v8105 = vmul.f32 %v8087, %v407
    %v8106 = vmul.f32 %v8087, %v408
    %v8107 = vmul.f32 %v8087, %v409
    %v8108 = vmul.f32 %v8087, %v410
    %v8109 = vmul.f32 %v8092, %v411
    %v8110 = vmul.f32 %v8092, %v412
    %v8111 = vmul.f32 %v8092, %v413
    %v8112 = vmul.f32 %v8092, %v414
    %v8113 = vmul.f32 %v8092, %v415
    %8134 = vrot.lane.b32.xlu0 %v8094, 80
    %v8135 = vpop.permute.xlu0 %8134
    %8136 = vrot.lane.b32.xlu0 %v8095, 80
    %v8137 = vpop.permute.xlu0 %8136
    %8138 = vrot.lane.b32.xlu0 %v8096, 80
    %v8139 = vpop.permute.xlu0 %8138
    %8140 = vrot.lane.b32.xlu0 %v8097, 80
    %v8141 = vpop.permute.xlu0 %8140
    %8142 = vrot.lane.b32.xlu0 %v8098, 80
    %v8143 = vpop.permute.xlu0 %8142
    %8144 = vrot.lane.b32.xlu0 %v8099, 80
    %v8145 = vpop.permute.xlu0 %8144
    %8146 = vrot.lane.b32.xlu0 %v8100, 80
    %v8147 = vpop.permute.xlu0 %8146
    %8148 = vrot.lane.b32.xlu0 %v8101, 80
    %v8149 = vpop.permute.xlu0 %8148
    %8150 = vrot.lane.b32.xlu0 %v8102, 80
    %v8151 = vpop.permute.xlu0 %8150
    %8152 = vrot.lane.b32.xlu0 %v8103, 80
    %v8153 = vpop.permute.xlu0 %8152
    %8154 = vrot.lane.b32.xlu0 %v8104, 80
    %v8155 = vpop.permute.xlu0 %8154
    %8156 = vrot.lane.b32.xlu0 %v8105, 80
    %v8157 = vpop.permute.xlu0 %8156
    %8158 = vrot.lane.b32.xlu0 %v8106, 80
    %v8159 = vpop.permute.xlu0 %8158
    %8160 = vrot.lane.b32.xlu0 %v8107, 80
    %v8161 = vpop.permute.xlu0 %8160
    %8162 = vrot.lane.b32.xlu0 %v8108, 80
    %v8163 = vpop.permute.xlu0 %8162
    %8164 = vrot.lane.b32.xlu0 %v8109, 80
    %v8165 = vpop.permute.xlu0 %8164
    %8166 = vrot.lane.b32.xlu0 %v8110, 80
    %v8167 = vpop.permute.xlu0 %8166
    %8168 = vrot.lane.b32.xlu0 %v8111, 80
    %v8169 = vpop.permute.xlu0 %8168
    %8170 = vrot.lane.b32.xlu0 %v8112, 80
    %v8171 = vpop.permute.xlu0 %8170
    %8172 = vrot.lane.b32.xlu0 %v8113, 80
    %v8173 = vpop.permute.xlu0 %8172
    %vm8174 = vcmask 654336
    %v8175 = vsel %vm8174, %v8135, %v8137
    %v8176 = vsel %vm8174, %v8137, %v8139
    %v8177 = vsel %vm8174, %v8139, %v8141
    %v8178 = vsel %vm8174, %v8141, %v8143
    %v8179 = vsel %vm8174, %v8145, %v8147
    %v8180 = vsel %vm8174, %v8147, %v8149
    %v8181 = vsel %vm8174, %v8149, %v8151
    %v8182 = vsel %vm8174, %v8151, %v8153
    %v8183 = vsel %vm8174, %v8155, %v8157
    %v8184 = vsel %vm8174, %v8157, %v8159
    %v8185 = vsel %vm8174, %v8159, %v8161
    %v8186 = vsel %vm8174, %v8161, %v8163
    %v8187 = vsel %vm8174, %v8165, %v8167
    %v8188 = vsel %vm8174, %v8167, %v8169
    %v8189 = vsel %vm8174, %v8169, %v8171
    %v8190 = vsel %vm8174, %v8171, %v8173
    %v8211 = vadd.f32 %v8049, %v8175
    %v8212 = vadd.f32 %v8050, %v8176
    %v8213 = vadd.f32 %v8051, %v8177
    %v8214 = vadd.f32 %v8052, %v8178
    %v8215 = vadd.f32 %v8053, %v8143
    %v8216 = vadd.f32 %v8054, %v8179
    %v8217 = vadd.f32 %v8055, %v8180
    %v8218 = vadd.f32 %v8056, %v8181
    %v8219 = vadd.f32 %v8057, %v8182
    %v8220 = vadd.f32 %v8058, %v8153
    %v8221 = vadd.f32 %v8059, %v8183
    %v8222 = vadd.f32 %v8060, %v8184
    %v8223 = vadd.f32 %v8061, %v8185
    %v8224 = vadd.f32 %v8062, %v8186
    %v8225 = vadd.f32 %v8063, %v8163
    %v8226 = vadd.f32 %v8064, %v8187
    %v8227 = vadd.f32 %v8065, %v8188
    %v8228 = vadd.f32 %v8066, %v8189
    %v8229 = vadd.f32 %v8067, %v8190
    %v8230 = vadd.f32 %v8068, %v8173
    %s8231 = scalar_lea.vmem %s2, 1568
    %v8232 = vld [vmem:[%s8231] sm:$0xff]
    %v8233 = vld [vmem:[%s8231 + $0x8] sm:$0xff]
    %v8234 = vld [vmem:[%s8231 + $0x10] sm:$0xff]
    %v8235 = vld [vmem:[%s8231 + $0x18] sm:$0xff]
    %8237 = vset.pattern.permute.xlu0 0
    %8238 = vperm.xlu0 %8237, %v8232
    %v8239 = vpop.permute.xlu0 %8238
    %8242 = vset.pattern.permute.xlu0 0
    %8243 = vperm.xlu0 %8242, %v8233
    %v8244 = vpop.permute.xlu0 %8243
    %8247 = vset.pattern.permute.xlu0 0
    %8248 = vperm.xlu0 %8247, %v8234
    %v8249 = vpop.permute.xlu0 %8248
    %8252 = vset.pattern.permute.xlu0 0
    %8253 = vperm.xlu0 %8252, %v8235
    %v8254 = vpop.permute.xlu0 %8253
    %v8256 = vmul.f32 %v8239, %v396
    %v8257 = vmul.f32 %v8239, %v397
    %v8258 = vmul.f32 %v8239, %v398
    %v8259 = vmul.f32 %v8239, %v399
    %v8260 = vmul.f32 %v8239, %v400
    %v8261 = vmul.f32 %v8244, %v401
    %v8262 = vmul.f32 %v8244, %v402
    %v8263 = vmul.f32 %v8244, %v403
    %v8264 = vmul.f32 %v8244, %v404
    %v8265 = vmul.f32 %v8244, %v405
    %v8266 = vmul.f32 %v8249, %v406
    %v8267 = vmul.f32 %v8249, %v407
    %v8268 = vmul.f32 %v8249, %v408
    %v8269 = vmul.f32 %v8249, %v409
    %v8270 = vmul.f32 %v8249, %v410
    %v8271 = vmul.f32 %v8254, %v411
    %v8272 = vmul.f32 %v8254, %v412
    %v8273 = vmul.f32 %v8254, %v413
    %v8274 = vmul.f32 %v8254, %v414
    %v8275 = vmul.f32 %v8254, %v415
    %8296 = vrot.lane.b32.xlu0 %v8256, 79
    %v8297 = vpop.permute.xlu0 %8296
    %8298 = vrot.lane.b32.xlu0 %v8257, 79
    %v8299 = vpop.permute.xlu0 %8298
    %8300 = vrot.lane.b32.xlu0 %v8258, 79
    %v8301 = vpop.permute.xlu0 %8300
    %8302 = vrot.lane.b32.xlu0 %v8259, 79
    %v8303 = vpop.permute.xlu0 %8302
    %8304 = vrot.lane.b32.xlu0 %v8260, 79
    %v8305 = vpop.permute.xlu0 %8304
    %8306 = vrot.lane.b32.xlu0 %v8261, 79
    %v8307 = vpop.permute.xlu0 %8306
    %8308 = vrot.lane.b32.xlu0 %v8262, 79
    %v8309 = vpop.permute.xlu0 %8308
    %8310 = vrot.lane.b32.xlu0 %v8263, 79
    %v8311 = vpop.permute.xlu0 %8310
    %8312 = vrot.lane.b32.xlu0 %v8264, 79
    %v8313 = vpop.permute.xlu0 %8312
    %8314 = vrot.lane.b32.xlu0 %v8265, 79
    %v8315 = vpop.permute.xlu0 %8314
    %8316 = vrot.lane.b32.xlu0 %v8266, 79
    %v8317 = vpop.permute.xlu0 %8316
    %8318 = vrot.lane.b32.xlu0 %v8267, 79
    %v8319 = vpop.permute.xlu0 %8318
    %8320 = vrot.lane.b32.xlu0 %v8268, 79
    %v8321 = vpop.permute.xlu0 %8320
    %8322 = vrot.lane.b32.xlu0 %v8269, 79
    %v8323 = vpop.permute.xlu0 %8322
    %8324 = vrot.lane.b32.xlu0 %v8270, 79
    %v8325 = vpop.permute.xlu0 %8324
    %8326 = vrot.lane.b32.xlu0 %v8271, 79
    %v8327 = vpop.permute.xlu0 %8326
    %8328 = vrot.lane.b32.xlu0 %v8272, 79
    %v8329 = vpop.permute.xlu0 %8328
    %8330 = vrot.lane.b32.xlu0 %v8273, 79
    %v8331 = vpop.permute.xlu0 %8330
    %8332 = vrot.lane.b32.xlu0 %v8274, 79
    %v8333 = vpop.permute.xlu0 %8332
    %8334 = vrot.lane.b32.xlu0 %v8275, 79
    %v8335 = vpop.permute.xlu0 %8334
    %vm8336 = vcmask 646144
    %v8337 = vsel %vm8336, %v8297, %v8299
    %v8338 = vsel %vm8336, %v8299, %v8301
    %v8339 = vsel %vm8336, %v8301, %v8303
    %v8340 = vsel %vm8336, %v8303, %v8305
    %v8341 = vsel %vm8336, %v8307, %v8309
    %v8342 = vsel %vm8336, %v8309, %v8311
    %v8343 = vsel %vm8336, %v8311, %v8313
    %v8344 = vsel %vm8336, %v8313, %v8315
    %v8345 = vsel %vm8336, %v8317, %v8319
    %v8346 = vsel %vm8336, %v8319, %v8321
    %v8347 = vsel %vm8336, %v8321, %v8323
    %v8348 = vsel %vm8336, %v8323, %v8325
    %v8349 = vsel %vm8336, %v8327, %v8329
    %v8350 = vsel %vm8336, %v8329, %v8331
    %v8351 = vsel %vm8336, %v8331, %v8333
    %v8352 = vsel %vm8336, %v8333, %v8335
    %v8373 = vadd.f32 %v8211, %v8337
    %v8374 = vadd.f32 %v8212, %v8338
    %v8375 = vadd.f32 %v8213, %v8339
    %v8376 = vadd.f32 %v8214, %v8340
    %v8377 = vadd.f32 %v8215, %v8305
    %v8378 = vadd.f32 %v8216, %v8341
    %v8379 = vadd.f32 %v8217, %v8342
    %v8380 = vadd.f32 %v8218, %v8343
    %v8381 = vadd.f32 %v8219, %v8344
    %v8382 = vadd.f32 %v8220, %v8315
    %v8383 = vadd.f32 %v8221, %v8345
    %v8384 = vadd.f32 %v8222, %v8346
    %v8385 = vadd.f32 %v8223, %v8347
    %v8386 = vadd.f32 %v8224, %v8348
    %v8387 = vadd.f32 %v8225, %v8325
    %v8388 = vadd.f32 %v8226, %v8349
    %v8389 = vadd.f32 %v8227, %v8350
    %v8390 = vadd.f32 %v8228, %v8351
    %v8391 = vadd.f32 %v8229, %v8352
    %v8392 = vadd.f32 %v8230, %v8335
    %s8393 = scalar_lea.vmem %s2, 1600
    %v8394 = vld [vmem:[%s8393] sm:$0xff]
    %v8395 = vld [vmem:[%s8393 + $0x8] sm:$0xff]
    %v8396 = vld [vmem:[%s8393 + $0x10] sm:$0xff]
    %v8397 = vld [vmem:[%s8393 + $0x18] sm:$0xff]
    %8399 = vset.pattern.permute.xlu0 0
    %8400 = vperm.xlu0 %8399, %v8394
    %v8401 = vpop.permute.xlu0 %8400
    %8404 = vset.pattern.permute.xlu0 0
    %8405 = vperm.xlu0 %8404, %v8395
    %v8406 = vpop.permute.xlu0 %8405
    %8409 = vset.pattern.permute.xlu0 0
    %8410 = vperm.xlu0 %8409, %v8396
    %v8411 = vpop.permute.xlu0 %8410
    %8414 = vset.pattern.permute.xlu0 0
    %8415 = vperm.xlu0 %8414, %v8397
    %v8416 = vpop.permute.xlu0 %8415
    %v8418 = vmul.f32 %v8401, %v396
    %v8419 = vmul.f32 %v8401, %v397
    %v8420 = vmul.f32 %v8401, %v398
    %v8421 = vmul.f32 %v8401, %v399
    %v8422 = vmul.f32 %v8401, %v400
    %v8423 = vmul.f32 %v8406, %v401
    %v8424 = vmul.f32 %v8406, %v402
    %v8425 = vmul.f32 %v8406, %v403
    %v8426 = vmul.f32 %v8406, %v404
    %v8427 = vmul.f32 %v8406, %v405
    %v8428 = vmul.f32 %v8411, %v406
    %v8429 = vmul.f32 %v8411, %v407
    %v8430 = vmul.f32 %v8411, %v408
    %v8431 = vmul.f32 %v8411, %v409
    %v8432 = vmul.f32 %v8411, %v410
    %v8433 = vmul.f32 %v8416, %v411
    %v8434 = vmul.f32 %v8416, %v412
    %v8435 = vmul.f32 %v8416, %v413
    %v8436 = vmul.f32 %v8416, %v414
    %v8437 = vmul.f32 %v8416, %v415
    %8458 = vrot.lane.b32.xlu0 %v8418, 78
    %v8459 = vpop.permute.xlu0 %8458
    %8460 = vrot.lane.b32.xlu0 %v8419, 78
    %v8461 = vpop.permute.xlu0 %8460
    %8462 = vrot.lane.b32.xlu0 %v8420, 78
    %v8463 = vpop.permute.xlu0 %8462
    %8464 = vrot.lane.b32.xlu0 %v8421, 78
    %v8465 = vpop.permute.xlu0 %8464
    %8466 = vrot.lane.b32.xlu0 %v8422, 78
    %v8467 = vpop.permute.xlu0 %8466
    %8468 = vrot.lane.b32.xlu0 %v8423, 78
    %v8469 = vpop.permute.xlu0 %8468
    %8470 = vrot.lane.b32.xlu0 %v8424, 78
    %v8471 = vpop.permute.xlu0 %8470
    %8472 = vrot.lane.b32.xlu0 %v8425, 78
    %v8473 = vpop.permute.xlu0 %8472
    %8474 = vrot.lane.b32.xlu0 %v8426, 78
    %v8475 = vpop.permute.xlu0 %8474
    %8476 = vrot.lane.b32.xlu0 %v8427, 78
    %v8477 = vpop.permute.xlu0 %8476
    %8478 = vrot.lane.b32.xlu0 %v8428, 78
    %v8479 = vpop.permute.xlu0 %8478
    %8480 = vrot.lane.b32.xlu0 %v8429, 78
    %v8481 = vpop.permute.xlu0 %8480
    %8482 = vrot.lane.b32.xlu0 %v8430, 78
    %v8483 = vpop.permute.xlu0 %8482
    %8484 = vrot.lane.b32.xlu0 %v8431, 78
    %v8485 = vpop.permute.xlu0 %8484
    %8486 = vrot.lane.b32.xlu0 %v8432, 78
    %v8487 = vpop.permute.xlu0 %8486
    %8488 = vrot.lane.b32.xlu0 %v8433, 78
    %v8489 = vpop.permute.xlu0 %8488
    %8490 = vrot.lane.b32.xlu0 %v8434, 78
    %v8491 = vpop.permute.xlu0 %8490
    %8492 = vrot.lane.b32.xlu0 %v8435, 78
    %v8493 = vpop.permute.xlu0 %8492
    %8494 = vrot.lane.b32.xlu0 %v8436, 78
    %v8495 = vpop.permute.xlu0 %8494
    %8496 = vrot.lane.b32.xlu0 %v8437, 78
    %v8497 = vpop.permute.xlu0 %8496
    %vm8498 = vcmask 637952
    %v8499 = vsel %vm8498, %v8459, %v8461
    %v8500 = vsel %vm8498, %v8461, %v8463
    %v8501 = vsel %vm8498, %v8463, %v8465
    %v8502 = vsel %vm8498, %v8465, %v8467
    %v8503 = vsel %vm8498, %v8469, %v8471
    %v8504 = vsel %vm8498, %v8471, %v8473
    %v8505 = vsel %vm8498, %v8473, %v8475
    %v8506 = vsel %vm8498, %v8475, %v8477
    %v8507 = vsel %vm8498, %v8479, %v8481
    %v8508 = vsel %vm8498, %v8481, %v8483
    %v8509 = vsel %vm8498, %v8483, %v8485
    %v8510 = vsel %vm8498, %v8485, %v8487
    %v8511 = vsel %vm8498, %v8489, %v8491
    %v8512 = vsel %vm8498, %v8491, %v8493
    %v8513 = vsel %vm8498, %v8493, %v8495
    %v8514 = vsel %vm8498, %v8495, %v8497
    %v8535 = vadd.f32 %v8373, %v8499
    %v8536 = vadd.f32 %v8374, %v8500
    %v8537 = vadd.f32 %v8375, %v8501
    %v8538 = vadd.f32 %v8376, %v8502
    %v8539 = vadd.f32 %v8377, %v8467
    %v8540 = vadd.f32 %v8378, %v8503
    %v8541 = vadd.f32 %v8379, %v8504
    %v8542 = vadd.f32 %v8380, %v8505
    %v8543 = vadd.f32 %v8381, %v8506
    %v8544 = vadd.f32 %v8382, %v8477
    %v8545 = vadd.f32 %v8383, %v8507
    %v8546 = vadd.f32 %v8384, %v8508
    %v8547 = vadd.f32 %v8385, %v8509
    %v8548 = vadd.f32 %v8386, %v8510
    %v8549 = vadd.f32 %v8387, %v8487
    %v8550 = vadd.f32 %v8388, %v8511
    %v8551 = vadd.f32 %v8389, %v8512
    %v8552 = vadd.f32 %v8390, %v8513
    %v8553 = vadd.f32 %v8391, %v8514
    %v8554 = vadd.f32 %v8392, %v8497
    %s8555 = scalar_lea.vmem %s2, 1632
    %v8556 = vld [vmem:[%s8555] sm:$0xff]
    %v8557 = vld [vmem:[%s8555 + $0x8] sm:$0xff]
    %v8558 = vld [vmem:[%s8555 + $0x10] sm:$0xff]
    %v8559 = vld [vmem:[%s8555 + $0x18] sm:$0xff]
    %8561 = vset.pattern.permute.xlu0 0
    %8562 = vperm.xlu0 %8561, %v8556
    %v8563 = vpop.permute.xlu0 %8562
    %8566 = vset.pattern.permute.xlu0 0
    %8567 = vperm.xlu0 %8566, %v8557
    %v8568 = vpop.permute.xlu0 %8567
    %8571 = vset.pattern.permute.xlu0 0
    %8572 = vperm.xlu0 %8571, %v8558
    %v8573 = vpop.permute.xlu0 %8572
    %8576 = vset.pattern.permute.xlu0 0
    %8577 = vperm.xlu0 %8576, %v8559
    %v8578 = vpop.permute.xlu0 %8577
    %v8580 = vmul.f32 %v8563, %v396
    %v8581 = vmul.f32 %v8563, %v397
    %v8582 = vmul.f32 %v8563, %v398
    %v8583 = vmul.f32 %v8563, %v399
    %v8584 = vmul.f32 %v8563, %v400
    %v8585 = vmul.f32 %v8568, %v401
    %v8586 = vmul.f32 %v8568, %v402
    %v8587 = vmul.f32 %v8568, %v403
    %v8588 = vmul.f32 %v8568, %v404
    %v8589 = vmul.f32 %v8568, %v405
    %v8590 = vmul.f32 %v8573, %v406
    %v8591 = vmul.f32 %v8573, %v407
    %v8592 = vmul.f32 %v8573, %v408
    %v8593 = vmul.f32 %v8573, %v409
    %v8594 = vmul.f32 %v8573, %v410
    %v8595 = vmul.f32 %v8578, %v411
    %v8596 = vmul.f32 %v8578, %v412
    %v8597 = vmul.f32 %v8578, %v413
    %v8598 = vmul.f32 %v8578, %v414
    %v8599 = vmul.f32 %v8578, %v415
    %8620 = vrot.lane.b32.xlu0 %v8580, 77
    %v8621 = vpop.permute.xlu0 %8620
    %8622 = vrot.lane.b32.xlu0 %v8581, 77
    %v8623 = vpop.permute.xlu0 %8622
    %8624 = vrot.lane.b32.xlu0 %v8582, 77
    %v8625 = vpop.permute.xlu0 %8624
    %8626 = vrot.lane.b32.xlu0 %v8583, 77
    %v8627 = vpop.permute.xlu0 %8626
    %8628 = vrot.lane.b32.xlu0 %v8584, 77
    %v8629 = vpop.permute.xlu0 %8628
    %8630 = vrot.lane.b32.xlu0 %v8585, 77
    %v8631 = vpop.permute.xlu0 %8630
    %8632 = vrot.lane.b32.xlu0 %v8586, 77
    %v8633 = vpop.permute.xlu0 %8632
    %8634 = vrot.lane.b32.xlu0 %v8587, 77
    %v8635 = vpop.permute.xlu0 %8634
    %8636 = vrot.lane.b32.xlu0 %v8588, 77
    %v8637 = vpop.permute.xlu0 %8636
    %8638 = vrot.lane.b32.xlu0 %v8589, 77
    %v8639 = vpop.permute.xlu0 %8638
    %8640 = vrot.lane.b32.xlu0 %v8590, 77
    %v8641 = vpop.permute.xlu0 %8640
    %8642 = vrot.lane.b32.xlu0 %v8591, 77
    %v8643 = vpop.permute.xlu0 %8642
    %8644 = vrot.lane.b32.xlu0 %v8592, 77
    %v8645 = vpop.permute.xlu0 %8644
    %8646 = vrot.lane.b32.xlu0 %v8593, 77
    %v8647 = vpop.permute.xlu0 %8646
    %8648 = vrot.lane.b32.xlu0 %v8594, 77
    %v8649 = vpop.permute.xlu0 %8648
    %8650 = vrot.lane.b32.xlu0 %v8595, 77
    %v8651 = vpop.permute.xlu0 %8650
    %8652 = vrot.lane.b32.xlu0 %v8596, 77
    %v8653 = vpop.permute.xlu0 %8652
    %8654 = vrot.lane.b32.xlu0 %v8597, 77
    %v8655 = vpop.permute.xlu0 %8654
    %8656 = vrot.lane.b32.xlu0 %v8598, 77
    %v8657 = vpop.permute.xlu0 %8656
    %8658 = vrot.lane.b32.xlu0 %v8599, 77
    %v8659 = vpop.permute.xlu0 %8658
    %vm8660 = vcmask 629760
    %v8661 = vsel %vm8660, %v8621, %v8623
    %v8662 = vsel %vm8660, %v8623, %v8625
    %v8663 = vsel %vm8660, %v8625, %v8627
    %v8664 = vsel %vm8660, %v8627, %v8629
    %v8665 = vsel %vm8660, %v8631, %v8633
    %v8666 = vsel %vm8660, %v8633, %v8635
    %v8667 = vsel %vm8660, %v8635, %v8637
    %v8668 = vsel %vm8660, %v8637, %v8639
    %v8669 = vsel %vm8660, %v8641, %v8643
    %v8670 = vsel %vm8660, %v8643, %v8645
    %v8671 = vsel %vm8660, %v8645, %v8647
    %v8672 = vsel %vm8660, %v8647, %v8649
    %v8673 = vsel %vm8660, %v8651, %v8653
    %v8674 = vsel %vm8660, %v8653, %v8655
    %v8675 = vsel %vm8660, %v8655, %v8657
    %v8676 = vsel %vm8660, %v8657, %v8659
    %v8697 = vadd.f32 %v8535, %v8661
    %v8698 = vadd.f32 %v8536, %v8662
    %v8699 = vadd.f32 %v8537, %v8663
    %v8700 = vadd.f32 %v8538, %v8664
    %v8701 = vadd.f32 %v8539, %v8629
    %v8702 = vadd.f32 %v8540, %v8665
    %v8703 = vadd.f32 %v8541, %v8666
    %v8704 = vadd.f32 %v8542, %v8667
    %v8705 = vadd.f32 %v8543, %v8668
    %v8706 = vadd.f32 %v8544, %v8639
    %v8707 = vadd.f32 %v8545, %v8669
    %v8708 = vadd.f32 %v8546, %v8670
    %v8709 = vadd.f32 %v8547, %v8671
    %v8710 = vadd.f32 %v8548, %v8672
    %v8711 = vadd.f32 %v8549, %v8649
    %v8712 = vadd.f32 %v8550, %v8673
    %v8713 = vadd.f32 %v8551, %v8674
    %v8714 = vadd.f32 %v8552, %v8675
    %v8715 = vadd.f32 %v8553, %v8676
    %v8716 = vadd.f32 %v8554, %v8659
    %s8717 = scalar_lea.vmem %s2, 1664
    %v8718 = vld [vmem:[%s8717] sm:$0xff]
    %v8719 = vld [vmem:[%s8717 + $0x8] sm:$0xff]
    %v8720 = vld [vmem:[%s8717 + $0x10] sm:$0xff]
    %v8721 = vld [vmem:[%s8717 + $0x18] sm:$0xff]
    %8723 = vset.pattern.permute.xlu0 0
    %8724 = vperm.xlu0 %8723, %v8718
    %v8725 = vpop.permute.xlu0 %8724
    %8728 = vset.pattern.permute.xlu0 0
    %8729 = vperm.xlu0 %8728, %v8719
    %v8730 = vpop.permute.xlu0 %8729
    %8733 = vset.pattern.permute.xlu0 0
    %8734 = vperm.xlu0 %8733, %v8720
    %v8735 = vpop.permute.xlu0 %8734
    %8738 = vset.pattern.permute.xlu0 0
    %8739 = vperm.xlu0 %8738, %v8721
    %v8740 = vpop.permute.xlu0 %8739
    %v8742 = vmul.f32 %v8725, %v396
    %v8743 = vmul.f32 %v8725, %v397
    %v8744 = vmul.f32 %v8725, %v398
    %v8745 = vmul.f32 %v8725, %v399
    %v8746 = vmul.f32 %v8725, %v400
    %v8747 = vmul.f32 %v8730, %v401
    %v8748 = vmul.f32 %v8730, %v402
    %v8749 = vmul.f32 %v8730, %v403
    %v8750 = vmul.f32 %v8730, %v404
    %v8751 = vmul.f32 %v8730, %v405
    %v8752 = vmul.f32 %v8735, %v406
    %v8753 = vmul.f32 %v8735, %v407
    %v8754 = vmul.f32 %v8735, %v408
    %v8755 = vmul.f32 %v8735, %v409
    %v8756 = vmul.f32 %v8735, %v410
    %v8757 = vmul.f32 %v8740, %v411
    %v8758 = vmul.f32 %v8740, %v412
    %v8759 = vmul.f32 %v8740, %v413
    %v8760 = vmul.f32 %v8740, %v414
    %v8761 = vmul.f32 %v8740, %v415
    %8782 = vrot.lane.b32.xlu0 %v8742, 76
    %v8783 = vpop.permute.xlu0 %8782
    %8784 = vrot.lane.b32.xlu0 %v8743, 76
    %v8785 = vpop.permute.xlu0 %8784
    %8786 = vrot.lane.b32.xlu0 %v8744, 76
    %v8787 = vpop.permute.xlu0 %8786
    %8788 = vrot.lane.b32.xlu0 %v8745, 76
    %v8789 = vpop.permute.xlu0 %8788
    %8790 = vrot.lane.b32.xlu0 %v8746, 76
    %v8791 = vpop.permute.xlu0 %8790
    %8792 = vrot.lane.b32.xlu0 %v8747, 76
    %v8793 = vpop.permute.xlu0 %8792
    %8794 = vrot.lane.b32.xlu0 %v8748, 76
    %v8795 = vpop.permute.xlu0 %8794
    %8796 = vrot.lane.b32.xlu0 %v8749, 76
    %v8797 = vpop.permute.xlu0 %8796
    %8798 = vrot.lane.b32.xlu0 %v8750, 76
    %v8799 = vpop.permute.xlu0 %8798
    %8800 = vrot.lane.b32.xlu0 %v8751, 76
    %v8801 = vpop.permute.xlu0 %8800
    %8802 = vrot.lane.b32.xlu0 %v8752, 76
    %v8803 = vpop.permute.xlu0 %8802
    %8804 = vrot.lane.b32.xlu0 %v8753, 76
    %v8805 = vpop.permute.xlu0 %8804
    %8806 = vrot.lane.b32.xlu0 %v8754, 76
    %v8807 = vpop.permute.xlu0 %8806
    %8808 = vrot.lane.b32.xlu0 %v8755, 76
    %v8809 = vpop.permute.xlu0 %8808
    %8810 = vrot.lane.b32.xlu0 %v8756, 76
    %v8811 = vpop.permute.xlu0 %8810
    %8812 = vrot.lane.b32.xlu0 %v8757, 76
    %v8813 = vpop.permute.xlu0 %8812
    %8814 = vrot.lane.b32.xlu0 %v8758, 76
    %v8815 = vpop.permute.xlu0 %8814
    %8816 = vrot.lane.b32.xlu0 %v8759, 76
    %v8817 = vpop.permute.xlu0 %8816
    %8818 = vrot.lane.b32.xlu0 %v8760, 76
    %v8819 = vpop.permute.xlu0 %8818
    %8820 = vrot.lane.b32.xlu0 %v8761, 76
    %v8821 = vpop.permute.xlu0 %8820
    %vm8822 = vcmask 621568
    %v8823 = vsel %vm8822, %v8783, %v8785
    %v8824 = vsel %vm8822, %v8785, %v8787
    %v8825 = vsel %vm8822, %v8787, %v8789
    %v8826 = vsel %vm8822, %v8789, %v8791
    %v8827 = vsel %vm8822, %v8793, %v8795
    %v8828 = vsel %vm8822, %v8795, %v8797
    %v8829 = vsel %vm8822, %v8797, %v8799
    %v8830 = vsel %vm8822, %v8799, %v8801
    %v8831 = vsel %vm8822, %v8803, %v8805
    %v8832 = vsel %vm8822, %v8805, %v8807
    %v8833 = vsel %vm8822, %v8807, %v8809
    %v8834 = vsel %vm8822, %v8809, %v8811
    %v8835 = vsel %vm8822, %v8813, %v8815
    %v8836 = vsel %vm8822, %v8815, %v8817
    %v8837 = vsel %vm8822, %v8817, %v8819
    %v8838 = vsel %vm8822, %v8819, %v8821
    %v8859 = vadd.f32 %v8697, %v8823
    %v8860 = vadd.f32 %v8698, %v8824
    %v8861 = vadd.f32 %v8699, %v8825
    %v8862 = vadd.f32 %v8700, %v8826
    %v8863 = vadd.f32 %v8701, %v8791
    %v8864 = vadd.f32 %v8702, %v8827
    %v8865 = vadd.f32 %v8703, %v8828
    %v8866 = vadd.f32 %v8704, %v8829
    %v8867 = vadd.f32 %v8705, %v8830
    %v8868 = vadd.f32 %v8706, %v8801
    %v8869 = vadd.f32 %v8707, %v8831
    %v8870 = vadd.f32 %v8708, %v8832
    %v8871 = vadd.f32 %v8709, %v8833
    %v8872 = vadd.f32 %v8710, %v8834
    %v8873 = vadd.f32 %v8711, %v8811
    %v8874 = vadd.f32 %v8712, %v8835
    %v8875 = vadd.f32 %v8713, %v8836
    %v8876 = vadd.f32 %v8714, %v8837
    %v8877 = vadd.f32 %v8715, %v8838
    %v8878 = vadd.f32 %v8716, %v8821
    %s8879 = scalar_lea.vmem %s2, 1696
    %v8880 = vld [vmem:[%s8879] sm:$0xff]
    %v8881 = vld [vmem:[%s8879 + $0x8] sm:$0xff]
    %v8882 = vld [vmem:[%s8879 + $0x10] sm:$0xff]
    %v8883 = vld [vmem:[%s8879 + $0x18] sm:$0xff]
    %8885 = vset.pattern.permute.xlu0 0
    %8886 = vperm.xlu0 %8885, %v8880
    %v8887 = vpop.permute.xlu0 %8886
    %8890 = vset.pattern.permute.xlu0 0
    %8891 = vperm.xlu0 %8890, %v8881
    %v8892 = vpop.permute.xlu0 %8891
    %8895 = vset.pattern.permute.xlu0 0
    %8896 = vperm.xlu0 %8895, %v8882
    %v8897 = vpop.permute.xlu0 %8896
    %8900 = vset.pattern.permute.xlu0 0
    %8901 = vperm.xlu0 %8900, %v8883
    %v8902 = vpop.permute.xlu0 %8901
    %v8904 = vmul.f32 %v8887, %v396
    %v8905 = vmul.f32 %v8887, %v397
    %v8906 = vmul.f32 %v8887, %v398
    %v8907 = vmul.f32 %v8887, %v399
    %v8908 = vmul.f32 %v8887, %v400
    %v8909 = vmul.f32 %v8892, %v401
    %v8910 = vmul.f32 %v8892, %v402
    %v8911 = vmul.f32 %v8892, %v403
    %v8912 = vmul.f32 %v8892, %v404
    %v8913 = vmul.f32 %v8892, %v405
    %v8914 = vmul.f32 %v8897, %v406
    %v8915 = vmul.f32 %v8897, %v407
    %v8916 = vmul.f32 %v8897, %v408
    %v8917 = vmul.f32 %v8897, %v409
    %v8918 = vmul.f32 %v8897, %v410
    %v8919 = vmul.f32 %v8902, %v411
    %v8920 = vmul.f32 %v8902, %v412
    %v8921 = vmul.f32 %v8902, %v413
    %v8922 = vmul.f32 %v8902, %v414
    %v8923 = vmul.f32 %v8902, %v415
    %8944 = vrot.lane.b32.xlu0 %v8904, 75
    %v8945 = vpop.permute.xlu0 %8944
    %8946 = vrot.lane.b32.xlu0 %v8905, 75
    %v8947 = vpop.permute.xlu0 %8946
    %8948 = vrot.lane.b32.xlu0 %v8906, 75
    %v8949 = vpop.permute.xlu0 %8948
    %8950 = vrot.lane.b32.xlu0 %v8907, 75
    %v8951 = vpop.permute.xlu0 %8950
    %8952 = vrot.lane.b32.xlu0 %v8908, 75
    %v8953 = vpop.permute.xlu0 %8952
    %8954 = vrot.lane.b32.xlu0 %v8909, 75
    %v8955 = vpop.permute.xlu0 %8954
    %8956 = vrot.lane.b32.xlu0 %v8910, 75
    %v8957 = vpop.permute.xlu0 %8956
    %8958 = vrot.lane.b32.xlu0 %v8911, 75
    %v8959 = vpop.permute.xlu0 %8958
    %8960 = vrot.lane.b32.xlu0 %v8912, 75
    %v8961 = vpop.permute.xlu0 %8960
    %8962 = vrot.lane.b32.xlu0 %v8913, 75
    %v8963 = vpop.permute.xlu0 %8962
    %8964 = vrot.lane.b32.xlu0 %v8914, 75
    %v8965 = vpop.permute.xlu0 %8964
    %8966 = vrot.lane.b32.xlu0 %v8915, 75
    %v8967 = vpop.permute.xlu0 %8966
    %8968 = vrot.lane.b32.xlu0 %v8916, 75
    %v8969 = vpop.permute.xlu0 %8968
    %8970 = vrot.lane.b32.xlu0 %v8917, 75
    %v8971 = vpop.permute.xlu0 %8970
    %8972 = vrot.lane.b32.xlu0 %v8918, 75
    %v8973 = vpop.permute.xlu0 %8972
    %8974 = vrot.lane.b32.xlu0 %v8919, 75
    %v8975 = vpop.permute.xlu0 %8974
    %8976 = vrot.lane.b32.xlu0 %v8920, 75
    %v8977 = vpop.permute.xlu0 %8976
    %8978 = vrot.lane.b32.xlu0 %v8921, 75
    %v8979 = vpop.permute.xlu0 %8978
    %8980 = vrot.lane.b32.xlu0 %v8922, 75
    %v8981 = vpop.permute.xlu0 %8980
    %8982 = vrot.lane.b32.xlu0 %v8923, 75
    %v8983 = vpop.permute.xlu0 %8982
    %vm8984 = vcmask 613376
    %v8985 = vsel %vm8984, %v8945, %v8947
    %v8986 = vsel %vm8984, %v8947, %v8949
    %v8987 = vsel %vm8984, %v8949, %v8951
    %v8988 = vsel %vm8984, %v8951, %v8953
    %v8989 = vsel %vm8984, %v8955, %v8957
    %v8990 = vsel %vm8984, %v8957, %v8959
    %v8991 = vsel %vm8984, %v8959, %v8961
    %v8992 = vsel %vm8984, %v8961, %v8963
    %v8993 = vsel %vm8984, %v8965, %v8967
    %v8994 = vsel %vm8984, %v8967, %v8969
    %v8995 = vsel %vm8984, %v8969, %v8971
    %v8996 = vsel %vm8984, %v8971, %v8973
    %v8997 = vsel %vm8984, %v8975, %v8977
    %v8998 = vsel %vm8984, %v8977, %v8979
    %v8999 = vsel %vm8984, %v8979, %v8981
    %v9000 = vsel %vm8984, %v8981, %v8983
    %v9021 = vadd.f32 %v8859, %v8985
    %v9022 = vadd.f32 %v8860, %v8986
    %v9023 = vadd.f32 %v8861, %v8987
    %v9024 = vadd.f32 %v8862, %v8988
    %v9025 = vadd.f32 %v8863, %v8953
    %v9026 = vadd.f32 %v8864, %v8989
    %v9027 = vadd.f32 %v8865, %v8990
    %v9028 = vadd.f32 %v8866, %v8991
    %v9029 = vadd.f32 %v8867, %v8992
    %v9030 = vadd.f32 %v8868, %v8963
    %v9031 = vadd.f32 %v8869, %v8993
    %v9032 = vadd.f32 %v8870, %v8994
    %v9033 = vadd.f32 %v8871, %v8995
    %v9034 = vadd.f32 %v8872, %v8996
    %v9035 = vadd.f32 %v8873, %v8973
    %v9036 = vadd.f32 %v8874, %v8997
    %v9037 = vadd.f32 %v8875, %v8998
    %v9038 = vadd.f32 %v8876, %v8999
    %v9039 = vadd.f32 %v8877, %v9000
    %v9040 = vadd.f32 %v8878, %v8983
    %s9041 = scalar_lea.vmem %s2, 1728
    %v9042 = vld [vmem:[%s9041] sm:$0xff]
    %v9043 = vld [vmem:[%s9041 + $0x8] sm:$0xff]
    %v9044 = vld [vmem:[%s9041 + $0x10] sm:$0xff]
    %v9045 = vld [vmem:[%s9041 + $0x18] sm:$0xff]
    %9047 = vset.pattern.permute.xlu0 0
    %9048 = vperm.xlu0 %9047, %v9042
    %v9049 = vpop.permute.xlu0 %9048
    %9052 = vset.pattern.permute.xlu0 0
    %9053 = vperm.xlu0 %9052, %v9043
    %v9054 = vpop.permute.xlu0 %9053
    %9057 = vset.pattern.permute.xlu0 0
    %9058 = vperm.xlu0 %9057, %v9044
    %v9059 = vpop.permute.xlu0 %9058
    %9062 = vset.pattern.permute.xlu0 0
    %9063 = vperm.xlu0 %9062, %v9045
    %v9064 = vpop.permute.xlu0 %9063
    %v9066 = vmul.f32 %v9049, %v396
    %v9067 = vmul.f32 %v9049, %v397
    %v9068 = vmul.f32 %v9049, %v398
    %v9069 = vmul.f32 %v9049, %v399
    %v9070 = vmul.f32 %v9049, %v400
    %v9071 = vmul.f32 %v9054, %v401
    %v9072 = vmul.f32 %v9054, %v402
    %v9073 = vmul.f32 %v9054, %v403
    %v9074 = vmul.f32 %v9054, %v404
    %v9075 = vmul.f32 %v9054, %v405
    %v9076 = vmul.f32 %v9059, %v406
    %v9077 = vmul.f32 %v9059, %v407
    %v9078 = vmul.f32 %v9059, %v408
    %v9079 = vmul.f32 %v9059, %v409
    %v9080 = vmul.f32 %v9059, %v410
    %v9081 = vmul.f32 %v9064, %v411
    %v9082 = vmul.f32 %v9064, %v412
    %v9083 = vmul.f32 %v9064, %v413
    %v9084 = vmul.f32 %v9064, %v414
    %v9085 = vmul.f32 %v9064, %v415
    %9106 = vrot.lane.b32.xlu0 %v9066, 74
    %v9107 = vpop.permute.xlu0 %9106
    %9108 = vrot.lane.b32.xlu0 %v9067, 74
    %v9109 = vpop.permute.xlu0 %9108
    %9110 = vrot.lane.b32.xlu0 %v9068, 74
    %v9111 = vpop.permute.xlu0 %9110
    %9112 = vrot.lane.b32.xlu0 %v9069, 74
    %v9113 = vpop.permute.xlu0 %9112
    %9114 = vrot.lane.b32.xlu0 %v9070, 74
    %v9115 = vpop.permute.xlu0 %9114
    %9116 = vrot.lane.b32.xlu0 %v9071, 74
    %v9117 = vpop.permute.xlu0 %9116
    %9118 = vrot.lane.b32.xlu0 %v9072, 74
    %v9119 = vpop.permute.xlu0 %9118
    %9120 = vrot.lane.b32.xlu0 %v9073, 74
    %v9121 = vpop.permute.xlu0 %9120
    %9122 = vrot.lane.b32.xlu0 %v9074, 74
    %v9123 = vpop.permute.xlu0 %9122
    %9124 = vrot.lane.b32.xlu0 %v9075, 74
    %v9125 = vpop.permute.xlu0 %9124
    %9126 = vrot.lane.b32.xlu0 %v9076, 74
    %v9127 = vpop.permute.xlu0 %9126
    %9128 = vrot.lane.b32.xlu0 %v9077, 74
    %v9129 = vpop.permute.xlu0 %9128
    %9130 = vrot.lane.b32.xlu0 %v9078, 74
    %v9131 = vpop.permute.xlu0 %9130
    %9132 = vrot.lane.b32.xlu0 %v9079, 74
    %v9133 = vpop.permute.xlu0 %9132
    %9134 = vrot.lane.b32.xlu0 %v9080, 74
    %v9135 = vpop.permute.xlu0 %9134
    %9136 = vrot.lane.b32.xlu0 %v9081, 74
    %v9137 = vpop.permute.xlu0 %9136
    %9138 = vrot.lane.b32.xlu0 %v9082, 74
    %v9139 = vpop.permute.xlu0 %9138
    %9140 = vrot.lane.b32.xlu0 %v9083, 74
    %v9141 = vpop.permute.xlu0 %9140
    %9142 = vrot.lane.b32.xlu0 %v9084, 74
    %v9143 = vpop.permute.xlu0 %9142
    %9144 = vrot.lane.b32.xlu0 %v9085, 74
    %v9145 = vpop.permute.xlu0 %9144
    %vm9146 = vcmask 605184
    %v9147 = vsel %vm9146, %v9107, %v9109
    %v9148 = vsel %vm9146, %v9109, %v9111
    %v9149 = vsel %vm9146, %v9111, %v9113
    %v9150 = vsel %vm9146, %v9113, %v9115
    %v9151 = vsel %vm9146, %v9117, %v9119
    %v9152 = vsel %vm9146, %v9119, %v9121
    %v9153 = vsel %vm9146, %v9121, %v9123
    %v9154 = vsel %vm9146, %v9123, %v9125
    %v9155 = vsel %vm9146, %v9127, %v9129
    %v9156 = vsel %vm9146, %v9129, %v9131
    %v9157 = vsel %vm9146, %v9131, %v9133
    %v9158 = vsel %vm9146, %v9133, %v9135
    %v9159 = vsel %vm9146, %v9137, %v9139
    %v9160 = vsel %vm9146, %v9139, %v9141
    %v9161 = vsel %vm9146, %v9141, %v9143
    %v9162 = vsel %vm9146, %v9143, %v9145
    %v9183 = vadd.f32 %v9021, %v9147
    %v9184 = vadd.f32 %v9022, %v9148
    %v9185 = vadd.f32 %v9023, %v9149
    %v9186 = vadd.f32 %v9024, %v9150
    %v9187 = vadd.f32 %v9025, %v9115
    %v9188 = vadd.f32 %v9026, %v9151
    %v9189 = vadd.f32 %v9027, %v9152
    %v9190 = vadd.f32 %v9028, %v9153
    %v9191 = vadd.f32 %v9029, %v9154
    %v9192 = vadd.f32 %v9030, %v9125
    %v9193 = vadd.f32 %v9031, %v9155
    %v9194 = vadd.f32 %v9032, %v9156
    %v9195 = vadd.f32 %v9033, %v9157
    %v9196 = vadd.f32 %v9034, %v9158
    %v9197 = vadd.f32 %v9035, %v9135
    %v9198 = vadd.f32 %v9036, %v9159
    %v9199 = vadd.f32 %v9037, %v9160
    %v9200 = vadd.f32 %v9038, %v9161
    %v9201 = vadd.f32 %v9039, %v9162
    %v9202 = vadd.f32 %v9040, %v9145
    %s9203 = scalar_lea.vmem %s2, 1760
    %v9204 = vld [vmem:[%s9203] sm:$0xff]
    %v9205 = vld [vmem:[%s9203 + $0x8] sm:$0xff]
    %v9206 = vld [vmem:[%s9203 + $0x10] sm:$0xff]
    %v9207 = vld [vmem:[%s9203 + $0x18] sm:$0xff]
    %9209 = vset.pattern.permute.xlu0 0
    %9210 = vperm.xlu0 %9209, %v9204
    %v9211 = vpop.permute.xlu0 %9210
    %9214 = vset.pattern.permute.xlu0 0
    %9215 = vperm.xlu0 %9214, %v9205
    %v9216 = vpop.permute.xlu0 %9215
    %9219 = vset.pattern.permute.xlu0 0
    %9220 = vperm.xlu0 %9219, %v9206
    %v9221 = vpop.permute.xlu0 %9220
    %9224 = vset.pattern.permute.xlu0 0
    %9225 = vperm.xlu0 %9224, %v9207
    %v9226 = vpop.permute.xlu0 %9225
    %v9228 = vmul.f32 %v9211, %v396
    %v9229 = vmul.f32 %v9211, %v397
    %v9230 = vmul.f32 %v9211, %v398
    %v9231 = vmul.f32 %v9211, %v399
    %v9232 = vmul.f32 %v9211, %v400
    %v9233 = vmul.f32 %v9216, %v401
    %v9234 = vmul.f32 %v9216, %v402
    %v9235 = vmul.f32 %v9216, %v403
    %v9236 = vmul.f32 %v9216, %v404
    %v9237 = vmul.f32 %v9216, %v405
    %v9238 = vmul.f32 %v9221, %v406
    %v9239 = vmul.f32 %v9221, %v407
    %v9240 = vmul.f32 %v9221, %v408
    %v9241 = vmul.f32 %v9221, %v409
    %v9242 = vmul.f32 %v9221, %v410
    %v9243 = vmul.f32 %v9226, %v411
    %v9244 = vmul.f32 %v9226, %v412
    %v9245 = vmul.f32 %v9226, %v413
    %v9246 = vmul.f32 %v9226, %v414
    %v9247 = vmul.f32 %v9226, %v415
    %9268 = vrot.lane.b32.xlu0 %v9228, 73
    %v9269 = vpop.permute.xlu0 %9268
    %9270 = vrot.lane.b32.xlu0 %v9229, 73
    %v9271 = vpop.permute.xlu0 %9270
    %9272 = vrot.lane.b32.xlu0 %v9230, 73
    %v9273 = vpop.permute.xlu0 %9272
    %9274 = vrot.lane.b32.xlu0 %v9231, 73
    %v9275 = vpop.permute.xlu0 %9274
    %9276 = vrot.lane.b32.xlu0 %v9232, 73
    %v9277 = vpop.permute.xlu0 %9276
    %9278 = vrot.lane.b32.xlu0 %v9233, 73
    %v9279 = vpop.permute.xlu0 %9278
    %9280 = vrot.lane.b32.xlu0 %v9234, 73
    %v9281 = vpop.permute.xlu0 %9280
    %9282 = vrot.lane.b32.xlu0 %v9235, 73
    %v9283 = vpop.permute.xlu0 %9282
    %9284 = vrot.lane.b32.xlu0 %v9236, 73
    %v9285 = vpop.permute.xlu0 %9284
    %9286 = vrot.lane.b32.xlu0 %v9237, 73
    %v9287 = vpop.permute.xlu0 %9286
    %9288 = vrot.lane.b32.xlu0 %v9238, 73
    %v9289 = vpop.permute.xlu0 %9288
    %9290 = vrot.lane.b32.xlu0 %v9239, 73
    %v9291 = vpop.permute.xlu0 %9290
    %9292 = vrot.lane.b32.xlu0 %v9240, 73
    %v9293 = vpop.permute.xlu0 %9292
    %9294 = vrot.lane.b32.xlu0 %v9241, 73
    %v9295 = vpop.permute.xlu0 %9294
    %9296 = vrot.lane.b32.xlu0 %v9242, 73
    %v9297 = vpop.permute.xlu0 %9296
    %9298 = vrot.lane.b32.xlu0 %v9243, 73
    %v9299 = vpop.permute.xlu0 %9298
    %9300 = vrot.lane.b32.xlu0 %v9244, 73
    %v9301 = vpop.permute.xlu0 %9300
    %9302 = vrot.lane.b32.xlu0 %v9245, 73
    %v9303 = vpop.permute.xlu0 %9302
    %9304 = vrot.lane.b32.xlu0 %v9246, 73
    %v9305 = vpop.permute.xlu0 %9304
    %9306 = vrot.lane.b32.xlu0 %v9247, 73
    %v9307 = vpop.permute.xlu0 %9306
    %vm9308 = vcmask 596992
    %v9309 = vsel %vm9308, %v9269, %v9271
    %v9310 = vsel %vm9308, %v9271, %v9273
    %v9311 = vsel %vm9308, %v9273, %v9275
    %v9312 = vsel %vm9308, %v9275, %v9277
    %v9313 = vsel %vm9308, %v9279, %v9281
    %v9314 = vsel %vm9308, %v9281, %v9283
    %v9315 = vsel %vm9308, %v9283, %v9285
    %v9316 = vsel %vm9308, %v9285, %v9287
    %v9317 = vsel %vm9308, %v9289, %v9291
    %v9318 = vsel %vm9308, %v9291, %v9293
    %v9319 = vsel %vm9308, %v9293, %v9295
    %v9320 = vsel %vm9308, %v9295, %v9297
    %v9321 = vsel %vm9308, %v9299, %v9301
    %v9322 = vsel %vm9308, %v9301, %v9303
    %v9323 = vsel %vm9308, %v9303, %v9305
    %v9324 = vsel %vm9308, %v9305, %v9307
    %v9345 = vadd.f32 %v9183, %v9309
    %v9346 = vadd.f32 %v9184, %v9310
    %v9347 = vadd.f32 %v9185, %v9311
    %v9348 = vadd.f32 %v9186, %v9312
    %v9349 = vadd.f32 %v9187, %v9277
    %v9350 = vadd.f32 %v9188, %v9313
    %v9351 = vadd.f32 %v9189, %v9314
    %v9352 = vadd.f32 %v9190, %v9315
    %v9353 = vadd.f32 %v9191, %v9316
    %v9354 = vadd.f32 %v9192, %v9287
    %v9355 = vadd.f32 %v9193, %v9317
    %v9356 = vadd.f32 %v9194, %v9318
    %v9357 = vadd.f32 %v9195, %v9319
    %v9358 = vadd.f32 %v9196, %v9320
    %v9359 = vadd.f32 %v9197, %v9297
    %v9360 = vadd.f32 %v9198, %v9321
    %v9361 = vadd.f32 %v9199, %v9322
    %v9362 = vadd.f32 %v9200, %v9323
    %v9363 = vadd.f32 %v9201, %v9324
    %v9364 = vadd.f32 %v9202, %v9307
    %s9365 = scalar_lea.vmem %s2, 1792
    %v9366 = vld [vmem:[%s9365] sm:$0xff]
    %v9367 = vld [vmem:[%s9365 + $0x8] sm:$0xff]
    %v9368 = vld [vmem:[%s9365 + $0x10] sm:$0xff]
    %v9369 = vld [vmem:[%s9365 + $0x18] sm:$0xff]
    %9371 = vset.pattern.permute.xlu0 0
    %9372 = vperm.xlu0 %9371, %v9366
    %v9373 = vpop.permute.xlu0 %9372
    %9376 = vset.pattern.permute.xlu0 0
    %9377 = vperm.xlu0 %9376, %v9367
    %v9378 = vpop.permute.xlu0 %9377
    %9381 = vset.pattern.permute.xlu0 0
    %9382 = vperm.xlu0 %9381, %v9368
    %v9383 = vpop.permute.xlu0 %9382
    %9386 = vset.pattern.permute.xlu0 0
    %9387 = vperm.xlu0 %9386, %v9369
    %v9388 = vpop.permute.xlu0 %9387
    %v9390 = vmul.f32 %v9373, %v396
    %v9391 = vmul.f32 %v9373, %v397
    %v9392 = vmul.f32 %v9373, %v398
    %v9393 = vmul.f32 %v9373, %v399
    %v9394 = vmul.f32 %v9373, %v400
    %v9395 = vmul.f32 %v9378, %v401
    %v9396 = vmul.f32 %v9378, %v402
    %v9397 = vmul.f32 %v9378, %v403
    %v9398 = vmul.f32 %v9378, %v404
    %v9399 = vmul.f32 %v9378, %v405
    %v9400 = vmul.f32 %v9383, %v406
    %v9401 = vmul.f32 %v9383, %v407
    %v9402 = vmul.f32 %v9383, %v408
    %v9403 = vmul.f32 %v9383, %v409
    %v9404 = vmul.f32 %v9383, %v410
    %v9405 = vmul.f32 %v9388, %v411
    %v9406 = vmul.f32 %v9388, %v412
    %v9407 = vmul.f32 %v9388, %v413
    %v9408 = vmul.f32 %v9388, %v414
    %v9409 = vmul.f32 %v9388, %v415
    %9430 = vrot.lane.b32.xlu0 %v9390, 72
    %v9431 = vpop.permute.xlu0 %9430
    %9432 = vrot.lane.b32.xlu0 %v9391, 72
    %v9433 = vpop.permute.xlu0 %9432
    %9434 = vrot.lane.b32.xlu0 %v9392, 72
    %v9435 = vpop.permute.xlu0 %9434
    %9436 = vrot.lane.b32.xlu0 %v9393, 72
    %v9437 = vpop.permute.xlu0 %9436
    %9438 = vrot.lane.b32.xlu0 %v9394, 72
    %v9439 = vpop.permute.xlu0 %9438
    %9440 = vrot.lane.b32.xlu0 %v9395, 72
    %v9441 = vpop.permute.xlu0 %9440
    %9442 = vrot.lane.b32.xlu0 %v9396, 72
    %v9443 = vpop.permute.xlu0 %9442
    %9444 = vrot.lane.b32.xlu0 %v9397, 72
    %v9445 = vpop.permute.xlu0 %9444
    %9446 = vrot.lane.b32.xlu0 %v9398, 72
    %v9447 = vpop.permute.xlu0 %9446
    %9448 = vrot.lane.b32.xlu0 %v9399, 72
    %v9449 = vpop.permute.xlu0 %9448
    %9450 = vrot.lane.b32.xlu0 %v9400, 72
    %v9451 = vpop.permute.xlu0 %9450
    %9452 = vrot.lane.b32.xlu0 %v9401, 72
    %v9453 = vpop.permute.xlu0 %9452
    %9454 = vrot.lane.b32.xlu0 %v9402, 72
    %v9455 = vpop.permute.xlu0 %9454
    %9456 = vrot.lane.b32.xlu0 %v9403, 72
    %v9457 = vpop.permute.xlu0 %9456
    %9458 = vrot.lane.b32.xlu0 %v9404, 72
    %v9459 = vpop.permute.xlu0 %9458
    %9460 = vrot.lane.b32.xlu0 %v9405, 72
    %v9461 = vpop.permute.xlu0 %9460
    %9462 = vrot.lane.b32.xlu0 %v9406, 72
    %v9463 = vpop.permute.xlu0 %9462
    %9464 = vrot.lane.b32.xlu0 %v9407, 72
    %v9465 = vpop.permute.xlu0 %9464
    %9466 = vrot.lane.b32.xlu0 %v9408, 72
    %v9467 = vpop.permute.xlu0 %9466
    %9468 = vrot.lane.b32.xlu0 %v9409, 72
    %v9469 = vpop.permute.xlu0 %9468
    %vm9470 = vcmask 588800
    %v9471 = vsel %vm9470, %v9431, %v9433
    %v9472 = vsel %vm9470, %v9433, %v9435
    %v9473 = vsel %vm9470, %v9435, %v9437
    %v9474 = vsel %vm9470, %v9437, %v9439
    %v9475 = vsel %vm9470, %v9441, %v9443
    %v9476 = vsel %vm9470, %v9443, %v9445
    %v9477 = vsel %vm9470, %v9445, %v9447
    %v9478 = vsel %vm9470, %v9447, %v9449
    %v9479 = vsel %vm9470, %v9451, %v9453
    %v9480 = vsel %vm9470, %v9453, %v9455
    %v9481 = vsel %vm9470, %v9455, %v9457
    %v9482 = vsel %vm9470, %v9457, %v9459
    %v9483 = vsel %vm9470, %v9461, %v9463
    %v9484 = vsel %vm9470, %v9463, %v9465
    %v9485 = vsel %vm9470, %v9465, %v9467
    %v9486 = vsel %vm9470, %v9467, %v9469
    %v9507 = vadd.f32 %v9345, %v9471
    %v9508 = vadd.f32 %v9346, %v9472
    %v9509 = vadd.f32 %v9347, %v9473
    %v9510 = vadd.f32 %v9348, %v9474
    %v9511 = vadd.f32 %v9349, %v9439
    %v9512 = vadd.f32 %v9350, %v9475
    %v9513 = vadd.f32 %v9351, %v9476
    %v9514 = vadd.f32 %v9352, %v9477
    %v9515 = vadd.f32 %v9353, %v9478
    %v9516 = vadd.f32 %v9354, %v9449
    %v9517 = vadd.f32 %v9355, %v9479
    %v9518 = vadd.f32 %v9356, %v9480
    %v9519 = vadd.f32 %v9357, %v9481
    %v9520 = vadd.f32 %v9358, %v9482
    %v9521 = vadd.f32 %v9359, %v9459
    %v9522 = vadd.f32 %v9360, %v9483
    %v9523 = vadd.f32 %v9361, %v9484
    %v9524 = vadd.f32 %v9362, %v9485
    %v9525 = vadd.f32 %v9363, %v9486
    %v9526 = vadd.f32 %v9364, %v9469
    %s9527 = scalar_lea.vmem %s2, 1824
    %v9528 = vld [vmem:[%s9527] sm:$0xff]
    %v9529 = vld [vmem:[%s9527 + $0x8] sm:$0xff]
    %v9530 = vld [vmem:[%s9527 + $0x10] sm:$0xff]
    %v9531 = vld [vmem:[%s9527 + $0x18] sm:$0xff]
    %9533 = vset.pattern.permute.xlu0 0
    %9534 = vperm.xlu0 %9533, %v9528
    %v9535 = vpop.permute.xlu0 %9534
    %9538 = vset.pattern.permute.xlu0 0
    %9539 = vperm.xlu0 %9538, %v9529
    %v9540 = vpop.permute.xlu0 %9539
    %9543 = vset.pattern.permute.xlu0 0
    %9544 = vperm.xlu0 %9543, %v9530
    %v9545 = vpop.permute.xlu0 %9544
    %9548 = vset.pattern.permute.xlu0 0
    %9549 = vperm.xlu0 %9548, %v9531
    %v9550 = vpop.permute.xlu0 %9549
    %v9552 = vmul.f32 %v9535, %v396
    %v9553 = vmul.f32 %v9535, %v397
    %v9554 = vmul.f32 %v9535, %v398
    %v9555 = vmul.f32 %v9535, %v399
    %v9556 = vmul.f32 %v9535, %v400
    %v9557 = vmul.f32 %v9540, %v401
    %v9558 = vmul.f32 %v9540, %v402
    %v9559 = vmul.f32 %v9540, %v403
    %v9560 = vmul.f32 %v9540, %v404
    %v9561 = vmul.f32 %v9540, %v405
    %v9562 = vmul.f32 %v9545, %v406
    %v9563 = vmul.f32 %v9545, %v407
    %v9564 = vmul.f32 %v9545, %v408
    %v9565 = vmul.f32 %v9545, %v409
    %v9566 = vmul.f32 %v9545, %v410
    %v9567 = vmul.f32 %v9550, %v411
    %v9568 = vmul.f32 %v9550, %v412
    %v9569 = vmul.f32 %v9550, %v413
    %v9570 = vmul.f32 %v9550, %v414
    %v9571 = vmul.f32 %v9550, %v415
    %9592 = vrot.lane.b32.xlu0 %v9552, 71
    %v9593 = vpop.permute.xlu0 %9592
    %9594 = vrot.lane.b32.xlu0 %v9553, 71
    %v9595 = vpop.permute.xlu0 %9594
    %9596 = vrot.lane.b32.xlu0 %v9554, 71
    %v9597 = vpop.permute.xlu0 %9596
    %9598 = vrot.lane.b32.xlu0 %v9555, 71
    %v9599 = vpop.permute.xlu0 %9598
    %9600 = vrot.lane.b32.xlu0 %v9556, 71
    %v9601 = vpop.permute.xlu0 %9600
    %9602 = vrot.lane.b32.xlu0 %v9557, 71
    %v9603 = vpop.permute.xlu0 %9602
    %9604 = vrot.lane.b32.xlu0 %v9558, 71
    %v9605 = vpop.permute.xlu0 %9604
    %9606 = vrot.lane.b32.xlu0 %v9559, 71
    %v9607 = vpop.permute.xlu0 %9606
    %9608 = vrot.lane.b32.xlu0 %v9560, 71
    %v9609 = vpop.permute.xlu0 %9608
    %9610 = vrot.lane.b32.xlu0 %v9561, 71
    %v9611 = vpop.permute.xlu0 %9610
    %9612 = vrot.lane.b32.xlu0 %v9562, 71
    %v9613 = vpop.permute.xlu0 %9612
    %9614 = vrot.lane.b32.xlu0 %v9563, 71
    %v9615 = vpop.permute.xlu0 %9614
    %9616 = vrot.lane.b32.xlu0 %v9564, 71
    %v9617 = vpop.permute.xlu0 %9616
    %9618 = vrot.lane.b32.xlu0 %v9565, 71
    %v9619 = vpop.permute.xlu0 %9618
    %9620 = vrot.lane.b32.xlu0 %v9566, 71
    %v9621 = vpop.permute.xlu0 %9620
    %9622 = vrot.lane.b32.xlu0 %v9567, 71
    %v9623 = vpop.permute.xlu0 %9622
    %9624 = vrot.lane.b32.xlu0 %v9568, 71
    %v9625 = vpop.permute.xlu0 %9624
    %9626 = vrot.lane.b32.xlu0 %v9569, 71
    %v9627 = vpop.permute.xlu0 %9626
    %9628 = vrot.lane.b32.xlu0 %v9570, 71
    %v9629 = vpop.permute.xlu0 %9628
    %9630 = vrot.lane.b32.xlu0 %v9571, 71
    %v9631 = vpop.permute.xlu0 %9630
    %vm9632 = vcmask 580608
    %v9633 = vsel %vm9632, %v9593, %v9595
    %v9634 = vsel %vm9632, %v9595, %v9597
    %v9635 = vsel %vm9632, %v9597, %v9599
    %v9636 = vsel %vm9632, %v9599, %v9601
    %v9637 = vsel %vm9632, %v9603, %v9605
    %v9638 = vsel %vm9632, %v9605, %v9607
    %v9639 = vsel %vm9632, %v9607, %v9609
    %v9640 = vsel %vm9632, %v9609, %v9611
    %v9641 = vsel %vm9632, %v9613, %v9615
    %v9642 = vsel %vm9632, %v9615, %v9617
    %v9643 = vsel %vm9632, %v9617, %v9619
    %v9644 = vsel %vm9632, %v9619, %v9621
    %v9645 = vsel %vm9632, %v9623, %v9625
    %v9646 = vsel %vm9632, %v9625, %v9627
    %v9647 = vsel %vm9632, %v9627, %v9629
    %v9648 = vsel %vm9632, %v9629, %v9631
    %v9669 = vadd.f32 %v9507, %v9633
    %v9670 = vadd.f32 %v9508, %v9634
    %v9671 = vadd.f32 %v9509, %v9635
    %v9672 = vadd.f32 %v9510, %v9636
    %v9673 = vadd.f32 %v9511, %v9601
    %v9674 = vadd.f32 %v9512, %v9637
    %v9675 = vadd.f32 %v9513, %v9638
    %v9676 = vadd.f32 %v9514, %v9639
    %v9677 = vadd.f32 %v9515, %v9640
    %v9678 = vadd.f32 %v9516, %v9611
    %v9679 = vadd.f32 %v9517, %v9641
    %v9680 = vadd.f32 %v9518, %v9642
    %v9681 = vadd.f32 %v9519, %v9643
    %v9682 = vadd.f32 %v9520, %v9644
    %v9683 = vadd.f32 %v9521, %v9621
    %v9684 = vadd.f32 %v9522, %v9645
    %v9685 = vadd.f32 %v9523, %v9646
    %v9686 = vadd.f32 %v9524, %v9647
    %v9687 = vadd.f32 %v9525, %v9648
    %v9688 = vadd.f32 %v9526, %v9631
    %s9689 = scalar_lea.vmem %s2, 1856
    %v9690 = vld [vmem:[%s9689] sm:$0xff]
    %v9691 = vld [vmem:[%s9689 + $0x8] sm:$0xff]
    %v9692 = vld [vmem:[%s9689 + $0x10] sm:$0xff]
    %v9693 = vld [vmem:[%s9689 + $0x18] sm:$0xff]
    %9695 = vset.pattern.permute.xlu0 0
    %9696 = vperm.xlu0 %9695, %v9690
    %v9697 = vpop.permute.xlu0 %9696
    %9700 = vset.pattern.permute.xlu0 0
    %9701 = vperm.xlu0 %9700, %v9691
    %v9702 = vpop.permute.xlu0 %9701
    %9705 = vset.pattern.permute.xlu0 0
    %9706 = vperm.xlu0 %9705, %v9692
    %v9707 = vpop.permute.xlu0 %9706
    %9710 = vset.pattern.permute.xlu0 0
    %9711 = vperm.xlu0 %9710, %v9693
    %v9712 = vpop.permute.xlu0 %9711
    %v9714 = vmul.f32 %v9697, %v396
    %v9715 = vmul.f32 %v9697, %v397
    %v9716 = vmul.f32 %v9697, %v398
    %v9717 = vmul.f32 %v9697, %v399
    %v9718 = vmul.f32 %v9697, %v400
    %v9719 = vmul.f32 %v9702, %v401
    %v9720 = vmul.f32 %v9702, %v402
    %v9721 = vmul.f32 %v9702, %v403
    %v9722 = vmul.f32 %v9702, %v404
    %v9723 = vmul.f32 %v9702, %v405
    %v9724 = vmul.f32 %v9707, %v406
    %v9725 = vmul.f32 %v9707, %v407
    %v9726 = vmul.f32 %v9707, %v408
    %v9727 = vmul.f32 %v9707, %v409
    %v9728 = vmul.f32 %v9707, %v410
    %v9729 = vmul.f32 %v9712, %v411
    %v9730 = vmul.f32 %v9712, %v412
    %v9731 = vmul.f32 %v9712, %v413
    %v9732 = vmul.f32 %v9712, %v414
    %v9733 = vmul.f32 %v9712, %v415
    %9754 = vrot.lane.b32.xlu0 %v9714, 70
    %v9755 = vpop.permute.xlu0 %9754
    %9756 = vrot.lane.b32.xlu0 %v9715, 70
    %v9757 = vpop.permute.xlu0 %9756
    %9758 = vrot.lane.b32.xlu0 %v9716, 70
    %v9759 = vpop.permute.xlu0 %9758
    %9760 = vrot.lane.b32.xlu0 %v9717, 70
    %v9761 = vpop.permute.xlu0 %9760
    %9762 = vrot.lane.b32.xlu0 %v9718, 70
    %v9763 = vpop.permute.xlu0 %9762
    %9764 = vrot.lane.b32.xlu0 %v9719, 70
    %v9765 = vpop.permute.xlu0 %9764
    %9766 = vrot.lane.b32.xlu0 %v9720, 70
    %v9767 = vpop.permute.xlu0 %9766
    %9768 = vrot.lane.b32.xlu0 %v9721, 70
    %v9769 = vpop.permute.xlu0 %9768
    %9770 = vrot.lane.b32.xlu0 %v9722, 70
    %v9771 = vpop.permute.xlu0 %9770
    %9772 = vrot.lane.b32.xlu0 %v9723, 70
    %v9773 = vpop.permute.xlu0 %9772
    %9774 = vrot.lane.b32.xlu0 %v9724, 70
    %v9775 = vpop.permute.xlu0 %9774
    %9776 = vrot.lane.b32.xlu0 %v9725, 70
    %v9777 = vpop.permute.xlu0 %9776
    %9778 = vrot.lane.b32.xlu0 %v9726, 70
    %v9779 = vpop.permute.xlu0 %9778
    %9780 = vrot.lane.b32.xlu0 %v9727, 70
    %v9781 = vpop.permute.xlu0 %9780
    %9782 = vrot.lane.b32.xlu0 %v9728, 70
    %v9783 = vpop.permute.xlu0 %9782
    %9784 = vrot.lane.b32.xlu0 %v9729, 70
    %v9785 = vpop.permute.xlu0 %9784
    %9786 = vrot.lane.b32.xlu0 %v9730, 70
    %v9787 = vpop.permute.xlu0 %9786
    %9788 = vrot.lane.b32.xlu0 %v9731, 70
    %v9789 = vpop.permute.xlu0 %9788
    %9790 = vrot.lane.b32.xlu0 %v9732, 70
    %v9791 = vpop.permute.xlu0 %9790
    %9792 = vrot.lane.b32.xlu0 %v9733, 70
    %v9793 = vpop.permute.xlu0 %9792
    %vm9794 = vcmask 572416
    %v9795 = vsel %vm9794, %v9755, %v9757
    %v9796 = vsel %vm9794, %v9757, %v9759
    %v9797 = vsel %vm9794, %v9759, %v9761
    %v9798 = vsel %vm9794, %v9761, %v9763
    %v9799 = vsel %vm9794, %v9765, %v9767
    %v9800 = vsel %vm9794, %v9767, %v9769
    %v9801 = vsel %vm9794, %v9769, %v9771
    %v9802 = vsel %vm9794, %v9771, %v9773
    %v9803 = vsel %vm9794, %v9775, %v9777
    %v9804 = vsel %vm9794, %v9777, %v9779
    %v9805 = vsel %vm9794, %v9779, %v9781
    %v9806 = vsel %vm9794, %v9781, %v9783
    %v9807 = vsel %vm9794, %v9785, %v9787
    %v9808 = vsel %vm9794, %v9787, %v9789
    %v9809 = vsel %vm9794, %v9789, %v9791
    %v9810 = vsel %vm9794, %v9791, %v9793
    %v9831 = vadd.f32 %v9669, %v9795
    %v9832 = vadd.f32 %v9670, %v9796
    %v9833 = vadd.f32 %v9671, %v9797
    %v9834 = vadd.f32 %v9672, %v9798
    %v9835 = vadd.f32 %v9673, %v9763
    %v9836 = vadd.f32 %v9674, %v9799
    %v9837 = vadd.f32 %v9675, %v9800
    %v9838 = vadd.f32 %v9676, %v9801
    %v9839 = vadd.f32 %v9677, %v9802
    %v9840 = vadd.f32 %v9678, %v9773
    %v9841 = vadd.f32 %v9679, %v9803
    %v9842 = vadd.f32 %v9680, %v9804
    %v9843 = vadd.f32 %v9681, %v9805
    %v9844 = vadd.f32 %v9682, %v9806
    %v9845 = vadd.f32 %v9683, %v9783
    %v9846 = vadd.f32 %v9684, %v9807
    %v9847 = vadd.f32 %v9685, %v9808
    %v9848 = vadd.f32 %v9686, %v9809
    %v9849 = vadd.f32 %v9687, %v9810
    %v9850 = vadd.f32 %v9688, %v9793
    %s9851 = scalar_lea.vmem %s2, 1888
    %v9852 = vld [vmem:[%s9851] sm:$0xff]
    %v9853 = vld [vmem:[%s9851 + $0x8] sm:$0xff]
    %v9854 = vld [vmem:[%s9851 + $0x10] sm:$0xff]
    %v9855 = vld [vmem:[%s9851 + $0x18] sm:$0xff]
    %9857 = vset.pattern.permute.xlu0 0
    %9858 = vperm.xlu0 %9857, %v9852
    %v9859 = vpop.permute.xlu0 %9858
    %9862 = vset.pattern.permute.xlu0 0
    %9863 = vperm.xlu0 %9862, %v9853
    %v9864 = vpop.permute.xlu0 %9863
    %9867 = vset.pattern.permute.xlu0 0
    %9868 = vperm.xlu0 %9867, %v9854
    %v9869 = vpop.permute.xlu0 %9868
    %9872 = vset.pattern.permute.xlu0 0
    %9873 = vperm.xlu0 %9872, %v9855
    %v9874 = vpop.permute.xlu0 %9873
    %v9876 = vmul.f32 %v9859, %v396
    %v9877 = vmul.f32 %v9859, %v397
    %v9878 = vmul.f32 %v9859, %v398
    %v9879 = vmul.f32 %v9859, %v399
    %v9880 = vmul.f32 %v9859, %v400
    %v9881 = vmul.f32 %v9864, %v401
    %v9882 = vmul.f32 %v9864, %v402
    %v9883 = vmul.f32 %v9864, %v403
    %v9884 = vmul.f32 %v9864, %v404
    %v9885 = vmul.f32 %v9864, %v405
    %v9886 = vmul.f32 %v9869, %v406
    %v9887 = vmul.f32 %v9869, %v407
    %v9888 = vmul.f32 %v9869, %v408
    %v9889 = vmul.f32 %v9869, %v409
    %v9890 = vmul.f32 %v9869, %v410
    %v9891 = vmul.f32 %v9874, %v411
    %v9892 = vmul.f32 %v9874, %v412
    %v9893 = vmul.f32 %v9874, %v413
    %v9894 = vmul.f32 %v9874, %v414
    %v9895 = vmul.f32 %v9874, %v415
    %9916 = vrot.lane.b32.xlu0 %v9876, 69
    %v9917 = vpop.permute.xlu0 %9916
    %9918 = vrot.lane.b32.xlu0 %v9877, 69
    %v9919 = vpop.permute.xlu0 %9918
    %9920 = vrot.lane.b32.xlu0 %v9878, 69
    %v9921 = vpop.permute.xlu0 %9920
    %9922 = vrot.lane.b32.xlu0 %v9879, 69
    %v9923 = vpop.permute.xlu0 %9922
    %9924 = vrot.lane.b32.xlu0 %v9880, 69
    %v9925 = vpop.permute.xlu0 %9924
    %9926 = vrot.lane.b32.xlu0 %v9881, 69
    %v9927 = vpop.permute.xlu0 %9926
    %9928 = vrot.lane.b32.xlu0 %v9882, 69
    %v9929 = vpop.permute.xlu0 %9928
    %9930 = vrot.lane.b32.xlu0 %v9883, 69
    %v9931 = vpop.permute.xlu0 %9930
    %9932 = vrot.lane.b32.xlu0 %v9884, 69
    %v9933 = vpop.permute.xlu0 %9932
    %9934 = vrot.lane.b32.xlu0 %v9885, 69
    %v9935 = vpop.permute.xlu0 %9934
    %9936 = vrot.lane.b32.xlu0 %v9886, 69
    %v9937 = vpop.permute.xlu0 %9936
    %9938 = vrot.lane.b32.xlu0 %v9887, 69
    %v9939 = vpop.permute.xlu0 %9938
    %9940 = vrot.lane.b32.xlu0 %v9888, 69
    %v9941 = vpop.permute.xlu0 %9940
    %9942 = vrot.lane.b32.xlu0 %v9889, 69
    %v9943 = vpop.permute.xlu0 %9942
    %9944 = vrot.lane.b32.xlu0 %v9890, 69
    %v9945 = vpop.permute.xlu0 %9944
    %9946 = vrot.lane.b32.xlu0 %v9891, 69
    %v9947 = vpop.permute.xlu0 %9946
    %9948 = vrot.lane.b32.xlu0 %v9892, 69
    %v9949 = vpop.permute.xlu0 %9948
    %9950 = vrot.lane.b32.xlu0 %v9893, 69
    %v9951 = vpop.permute.xlu0 %9950
    %9952 = vrot.lane.b32.xlu0 %v9894, 69
    %v9953 = vpop.permute.xlu0 %9952
    %9954 = vrot.lane.b32.xlu0 %v9895, 69
    %v9955 = vpop.permute.xlu0 %9954
    %vm9956 = vcmask 564224
    %v9957 = vsel %vm9956, %v9917, %v9919
    %v9958 = vsel %vm9956, %v9919, %v9921
    %v9959 = vsel %vm9956, %v9921, %v9923
    %v9960 = vsel %vm9956, %v9923, %v9925
    %v9961 = vsel %vm9956, %v9927, %v9929
    %v9962 = vsel %vm9956, %v9929, %v9931
    %v9963 = vsel %vm9956, %v9931, %v9933
    %v9964 = vsel %vm9956, %v9933, %v9935
    %v9965 = vsel %vm9956, %v9937, %v9939
    %v9966 = vsel %vm9956, %v9939, %v9941
    %v9967 = vsel %vm9956, %v9941, %v9943
    %v9968 = vsel %vm9956, %v9943, %v9945
    %v9969 = vsel %vm9956, %v9947, %v9949
    %v9970 = vsel %vm9956, %v9949, %v9951
    %v9971 = vsel %vm9956, %v9951, %v9953
    %v9972 = vsel %vm9956, %v9953, %v9955
    %v9993 = vadd.f32 %v9831, %v9957
    %v9994 = vadd.f32 %v9832, %v9958
    %v9995 = vadd.f32 %v9833, %v9959
    %v9996 = vadd.f32 %v9834, %v9960
    %v9997 = vadd.f32 %v9835, %v9925
    %v9998 = vadd.f32 %v9836, %v9961
    %v9999 = vadd.f32 %v9837, %v9962
    %v10000 = vadd.f32 %v9838, %v9963
    %v10001 = vadd.f32 %v9839, %v9964
    %v10002 = vadd.f32 %v9840, %v9935
    %v10003 = vadd.f32 %v9841, %v9965
    %v10004 = vadd.f32 %v9842, %v9966
    %v10005 = vadd.f32 %v9843, %v9967
    %v10006 = vadd.f32 %v9844, %v9968
    %v10007 = vadd.f32 %v9845, %v9945
    %v10008 = vadd.f32 %v9846, %v9969
    %v10009 = vadd.f32 %v9847, %v9970
    %v10010 = vadd.f32 %v9848, %v9971
    %v10011 = vadd.f32 %v9849, %v9972
    %v10012 = vadd.f32 %v9850, %v9955
    %s10013 = scalar_lea.vmem %s2, 1920
    %v10014 = vld [vmem:[%s10013] sm:$0xff]
    %v10015 = vld [vmem:[%s10013 + $0x8] sm:$0xff]
    %v10016 = vld [vmem:[%s10013 + $0x10] sm:$0xff]
    %v10017 = vld [vmem:[%s10013 + $0x18] sm:$0xff]
    %10019 = vset.pattern.permute.xlu0 0
    %10020 = vperm.xlu0 %10019, %v10014
    %v10021 = vpop.permute.xlu0 %10020
    %10024 = vset.pattern.permute.xlu0 0
    %10025 = vperm.xlu0 %10024, %v10015
    %v10026 = vpop.permute.xlu0 %10025
    %10029 = vset.pattern.permute.xlu0 0
    %10030 = vperm.xlu0 %10029, %v10016
    %v10031 = vpop.permute.xlu0 %10030
    %10034 = vset.pattern.permute.xlu0 0
    %10035 = vperm.xlu0 %10034, %v10017
    %v10036 = vpop.permute.xlu0 %10035
    %v10038 = vmul.f32 %v10021, %v396
    %v10039 = vmul.f32 %v10021, %v397
    %v10040 = vmul.f32 %v10021, %v398
    %v10041 = vmul.f32 %v10021, %v399
    %v10042 = vmul.f32 %v10021, %v400
    %v10043 = vmul.f32 %v10026, %v401
    %v10044 = vmul.f32 %v10026, %v402
    %v10045 = vmul.f32 %v10026, %v403
    %v10046 = vmul.f32 %v10026, %v404
    %v10047 = vmul.f32 %v10026, %v405
    %v10048 = vmul.f32 %v10031, %v406
    %v10049 = vmul.f32 %v10031, %v407
    %v10050 = vmul.f32 %v10031, %v408
    %v10051 = vmul.f32 %v10031, %v409
    %v10052 = vmul.f32 %v10031, %v410
    %v10053 = vmul.f32 %v10036, %v411
    %v10054 = vmul.f32 %v10036, %v412
    %v10055 = vmul.f32 %v10036, %v413
    %v10056 = vmul.f32 %v10036, %v414
    %v10057 = vmul.f32 %v10036, %v415
    %10078 = vrot.lane.b32.xlu0 %v10038, 68
    %v10079 = vpop.permute.xlu0 %10078
    %10080 = vrot.lane.b32.xlu0 %v10039, 68
    %v10081 = vpop.permute.xlu0 %10080
    %10082 = vrot.lane.b32.xlu0 %v10040, 68
    %v10083 = vpop.permute.xlu0 %10082
    %10084 = vrot.lane.b32.xlu0 %v10041, 68
    %v10085 = vpop.permute.xlu0 %10084
    %10086 = vrot.lane.b32.xlu0 %v10042, 68
    %v10087 = vpop.permute.xlu0 %10086
    %10088 = vrot.lane.b32.xlu0 %v10043, 68
    %v10089 = vpop.permute.xlu0 %10088
    %10090 = vrot.lane.b32.xlu0 %v10044, 68
    %v10091 = vpop.permute.xlu0 %10090
    %10092 = vrot.lane.b32.xlu0 %v10045, 68
    %v10093 = vpop.permute.xlu0 %10092
    %10094 = vrot.lane.b32.xlu0 %v10046, 68
    %v10095 = vpop.permute.xlu0 %10094
    %10096 = vrot.lane.b32.xlu0 %v10047, 68
    %v10097 = vpop.permute.xlu0 %10096
    %10098 = vrot.lane.b32.xlu0 %v10048, 68
    %v10099 = vpop.permute.xlu0 %10098
    %10100 = vrot.lane.b32.xlu0 %v10049, 68
    %v10101 = vpop.permute.xlu0 %10100
    %10102 = vrot.lane.b32.xlu0 %v10050, 68
    %v10103 = vpop.permute.xlu0 %10102
    %10104 = vrot.lane.b32.xlu0 %v10051, 68
    %v10105 = vpop.permute.xlu0 %10104
    %10106 = vrot.lane.b32.xlu0 %v10052, 68
    %v10107 = vpop.permute.xlu0 %10106
    %10108 = vrot.lane.b32.xlu0 %v10053, 68
    %v10109 = vpop.permute.xlu0 %10108
    %10110 = vrot.lane.b32.xlu0 %v10054, 68
    %v10111 = vpop.permute.xlu0 %10110
    %10112 = vrot.lane.b32.xlu0 %v10055, 68
    %v10113 = vpop.permute.xlu0 %10112
    %10114 = vrot.lane.b32.xlu0 %v10056, 68
    %v10115 = vpop.permute.xlu0 %10114
    %10116 = vrot.lane.b32.xlu0 %v10057, 68
    %v10117 = vpop.permute.xlu0 %10116
    %vm10118 = vcmask 556032
    %v10119 = vsel %vm10118, %v10079, %v10081
    %v10120 = vsel %vm10118, %v10081, %v10083
    %v10121 = vsel %vm10118, %v10083, %v10085
    %v10122 = vsel %vm10118, %v10085, %v10087
    %v10123 = vsel %vm10118, %v10089, %v10091
    %v10124 = vsel %vm10118, %v10091, %v10093
    %v10125 = vsel %vm10118, %v10093, %v10095
    %v10126 = vsel %vm10118, %v10095, %v10097
    %v10127 = vsel %vm10118, %v10099, %v10101
    %v10128 = vsel %vm10118, %v10101, %v10103
    %v10129 = vsel %vm10118, %v10103, %v10105
    %v10130 = vsel %vm10118, %v10105, %v10107
    %v10131 = vsel %vm10118, %v10109, %v10111
    %v10132 = vsel %vm10118, %v10111, %v10113
    %v10133 = vsel %vm10118, %v10113, %v10115
    %v10134 = vsel %vm10118, %v10115, %v10117
    %v10155 = vadd.f32 %v9993, %v10119
    %v10156 = vadd.f32 %v9994, %v10120
    %v10157 = vadd.f32 %v9995, %v10121
    %v10158 = vadd.f32 %v9996, %v10122
    %v10159 = vadd.f32 %v9997, %v10087
    %v10160 = vadd.f32 %v9998, %v10123
    %v10161 = vadd.f32 %v9999, %v10124
    %v10162 = vadd.f32 %v10000, %v10125
    %v10163 = vadd.f32 %v10001, %v10126
    %v10164 = vadd.f32 %v10002, %v10097
    %v10165 = vadd.f32 %v10003, %v10127
    %v10166 = vadd.f32 %v10004, %v10128
    %v10167 = vadd.f32 %v10005, %v10129
    %v10168 = vadd.f32 %v10006, %v10130
    %v10169 = vadd.f32 %v10007, %v10107
    %v10170 = vadd.f32 %v10008, %v10131
    %v10171 = vadd.f32 %v10009, %v10132
    %v10172 = vadd.f32 %v10010, %v10133
    %v10173 = vadd.f32 %v10011, %v10134
    %v10174 = vadd.f32 %v10012, %v10117
    %s10175 = scalar_lea.vmem %s2, 1952
    %v10176 = vld [vmem:[%s10175] sm:$0xff]
    %v10177 = vld [vmem:[%s10175 + $0x8] sm:$0xff]
    %v10178 = vld [vmem:[%s10175 + $0x10] sm:$0xff]
    %v10179 = vld [vmem:[%s10175 + $0x18] sm:$0xff]
    %10181 = vset.pattern.permute.xlu0 0
    %10182 = vperm.xlu0 %10181, %v10176
    %v10183 = vpop.permute.xlu0 %10182
    %10186 = vset.pattern.permute.xlu0 0
    %10187 = vperm.xlu0 %10186, %v10177
    %v10188 = vpop.permute.xlu0 %10187
    %10191 = vset.pattern.permute.xlu0 0
    %10192 = vperm.xlu0 %10191, %v10178
    %v10193 = vpop.permute.xlu0 %10192
    %10196 = vset.pattern.permute.xlu0 0
    %10197 = vperm.xlu0 %10196, %v10179
    %v10198 = vpop.permute.xlu0 %10197
    %v10200 = vmul.f32 %v10183, %v396
    %v10201 = vmul.f32 %v10183, %v397
    %v10202 = vmul.f32 %v10183, %v398
    %v10203 = vmul.f32 %v10183, %v399
    %v10204 = vmul.f32 %v10183, %v400
    %v10205 = vmul.f32 %v10188, %v401
    %v10206 = vmul.f32 %v10188, %v402
    %v10207 = vmul.f32 %v10188, %v403
    %v10208 = vmul.f32 %v10188, %v404
    %v10209 = vmul.f32 %v10188, %v405
    %v10210 = vmul.f32 %v10193, %v406
    %v10211 = vmul.f32 %v10193, %v407
    %v10212 = vmul.f32 %v10193, %v408
    %v10213 = vmul.f32 %v10193, %v409
    %v10214 = vmul.f32 %v10193, %v410
    %v10215 = vmul.f32 %v10198, %v411
    %v10216 = vmul.f32 %v10198, %v412
    %v10217 = vmul.f32 %v10198, %v413
    %v10218 = vmul.f32 %v10198, %v414
    %v10219 = vmul.f32 %v10198, %v415
    %10240 = vrot.lane.b32.xlu0 %v10200, 67
    %v10241 = vpop.permute.xlu0 %10240
    %10242 = vrot.lane.b32.xlu0 %v10201, 67
    %v10243 = vpop.permute.xlu0 %10242
    %10244 = vrot.lane.b32.xlu0 %v10202, 67
    %v10245 = vpop.permute.xlu0 %10244
    %10246 = vrot.lane.b32.xlu0 %v10203, 67
    %v10247 = vpop.permute.xlu0 %10246
    %10248 = vrot.lane.b32.xlu0 %v10204, 67
    %v10249 = vpop.permute.xlu0 %10248
    %10250 = vrot.lane.b32.xlu0 %v10205, 67
    %v10251 = vpop.permute.xlu0 %10250
    %10252 = vrot.lane.b32.xlu0 %v10206, 67
    %v10253 = vpop.permute.xlu0 %10252
    %10254 = vrot.lane.b32.xlu0 %v10207, 67
    %v10255 = vpop.permute.xlu0 %10254
    %10256 = vrot.lane.b32.xlu0 %v10208, 67
    %v10257 = vpop.permute.xlu0 %10256
    %10258 = vrot.lane.b32.xlu0 %v10209, 67
    %v10259 = vpop.permute.xlu0 %10258
    %10260 = vrot.lane.b32.xlu0 %v10210, 67
    %v10261 = vpop.permute.xlu0 %10260
    %10262 = vrot.lane.b32.xlu0 %v10211, 67
    %v10263 = vpop.permute.xlu0 %10262
    %10264 = vrot.lane.b32.xlu0 %v10212, 67
    %v10265 = vpop.permute.xlu0 %10264
    %10266 = vrot.lane.b32.xlu0 %v10213, 67
    %v10267 = vpop.permute.xlu0 %10266
    %10268 = vrot.lane.b32.xlu0 %v10214, 67
    %v10269 = vpop.permute.xlu0 %10268
    %10270 = vrot.lane.b32.xlu0 %v10215, 67
    %v10271 = vpop.permute.xlu0 %10270
    %10272 = vrot.lane.b32.xlu0 %v10216, 67
    %v10273 = vpop.permute.xlu0 %10272
    %10274 = vrot.lane.b32.xlu0 %v10217, 67
    %v10275 = vpop.permute.xlu0 %10274
    %10276 = vrot.lane.b32.xlu0 %v10218, 67
    %v10277 = vpop.permute.xlu0 %10276
    %10278 = vrot.lane.b32.xlu0 %v10219, 67
    %v10279 = vpop.permute.xlu0 %10278
    %vm10280 = vcmask 547840
    %v10281 = vsel %vm10280, %v10241, %v10243
    %v10282 = vsel %vm10280, %v10243, %v10245
    %v10283 = vsel %vm10280, %v10245, %v10247
    %v10284 = vsel %vm10280, %v10247, %v10249
    %v10285 = vsel %vm10280, %v10251, %v10253
    %v10286 = vsel %vm10280, %v10253, %v10255
    %v10287 = vsel %vm10280, %v10255, %v10257
    %v10288 = vsel %vm10280, %v10257, %v10259
    %v10289 = vsel %vm10280, %v10261, %v10263
    %v10290 = vsel %vm10280, %v10263, %v10265
    %v10291 = vsel %vm10280, %v10265, %v10267
    %v10292 = vsel %vm10280, %v10267, %v10269
    %v10293 = vsel %vm10280, %v10271, %v10273
    %v10294 = vsel %vm10280, %v10273, %v10275
    %v10295 = vsel %vm10280, %v10275, %v10277
    %v10296 = vsel %vm10280, %v10277, %v10279
    %v10317 = vadd.f32 %v10155, %v10281
    %v10318 = vadd.f32 %v10156, %v10282
    %v10319 = vadd.f32 %v10157, %v10283
    %v10320 = vadd.f32 %v10158, %v10284
    %v10321 = vadd.f32 %v10159, %v10249
    %v10322 = vadd.f32 %v10160, %v10285
    %v10323 = vadd.f32 %v10161, %v10286
    %v10324 = vadd.f32 %v10162, %v10287
    %v10325 = vadd.f32 %v10163, %v10288
    %v10326 = vadd.f32 %v10164, %v10259
    %v10327 = vadd.f32 %v10165, %v10289
    %v10328 = vadd.f32 %v10166, %v10290
    %v10329 = vadd.f32 %v10167, %v10291
    %v10330 = vadd.f32 %v10168, %v10292
    %v10331 = vadd.f32 %v10169, %v10269
    %v10332 = vadd.f32 %v10170, %v10293
    %v10333 = vadd.f32 %v10171, %v10294
    %v10334 = vadd.f32 %v10172, %v10295
    %v10335 = vadd.f32 %v10173, %v10296
    %v10336 = vadd.f32 %v10174, %v10279
    %s10337 = scalar_lea.vmem %s2, 1984
    %v10338 = vld [vmem:[%s10337] sm:$0xff]
    %v10339 = vld [vmem:[%s10337 + $0x8] sm:$0xff]
    %v10340 = vld [vmem:[%s10337 + $0x10] sm:$0xff]
    %v10341 = vld [vmem:[%s10337 + $0x18] sm:$0xff]
    %10343 = vset.pattern.permute.xlu0 0
    %10344 = vperm.xlu0 %10343, %v10338
    %v10345 = vpop.permute.xlu0 %10344
    %10348 = vset.pattern.permute.xlu0 0
    %10349 = vperm.xlu0 %10348, %v10339
    %v10350 = vpop.permute.xlu0 %10349
    %10353 = vset.pattern.permute.xlu0 0
    %10354 = vperm.xlu0 %10353, %v10340
    %v10355 = vpop.permute.xlu0 %10354
    %10358 = vset.pattern.permute.xlu0 0
    %10359 = vperm.xlu0 %10358, %v10341
    %v10360 = vpop.permute.xlu0 %10359
    %v10362 = vmul.f32 %v10345, %v396
    %v10363 = vmul.f32 %v10345, %v397
    %v10364 = vmul.f32 %v10345, %v398
    %v10365 = vmul.f32 %v10345, %v399
    %v10366 = vmul.f32 %v10345, %v400
    %v10367 = vmul.f32 %v10350, %v401
    %v10368 = vmul.f32 %v10350, %v402
    %v10369 = vmul.f32 %v10350, %v403
    %v10370 = vmul.f32 %v10350, %v404
    %v10371 = vmul.f32 %v10350, %v405
    %v10372 = vmul.f32 %v10355, %v406
    %v10373 = vmul.f32 %v10355, %v407
    %v10374 = vmul.f32 %v10355, %v408
    %v10375 = vmul.f32 %v10355, %v409
    %v10376 = vmul.f32 %v10355, %v410
    %v10377 = vmul.f32 %v10360, %v411
    %v10378 = vmul.f32 %v10360, %v412
    %v10379 = vmul.f32 %v10360, %v413
    %v10380 = vmul.f32 %v10360, %v414
    %v10381 = vmul.f32 %v10360, %v415
    %10402 = vrot.lane.b32.xlu0 %v10362, 66
    %v10403 = vpop.permute.xlu0 %10402
    %10404 = vrot.lane.b32.xlu0 %v10363, 66
    %v10405 = vpop.permute.xlu0 %10404
    %10406 = vrot.lane.b32.xlu0 %v10364, 66
    %v10407 = vpop.permute.xlu0 %10406
    %10408 = vrot.lane.b32.xlu0 %v10365, 66
    %v10409 = vpop.permute.xlu0 %10408
    %10410 = vrot.lane.b32.xlu0 %v10366, 66
    %v10411 = vpop.permute.xlu0 %10410
    %10412 = vrot.lane.b32.xlu0 %v10367, 66
    %v10413 = vpop.permute.xlu0 %10412
    %10414 = vrot.lane.b32.xlu0 %v10368, 66
    %v10415 = vpop.permute.xlu0 %10414
    %10416 = vrot.lane.b32.xlu0 %v10369, 66
    %v10417 = vpop.permute.xlu0 %10416
    %10418 = vrot.lane.b32.xlu0 %v10370, 66
    %v10419 = vpop.permute.xlu0 %10418
    %10420 = vrot.lane.b32.xlu0 %v10371, 66
    %v10421 = vpop.permute.xlu0 %10420
    %10422 = vrot.lane.b32.xlu0 %v10372, 66
    %v10423 = vpop.permute.xlu0 %10422
    %10424 = vrot.lane.b32.xlu0 %v10373, 66
    %v10425 = vpop.permute.xlu0 %10424
    %10426 = vrot.lane.b32.xlu0 %v10374, 66
    %v10427 = vpop.permute.xlu0 %10426
    %10428 = vrot.lane.b32.xlu0 %v10375, 66
    %v10429 = vpop.permute.xlu0 %10428
    %10430 = vrot.lane.b32.xlu0 %v10376, 66
    %v10431 = vpop.permute.xlu0 %10430
    %10432 = vrot.lane.b32.xlu0 %v10377, 66
    %v10433 = vpop.permute.xlu0 %10432
    %10434 = vrot.lane.b32.xlu0 %v10378, 66
    %v10435 = vpop.permute.xlu0 %10434
    %10436 = vrot.lane.b32.xlu0 %v10379, 66
    %v10437 = vpop.permute.xlu0 %10436
    %10438 = vrot.lane.b32.xlu0 %v10380, 66
    %v10439 = vpop.permute.xlu0 %10438
    %10440 = vrot.lane.b32.xlu0 %v10381, 66
    %v10441 = vpop.permute.xlu0 %10440
    %vm10442 = vcmask 539648
    %v10443 = vsel %vm10442, %v10403, %v10405
    %v10444 = vsel %vm10442, %v10405, %v10407
    %v10445 = vsel %vm10442, %v10407, %v10409
    %v10446 = vsel %vm10442, %v10409, %v10411
    %v10447 = vsel %vm10442, %v10413, %v10415
    %v10448 = vsel %vm10442, %v10415, %v10417
    %v10449 = vsel %vm10442, %v10417, %v10419
    %v10450 = vsel %vm10442, %v10419, %v10421
    %v10451 = vsel %vm10442, %v10423, %v10425
    %v10452 = vsel %vm10442, %v10425, %v10427
    %v10453 = vsel %vm10442, %v10427, %v10429
    %v10454 = vsel %vm10442, %v10429, %v10431
    %v10455 = vsel %vm10442, %v10433, %v10435
    %v10456 = vsel %vm10442, %v10435, %v10437
    %v10457 = vsel %vm10442, %v10437, %v10439
    %v10458 = vsel %vm10442, %v10439, %v10441
    %v10479 = vadd.f32 %v10317, %v10443
    %v10480 = vadd.f32 %v10318, %v10444
    %v10481 = vadd.f32 %v10319, %v10445
    %v10482 = vadd.f32 %v10320, %v10446
    %v10483 = vadd.f32 %v10321, %v10411
    %v10484 = vadd.f32 %v10322, %v10447
    %v10485 = vadd.f32 %v10323, %v10448
    %v10486 = vadd.f32 %v10324, %v10449
    %v10487 = vadd.f32 %v10325, %v10450
    %v10488 = vadd.f32 %v10326, %v10421
    %v10489 = vadd.f32 %v10327, %v10451
    %v10490 = vadd.f32 %v10328, %v10452
    %v10491 = vadd.f32 %v10329, %v10453
    %v10492 = vadd.f32 %v10330, %v10454
    %v10493 = vadd.f32 %v10331, %v10431
    %v10494 = vadd.f32 %v10332, %v10455
    %v10495 = vadd.f32 %v10333, %v10456
    %v10496 = vadd.f32 %v10334, %v10457
    %v10497 = vadd.f32 %v10335, %v10458
    %v10498 = vadd.f32 %v10336, %v10441
    %s10499 = scalar_lea.vmem %s2, 2016
    %v10500 = vld [vmem:[%s10499] sm:$0xff]
    %v10501 = vld [vmem:[%s10499 + $0x8] sm:$0xff]
    %v10502 = vld [vmem:[%s10499 + $0x10] sm:$0xff]
    %v10503 = vld [vmem:[%s10499 + $0x18] sm:$0xff]
    %10505 = vset.pattern.permute.xlu0 0
    %10506 = vperm.xlu0 %10505, %v10500
    %v10507 = vpop.permute.xlu0 %10506
    %10510 = vset.pattern.permute.xlu0 0
    %10511 = vperm.xlu0 %10510, %v10501
    %v10512 = vpop.permute.xlu0 %10511
    %10515 = vset.pattern.permute.xlu0 0
    %10516 = vperm.xlu0 %10515, %v10502
    %v10517 = vpop.permute.xlu0 %10516
    %10520 = vset.pattern.permute.xlu0 0
    %10521 = vperm.xlu0 %10520, %v10503
    %v10522 = vpop.permute.xlu0 %10521
    %v10524 = vmul.f32 %v10507, %v396
    %v10525 = vmul.f32 %v10507, %v397
    %v10526 = vmul.f32 %v10507, %v398
    %v10527 = vmul.f32 %v10507, %v399
    %v10528 = vmul.f32 %v10507, %v400
    %v10529 = vmul.f32 %v10512, %v401
    %v10530 = vmul.f32 %v10512, %v402
    %v10531 = vmul.f32 %v10512, %v403
    %v10532 = vmul.f32 %v10512, %v404
    %v10533 = vmul.f32 %v10512, %v405
    %v10534 = vmul.f32 %v10517, %v406
    %v10535 = vmul.f32 %v10517, %v407
    %v10536 = vmul.f32 %v10517, %v408
    %v10537 = vmul.f32 %v10517, %v409
    %v10538 = vmul.f32 %v10517, %v410
    %v10539 = vmul.f32 %v10522, %v411
    %v10540 = vmul.f32 %v10522, %v412
    %v10541 = vmul.f32 %v10522, %v413
    %v10542 = vmul.f32 %v10522, %v414
    %v10543 = vmul.f32 %v10522, %v415
    %10564 = vrot.lane.b32.xlu0 %v10524, 65
    %v10565 = vpop.permute.xlu0 %10564
    %10566 = vrot.lane.b32.xlu0 %v10525, 65
    %v10567 = vpop.permute.xlu0 %10566
    %10568 = vrot.lane.b32.xlu0 %v10526, 65
    %v10569 = vpop.permute.xlu0 %10568
    %10570 = vrot.lane.b32.xlu0 %v10527, 65
    %v10571 = vpop.permute.xlu0 %10570
    %10572 = vrot.lane.b32.xlu0 %v10528, 65
    %v10573 = vpop.permute.xlu0 %10572
    %10574 = vrot.lane.b32.xlu0 %v10529, 65
    %v10575 = vpop.permute.xlu0 %10574
    %10576 = vrot.lane.b32.xlu0 %v10530, 65
    %v10577 = vpop.permute.xlu0 %10576
    %10578 = vrot.lane.b32.xlu0 %v10531, 65
    %v10579 = vpop.permute.xlu0 %10578
    %10580 = vrot.lane.b32.xlu0 %v10532, 65
    %v10581 = vpop.permute.xlu0 %10580
    %10582 = vrot.lane.b32.xlu0 %v10533, 65
    %v10583 = vpop.permute.xlu0 %10582
    %10584 = vrot.lane.b32.xlu0 %v10534, 65
    %v10585 = vpop.permute.xlu0 %10584
    %10586 = vrot.lane.b32.xlu0 %v10535, 65
    %v10587 = vpop.permute.xlu0 %10586
    %10588 = vrot.lane.b32.xlu0 %v10536, 65
    %v10589 = vpop.permute.xlu0 %10588
    %10590 = vrot.lane.b32.xlu0 %v10537, 65
    %v10591 = vpop.permute.xlu0 %10590
    %10592 = vrot.lane.b32.xlu0 %v10538, 65
    %v10593 = vpop.permute.xlu0 %10592
    %10594 = vrot.lane.b32.xlu0 %v10539, 65
    %v10595 = vpop.permute.xlu0 %10594
    %10596 = vrot.lane.b32.xlu0 %v10540, 65
    %v10597 = vpop.permute.xlu0 %10596
    %10598 = vrot.lane.b32.xlu0 %v10541, 65
    %v10599 = vpop.permute.xlu0 %10598
    %10600 = vrot.lane.b32.xlu0 %v10542, 65
    %v10601 = vpop.permute.xlu0 %10600
    %10602 = vrot.lane.b32.xlu0 %v10543, 65
    %v10603 = vpop.permute.xlu0 %10602
    %vm10604 = vcmask 531456
    %v10605 = vsel %vm10604, %v10565, %v10567
    %v10606 = vsel %vm10604, %v10567, %v10569
    %v10607 = vsel %vm10604, %v10569, %v10571
    %v10608 = vsel %vm10604, %v10571, %v10573
    %v10609 = vsel %vm10604, %v10575, %v10577
    %v10610 = vsel %vm10604, %v10577, %v10579
    %v10611 = vsel %vm10604, %v10579, %v10581
    %v10612 = vsel %vm10604, %v10581, %v10583
    %v10613 = vsel %vm10604, %v10585, %v10587
    %v10614 = vsel %vm10604, %v10587, %v10589
    %v10615 = vsel %vm10604, %v10589, %v10591
    %v10616 = vsel %vm10604, %v10591, %v10593
    %v10617 = vsel %vm10604, %v10595, %v10597
    %v10618 = vsel %vm10604, %v10597, %v10599
    %v10619 = vsel %vm10604, %v10599, %v10601
    %v10620 = vsel %vm10604, %v10601, %v10603
    %v10641 = vadd.f32 %v10479, %v10605
    %v10642 = vadd.f32 %v10480, %v10606
    %v10643 = vadd.f32 %v10481, %v10607
    %v10644 = vadd.f32 %v10482, %v10608
    %v10645 = vadd.f32 %v10483, %v10573
    %v10646 = vadd.f32 %v10484, %v10609
    %v10647 = vadd.f32 %v10485, %v10610
    %v10648 = vadd.f32 %v10486, %v10611
    %v10649 = vadd.f32 %v10487, %v10612
    %v10650 = vadd.f32 %v10488, %v10583
    %v10651 = vadd.f32 %v10489, %v10613
    %v10652 = vadd.f32 %v10490, %v10614
    %v10653 = vadd.f32 %v10491, %v10615
    %v10654 = vadd.f32 %v10492, %v10616
    %v10655 = vadd.f32 %v10493, %v10593
    %v10656 = vadd.f32 %v10494, %v10617
    %v10657 = vadd.f32 %v10495, %v10618
    %v10658 = vadd.f32 %v10496, %v10619
    %v10659 = vadd.f32 %v10497, %v10620
    %v10660 = vadd.f32 %v10498, %v10603
    %v10661 = vld [vmem:[%s3] sm:$0xff]
    %v10662 = vld [vmem:[%s3 + $0x8] sm:$0xff]
    %v10663 = vld [vmem:[%s3 + $0x10] sm:$0xff]
    %v10664 = vld [vmem:[%s3 + $0x18] sm:$0xff]
    %10666 = vset.pattern.permute.xlu0 0
    %10667 = vperm.xlu0 %10666, %v10661
    %v10668 = vpop.permute.xlu0 %10667
    %10671 = vset.pattern.permute.xlu0 0
    %10672 = vperm.xlu0 %10671, %v10662
    %v10673 = vpop.permute.xlu0 %10672
    %10676 = vset.pattern.permute.xlu0 0
    %10677 = vperm.xlu0 %10676, %v10663
    %v10678 = vpop.permute.xlu0 %10677
    %10681 = vset.pattern.permute.xlu0 0
    %10682 = vperm.xlu0 %10681, %v10664
    %v10683 = vpop.permute.xlu0 %10682
    %v10685 = vadd.f32 %v10641, %v10668
    %v10686 = vadd.f32 %v10642, %v10668
    %v10687 = vadd.f32 %v10643, %v10668
    %v10688 = vadd.f32 %v10644, %v10668
    %v10689 = vadd.f32 %v10645, %v10668
    %v10690 = vadd.f32 %v10646, %v10673
    %v10691 = vadd.f32 %v10647, %v10673
    %v10692 = vadd.f32 %v10648, %v10673
    %v10693 = vadd.f32 %v10649, %v10673
    %v10694 = vadd.f32 %v10650, %v10673
    %v10695 = vadd.f32 %v10651, %v10678
    %v10696 = vadd.f32 %v10652, %v10678
    %v10697 = vadd.f32 %v10653, %v10678
    %v10698 = vadd.f32 %v10654, %v10678
    %v10699 = vadd.f32 %v10655, %v10678
    %v10700 = vadd.f32 %v10656, %v10683
    %v10701 = vadd.f32 %v10657, %v10683
    %v10702 = vadd.f32 %v10658, %v10683
    %v10703 = vadd.f32 %v10659, %v10683
    %v10704 = vadd.f32 %v10660, %v10683
    %vm10705 = vcmp.gt.f32.partialorder %v10685, 0.0
    %vm10706 = vcmp.gt.f32.partialorder %v10686, 0.0
    %vm10707 = vcmp.gt.f32.partialorder %v10687, 0.0
    %vm10708 = vcmp.gt.f32.partialorder %v10688, 0.0
    %vm10709 = vcmp.gt.f32.partialorder %v10689, 0.0
    %vm10710 = vcmp.gt.f32.partialorder %v10690, 0.0
    %vm10711 = vcmp.gt.f32.partialorder %v10691, 0.0
    %vm10712 = vcmp.gt.f32.partialorder %v10692, 0.0
    %vm10713 = vcmp.gt.f32.partialorder %v10693, 0.0
    %vm10714 = vcmp.gt.f32.partialorder %v10694, 0.0
    %vm10715 = vcmp.gt.f32.partialorder %v10695, 0.0
    %vm10716 = vcmp.gt.f32.partialorder %v10696, 0.0
    %vm10717 = vcmp.gt.f32.partialorder %v10697, 0.0
    %vm10718 = vcmp.gt.f32.partialorder %v10698, 0.0
    %vm10719 = vcmp.gt.f32.partialorder %v10699, 0.0
    %vm10720 = vcmp.gt.f32.partialorder %v10700, 0.0
    %vm10721 = vcmp.gt.f32.partialorder %v10701, 0.0
    %vm10722 = vcmp.gt.f32.partialorder %v10702, 0.0
    %vm10723 = vcmp.gt.f32.partialorder %v10703, 0.0
    %vm10724 = vcmp.gt.f32.partialorder %v10704, 0.0
    %v10725 = vmul.f32 %v10685, 1.442695
    %v10726 = vpow.pop %v10725
    %v10727 = vmul.f32 %v10686, 1.442695
    %v10728 = vpow.pop %v10727
    %v10729 = vmul.f32 %v10687, 1.442695
    %v10730 = vpow.pop %v10729
    %v10731 = vmul.f32 %v10688, 1.442695
    %v10732 = vpow.pop %v10731
    %v10733 = vmul.f32 %v10689, 1.442695
    %v10734 = vpow.pop %v10733
    %v10735 = vmul.f32 %v10690, 1.442695
    %v10736 = vpow.pop %v10735
    %v10737 = vmul.f32 %v10691, 1.442695
    %v10738 = vpow.pop %v10737
    %v10739 = vmul.f32 %v10692, 1.442695
    %v10740 = vpow.pop %v10739
    %v10741 = vmul.f32 %v10693, 1.442695
    %v10742 = vpow.pop %v10741
    %v10743 = vmul.f32 %v10694, 1.442695
    %v10744 = vpow.pop %v10743
    %v10745 = vmul.f32 %v10695, 1.442695
    %v10746 = vpow.pop %v10745
    %v10747 = vmul.f32 %v10696, 1.442695
    %v10748 = vpow.pop %v10747
    %v10749 = vmul.f32 %v10697, 1.442695
    %v10750 = vpow.pop %v10749
    %v10751 = vmul.f32 %v10698, 1.442695
    %v10752 = vpow.pop %v10751
    %v10753 = vmul.f32 %v10699, 1.442695
    %v10754 = vpow.pop %v10753
    %v10755 = vmul.f32 %v10700, 1.442695
    %v10756 = vpow.pop %v10755
    %v10757 = vmul.f32 %v10701, 1.442695
    %v10758 = vpow.pop %v10757
    %v10759 = vmul.f32 %v10702, 1.442695
    %v10760 = vpow.pop %v10759
    %v10761 = vmul.f32 %v10703, 1.442695
    %v10762 = vpow.pop %v10761
    %v10763 = vmul.f32 %v10704, 1.442695
    %v10764 = vpow.pop %v10763
    %v10765 = vsub.f32 %v10726, 1.0
    %v10766 = vsub.f32 %v10728, 1.0
    %v10767 = vsub.f32 %v10730, 1.0
    %v10768 = vsub.f32 %v10732, 1.0
    %v10769 = vsub.f32 %v10734, 1.0
    %v10770 = vsub.f32 %v10736, 1.0
    %v10771 = vsub.f32 %v10738, 1.0
    %v10772 = vsub.f32 %v10740, 1.0
    %v10773 = vsub.f32 %v10742, 1.0
    %v10774 = vsub.f32 %v10744, 1.0
    %v10775 = vsub.f32 %v10746, 1.0
    %v10776 = vsub.f32 %v10748, 1.0
    %v10777 = vsub.f32 %v10750, 1.0
    %v10778 = vsub.f32 %v10752, 1.0
    %v10779 = vsub.f32 %v10754, 1.0
    %v10780 = vsub.f32 %v10756, 1.0
    %v10781 = vsub.f32 %v10758, 1.0
    %v10782 = vsub.f32 %v10760, 1.0
    %v10783 = vsub.f32 %v10762, 1.0
    %v10784 = vsub.f32 %v10764, 1.0
    %v10785 = vsel %vm10705, %v10685, %v10765
    %v10786 = vsel %vm10706, %v10686, %v10766
    %v10787 = vsel %vm10707, %v10687, %v10767
    %v10788 = vsel %vm10708, %v10688, %v10768
    %v10789 = vsel %vm10709, %v10689, %v10769
    %v10790 = vsel %vm10710, %v10690, %v10770
    %v10791 = vsel %vm10711, %v10691, %v10771
    %v10792 = vsel %vm10712, %v10692, %v10772
    %v10793 = vsel %vm10713, %v10693, %v10773
    %v10794 = vsel %vm10714, %v10694, %v10774
    %v10795 = vsel %vm10715, %v10695, %v10775
    %v10796 = vsel %vm10716, %v10696, %v10776
    %v10797 = vsel %vm10717, %v10697, %v10777
    %v10798 = vsel %vm10718, %v10698, %v10778
    %v10799 = vsel %vm10719, %v10699, %v10779
    %v10800 = vsel %vm10720, %v10700, %v10780
    %v10801 = vsel %vm10721, %v10701, %v10781
    %v10802 = vsel %vm10722, %v10702, %v10782
    %v10803 = vsel %vm10723, %v10703, %v10783
    %v10804 = vsel %vm10724, %v10704, %v10784
    %v10805 = vld [vmem:[%s4] sm:$0xff]
    %v10806 = vld [vmem:[%s4 + $0x8] sm:$0xff]
    %v10807 = vld [vmem:[%s4 + $0x10] sm:$0xff]
    %v10808 = vld [vmem:[%s4 + $0x18] sm:$0xff]
    %v10809 = vld [vmem:[%s4 + $0x20] sm:$0xff]
    %v10810 = vld [vmem:[%s4 + $0x28] sm:$0xff]
    %v10811 = vld [vmem:[%s4 + $0x30] sm:$0xff]
    %v10812 = vld [vmem:[%s4 + $0x38] sm:$0xff]
    %v10813 = vld [vmem:[%s4 + $0x40] sm:$0xff]
    %v10814 = vld [vmem:[%s4 + $0x48] sm:$0xff]
    %v10815 = vld [vmem:[%s4 + $0x50] sm:$0xff]
    %v10816 = vld [vmem:[%s4 + $0x58] sm:$0xff]
    %v10817 = vld [vmem:[%s4 + $0x60] sm:$0xff]
    %v10818 = vld [vmem:[%s4 + $0x68] sm:$0xff]
    %v10819 = vld [vmem:[%s4 + $0x70] sm:$0xff]
    %v10820 = vld [vmem:[%s4 + $0x78] sm:$0xff]
    %v10821 = vld [vmem:[%s4 + $0x80] sm:$0xff]
    %v10822 = vld [vmem:[%s4 + $0x88] sm:$0xff]
    %v10823 = vld [vmem:[%s4 + $0x90] sm:$0xff]
    %v10824 = vld [vmem:[%s4 + $0x98] sm:$0xff]
    %v10825 = vld [vmem:[%s4 + $0xa0] sm:$0xff]
    %v10826 = vld [vmem:[%s4 + $0xa8] sm:$0xff]
    %v10827 = vld [vmem:[%s4 + $0xb0] sm:$0xff]
    %v10828 = vld [vmem:[%s4 + $0xb8] sm:$0xff]
    %v10829 = vld [vmem:[%s4 + $0xc0] sm:$0xff]
    %v10830 = vld [vmem:[%s4 + $0xc8] sm:$0xff]
    %v10831 = vld [vmem:[%s4 + $0xd0] sm:$0xff]
    %v10832 = vld [vmem:[%s4 + $0xd8] sm:$0xff]
    %v10833 = vld [vmem:[%s4 + $0xe0] sm:$0xff]
    %v10834 = vld [vmem:[%s4 + $0xe8] sm:$0xff]
    %v10835 = vld [vmem:[%s4 + $0xf0] sm:$0xff]
    %v10836 = vld [vmem:[%s4 + $0xf8] sm:$0xff]
    %v10837 = vld [vmem:[%s4 + $0x100] sm:$0xff]
    %v10838 = vld [vmem:[%s4 + $0x108] sm:$0xff]
    %v10839 = vld [vmem:[%s4 + $0x110] sm:$0xff]
    %v10840 = vld [vmem:[%s4 + $0x118] sm:$0xff]
    %v10841 = vld [vmem:[%s4 + $0x120] sm:$0xff]
    %v10842 = vld [vmem:[%s4 + $0x128] sm:$0xff]
    %v10843 = vld [vmem:[%s4 + $0x130] sm:$0xff]
    %v10844 = vld [vmem:[%s4 + $0x138] sm:$0xff]
    %v10845 = vld [vmem:[%s4 + $0x140] sm:$0xff]
    %v10846 = vld [vmem:[%s4 + $0x148] sm:$0xff]
    %v10847 = vld [vmem:[%s4 + $0x150] sm:$0xff]
    %v10848 = vld [vmem:[%s4 + $0x158] sm:$0xff]
    %v10849 = vld [vmem:[%s4 + $0x160] sm:$0xff]
    %v10850 = vld [vmem:[%s4 + $0x168] sm:$0xff]
    %v10851 = vld [vmem:[%s4 + $0x170] sm:$0xff]
    %v10852 = vld [vmem:[%s4 + $0x178] sm:$0xff]
    %v10853 = vld [vmem:[%s4 + $0x180] sm:$0xff]
    %v10854 = vld [vmem:[%s4 + $0x188] sm:$0xff]
    %v10855 = vld [vmem:[%s4 + $0x190] sm:$0xff]
    %v10856 = vld [vmem:[%s4 + $0x198] sm:$0xff]
    %v10857 = vld [vmem:[%s4 + $0x1a0] sm:$0xff]
    %v10858 = vld [vmem:[%s4 + $0x1a8] sm:$0xff]
    %v10859 = vld [vmem:[%s4 + $0x1b0] sm:$0xff]
    %v10860 = vld [vmem:[%s4 + $0x1b8] sm:$0xff]
    %v10861 = vld [vmem:[%s4 + $0x1c0] sm:$0xff]
    %v10862 = vld [vmem:[%s4 + $0x1c8] sm:$0xff]
    %v10863 = vld [vmem:[%s4 + $0x1d0] sm:$0xff]
    %v10864 = vld [vmem:[%s4 + $0x1d8] sm:$0xff]
    %v10865 = vld [vmem:[%s4 + $0x1e0] sm:$0xff]
    %v10866 = vld [vmem:[%s4 + $0x1e8] sm:$0xff]
    %v10867 = vld [vmem:[%s4 + $0x1f0] sm:$0xff]
    %v10868 = vld [vmem:[%s4 + $0x1f8] sm:$0xff]
    %v10869 = vld [vmem:[%s4 + $0x200] sm:$0xff]
    %v10870 = vld [vmem:[%s4 + $0x208] sm:$0xff]
    %v10871 = vld [vmem:[%s4 + $0x210] sm:$0xff]
    %v10872 = vld [vmem:[%s4 + $0x218] sm:$0xff]
    %v10873 = vld [vmem:[%s4 + $0x220] sm:$0xff]
    %v10874 = vld [vmem:[%s4 + $0x228] sm:$0xff]
    %v10875 = vld [vmem:[%s4 + $0x230] sm:$0xff]
    %v10876 = vld [vmem:[%s4 + $0x238] sm:$0xff]
    %v10877 = vld [vmem:[%s4 + $0x240] sm:$0xff]
    %v10878 = vld [vmem:[%s4 + $0x248] sm:$0xff]
    %v10879 = vld [vmem:[%s4 + $0x250] sm:$0xff]
    %v10880 = vld [vmem:[%s4 + $0x258] sm:$0xff]
    %v10881 = vld [vmem:[%s4 + $0x260] sm:$0xff]
    %v10882 = vld [vmem:[%s4 + $0x268] sm:$0xff]
    %v10883 = vld [vmem:[%s4 + $0x270] sm:$0xff]
    %v10884 = vld [vmem:[%s4 + $0x278] sm:$0xff]
    %v10885 = vld [vmem:[%s4 + $0x280] sm:$0xff]
    %v10886 = vld [vmem:[%s4 + $0x288] sm:$0xff]
    %v10887 = vld [vmem:[%s4 + $0x290] sm:$0xff]
    %v10888 = vld [vmem:[%s4 + $0x298] sm:$0xff]
    %v10889 = vld [vmem:[%s4 + $0x2a0] sm:$0xff]
    %v10890 = vld [vmem:[%s4 + $0x2a8] sm:$0xff]
    %v10891 = vld [vmem:[%s4 + $0x2b0] sm:$0xff]
    %v10892 = vld [vmem:[%s4 + $0x2b8] sm:$0xff]
    %v10893 = vld [vmem:[%s4 + $0x2c0] sm:$0xff]
    %v10894 = vld [vmem:[%s4 + $0x2c8] sm:$0xff]
    %v10895 = vld [vmem:[%s4 + $0x2d0] sm:$0xff]
    %v10896 = vld [vmem:[%s4 + $0x2d8] sm:$0xff]
    %v10897 = vld [vmem:[%s4 + $0x2e0] sm:$0xff]
    %v10898 = vld [vmem:[%s4 + $0x2e8] sm:$0xff]
    %v10899 = vld [vmem:[%s4 + $0x2f0] sm:$0xff]
    %v10900 = vld [vmem:[%s4 + $0x2f8] sm:$0xff]
    %v10901 = vld [vmem:[%s4 + $0x300] sm:$0xff]
    %v10902 = vld [vmem:[%s4 + $0x308] sm:$0xff]
    %v10903 = vld [vmem:[%s4 + $0x310] sm:$0xff]
    %v10904 = vld [vmem:[%s4 + $0x318] sm:$0xff]
    %v10905 = vld [vmem:[%s4 + $0x320] sm:$0xff]
    %v10906 = vld [vmem:[%s4 + $0x328] sm:$0xff]
    %v10907 = vld [vmem:[%s4 + $0x330] sm:$0xff]
    %v10908 = vld [vmem:[%s4 + $0x338] sm:$0xff]
    %v10909 = vld [vmem:[%s4 + $0x340] sm:$0xff]
    %v10910 = vld [vmem:[%s4 + $0x348] sm:$0xff]
    %v10911 = vld [vmem:[%s4 + $0x350] sm:$0xff]
    %v10912 = vld [vmem:[%s4 + $0x358] sm:$0xff]
    %v10913 = vld [vmem:[%s4 + $0x360] sm:$0xff]
    %v10914 = vld [vmem:[%s4 + $0x368] sm:$0xff]
    %v10915 = vld [vmem:[%s4 + $0x370] sm:$0xff]
    %v10916 = vld [vmem:[%s4 + $0x378] sm:$0xff]
    %v10917 = vld [vmem:[%s4 + $0x380] sm:$0xff]
    %v10918 = vld [vmem:[%s4 + $0x388] sm:$0xff]
    %v10919 = vld [vmem:[%s4 + $0x390] sm:$0xff]
    %v10920 = vld [vmem:[%s4 + $0x398] sm:$0xff]
    %v10921 = vld [vmem:[%s4 + $0x3a0] sm:$0xff]
    %v10922 = vld [vmem:[%s4 + $0x3a8] sm:$0xff]
    %v10923 = vld [vmem:[%s4 + $0x3b0] sm:$0xff]
    %v10924 = vld [vmem:[%s4 + $0x3b8] sm:$0xff]
    %v10925 = vld [vmem:[%s4 + $0x3c0] sm:$0xff]
    %v10926 = vld [vmem:[%s4 + $0x3c8] sm:$0xff]
    %v10927 = vld [vmem:[%s4 + $0x3d0] sm:$0xff]
    %v10928 = vld [vmem:[%s4 + $0x3d8] sm:$0xff]
    %v10929 = vld [vmem:[%s4 + $0x3e0] sm:$0xff]
    %v10930 = vld [vmem:[%s4 + $0x3e8] sm:$0xff]
    %v10931 = vld [vmem:[%s4 + $0x3f0] sm:$0xff]
    %v10932 = vld [vmem:[%s4 + $0x3f8] sm:$0xff]
    %v10933 = vld [vmem:[%s4 + $0x400] sm:$0xff]
    %v10934 = vld [vmem:[%s4 + $0x408] sm:$0xff]
    %v10935 = vld [vmem:[%s4 + $0x410] sm:$0xff]
    %v10936 = vld [vmem:[%s4 + $0x418] sm:$0xff]
    %v10937 = vld [vmem:[%s4 + $0x420] sm:$0xff]
    %v10938 = vld [vmem:[%s4 + $0x428] sm:$0xff]
    %v10939 = vld [vmem:[%s4 + $0x430] sm:$0xff]
    %v10940 = vld [vmem:[%s4 + $0x438] sm:$0xff]
    %vm10941 = vcmask 261120
    %v10943 = vsel %vm10941, %v10789, 0
    %v10946 = vsel %vm10941, %v10794, 0
    %v10949 = vsel %vm10941, %v10799, 0
    %v10952 = vsel %vm10941, %v10804, 0
    %10954 = vmatprep.subr.mxu0 %v10836
    %10955 = vmatpush1.msra.mxu0 %v10835
    %10956 = vmatprep.subr.mxu0 %v10834
    %10957 = vmatpush1.msra.mxu0 %v10833
    %10958 = vmatprep.subr.mxu0 %v10832
    %10959 = vmatpush1.msra.mxu0 %v10831
    %10960 = vmatprep.subr.mxu0 %v10830
    %10961 = vmatpush1.msra.mxu0 %v10829
    %10962 = vmatprep.subr.mxu0 %v10828
    %10963 = vmatpush1.msra.mxu0 %v10827
    %10964 = vmatprep.subr.mxu0 %v10826
    %10965 = vmatpush1.msra.mxu0 %v10825
    %10966 = vmatprep.subr.mxu0 %v10824
    %10967 = vmatpush1.msra.mxu0 %v10823
    %10968 = vmatprep.subr.mxu0 %v10822
    %10969 = vmatpush1.msra.mxu0 %v10821
    %10970 = vmatprep.subr.mxu0 %v10820
    %10971 = vmatpush1.msra.mxu0 %v10819
    %10972 = vmatprep.subr.mxu0 %v10818
    %10973 = vmatpush1.msra.mxu0 %v10817
    %10974 = vmatprep.subr.mxu0 %v10816
    %10975 = vmatpush1.msra.mxu0 %v10815
    %10976 = vmatprep.subr.mxu0 %v10814
    %10977 = vmatpush1.msra.mxu0 %v10813
    %10978 = vmatprep.subr.mxu0 %v10812
    %10979 = vmatpush1.msra.mxu0 %v10811
    %10980 = vmatprep.subr.mxu0 %v10810
    %10981 = vmatpush1.msra.mxu0 %v10809
    %10982 = vmatprep.subr.mxu0 %v10808
    %10983 = vmatpush1.msra.mxu0 %v10807
    %10984 = vmatprep.subr.mxu0 %v10806
    %10985 = vmatpush1.msra.mxu0 %v10805
    %10986 = vmatprep.subr.mxu0 %v10868
    %10987 = vmatpush2.msra.mxu0 %v10867
    %10988 = vmatprep.subr.mxu0 %v10866
    %10989 = vmatpush2.msra.mxu0 %v10865
    %10990 = vmatprep.subr.mxu0 %v10864
    %10991 = vmatpush2.msra.mxu0 %v10863
    %10992 = vmatprep.subr.mxu0 %v10862
    %10993 = vmatpush2.msra.mxu0 %v10861
    %10994 = vmatprep.subr.mxu0 %v10860
    %10995 = vmatpush2.msra.mxu0 %v10859
    %10996 = vmatprep.subr.mxu0 %v10858
    %10997 = vmatpush2.msra.mxu0 %v10857
    %10998 = vmatprep.subr.mxu0 %v10856
    %10999 = vmatpush2.msra.mxu0 %v10855
    %11000 = vmatprep.subr.mxu0 %v10854
    %11001 = vmatpush2.msra.mxu0 %v10853
    %11002 = vmatprep.subr.mxu0 %v10852
    %11003 = vmatpush2.msra.mxu0 %v10851
    %11004 = vmatprep.subr.mxu0 %v10850
    %11005 = vmatpush2.msra.mxu0 %v10849
    %11006 = vmatprep.subr.mxu0 %v10848
    %11007 = vmatpush2.msra.mxu0 %v10847
    %11008 = vmatprep.subr.mxu0 %v10846
    %11009 = vmatpush2.msra.mxu0 %v10845
    %11010 = vmatprep.subr.mxu0 %v10844
    %11011 = vmatpush2.msra.mxu0 %v10843
    %11012 = vmatprep.subr.mxu0 %v10842
    %11013 = vmatpush2.msra.mxu0 %v10841
    %11014 = vmatprep.subr.mxu0 %v10840
    %11015 = vmatpush2.msra.mxu0 %v10839
    %11016 = vmatprep.subr.mxu0 %v10838
    %11017 = vmatpush2.msra.mxu0 %v10837
    %11018 = vmatprep.mubr.f32.mxu0 %v10786
    %11019 = vmatmul.mubr.f32.gmra.mxu0 %v10785
    %v11020 = vpop.f32.mrf.mxu0
    %v11021 = vadd.f32 0.0, %v11020
    %v11022 = vpop.f32.mrf.mxu0
    %v11023 = vadd.f32 0.0, %v11022
    %11024 = vmatprep.mubr.f32.mxu0 %v10791
    %11025 = vmatmul.mubr.f32.gmra.mxu0 %v10790
    %v11026 = vpop.f32.mrf.mxu0
    %v11027 = vadd.f32 0.0, %v11026
    %v11028 = vpop.f32.mrf.mxu0
    %v11029 = vadd.f32 0.0, %v11028
    %11030 = vmatprep.mubr.f32.mxu0 %v10796
    %11031 = vmatmul.mubr.f32.gmra.mxu0 %v10795
    %v11032 = vpop.f32.mrf.mxu0
    %v11033 = vadd.f32 0.0, %v11032
    %v11034 = vpop.f32.mrf.mxu0
    %v11035 = vadd.f32 0.0, %v11034
    %11036 = vmatprep.mubr.f32.mxu0 %v10801
    %11037 = vmatmul.mubr.f32.gmra.mxu0 %v10800
    %v11038 = vpop.f32.mrf.mxu0
    %v11039 = vadd.f32 0.0, %v11038
    %v11040 = vpop.f32.mrf.mxu0
    %v11041 = vadd.f32 0.0, %v11040
    %11042 = vdwg.mxu0
    %11043 = vmatprep.subr.mxu0 %v10900
    %11044 = vmatpush1.msra.mxu0 %v10899
    %11045 = vmatprep.subr.mxu0 %v10898
    %11046 = vmatpush1.msra.mxu0 %v10897
    %11047 = vmatprep.subr.mxu0 %v10896
    %11048 = vmatpush1.msra.mxu0 %v10895
    %11049 = vmatprep.subr.mxu0 %v10894
    %11050 = vmatpush1.msra.mxu0 %v10893
    %11051 = vmatprep.subr.mxu0 %v10892
    %11052 = vmatpush1.msra.mxu0 %v10891
    %11053 = vmatprep.subr.mxu0 %v10890
    %11054 = vmatpush1.msra.mxu0 %v10889
    %11055 = vmatprep.subr.mxu0 %v10888
    %11056 = vmatpush1.msra.mxu0 %v10887
    %11057 = vmatprep.subr.mxu0 %v10886
    %11058 = vmatpush1.msra.mxu0 %v10885
    %11059 = vmatprep.subr.mxu0 %v10884
    %11060 = vmatpush1.msra.mxu0 %v10883
    %11061 = vmatprep.subr.mxu0 %v10882
    %11062 = vmatpush1.msra.mxu0 %v10881
    %11063 = vmatprep.subr.mxu0 %v10880
    %11064 = vmatpush1.msra.mxu0 %v10879
    %11065 = vmatprep.subr.mxu0 %v10878
    %11066 = vmatpush1.msra.mxu0 %v10877
    %11067 = vmatprep.subr.mxu0 %v10876
    %11068 = vmatpush1.msra.mxu0 %v10875
    %11069 = vmatprep.subr.mxu0 %v10874
    %11070 = vmatpush1.msra.mxu0 %v10873
    %11071 = vmatprep.subr.mxu0 %v10872
    %11072 = vmatpush1.msra.mxu0 %v10871
    %11073 = vmatprep.subr.mxu0 %v10870
    %11074 = vmatpush1.msra.mxu0 %v10869
    %11075 = vmatprep.subr.mxu0 %v10932
    %11076 = vmatpush2.msra.mxu0 %v10931
    %11077 = vmatprep.subr.mxu0 %v10930
    %11078 = vmatpush2.msra.mxu0 %v10929
    %11079 = vmatprep.subr.mxu0 %v10928
    %11080 = vmatpush2.msra.mxu0 %v10927
    %11081 = vmatprep.subr.mxu0 %v10926
    %11082 = vmatpush2.msra.mxu0 %v10925
    %11083 = vmatprep.subr.mxu0 %v10924
    %11084 = vmatpush2.msra.mxu0 %v10923
    %11085 = vmatprep.subr.mxu0 %v10922
    %11086 = vmatpush2.msra.mxu0 %v10921
    %11087 = vmatprep.subr.mxu0 %v10920
    %11088 = vmatpush2.msra.mxu0 %v10919
    %11089 = vmatprep.subr.mxu0 %v10918
    %11090 = vmatpush2.msra.mxu0 %v10917
    %11091 = vmatprep.subr.mxu0 %v10916
    %11092 = vmatpush2.msra.mxu0 %v10915
    %11093 = vmatprep.subr.mxu0 %v10914
    %11094 = vmatpush2.msra.mxu0 %v10913
    %11095 = vmatprep.subr.mxu0 %v10912
    %11096 = vmatpush2.msra.mxu0 %v10911
    %11097 = vmatprep.subr.mxu0 %v10910
    %11098 = vmatpush2.msra.mxu0 %v10909
    %11099 = vmatprep.subr.mxu0 %v10908
    %11100 = vmatpush2.msra.mxu0 %v10907
    %11101 = vmatprep.subr.mxu0 %v10906
    %11102 = vmatpush2.msra.mxu0 %v10905
    %11103 = vmatprep.subr.mxu0 %v10904
    %11104 = vmatpush2.msra.mxu0 %v10903
    %11105 = vmatprep.subr.mxu0 %v10902
    %11106 = vmatpush2.msra.mxu0 %v10901
    %11107 = vmatprep.mubr.f32.mxu0 %v10788
    %11108 = vmatmul.mubr.f32.gmra.mxu0 %v10787
    %v11109 = vpop.f32.mrf.mxu0
    %v11110 = vadd.f32 %v11021, %v11109
    %v11111 = vpop.f32.mrf.mxu0
    %v11112 = vadd.f32 %v11023, %v11111
    %11113 = vmatprep.mubr.f32.mxu0 %v10793
    %11114 = vmatmul.mubr.f32.gmra.mxu0 %v10792
    %v11115 = vpop.f32.mrf.mxu0
    %v11116 = vadd.f32 %v11027, %v11115
    %v11117 = vpop.f32.mrf.mxu0
    %v11118 = vadd.f32 %v11029, %v11117
    %11119 = vmatprep.mubr.f32.mxu0 %v10798
    %11120 = vmatmul.mubr.f32.gmra.mxu0 %v10797
    %v11121 = vpop.f32.mrf.mxu0
    %v11122 = vadd.f32 %v11033, %v11121
    %v11123 = vpop.f32.mrf.mxu0
    %v11124 = vadd.f32 %v11035, %v11123
    %11125 = vmatprep.mubr.f32.mxu0 %v10803
    %11126 = vmatmul.mubr.f32.gmra.mxu0 %v10802
    %v11127 = vpop.f32.mrf.mxu0
    %v11128 = vadd.f32 %v11039, %v11127
    %v11129 = vpop.f32.mrf.mxu0
    %v11130 = vadd.f32 %v11041, %v11129
    %11131 = vdwg.mxu0
    %11132 = vmatprep.subr.mxu0 0.0
    %11133 = vmatpush1.msra.mxu0 0.0
    %11134 = vmatprep.subr.mxu0 0.0
    %11135 = vmatpush1.msra.mxu0 0.0
    %11136 = vmatprep.subr.mxu0 0.0
    %11137 = vmatpush1.msra.mxu0 0.0
    %11138 = vmatprep.subr.mxu0 0.0
    %11139 = vmatpush1.msra.mxu0 0.0
    %11140 = vmatprep.subr.mxu0 0.0
    %11141 = vmatpush1.msra.mxu0 0.0
    %11142 = vmatprep.subr.mxu0 0.0
    %11143 = vmatpush1.msra.mxu0 0.0
    %11144 = vmatprep.subr.mxu0 0.0
    %11145 = vmatpush1.msra.mxu0 0.0
    %11146 = vmatprep.subr.mxu0 0.0
    %11147 = vmatpush1.msra.mxu0 0.0
    %11148 = vmatprep.subr.mxu0 0.0
    %11149 = vmatpush1.msra.mxu0 0.0
    %11150 = vmatprep.subr.mxu0 0.0
    %11151 = vmatpush1.msra.mxu0 0.0
    %11152 = vmatprep.subr.mxu0 0.0
    %11153 = vmatpush1.msra.mxu0 0.0
    %11154 = vmatprep.subr.mxu0 0.0
    %11155 = vmatpush1.msra.mxu0 0.0
    %11156 = vmatprep.subr.mxu0 %v10940
    %11157 = vmatpush1.msra.mxu0 %v10939
    %11158 = vmatprep.subr.mxu0 %v10938
    %11159 = vmatpush1.msra.mxu0 %v10937
    %11160 = vmatprep.subr.mxu0 %v10936
    %11161 = vmatpush1.msra.mxu0 %v10935
    %11162 = vmatprep.subr.mxu0 %v10934
    %11163 = vmatpush1.msra.mxu0 %v10933
    %11164 = vmatprep.subr.mxu0 0.0
    %11165 = vmatpush2.msra.mxu0 0.0
    %11166 = vmatprep.subr.mxu0 0.0
    %11167 = vmatpush2.msra.mxu0 0.0
    %11168 = vmatprep.subr.mxu0 0.0
    %11169 = vmatpush2.msra.mxu0 0.0
    %11170 = vmatprep.subr.mxu0 0.0
    %11171 = vmatpush2.msra.mxu0 0.0
    %11172 = vmatprep.subr.mxu0 0.0
    %11173 = vmatpush2.msra.mxu0 0.0
    %11174 = vmatprep.subr.mxu0 0.0
    %11175 = vmatpush2.msra.mxu0 0.0
    %11176 = vmatprep.subr.mxu0 0.0
    %11177 = vmatpush2.msra.mxu0 0.0
    %11178 = vmatprep.subr.mxu0 0.0
    %11179 = vmatpush2.msra.mxu0 0.0
    %11180 = vmatprep.subr.mxu0 0.0
    %11181 = vmatpush2.msra.mxu0 0.0
    %11182 = vmatprep.subr.mxu0 0.0
    %11183 = vmatpush2.msra.mxu0 0.0
    %11184 = vmatprep.subr.mxu0 0.0
    %11185 = vmatpush2.msra.mxu0 0.0
    %11186 = vmatprep.subr.mxu0 0.0
    %11187 = vmatpush2.msra.mxu0 0.0
    %11188 = vmatprep.subr.mxu0 0.0
    %11189 = vmatpush2.msra.mxu0 0.0
    %11190 = vmatprep.subr.mxu0 0.0
    %11191 = vmatpush2.msra.mxu0 0.0
    %11192 = vmatprep.subr.mxu0 0.0
    %11193 = vmatpush2.msra.mxu0 0.0
    %11194 = vmatprep.subr.mxu0 0.0
    %11195 = vmatpush2.msra.mxu0 0.0
    %11196 = vmatprep.mubr.f32.mxu0 0.0
    %11197 = vmatmul.mubr.f32.gmra.mxu0 %v10943
    %v11198 = vpop.f32.mrf.mxu0
    %v11199 = vadd.f32 %v11110, %v11198
    %v11200 = vpop.f32.mrf.mxu0
    %v11201 = vadd.f32 %v11112, %v11200
    %11202 = vmatprep.mubr.f32.mxu0 0.0
    %11203 = vmatmul.mubr.f32.gmra.mxu0 %v10946
    %v11204 = vpop.f32.mrf.mxu0
    %v11205 = vadd.f32 %v11116, %v11204
    %v11206 = vpop.f32.mrf.mxu0
    %v11207 = vadd.f32 %v11118, %v11206
    %11208 = vmatprep.mubr.f32.mxu0 0.0
    %11209 = vmatmul.mubr.f32.gmra.mxu0 %v10949
    %v11210 = vpop.f32.mrf.mxu0
    %v11211 = vadd.f32 %v11122, %v11210
    %v11212 = vpop.f32.mrf.mxu0
    %v11213 = vadd.f32 %v11124, %v11212
    %11214 = vmatprep.mubr.f32.mxu0 0.0
    %11215 = vmatmul.mubr.f32.gmra.mxu0 %v10952
    %v11216 = vpop.f32.mrf.mxu0
    %v11217 = vadd.f32 %v11128, %v11216
    %v11218 = vpop.f32.mrf.mxu0
    %v11219 = vadd.f32 %v11130, %v11218
    %11220 = vdwg.mxu0
    %v11221 = vld [vmem:[%s5] sm:$0xff]
    %v11222 = vld [vmem:[%s5 + $0x8] sm:$0xff]
    %v11223 = vld [vmem:[%s5 + $0x10] sm:$0xff]
    %v11224 = vld [vmem:[%s5 + $0x18] sm:$0xff]
    %11226 = vset.pattern.permute.xlu0 0
    %11227 = vperm.xlu0 %11226, %v11221
    %v11228 = vpop.permute.xlu0 %11227
    %11231 = vset.pattern.permute.xlu0 0
    %11232 = vperm.xlu0 %11231, %v11222
    %v11233 = vpop.permute.xlu0 %11232
    %11236 = vset.pattern.permute.xlu0 0
    %11237 = vperm.xlu0 %11236, %v11223
    %v11238 = vpop.permute.xlu0 %11237
    %11241 = vset.pattern.permute.xlu0 0
    %11242 = vperm.xlu0 %11241, %v11224
    %v11243 = vpop.permute.xlu0 %11242
    %v11245 = vmul.f32 %v11228, %v11199
    %v11246 = vmul.f32 %v11228, %v11201
    %v11247 = vmul.f32 %v11233, %v11205
    %v11248 = vmul.f32 %v11233, %v11207
    %v11249 = vmul.f32 %v11238, %v11211
    %v11250 = vmul.f32 %v11238, %v11213
    %v11251 = vmul.f32 %v11243, %v11217
    %v11252 = vmul.f32 %v11243, %v11219
    %s11253 = scalar_lea.vmem %s5, 32
    %v11254 = vld [vmem:[%s11253] sm:$0xff]
    %v11255 = vld [vmem:[%s11253 + $0x8] sm:$0xff]
    %v11256 = vld [vmem:[%s11253 + $0x10] sm:$0xff]
    %v11257 = vld [vmem:[%s11253 + $0x18] sm:$0xff]
    %11259 = vset.pattern.permute.xlu0 0
    %11260 = vperm.xlu0 %11259, %v11254
    %v11261 = vpop.permute.xlu0 %11260
    %11264 = vset.pattern.permute.xlu0 0
    %11265 = vperm.xlu0 %11264, %v11255
    %v11266 = vpop.permute.xlu0 %11265
    %11269 = vset.pattern.permute.xlu0 0
    %11270 = vperm.xlu0 %11269, %v11256
    %v11271 = vpop.permute.xlu0 %11270
    %11274 = vset.pattern.permute.xlu0 0
    %11275 = vperm.xlu0 %11274, %v11257
    %v11276 = vpop.permute.xlu0 %11275
    %v11278 = vmul.f32 %v11261, %v11199
    %v11279 = vmul.f32 %v11261, %v11201
    %v11280 = vmul.f32 %v11266, %v11205
    %v11281 = vmul.f32 %v11266, %v11207
    %v11282 = vmul.f32 %v11271, %v11211
    %v11283 = vmul.f32 %v11271, %v11213
    %v11284 = vmul.f32 %v11276, %v11217
    %v11285 = vmul.f32 %v11276, %v11219
    %11294 = vrot.lane.b32.xlu0 %v11278, 127
    %v11295 = vpop.permute.xlu0 %11294
    %11296 = vrot.lane.b32.xlu0 %v11279, 127
    %v11297 = vpop.permute.xlu0 %11296
    %11298 = vrot.lane.b32.xlu0 %v11280, 127
    %v11299 = vpop.permute.xlu0 %11298
    %11300 = vrot.lane.b32.xlu0 %v11281, 127
    %v11301 = vpop.permute.xlu0 %11300
    %11302 = vrot.lane.b32.xlu0 %v11282, 127
    %v11303 = vpop.permute.xlu0 %11302
    %11304 = vrot.lane.b32.xlu0 %v11283, 127
    %v11305 = vpop.permute.xlu0 %11304
    %11306 = vrot.lane.b32.xlu0 %v11284, 127
    %v11307 = vpop.permute.xlu0 %11306
    %11308 = vrot.lane.b32.xlu0 %v11285, 127
    %v11309 = vpop.permute.xlu0 %11308
    %v11310 = vsel %vm561, %v11295, %v11297
    %v11311 = vsel %vm561, %v11299, %v11301
    %v11312 = vsel %vm561, %v11303, %v11305
    %v11313 = vsel %vm561, %v11307, %v11309
    %v11322 = vadd.f32 %v11245, %v11310
    %v11323 = vadd.f32 %v11246, %v11297
    %v11324 = vadd.f32 %v11247, %v11311
    %v11325 = vadd.f32 %v11248, %v11301
    %v11326 = vadd.f32 %v11249, %v11312
    %v11327 = vadd.f32 %v11250, %v11305
    %v11328 = vadd.f32 %v11251, %v11313
    %v11329 = vadd.f32 %v11252, %v11309
    %s11330 = scalar_lea.vmem %s5, 64
    %v11331 = vld [vmem:[%s11330] sm:$0xff]
    %v11332 = vld [vmem:[%s11330 + $0x8] sm:$0xff]
    %v11333 = vld [vmem:[%s11330 + $0x10] sm:$0xff]
    %v11334 = vld [vmem:[%s11330 + $0x18] sm:$0xff]
    %11336 = vset.pattern.permute.xlu0 0
    %11337 = vperm.xlu0 %11336, %v11331
    %v11338 = vpop.permute.xlu0 %11337
    %11341 = vset.pattern.permute.xlu0 0
    %11342 = vperm.xlu0 %11341, %v11332
    %v11343 = vpop.permute.xlu0 %11342
    %11346 = vset.pattern.permute.xlu0 0
    %11347 = vperm.xlu0 %11346, %v11333
    %v11348 = vpop.permute.xlu0 %11347
    %11351 = vset.pattern.permute.xlu0 0
    %11352 = vperm.xlu0 %11351, %v11334
    %v11353 = vpop.permute.xlu0 %11352
    %v11355 = vmul.f32 %v11338, %v11199
    %v11356 = vmul.f32 %v11338, %v11201
    %v11357 = vmul.f32 %v11343, %v11205
    %v11358 = vmul.f32 %v11343, %v11207
    %v11359 = vmul.f32 %v11348, %v11211
    %v11360 = vmul.f32 %v11348, %v11213
    %v11361 = vmul.f32 %v11353, %v11217
    %v11362 = vmul.f32 %v11353, %v11219
    %11371 = vrot.lane.b32.xlu0 %v11355, 126
    %v11372 = vpop.permute.xlu0 %11371
    %11373 = vrot.lane.b32.xlu0 %v11356, 126
    %v11374 = vpop.permute.xlu0 %11373
    %11375 = vrot.lane.b32.xlu0 %v11357, 126
    %v11376 = vpop.permute.xlu0 %11375
    %11377 = vrot.lane.b32.xlu0 %v11358, 126
    %v11378 = vpop.permute.xlu0 %11377
    %11379 = vrot.lane.b32.xlu0 %v11359, 126
    %v11380 = vpop.permute.xlu0 %11379
    %11381 = vrot.lane.b32.xlu0 %v11360, 126
    %v11382 = vpop.permute.xlu0 %11381
    %11383 = vrot.lane.b32.xlu0 %v11361, 126
    %v11384 = vpop.permute.xlu0 %11383
    %11385 = vrot.lane.b32.xlu0 %v11362, 126
    %v11386 = vpop.permute.xlu0 %11385
    %v11387 = vsel %vm723, %v11372, %v11374
    %v11388 = vsel %vm723, %v11376, %v11378
    %v11389 = vsel %vm723, %v11380, %v11382
    %v11390 = vsel %vm723, %v11384, %v11386
    %v11399 = vadd.f32 %v11322, %v11387
    %v11400 = vadd.f32 %v11323, %v11374
    %v11401 = vadd.f32 %v11324, %v11388
    %v11402 = vadd.f32 %v11325, %v11378
    %v11403 = vadd.f32 %v11326, %v11389
    %v11404 = vadd.f32 %v11327, %v11382
    %v11405 = vadd.f32 %v11328, %v11390
    %v11406 = vadd.f32 %v11329, %v11386
    %s11407 = scalar_lea.vmem %s5, 96
    %v11408 = vld [vmem:[%s11407] sm:$0xff]
    %v11409 = vld [vmem:[%s11407 + $0x8] sm:$0xff]
    %v11410 = vld [vmem:[%s11407 + $0x10] sm:$0xff]
    %v11411 = vld [vmem:[%s11407 + $0x18] sm:$0xff]
    %11413 = vset.pattern.permute.xlu0 0
    %11414 = vperm.xlu0 %11413, %v11408
    %v11415 = vpop.permute.xlu0 %11414
    %11418 = vset.pattern.permute.xlu0 0
    %11419 = vperm.xlu0 %11418, %v11409
    %v11420 = vpop.permute.xlu0 %11419
    %11423 = vset.pattern.permute.xlu0 0
    %11424 = vperm.xlu0 %11423, %v11410
    %v11425 = vpop.permute.xlu0 %11424
    %11428 = vset.pattern.permute.xlu0 0
    %11429 = vperm.xlu0 %11428, %v11411
    %v11430 = vpop.permute.xlu0 %11429
    %v11432 = vmul.f32 %v11415, %v11199
    %v11433 = vmul.f32 %v11415, %v11201
    %v11434 = vmul.f32 %v11420, %v11205
    %v11435 = vmul.f32 %v11420, %v11207
    %v11436 = vmul.f32 %v11425, %v11211
    %v11437 = vmul.f32 %v11425, %v11213
    %v11438 = vmul.f32 %v11430, %v11217
    %v11439 = vmul.f32 %v11430, %v11219
    %11448 = vrot.lane.b32.xlu0 %v11432, 125
    %v11449 = vpop.permute.xlu0 %11448
    %11450 = vrot.lane.b32.xlu0 %v11433, 125
    %v11451 = vpop.permute.xlu0 %11450
    %11452 = vrot.lane.b32.xlu0 %v11434, 125
    %v11453 = vpop.permute.xlu0 %11452
    %11454 = vrot.lane.b32.xlu0 %v11435, 125
    %v11455 = vpop.permute.xlu0 %11454
    %11456 = vrot.lane.b32.xlu0 %v11436, 125
    %v11457 = vpop.permute.xlu0 %11456
    %11458 = vrot.lane.b32.xlu0 %v11437, 125
    %v11459 = vpop.permute.xlu0 %11458
    %11460 = vrot.lane.b32.xlu0 %v11438, 125
    %v11461 = vpop.permute.xlu0 %11460
    %11462 = vrot.lane.b32.xlu0 %v11439, 125
    %v11463 = vpop.permute.xlu0 %11462
    %v11464 = vsel %vm885, %v11449, %v11451
    %v11465 = vsel %vm885, %v11453, %v11455
    %v11466 = vsel %vm885, %v11457, %v11459
    %v11467 = vsel %vm885, %v11461, %v11463
    %v11476 = vadd.f32 %v11399, %v11464
    %v11477 = vadd.f32 %v11400, %v11451
    %v11478 = vadd.f32 %v11401, %v11465
    %v11479 = vadd.f32 %v11402, %v11455
    %v11480 = vadd.f32 %v11403, %v11466
    %v11481 = vadd.f32 %v11404, %v11459
    %v11482 = vadd.f32 %v11405, %v11467
    %v11483 = vadd.f32 %v11406, %v11463
    %s11484 = scalar_lea.vmem %s5, 128
    %v11485 = vld [vmem:[%s11484] sm:$0xff]
    %v11486 = vld [vmem:[%s11484 + $0x8] sm:$0xff]
    %v11487 = vld [vmem:[%s11484 + $0x10] sm:$0xff]
    %v11488 = vld [vmem:[%s11484 + $0x18] sm:$0xff]
    %11490 = vset.pattern.permute.xlu0 0
    %11491 = vperm.xlu0 %11490, %v11485
    %v11492 = vpop.permute.xlu0 %11491
    %11495 = vset.pattern.permute.xlu0 0
    %11496 = vperm.xlu0 %11495, %v11486
    %v11497 = vpop.permute.xlu0 %11496
    %11500 = vset.pattern.permute.xlu0 0
    %11501 = vperm.xlu0 %11500, %v11487
    %v11502 = vpop.permute.xlu0 %11501
    %11505 = vset.pattern.permute.xlu0 0
    %11506 = vperm.xlu0 %11505, %v11488
    %v11507 = vpop.permute.xlu0 %11506
    %v11509 = vmul.f32 %v11492, %v11199
    %v11510 = vmul.f32 %v11492, %v11201
    %v11511 = vmul.f32 %v11497, %v11205
    %v11512 = vmul.f32 %v11497, %v11207
    %v11513 = vmul.f32 %v11502, %v11211
    %v11514 = vmul.f32 %v11502, %v11213
    %v11515 = vmul.f32 %v11507, %v11217
    %v11516 = vmul.f32 %v11507, %v11219
    %11525 = vrot.lane.b32.xlu0 %v11509, 124
    %v11526 = vpop.permute.xlu0 %11525
    %11527 = vrot.lane.b32.xlu0 %v11510, 124
    %v11528 = vpop.permute.xlu0 %11527
    %11529 = vrot.lane.b32.xlu0 %v11511, 124
    %v11530 = vpop.permute.xlu0 %11529
    %11531 = vrot.lane.b32.xlu0 %v11512, 124
    %v11532 = vpop.permute.xlu0 %11531
    %11533 = vrot.lane.b32.xlu0 %v11513, 124
    %v11534 = vpop.permute.xlu0 %11533
    %11535 = vrot.lane.b32.xlu0 %v11514, 124
    %v11536 = vpop.permute.xlu0 %11535
    %11537 = vrot.lane.b32.xlu0 %v11515, 124
    %v11538 = vpop.permute.xlu0 %11537
    %11539 = vrot.lane.b32.xlu0 %v11516, 124
    %v11540 = vpop.permute.xlu0 %11539
    %v11541 = vsel %vm1047, %v11526, %v11528
    %v11542 = vsel %vm1047, %v11530, %v11532
    %v11543 = vsel %vm1047, %v11534, %v11536
    %v11544 = vsel %vm1047, %v11538, %v11540
    %v11553 = vadd.f32 %v11476, %v11541
    %v11554 = vadd.f32 %v11477, %v11528
    %v11555 = vadd.f32 %v11478, %v11542
    %v11556 = vadd.f32 %v11479, %v11532
    %v11557 = vadd.f32 %v11480, %v11543
    %v11558 = vadd.f32 %v11481, %v11536
    %v11559 = vadd.f32 %v11482, %v11544
    %v11560 = vadd.f32 %v11483, %v11540
    %s11561 = scalar_lea.vmem %s5, 160
    %v11562 = vld [vmem:[%s11561] sm:$0xff]
    %v11563 = vld [vmem:[%s11561 + $0x8] sm:$0xff]
    %v11564 = vld [vmem:[%s11561 + $0x10] sm:$0xff]
    %v11565 = vld [vmem:[%s11561 + $0x18] sm:$0xff]
    %11567 = vset.pattern.permute.xlu0 0
    %11568 = vperm.xlu0 %11567, %v11562
    %v11569 = vpop.permute.xlu0 %11568
    %11572 = vset.pattern.permute.xlu0 0
    %11573 = vperm.xlu0 %11572, %v11563
    %v11574 = vpop.permute.xlu0 %11573
    %11577 = vset.pattern.permute.xlu0 0
    %11578 = vperm.xlu0 %11577, %v11564
    %v11579 = vpop.permute.xlu0 %11578
    %11582 = vset.pattern.permute.xlu0 0
    %11583 = vperm.xlu0 %11582, %v11565
    %v11584 = vpop.permute.xlu0 %11583
    %v11586 = vmul.f32 %v11569, %v11199
    %v11587 = vmul.f32 %v11569, %v11201
    %v11588 = vmul.f32 %v11574, %v11205
    %v11589 = vmul.f32 %v11574, %v11207
    %v11590 = vmul.f32 %v11579, %v11211
    %v11591 = vmul.f32 %v11579, %v11213
    %v11592 = vmul.f32 %v11584, %v11217
    %v11593 = vmul.f32 %v11584, %v11219
    %11602 = vrot.lane.b32.xlu0 %v11586, 123
    %v11603 = vpop.permute.xlu0 %11602
    %11604 = vrot.lane.b32.xlu0 %v11587, 123
    %v11605 = vpop.permute.xlu0 %11604
    %11606 = vrot.lane.b32.xlu0 %v11588, 123
    %v11607 = vpop.permute.xlu0 %11606
    %11608 = vrot.lane.b32.xlu0 %v11589, 123
    %v11609 = vpop.permute.xlu0 %11608
    %11610 = vrot.lane.b32.xlu0 %v11590, 123
    %v11611 = vpop.permute.xlu0 %11610
    %11612 = vrot.lane.b32.xlu0 %v11591, 123
    %v11613 = vpop.permute.xlu0 %11612
    %11614 = vrot.lane.b32.xlu0 %v11592, 123
    %v11615 = vpop.permute.xlu0 %11614
    %11616 = vrot.lane.b32.xlu0 %v11593, 123
    %v11617 = vpop.permute.xlu0 %11616
    %v11618 = vsel %vm1209, %v11603, %v11605
    %v11619 = vsel %vm1209, %v11607, %v11609
    %v11620 = vsel %vm1209, %v11611, %v11613
    %v11621 = vsel %vm1209, %v11615, %v11617
    %v11630 = vadd.f32 %v11553, %v11618
    %v11631 = vadd.f32 %v11554, %v11605
    %v11632 = vadd.f32 %v11555, %v11619
    %v11633 = vadd.f32 %v11556, %v11609
    %v11634 = vadd.f32 %v11557, %v11620
    %v11635 = vadd.f32 %v11558, %v11613
    %v11636 = vadd.f32 %v11559, %v11621
    %v11637 = vadd.f32 %v11560, %v11617
    %s11638 = scalar_lea.vmem %s5, 192
    %v11639 = vld [vmem:[%s11638] sm:$0xff]
    %v11640 = vld [vmem:[%s11638 + $0x8] sm:$0xff]
    %v11641 = vld [vmem:[%s11638 + $0x10] sm:$0xff]
    %v11642 = vld [vmem:[%s11638 + $0x18] sm:$0xff]
    %11644 = vset.pattern.permute.xlu0 0
    %11645 = vperm.xlu0 %11644, %v11639
    %v11646 = vpop.permute.xlu0 %11645
    %11649 = vset.pattern.permute.xlu0 0
    %11650 = vperm.xlu0 %11649, %v11640
    %v11651 = vpop.permute.xlu0 %11650
    %11654 = vset.pattern.permute.xlu0 0
    %11655 = vperm.xlu0 %11654, %v11641
    %v11656 = vpop.permute.xlu0 %11655
    %11659 = vset.pattern.permute.xlu0 0
    %11660 = vperm.xlu0 %11659, %v11642
    %v11661 = vpop.permute.xlu0 %11660
    %v11663 = vmul.f32 %v11646, %v11199
    %v11664 = vmul.f32 %v11646, %v11201
    %v11665 = vmul.f32 %v11651, %v11205
    %v11666 = vmul.f32 %v11651, %v11207
    %v11667 = vmul.f32 %v11656, %v11211
    %v11668 = vmul.f32 %v11656, %v11213
    %v11669 = vmul.f32 %v11661, %v11217
    %v11670 = vmul.f32 %v11661, %v11219
    %11679 = vrot.lane.b32.xlu0 %v11663, 122
    %v11680 = vpop.permute.xlu0 %11679
    %11681 = vrot.lane.b32.xlu0 %v11664, 122
    %v11682 = vpop.permute.xlu0 %11681
    %11683 = vrot.lane.b32.xlu0 %v11665, 122
    %v11684 = vpop.permute.xlu0 %11683
    %11685 = vrot.lane.b32.xlu0 %v11666, 122
    %v11686 = vpop.permute.xlu0 %11685
    %11687 = vrot.lane.b32.xlu0 %v11667, 122
    %v11688 = vpop.permute.xlu0 %11687
    %11689 = vrot.lane.b32.xlu0 %v11668, 122
    %v11690 = vpop.permute.xlu0 %11689
    %11691 = vrot.lane.b32.xlu0 %v11669, 122
    %v11692 = vpop.permute.xlu0 %11691
    %11693 = vrot.lane.b32.xlu0 %v11670, 122
    %v11694 = vpop.permute.xlu0 %11693
    %v11695 = vsel %vm1371, %v11680, %v11682
    %v11696 = vsel %vm1371, %v11684, %v11686
    %v11697 = vsel %vm1371, %v11688, %v11690
    %v11698 = vsel %vm1371, %v11692, %v11694
    %v11707 = vadd.f32 %v11630, %v11695
    %v11708 = vadd.f32 %v11631, %v11682
    %v11709 = vadd.f32 %v11632, %v11696
    %v11710 = vadd.f32 %v11633, %v11686
    %v11711 = vadd.f32 %v11634, %v11697
    %v11712 = vadd.f32 %v11635, %v11690
    %v11713 = vadd.f32 %v11636, %v11698
    %v11714 = vadd.f32 %v11637, %v11694
    %s11715 = scalar_lea.vmem %s5, 224
    %v11716 = vld [vmem:[%s11715] sm:$0xff]
    %v11717 = vld [vmem:[%s11715 + $0x8] sm:$0xff]
    %v11718 = vld [vmem:[%s11715 + $0x10] sm:$0xff]
    %v11719 = vld [vmem:[%s11715 + $0x18] sm:$0xff]
    %11721 = vset.pattern.permute.xlu0 0
    %11722 = vperm.xlu0 %11721, %v11716
    %v11723 = vpop.permute.xlu0 %11722
    %11726 = vset.pattern.permute.xlu0 0
    %11727 = vperm.xlu0 %11726, %v11717
    %v11728 = vpop.permute.xlu0 %11727
    %11731 = vset.pattern.permute.xlu0 0
    %11732 = vperm.xlu0 %11731, %v11718
    %v11733 = vpop.permute.xlu0 %11732
    %11736 = vset.pattern.permute.xlu0 0
    %11737 = vperm.xlu0 %11736, %v11719
    %v11738 = vpop.permute.xlu0 %11737
    %v11740 = vmul.f32 %v11723, %v11199
    %v11741 = vmul.f32 %v11723, %v11201
    %v11742 = vmul.f32 %v11728, %v11205
    %v11743 = vmul.f32 %v11728, %v11207
    %v11744 = vmul.f32 %v11733, %v11211
    %v11745 = vmul.f32 %v11733, %v11213
    %v11746 = vmul.f32 %v11738, %v11217
    %v11747 = vmul.f32 %v11738, %v11219
    %11756 = vrot.lane.b32.xlu0 %v11740, 121
    %v11757 = vpop.permute.xlu0 %11756
    %11758 = vrot.lane.b32.xlu0 %v11741, 121
    %v11759 = vpop.permute.xlu0 %11758
    %11760 = vrot.lane.b32.xlu0 %v11742, 121
    %v11761 = vpop.permute.xlu0 %11760
    %11762 = vrot.lane.b32.xlu0 %v11743, 121
    %v11763 = vpop.permute.xlu0 %11762
    %11764 = vrot.lane.b32.xlu0 %v11744, 121
    %v11765 = vpop.permute.xlu0 %11764
    %11766 = vrot.lane.b32.xlu0 %v11745, 121
    %v11767 = vpop.permute.xlu0 %11766
    %11768 = vrot.lane.b32.xlu0 %v11746, 121
    %v11769 = vpop.permute.xlu0 %11768
    %11770 = vrot.lane.b32.xlu0 %v11747, 121
    %v11771 = vpop.permute.xlu0 %11770
    %v11772 = vsel %vm1533, %v11757, %v11759
    %v11773 = vsel %vm1533, %v11761, %v11763
    %v11774 = vsel %vm1533, %v11765, %v11767
    %v11775 = vsel %vm1533, %v11769, %v11771
    %v11784 = vadd.f32 %v11707, %v11772
    %v11785 = vadd.f32 %v11708, %v11759
    %v11786 = vadd.f32 %v11709, %v11773
    %v11787 = vadd.f32 %v11710, %v11763
    %v11788 = vadd.f32 %v11711, %v11774
    %v11789 = vadd.f32 %v11712, %v11767
    %v11790 = vadd.f32 %v11713, %v11775
    %v11791 = vadd.f32 %v11714, %v11771
    %s11792 = scalar_lea.vmem %s5, 256
    %v11793 = vld [vmem:[%s11792] sm:$0xff]
    %v11794 = vld [vmem:[%s11792 + $0x8] sm:$0xff]
    %v11795 = vld [vmem:[%s11792 + $0x10] sm:$0xff]
    %v11796 = vld [vmem:[%s11792 + $0x18] sm:$0xff]
    %11798 = vset.pattern.permute.xlu0 0
    %11799 = vperm.xlu0 %11798, %v11793
    %v11800 = vpop.permute.xlu0 %11799
    %11803 = vset.pattern.permute.xlu0 0
    %11804 = vperm.xlu0 %11803, %v11794
    %v11805 = vpop.permute.xlu0 %11804
    %11808 = vset.pattern.permute.xlu0 0
    %11809 = vperm.xlu0 %11808, %v11795
    %v11810 = vpop.permute.xlu0 %11809
    %11813 = vset.pattern.permute.xlu0 0
    %11814 = vperm.xlu0 %11813, %v11796
    %v11815 = vpop.permute.xlu0 %11814
    %v11817 = vmul.f32 %v11800, %v11199
    %v11818 = vmul.f32 %v11800, %v11201
    %v11819 = vmul.f32 %v11805, %v11205
    %v11820 = vmul.f32 %v11805, %v11207
    %v11821 = vmul.f32 %v11810, %v11211
    %v11822 = vmul.f32 %v11810, %v11213
    %v11823 = vmul.f32 %v11815, %v11217
    %v11824 = vmul.f32 %v11815, %v11219
    %11833 = vrot.lane.b32.xlu0 %v11817, 120
    %v11834 = vpop.permute.xlu0 %11833
    %11835 = vrot.lane.b32.xlu0 %v11818, 120
    %v11836 = vpop.permute.xlu0 %11835
    %11837 = vrot.lane.b32.xlu0 %v11819, 120
    %v11838 = vpop.permute.xlu0 %11837
    %11839 = vrot.lane.b32.xlu0 %v11820, 120
    %v11840 = vpop.permute.xlu0 %11839
    %11841 = vrot.lane.b32.xlu0 %v11821, 120
    %v11842 = vpop.permute.xlu0 %11841
    %11843 = vrot.lane.b32.xlu0 %v11822, 120
    %v11844 = vpop.permute.xlu0 %11843
    %11845 = vrot.lane.b32.xlu0 %v11823, 120
    %v11846 = vpop.permute.xlu0 %11845
    %11847 = vrot.lane.b32.xlu0 %v11824, 120
    %v11848 = vpop.permute.xlu0 %11847
    %v11849 = vsel %vm1695, %v11834, %v11836
    %v11850 = vsel %vm1695, %v11838, %v11840
    %v11851 = vsel %vm1695, %v11842, %v11844
    %v11852 = vsel %vm1695, %v11846, %v11848
    %v11861 = vadd.f32 %v11784, %v11849
    %v11862 = vadd.f32 %v11785, %v11836
    %v11863 = vadd.f32 %v11786, %v11850
    %v11864 = vadd.f32 %v11787, %v11840
    %v11865 = vadd.f32 %v11788, %v11851
    %v11866 = vadd.f32 %v11789, %v11844
    %v11867 = vadd.f32 %v11790, %v11852
    %v11868 = vadd.f32 %v11791, %v11848
    %s11869 = scalar_lea.vmem %s5, 288
    %v11870 = vld [vmem:[%s11869] sm:$0xff]
    %v11871 = vld [vmem:[%s11869 + $0x8] sm:$0xff]
    %v11872 = vld [vmem:[%s11869 + $0x10] sm:$0xff]
    %v11873 = vld [vmem:[%s11869 + $0x18] sm:$0xff]
    %11875 = vset.pattern.permute.xlu0 0
    %11876 = vperm.xlu0 %11875, %v11870
    %v11877 = vpop.permute.xlu0 %11876
    %11880 = vset.pattern.permute.xlu0 0
    %11881 = vperm.xlu0 %11880, %v11871
    %v11882 = vpop.permute.xlu0 %11881
    %11885 = vset.pattern.permute.xlu0 0
    %11886 = vperm.xlu0 %11885, %v11872
    %v11887 = vpop.permute.xlu0 %11886
    %11890 = vset.pattern.permute.xlu0 0
    %11891 = vperm.xlu0 %11890, %v11873
    %v11892 = vpop.permute.xlu0 %11891
    %v11894 = vmul.f32 %v11877, %v11199
    %v11895 = vmul.f32 %v11877, %v11201
    %v11896 = vmul.f32 %v11882, %v11205
    %v11897 = vmul.f32 %v11882, %v11207
    %v11898 = vmul.f32 %v11887, %v11211
    %v11899 = vmul.f32 %v11887, %v11213
    %v11900 = vmul.f32 %v11892, %v11217
    %v11901 = vmul.f32 %v11892, %v11219
    %11910 = vrot.lane.b32.xlu0 %v11894, 119
    %v11911 = vpop.permute.xlu0 %11910
    %11912 = vrot.lane.b32.xlu0 %v11895, 119
    %v11913 = vpop.permute.xlu0 %11912
    %11914 = vrot.lane.b32.xlu0 %v11896, 119
    %v11915 = vpop.permute.xlu0 %11914
    %11916 = vrot.lane.b32.xlu0 %v11897, 119
    %v11917 = vpop.permute.xlu0 %11916
    %11918 = vrot.lane.b32.xlu0 %v11898, 119
    %v11919 = vpop.permute.xlu0 %11918
    %11920 = vrot.lane.b32.xlu0 %v11899, 119
    %v11921 = vpop.permute.xlu0 %11920
    %11922 = vrot.lane.b32.xlu0 %v11900, 119
    %v11923 = vpop.permute.xlu0 %11922
    %11924 = vrot.lane.b32.xlu0 %v11901, 119
    %v11925 = vpop.permute.xlu0 %11924
    %v11926 = vsel %vm1857, %v11911, %v11913
    %v11927 = vsel %vm1857, %v11915, %v11917
    %v11928 = vsel %vm1857, %v11919, %v11921
    %v11929 = vsel %vm1857, %v11923, %v11925
    %v11938 = vadd.f32 %v11861, %v11926
    %v11939 = vadd.f32 %v11862, %v11913
    %v11940 = vadd.f32 %v11863, %v11927
    %v11941 = vadd.f32 %v11864, %v11917
    %v11942 = vadd.f32 %v11865, %v11928
    %v11943 = vadd.f32 %v11866, %v11921
    %v11944 = vadd.f32 %v11867, %v11929
    %v11945 = vadd.f32 %v11868, %v11925
    %s11946 = scalar_lea.vmem %s5, 320
    %v11947 = vld [vmem:[%s11946] sm:$0xff]
    %v11948 = vld [vmem:[%s11946 + $0x8] sm:$0xff]
    %v11949 = vld [vmem:[%s11946 + $0x10] sm:$0xff]
    %v11950 = vld [vmem:[%s11946 + $0x18] sm:$0xff]
    %11952 = vset.pattern.permute.xlu0 0
    %11953 = vperm.xlu0 %11952, %v11947
    %v11954 = vpop.permute.xlu0 %11953
    %11957 = vset.pattern.permute.xlu0 0
    %11958 = vperm.xlu0 %11957, %v11948
    %v11959 = vpop.permute.xlu0 %11958
    %11962 = vset.pattern.permute.xlu0 0
    %11963 = vperm.xlu0 %11962, %v11949
    %v11964 = vpop.permute.xlu0 %11963
    %11967 = vset.pattern.permute.xlu0 0
    %11968 = vperm.xlu0 %11967, %v11950
    %v11969 = vpop.permute.xlu0 %11968
    %v11971 = vmul.f32 %v11954, %v11199
    %v11972 = vmul.f32 %v11954, %v11201
    %v11973 = vmul.f32 %v11959, %v11205
    %v11974 = vmul.f32 %v11959, %v11207
    %v11975 = vmul.f32 %v11964, %v11211
    %v11976 = vmul.f32 %v11964, %v11213
    %v11977 = vmul.f32 %v11969, %v11217
    %v11978 = vmul.f32 %v11969, %v11219
    %11987 = vrot.lane.b32.xlu0 %v11971, 118
    %v11988 = vpop.permute.xlu0 %11987
    %11989 = vrot.lane.b32.xlu0 %v11972, 118
    %v11990 = vpop.permute.xlu0 %11989
    %11991 = vrot.lane.b32.xlu0 %v11973, 118
    %v11992 = vpop.permute.xlu0 %11991
    %11993 = vrot.lane.b32.xlu0 %v11974, 118
    %v11994 = vpop.permute.xlu0 %11993
    %11995 = vrot.lane.b32.xlu0 %v11975, 118
    %v11996 = vpop.permute.xlu0 %11995
    %11997 = vrot.lane.b32.xlu0 %v11976, 118
    %v11998 = vpop.permute.xlu0 %11997
    %11999 = vrot.lane.b32.xlu0 %v11977, 118
    %v12000 = vpop.permute.xlu0 %11999
    %12001 = vrot.lane.b32.xlu0 %v11978, 118
    %v12002 = vpop.permute.xlu0 %12001
    %v12003 = vsel %vm2019, %v11988, %v11990
    %v12004 = vsel %vm2019, %v11992, %v11994
    %v12005 = vsel %vm2019, %v11996, %v11998
    %v12006 = vsel %vm2019, %v12000, %v12002
    %v12015 = vadd.f32 %v11938, %v12003
    %v12016 = vadd.f32 %v11939, %v11990
    %v12017 = vadd.f32 %v11940, %v12004
    %v12018 = vadd.f32 %v11941, %v11994
    %v12019 = vadd.f32 %v11942, %v12005
    %v12020 = vadd.f32 %v11943, %v11998
    %v12021 = vadd.f32 %v11944, %v12006
    %v12022 = vadd.f32 %v11945, %v12002
    %s12023 = scalar_lea.vmem %s5, 352
    %v12024 = vld [vmem:[%s12023] sm:$0xff]
    %v12025 = vld [vmem:[%s12023 + $0x8] sm:$0xff]
    %v12026 = vld [vmem:[%s12023 + $0x10] sm:$0xff]
    %v12027 = vld [vmem:[%s12023 + $0x18] sm:$0xff]
    %12029 = vset.pattern.permute.xlu0 0
    %12030 = vperm.xlu0 %12029, %v12024
    %v12031 = vpop.permute.xlu0 %12030
    %12034 = vset.pattern.permute.xlu0 0
    %12035 = vperm.xlu0 %12034, %v12025
    %v12036 = vpop.permute.xlu0 %12035
    %12039 = vset.pattern.permute.xlu0 0
    %12040 = vperm.xlu0 %12039, %v12026
    %v12041 = vpop.permute.xlu0 %12040
    %12044 = vset.pattern.permute.xlu0 0
    %12045 = vperm.xlu0 %12044, %v12027
    %v12046 = vpop.permute.xlu0 %12045
    %v12048 = vmul.f32 %v12031, %v11199
    %v12049 = vmul.f32 %v12031, %v11201
    %v12050 = vmul.f32 %v12036, %v11205
    %v12051 = vmul.f32 %v12036, %v11207
    %v12052 = vmul.f32 %v12041, %v11211
    %v12053 = vmul.f32 %v12041, %v11213
    %v12054 = vmul.f32 %v12046, %v11217
    %v12055 = vmul.f32 %v12046, %v11219
    %12064 = vrot.lane.b32.xlu0 %v12048, 117
    %v12065 = vpop.permute.xlu0 %12064
    %12066 = vrot.lane.b32.xlu0 %v12049, 117
    %v12067 = vpop.permute.xlu0 %12066
    %12068 = vrot.lane.b32.xlu0 %v12050, 117
    %v12069 = vpop.permute.xlu0 %12068
    %12070 = vrot.lane.b32.xlu0 %v12051, 117
    %v12071 = vpop.permute.xlu0 %12070
    %12072 = vrot.lane.b32.xlu0 %v12052, 117
    %v12073 = vpop.permute.xlu0 %12072
    %12074 = vrot.lane.b32.xlu0 %v12053, 117
    %v12075 = vpop.permute.xlu0 %12074
    %12076 = vrot.lane.b32.xlu0 %v12054, 117
    %v12077 = vpop.permute.xlu0 %12076
    %12078 = vrot.lane.b32.xlu0 %v12055, 117
    %v12079 = vpop.permute.xlu0 %12078
    %v12080 = vsel %vm2181, %v12065, %v12067
    %v12081 = vsel %vm2181, %v12069, %v12071
    %v12082 = vsel %vm2181, %v12073, %v12075
    %v12083 = vsel %vm2181, %v12077, %v12079
    %v12092 = vadd.f32 %v12015, %v12080
    %v12093 = vadd.f32 %v12016, %v12067
    %v12094 = vadd.f32 %v12017, %v12081
    %v12095 = vadd.f32 %v12018, %v12071
    %v12096 = vadd.f32 %v12019, %v12082
    %v12097 = vadd.f32 %v12020, %v12075
    %v12098 = vadd.f32 %v12021, %v12083
    %v12099 = vadd.f32 %v12022, %v12079
    %s12100 = scalar_lea.vmem %s5, 384
    %v12101 = vld [vmem:[%s12100] sm:$0xff]
    %v12102 = vld [vmem:[%s12100 + $0x8] sm:$0xff]
    %v12103 = vld [vmem:[%s12100 + $0x10] sm:$0xff]
    %v12104 = vld [vmem:[%s12100 + $0x18] sm:$0xff]
    %12106 = vset.pattern.permute.xlu0 0
    %12107 = vperm.xlu0 %12106, %v12101
    %v12108 = vpop.permute.xlu0 %12107
    %12111 = vset.pattern.permute.xlu0 0
    %12112 = vperm.xlu0 %12111, %v12102
    %v12113 = vpop.permute.xlu0 %12112
    %12116 = vset.pattern.permute.xlu0 0
    %12117 = vperm.xlu0 %12116, %v12103
    %v12118 = vpop.permute.xlu0 %12117
    %12121 = vset.pattern.permute.xlu0 0
    %12122 = vperm.xlu0 %12121, %v12104
    %v12123 = vpop.permute.xlu0 %12122
    %v12125 = vmul.f32 %v12108, %v11199
    %v12126 = vmul.f32 %v12108, %v11201
    %v12127 = vmul.f32 %v12113, %v11205
    %v12128 = vmul.f32 %v12113, %v11207
    %v12129 = vmul.f32 %v12118, %v11211
    %v12130 = vmul.f32 %v12118, %v11213
    %v12131 = vmul.f32 %v12123, %v11217
    %v12132 = vmul.f32 %v12123, %v11219
    %12141 = vrot.lane.b32.xlu0 %v12125, 116
    %v12142 = vpop.permute.xlu0 %12141
    %12143 = vrot.lane.b32.xlu0 %v12126, 116
    %v12144 = vpop.permute.xlu0 %12143
    %12145 = vrot.lane.b32.xlu0 %v12127, 116
    %v12146 = vpop.permute.xlu0 %12145
    %12147 = vrot.lane.b32.xlu0 %v12128, 116
    %v12148 = vpop.permute.xlu0 %12147
    %12149 = vrot.lane.b32.xlu0 %v12129, 116
    %v12150 = vpop.permute.xlu0 %12149
    %12151 = vrot.lane.b32.xlu0 %v12130, 116
    %v12152 = vpop.permute.xlu0 %12151
    %12153 = vrot.lane.b32.xlu0 %v12131, 116
    %v12154 = vpop.permute.xlu0 %12153
    %12155 = vrot.lane.b32.xlu0 %v12132, 116
    %v12156 = vpop.permute.xlu0 %12155
    %v12157 = vsel %vm2343, %v12142, %v12144
    %v12158 = vsel %vm2343, %v12146, %v12148
    %v12159 = vsel %vm2343, %v12150, %v12152
    %v12160 = vsel %vm2343, %v12154, %v12156
    %v12169 = vadd.f32 %v12092, %v12157
    %v12170 = vadd.f32 %v12093, %v12144
    %v12171 = vadd.f32 %v12094, %v12158
    %v12172 = vadd.f32 %v12095, %v12148
    %v12173 = vadd.f32 %v12096, %v12159
    %v12174 = vadd.f32 %v12097, %v12152
    %v12175 = vadd.f32 %v12098, %v12160
    %v12176 = vadd.f32 %v12099, %v12156
    %s12177 = scalar_lea.vmem %s5, 416
    %v12178 = vld [vmem:[%s12177] sm:$0xff]
    %v12179 = vld [vmem:[%s12177 + $0x8] sm:$0xff]
    %v12180 = vld [vmem:[%s12177 + $0x10] sm:$0xff]
    %v12181 = vld [vmem:[%s12177 + $0x18] sm:$0xff]
    %12183 = vset.pattern.permute.xlu0 0
    %12184 = vperm.xlu0 %12183, %v12178
    %v12185 = vpop.permute.xlu0 %12184
    %12188 = vset.pattern.permute.xlu0 0
    %12189 = vperm.xlu0 %12188, %v12179
    %v12190 = vpop.permute.xlu0 %12189
    %12193 = vset.pattern.permute.xlu0 0
    %12194 = vperm.xlu0 %12193, %v12180
    %v12195 = vpop.permute.xlu0 %12194
    %12198 = vset.pattern.permute.xlu0 0
    %12199 = vperm.xlu0 %12198, %v12181
    %v12200 = vpop.permute.xlu0 %12199
    %v12202 = vmul.f32 %v12185, %v11199
    %v12203 = vmul.f32 %v12185, %v11201
    %v12204 = vmul.f32 %v12190, %v11205
    %v12205 = vmul.f32 %v12190, %v11207
    %v12206 = vmul.f32 %v12195, %v11211
    %v12207 = vmul.f32 %v12195, %v11213
    %v12208 = vmul.f32 %v12200, %v11217
    %v12209 = vmul.f32 %v12200, %v11219
    %12218 = vrot.lane.b32.xlu0 %v12202, 115
    %v12219 = vpop.permute.xlu0 %12218
    %12220 = vrot.lane.b32.xlu0 %v12203, 115
    %v12221 = vpop.permute.xlu0 %12220
    %12222 = vrot.lane.b32.xlu0 %v12204, 115
    %v12223 = vpop.permute.xlu0 %12222
    %12224 = vrot.lane.b32.xlu0 %v12205, 115
    %v12225 = vpop.permute.xlu0 %12224
    %12226 = vrot.lane.b32.xlu0 %v12206, 115
    %v12227 = vpop.permute.xlu0 %12226
    %12228 = vrot.lane.b32.xlu0 %v12207, 115
    %v12229 = vpop.permute.xlu0 %12228
    %12230 = vrot.lane.b32.xlu0 %v12208, 115
    %v12231 = vpop.permute.xlu0 %12230
    %12232 = vrot.lane.b32.xlu0 %v12209, 115
    %v12233 = vpop.permute.xlu0 %12232
    %v12234 = vsel %vm2505, %v12219, %v12221
    %v12235 = vsel %vm2505, %v12223, %v12225
    %v12236 = vsel %vm2505, %v12227, %v12229
    %v12237 = vsel %vm2505, %v12231, %v12233
    %v12246 = vadd.f32 %v12169, %v12234
    %v12247 = vadd.f32 %v12170, %v12221
    %v12248 = vadd.f32 %v12171, %v12235
    %v12249 = vadd.f32 %v12172, %v12225
    %v12250 = vadd.f32 %v12173, %v12236
    %v12251 = vadd.f32 %v12174, %v12229
    %v12252 = vadd.f32 %v12175, %v12237
    %v12253 = vadd.f32 %v12176, %v12233
    %s12254 = scalar_lea.vmem %s5, 448
    %v12255 = vld [vmem:[%s12254] sm:$0xff]
    %v12256 = vld [vmem:[%s12254 + $0x8] sm:$0xff]
    %v12257 = vld [vmem:[%s12254 + $0x10] sm:$0xff]
    %v12258 = vld [vmem:[%s12254 + $0x18] sm:$0xff]
    %12260 = vset.pattern.permute.xlu0 0
    %12261 = vperm.xlu0 %12260, %v12255
    %v12262 = vpop.permute.xlu0 %12261
    %12265 = vset.pattern.permute.xlu0 0
    %12266 = vperm.xlu0 %12265, %v12256
    %v12267 = vpop.permute.xlu0 %12266
    %12270 = vset.pattern.permute.xlu0 0
    %12271 = vperm.xlu0 %12270, %v12257
    %v12272 = vpop.permute.xlu0 %12271
    %12275 = vset.pattern.permute.xlu0 0
    %12276 = vperm.xlu0 %12275, %v12258
    %v12277 = vpop.permute.xlu0 %12276
    %v12279 = vmul.f32 %v12262, %v11199
    %v12280 = vmul.f32 %v12262, %v11201
    %v12281 = vmul.f32 %v12267, %v11205
    %v12282 = vmul.f32 %v12267, %v11207
    %v12283 = vmul.f32 %v12272, %v11211
    %v12284 = vmul.f32 %v12272, %v11213
    %v12285 = vmul.f32 %v12277, %v11217
    %v12286 = vmul.f32 %v12277, %v11219
    %12295 = vrot.lane.b32.xlu0 %v12279, 114
    %v12296 = vpop.permute.xlu0 %12295
    %12297 = vrot.lane.b32.xlu0 %v12280, 114
    %v12298 = vpop.permute.xlu0 %12297
    %12299 = vrot.lane.b32.xlu0 %v12281, 114
    %v12300 = vpop.permute.xlu0 %12299
    %12301 = vrot.lane.b32.xlu0 %v12282, 114
    %v12302 = vpop.permute.xlu0 %12301
    %12303 = vrot.lane.b32.xlu0 %v12283, 114
    %v12304 = vpop.permute.xlu0 %12303
    %12305 = vrot.lane.b32.xlu0 %v12284, 114
    %v12306 = vpop.permute.xlu0 %12305
    %12307 = vrot.lane.b32.xlu0 %v12285, 114
    %v12308 = vpop.permute.xlu0 %12307
    %12309 = vrot.lane.b32.xlu0 %v12286, 114
    %v12310 = vpop.permute.xlu0 %12309
    %v12311 = vsel %vm2667, %v12296, %v12298
    %v12312 = vsel %vm2667, %v12300, %v12302
    %v12313 = vsel %vm2667, %v12304, %v12306
    %v12314 = vsel %vm2667, %v12308, %v12310
    %v12323 = vadd.f32 %v12246, %v12311
    %v12324 = vadd.f32 %v12247, %v12298
    %v12325 = vadd.f32 %v12248, %v12312
    %v12326 = vadd.f32 %v12249, %v12302
    %v12327 = vadd.f32 %v12250, %v12313
    %v12328 = vadd.f32 %v12251, %v12306
    %v12329 = vadd.f32 %v12252, %v12314
    %v12330 = vadd.f32 %v12253, %v12310
    %s12331 = scalar_lea.vmem %s5, 480
    %v12332 = vld [vmem:[%s12331] sm:$0xff]
    %v12333 = vld [vmem:[%s12331 + $0x8] sm:$0xff]
    %v12334 = vld [vmem:[%s12331 + $0x10] sm:$0xff]
    %v12335 = vld [vmem:[%s12331 + $0x18] sm:$0xff]
    %12337 = vset.pattern.permute.xlu0 0
    %12338 = vperm.xlu0 %12337, %v12332
    %v12339 = vpop.permute.xlu0 %12338
    %12342 = vset.pattern.permute.xlu0 0
    %12343 = vperm.xlu0 %12342, %v12333
    %v12344 = vpop.permute.xlu0 %12343
    %12347 = vset.pattern.permute.xlu0 0
    %12348 = vperm.xlu0 %12347, %v12334
    %v12349 = vpop.permute.xlu0 %12348
    %12352 = vset.pattern.permute.xlu0 0
    %12353 = vperm.xlu0 %12352, %v12335
    %v12354 = vpop.permute.xlu0 %12353
    %v12356 = vmul.f32 %v12339, %v11199
    %v12357 = vmul.f32 %v12339, %v11201
    %v12358 = vmul.f32 %v12344, %v11205
    %v12359 = vmul.f32 %v12344, %v11207
    %v12360 = vmul.f32 %v12349, %v11211
    %v12361 = vmul.f32 %v12349, %v11213
    %v12362 = vmul.f32 %v12354, %v11217
    %v12363 = vmul.f32 %v12354, %v11219
    %12372 = vrot.lane.b32.xlu0 %v12356, 113
    %v12373 = vpop.permute.xlu0 %12372
    %12374 = vrot.lane.b32.xlu0 %v12357, 113
    %v12375 = vpop.permute.xlu0 %12374
    %12376 = vrot.lane.b32.xlu0 %v12358, 113
    %v12377 = vpop.permute.xlu0 %12376
    %12378 = vrot.lane.b32.xlu0 %v12359, 113
    %v12379 = vpop.permute.xlu0 %12378
    %12380 = vrot.lane.b32.xlu0 %v12360, 113
    %v12381 = vpop.permute.xlu0 %12380
    %12382 = vrot.lane.b32.xlu0 %v12361, 113
    %v12383 = vpop.permute.xlu0 %12382
    %12384 = vrot.lane.b32.xlu0 %v12362, 113
    %v12385 = vpop.permute.xlu0 %12384
    %12386 = vrot.lane.b32.xlu0 %v12363, 113
    %v12387 = vpop.permute.xlu0 %12386
    %v12388 = vsel %vm2829, %v12373, %v12375
    %v12389 = vsel %vm2829, %v12377, %v12379
    %v12390 = vsel %vm2829, %v12381, %v12383
    %v12391 = vsel %vm2829, %v12385, %v12387
    %v12400 = vadd.f32 %v12323, %v12388
    %v12401 = vadd.f32 %v12324, %v12375
    %v12402 = vadd.f32 %v12325, %v12389
    %v12403 = vadd.f32 %v12326, %v12379
    %v12404 = vadd.f32 %v12327, %v12390
    %v12405 = vadd.f32 %v12328, %v12383
    %v12406 = vadd.f32 %v12329, %v12391
    %v12407 = vadd.f32 %v12330, %v12387
    %v12408 = vld [vmem:[%s6] sm:$0xff]
    %v12409 = vld [vmem:[%s6 + $0x8] sm:$0xff]
    %v12410 = vld [vmem:[%s6 + $0x10] sm:$0xff]
    %v12411 = vld [vmem:[%s6 + $0x18] sm:$0xff]
    %v12412 = vld [vmem:[%s7] sm:$0xff]
    %v12413 = vld [vmem:[%s7 + $0x8] sm:$0xff]
    %v12414 = vld [vmem:[%s7 + $0x10] sm:$0xff]
    %v12415 = vld [vmem:[%s7 + $0x18] sm:$0xff]
    %12417 = vset.pattern.permute.xlu0 0
    %12418 = vperm.xlu0 %12417, %v12412
    %v12419 = vpop.permute.xlu0 %12418
    %12422 = vset.pattern.permute.xlu0 0
    %12423 = vperm.xlu0 %12422, %v12413
    %v12424 = vpop.permute.xlu0 %12423
    %12427 = vset.pattern.permute.xlu0 0
    %12428 = vperm.xlu0 %12427, %v12414
    %v12429 = vpop.permute.xlu0 %12428
    %12432 = vset.pattern.permute.xlu0 0
    %12433 = vperm.xlu0 %12432, %v12415
    %v12434 = vpop.permute.xlu0 %12433
    %v12437 = vsel %vm10941, %v12408, 0
    %v12440 = vsel %vm10941, %v12409, 0
    %v12443 = vsel %vm10941, %v12410, 0
    %v12446 = vsel %vm10941, %v12411, 0
    %12448 = vmatprep.subr.mxu0 0.0
    %12449 = vmatpush1.msra.mxu0 0.0
    %12450 = vmatprep.subr.mxu0 0.0
    %12451 = vmatpush1.msra.mxu0 0.0
    %12452 = vmatprep.subr.mxu0 0.0
    %12453 = vmatpush1.msra.mxu0 0.0
    %12454 = vmatprep.subr.mxu0 0.0
    %12455 = vmatpush1.msra.mxu0 0.0
    %12456 = vmatprep.subr.mxu0 0.0
    %12457 = vmatpush1.msra.mxu0 0.0
    %12458 = vmatprep.subr.mxu0 0.0
    %12459 = vmatpush1.msra.mxu0 0.0
    %12460 = vmatprep.subr.mxu0 0.0
    %12461 = vmatpush1.msra.mxu0 0.0
    %12462 = vmatprep.subr.mxu0 0.0
    %12463 = vmatpush1.msra.mxu0 0.0
    %12464 = vmatprep.subr.mxu0 0.0
    %12465 = vmatpush1.msra.mxu0 0.0
    %12466 = vmatprep.subr.mxu0 0.0
    %12467 = vmatpush1.msra.mxu0 0.0
    %12468 = vmatprep.subr.mxu0 0.0
    %12469 = vmatpush1.msra.mxu0 0.0
    %12470 = vmatprep.subr.mxu0 0.0
    %12471 = vmatpush1.msra.mxu0 0.0
    %12472 = vmatprep.subr.mxu0 %v12407
    %12473 = vmatpush1.msra.mxu0 %v12406
    %12474 = vmatprep.subr.mxu0 %v12405
    %12475 = vmatpush1.msra.mxu0 %v12404
    %12476 = vmatprep.subr.mxu0 %v12403
    %12477 = vmatpush1.msra.mxu0 %v12402
    %12478 = vmatprep.subr.mxu0 %v12401
    %12479 = vmatpush1.msra.mxu0 %v12400
    %12480 = vmatprep.subr.mxu0 0.0
    %12481 = vmatpush2.msra.mxu0 0.0
    %12482 = vmatprep.subr.mxu0 0.0
    %12483 = vmatpush2.msra.mxu0 0.0
    %12484 = vmatprep.subr.mxu0 0.0
    %12485 = vmatpush2.msra.mxu0 0.0
    %12486 = vmatprep.subr.mxu0 0.0
    %12487 = vmatpush2.msra.mxu0 0.0
    %12488 = vmatprep.subr.mxu0 0.0
    %12489 = vmatpush2.msra.mxu0 0.0
    %12490 = vmatprep.subr.mxu0 0.0
    %12491 = vmatpush2.msra.mxu0 0.0
    %12492 = vmatprep.subr.mxu0 0.0
    %12493 = vmatpush2.msra.mxu0 0.0
    %12494 = vmatprep.subr.mxu0 0.0
    %12495 = vmatpush2.msra.mxu0 0.0
    %12496 = vmatprep.subr.mxu0 0.0
    %12497 = vmatpush2.msra.mxu0 0.0
    %12498 = vmatprep.subr.mxu0 0.0
    %12499 = vmatpush2.msra.mxu0 0.0
    %12500 = vmatprep.subr.mxu0 0.0
    %12501 = vmatpush2.msra.mxu0 0.0
    %12502 = vmatprep.subr.mxu0 0.0
    %12503 = vmatpush2.msra.mxu0 0.0
    %12504 = vmatprep.subr.mxu0 0.0
    %12505 = vmatpush2.msra.mxu0 0.0
    %12506 = vmatprep.subr.mxu0 0.0
    %12507 = vmatpush2.msra.mxu0 0.0
    %12508 = vmatprep.subr.mxu0 0.0
    %12509 = vmatpush2.msra.mxu0 0.0
    %12510 = vmatprep.subr.mxu0 0.0
    %12511 = vmatpush2.msra.mxu0 0.0
    %12512 = vmatprep.mubr.f32.mxu0 0.0
    %12513 = vmatmul.mubr.f32.gmra.mxu0 %v12437
    %v12514 = vpop.f32.mrf.mxu0
    %v12515 = vadd.f32 %v12419, %v12514
    %v12516 = vpop.f32.mrf.mxu0
    %v12517 = vadd.f32 %v12419, %v12516
    %12518 = vmatprep.mubr.f32.mxu0 0.0
    %12519 = vmatmul.mubr.f32.gmra.mxu0 %v12440
    %v12520 = vpop.f32.mrf.mxu0
    %v12521 = vadd.f32 %v12424, %v12520
    %v12522 = vpop.f32.mrf.mxu0
    %v12523 = vadd.f32 %v12424, %v12522
    %12524 = vmatprep.mubr.f32.mxu0 0.0
    %12525 = vmatmul.mubr.f32.gmra.mxu0 %v12443
    %v12526 = vpop.f32.mrf.mxu0
    %v12527 = vadd.f32 %v12429, %v12526
    %v12528 = vpop.f32.mrf.mxu0
    %v12529 = vadd.f32 %v12429, %v12528
    %12530 = vmatprep.mubr.f32.mxu0 0.0
    %12531 = vmatmul.mubr.f32.gmra.mxu0 %v12446
    %v12532 = vpop.f32.mrf.mxu0
    %v12533 = vadd.f32 %v12434, %v12532
    %v12534 = vpop.f32.mrf.mxu0
    %v12535 = vadd.f32 %v12434, %v12534
    %12536 = vdwg.mxu0
    %vm12537 = vcmp.gt.f32.partialorder %v12515, 0.0
    %vm12538 = vcmp.gt.f32.partialorder %v12517, 0.0
    %vm12539 = vcmp.gt.f32.partialorder %v12521, 0.0
    %vm12540 = vcmp.gt.f32.partialorder %v12523, 0.0
    %vm12541 = vcmp.gt.f32.partialorder %v12527, 0.0
    %vm12542 = vcmp.gt.f32.partialorder %v12529, 0.0
    %vm12543 = vcmp.gt.f32.partialorder %v12533, 0.0
    %vm12544 = vcmp.gt.f32.partialorder %v12535, 0.0
    %v12545 = vmul.f32 %v12515, 1.442695
    %v12546 = vpow.pop %v12545
    %v12547 = vmul.f32 %v12517, 1.442695
    %v12548 = vpow.pop %v12547
    %v12549 = vmul.f32 %v12521, 1.442695
    %v12550 = vpow.pop %v12549
    %v12551 = vmul.f32 %v12523, 1.442695
    %v12552 = vpow.pop %v12551
    %v12553 = vmul.f32 %v12527, 1.442695
    %v12554 = vpow.pop %v12553
    %v12555 = vmul.f32 %v12529, 1.442695
    %v12556 = vpow.pop %v12555
    %v12557 = vmul.f32 %v12533, 1.442695
    %v12558 = vpow.pop %v12557
    %v12559 = vmul.f32 %v12535, 1.442695
    %v12560 = vpow.pop %v12559
    %v12561 = vsub.f32 %v12546, 1.0
    %v12562 = vsub.f32 %v12548, 1.0
    %v12563 = vsub.f32 %v12550, 1.0
    %v12564 = vsub.f32 %v12552, 1.0
    %v12565 = vsub.f32 %v12554, 1.0
    %v12566 = vsub.f32 %v12556, 1.0
    %v12567 = vsub.f32 %v12558, 1.0
    %v12568 = vsub.f32 %v12560, 1.0
    %v12569 = vsel %vm12537, %v12515, %v12561
    %v12570 = vsel %vm12538, %v12517, %v12562
    %v12571 = vsel %vm12539, %v12521, %v12563
    %v12572 = vsel %vm12540, %v12523, %v12564
    %v12573 = vsel %vm12541, %v12527, %v12565
    %v12574 = vsel %vm12542, %v12529, %v12566
    %v12575 = vsel %vm12543, %v12533, %v12567
    %v12576 = vsel %vm12544, %v12535, %v12568
    %v12577 = vld [vmem:[%s8] sm:$0xff]
    %v12578 = vld [vmem:[%s8 + $0x8] sm:$0xff]
    %v12579 = vld [vmem:[%s8 + $0x10] sm:$0xff]
    %v12580 = vld [vmem:[%s8 + $0x18] sm:$0xff]
    %v12581 = vld [vmem:[%s8 + $0x20] sm:$0xff]
    %v12582 = vld [vmem:[%s8 + $0x28] sm:$0xff]
    %v12583 = vld [vmem:[%s8 + $0x30] sm:$0xff]
    %v12584 = vld [vmem:[%s8 + $0x38] sm:$0xff]
    %v12585 = vld [vmem:[%s8 + $0x40] sm:$0xff]
    %v12586 = vld [vmem:[%s8 + $0x48] sm:$0xff]
    %v12587 = vld [vmem:[%s8 + $0x50] sm:$0xff]
    %v12588 = vld [vmem:[%s8 + $0x58] sm:$0xff]
    %v12589 = vld [vmem:[%s8 + $0x60] sm:$0xff]
    %v12590 = vld [vmem:[%s8 + $0x68] sm:$0xff]
    %v12591 = vld [vmem:[%s8 + $0x70] sm:$0xff]
    %v12592 = vld [vmem:[%s8 + $0x78] sm:$0xff]
    %v12593 = vld [vmem:[%s8 + $0x80] sm:$0xff]
    %v12594 = vld [vmem:[%s8 + $0x88] sm:$0x1]
    %vm12595 = vcmask 72704
    %v12597 = vsel %vm12595, %v12570, 0
    %v12600 = vsel %vm12595, %v12572, 0
    %v12603 = vsel %vm12595, %v12574, 0
    %v12606 = vsel %vm12595, %v12576, 0
    %vm12608 = vcmask 1040384
    %v12610 = vsel %vm12608, %v12594, 0
    %12612 = vmatprep.subr.mxu0 0.0
    %12613 = vmatpush1.msra.mxu0 %v12592
    %12614 = vmatprep.subr.mxu0 0.0
    %12615 = vmatpush1.msra.mxu0 %v12591
    %12616 = vmatprep.subr.mxu0 0.0
    %12617 = vmatpush1.msra.mxu0 %v12590
    %12618 = vmatprep.subr.mxu0 0.0
    %12619 = vmatpush1.msra.mxu0 %v12589
    %12620 = vmatprep.subr.mxu0 0.0
    %12621 = vmatpush1.msra.mxu0 %v12588
    %12622 = vmatprep.subr.mxu0 0.0
    %12623 = vmatpush1.msra.mxu0 %v12587
    %12624 = vmatprep.subr.mxu0 0.0
    %12625 = vmatpush1.msra.mxu0 %v12586
    %12626 = vmatprep.subr.mxu0 0.0
    %12627 = vmatpush1.msra.mxu0 %v12585
    %12628 = vmatprep.subr.mxu0 0.0
    %12629 = vmatpush1.msra.mxu0 %v12584
    %12630 = vmatprep.subr.mxu0 0.0
    %12631 = vmatpush1.msra.mxu0 %v12583
    %12632 = vmatprep.subr.mxu0 0.0
    %12633 = vmatpush1.msra.mxu0 %v12582
    %12634 = vmatprep.subr.mxu0 0.0
    %12635 = vmatpush1.msra.mxu0 %v12581
    %12636 = vmatprep.subr.mxu0 0.0
    %12637 = vmatpush1.msra.mxu0 %v12580
    %12638 = vmatprep.subr.mxu0 0.0
    %12639 = vmatpush1.msra.mxu0 %v12579
    %12640 = vmatprep.subr.mxu0 0.0
    %12641 = vmatpush1.msra.mxu0 %v12578
    %12642 = vmatprep.subr.mxu0 0.0
    %12643 = vmatpush1.msra.mxu0 %v12577
    %12644 = vmatprep.subr.mxu0 0.0
    %12645 = vmatpush2.msra.mxu0 0.0
    %12646 = vmatprep.subr.mxu0 0.0
    %12647 = vmatpush2.msra.mxu0 0.0
    %12648 = vmatprep.subr.mxu0 0.0
    %12649 = vmatpush2.msra.mxu0 0.0
    %12650 = vmatprep.subr.mxu0 0.0
    %12651 = vmatpush2.msra.mxu0 0.0
    %12652 = vmatprep.subr.mxu0 0.0
    %12653 = vmatpush2.msra.mxu0 0.0
    %12654 = vmatprep.subr.mxu0 0.0
    %12655 = vmatpush2.msra.mxu0 0.0
    %12656 = vmatprep.subr.mxu0 0.0
    %12657 = vmatpush2.msra.mxu0 0.0
    %12658 = vmatprep.subr.mxu0 0.0
    %12659 = vmatpush2.msra.mxu0 0.0
    %12660 = vmatprep.subr.mxu0 0.0
    %12661 = vmatpush2.msra.mxu0 0.0
    %12662 = vmatprep.subr.mxu0 0.0
    %12663 = vmatpush2.msra.mxu0 0.0
    %12664 = vmatprep.subr.mxu0 0.0
    %12665 = vmatpush2.msra.mxu0 0.0
    %12666 = vmatprep.subr.mxu0 0.0
    %12667 = vmatpush2.msra.mxu0 0.0
    %12668 = vmatprep.subr.mxu0 0.0
    %12669 = vmatpush2.msra.mxu0 0.0
    %12670 = vmatprep.subr.mxu0 0.0
    %12671 = vmatpush2.msra.mxu0 0.0
    %12672 = vmatprep.subr.mxu0 0.0
    %12673 = vmatpush2.msra.mxu0 %v12610
    %12674 = vmatprep.subr.mxu0 0.0
    %12675 = vmatpush2.msra.mxu0 %v12593
    %12676 = vmatprep.mubr.f32.mxu0 %v12597
    %12677 = vmatmul.mubr.f32.gmra.mxu0 %v12569
    %v12678 = vpop.f32.mrf.mxu0
    %v12679 = vadd.f32 0.0, %v12678
    %v12680 = vpop.f32.mrf.mxu0
    %12681 = vmatprep.mubr.f32.mxu0 %v12600
    %12682 = vmatmul.mubr.f32.gmra.mxu0 %v12571
    %v12683 = vpop.f32.mrf.mxu0
    %v12684 = vadd.f32 0.0, %v12683
    %v12685 = vpop.f32.mrf.mxu0
    %12686 = vmatprep.mubr.f32.mxu0 %v12603
    %12687 = vmatmul.mubr.f32.gmra.mxu0 %v12573
    %v12688 = vpop.f32.mrf.mxu0
    %v12689 = vadd.f32 0.0, %v12688
    %v12690 = vpop.f32.mrf.mxu0
    %12691 = vmatprep.mubr.f32.mxu0 %v12606
    %12692 = vmatmul.mubr.f32.gmra.mxu0 %v12575
    %v12693 = vpop.f32.mrf.mxu0
    %v12694 = vadd.f32 0.0, %v12693
    %v12695 = vpop.f32.mrf.mxu0
    %12696 = vdwg.mxu0
    %v12697 = vld [vmem:[%s10] sm:$0x3]
    %v12698 = vld [vmem:[%s9] sm:$0xff]
    %v12699 = vld [vmem:[%s9 + $0x8] sm:$0xff]
    %v12700 = vld [vmem:[%s9 + $0x10] sm:$0xff]
    %v12701 = vld [vmem:[%s9 + $0x18] sm:$0xff]
    %v12702 = vmul.f32 %v12679, %v12698
    %v12703 = vmul.f32 %v12684, %v12699
    %v12704 = vmul.f32 %v12689, %v12700
    %v12705 = vmul.f32 %v12694, %v12701
    %v12707 = vsel %vm10941, %v12697, 0
    %12709 = vmatprep.subr.mxu0 0.0
    %12710 = vmatpush1.msra.mxu0 0.0
    %12711 = vmatprep.subr.mxu0 0.0
    %12712 = vmatpush1.msra.mxu0 0.0
    %12713 = vmatprep.subr.mxu0 0.0
    %12714 = vmatpush1.msra.mxu0 0.0
    %12715 = vmatprep.subr.mxu0 0.0
    %12716 = vmatpush1.msra.mxu0 0.0
    %12717 = vmatprep.subr.mxu0 0.0
    %12718 = vmatpush1.msra.mxu0 0.0
    %12719 = vmatprep.subr.mxu0 0.0
    %12720 = vmatpush1.msra.mxu0 0.0
    %12721 = vmatprep.subr.mxu0 0.0
    %12722 = vmatpush1.msra.mxu0 0.0
    %12723 = vmatprep.subr.mxu0 0.0
    %12724 = vmatpush1.msra.mxu0 0.0
    %12725 = vmatprep.subr.mxu0 0.0
    %12726 = vmatpush1.msra.mxu0 0.0
    %12727 = vmatprep.subr.mxu0 0.0
    %12728 = vmatpush1.msra.mxu0 0.0
    %12729 = vmatprep.subr.mxu0 0.0
    %12730 = vmatpush1.msra.mxu0 0.0
    %12731 = vmatprep.subr.mxu0 0.0
    %12732 = vmatpush1.msra.mxu0 0.0
    %12733 = vmatprep.subr.mxu0 0.0
    %12734 = vmatpush1.msra.mxu0 %v12705
    %12735 = vmatprep.subr.mxu0 0.0
    %12736 = vmatpush1.msra.mxu0 %v12704
    %12737 = vmatprep.subr.mxu0 0.0
    %12738 = vmatpush1.msra.mxu0 %v12703
    %12739 = vmatprep.subr.mxu0 0.0
    %12740 = vmatpush1.msra.mxu0 %v12702
    %12741 = vmatprep.subr.mxu0 0.0
    %12742 = vmatpush2.msra.mxu0 0.0
    %12743 = vmatprep.subr.mxu0 0.0
    %12744 = vmatpush2.msra.mxu0 0.0
    %12745 = vmatprep.subr.mxu0 0.0
    %12746 = vmatpush2.msra.mxu0 0.0
    %12747 = vmatprep.subr.mxu0 0.0
    %12748 = vmatpush2.msra.mxu0 0.0
    %12749 = vmatprep.subr.mxu0 0.0
    %12750 = vmatpush2.msra.mxu0 0.0
    %12751 = vmatprep.subr.mxu0 0.0
    %12752 = vmatpush2.msra.mxu0 0.0
    %12753 = vmatprep.subr.mxu0 0.0
    %12754 = vmatpush2.msra.mxu0 0.0
    %12755 = vmatprep.subr.mxu0 0.0
    %12756 = vmatpush2.msra.mxu0 0.0
    %12757 = vmatprep.subr.mxu0 0.0
    %12758 = vmatpush2.msra.mxu0 0.0
    %12759 = vmatprep.subr.mxu0 0.0
    %12760 = vmatpush2.msra.mxu0 0.0
    %12761 = vmatprep.subr.mxu0 0.0
    %12762 = vmatpush2.msra.mxu0 0.0
    %12763 = vmatprep.subr.mxu0 0.0
    %12764 = vmatpush2.msra.mxu0 0.0
    %12765 = vmatprep.subr.mxu0 0.0
    %12766 = vmatpush2.msra.mxu0 0.0
    %12767 = vmatprep.subr.mxu0 0.0
    %12768 = vmatpush2.msra.mxu0 0.0
    %12769 = vmatprep.subr.mxu0 0.0
    %12770 = vmatpush2.msra.mxu0 0.0
    %12771 = vmatprep.subr.mxu0 0.0
    %12772 = vmatpush2.msra.mxu0 0.0
    %12773 = vmatprep.mubr.f32.mxu0 0.0
    %12774 = vmatmul.mubr.f32.gmra.mxu0 %v12707
    %v12775 = vpop.f32.mrf.mxu0
    %v12776 = vadd.f32 0.0, %v12775
    %v12777 = vpop.f32.mrf.mxu0
    %12778 = vdwg.mxu0
    %v12779 = vld [vmem:[%s11] sm:$0xff]
    %v12780 = vld [vmem:[%s11 + $0x8] sm:$0xff]
    %v12781 = vld [vmem:[%s11 + $0x10] sm:$0xff]
    %v12782 = vld [vmem:[%s11 + $0x18] sm:$0xff]
    %v12783 = vld [vmem:[%s11 + $0x20] sm:$0xff]
    %v12784 = vld [vmem:[%s11 + $0x28] sm:$0xff]
    %v12785 = vld [vmem:[%s11 + $0x30] sm:$0xff]
    %v12786 = vld [vmem:[%s11 + $0x38] sm:$0xff]
    %v12787 = vld [vmem:[%s12] sm:$0x1]
    %v12789 = vlaneseq
    %v12790 = vshrl.u32 %v12789, 7
    %v12791 = vsub.s32 0, %v12790
    %v12792 = vrot.slane %v12787, %v12791
    %vm12794 = vcmask 523264
    %v12796 = vsel %vm12794, %v12776, 0
    %12798 = vmatprep.subr.mxu0 0.0
    %12799 = vmatpush1.msra.mxu0 0.0
    %12800 = vmatprep.subr.mxu0 0.0
    %12801 = vmatpush1.msra.mxu0 0.0
    %12802 = vmatprep.subr.mxu0 0.0
    %12803 = vmatpush1.msra.mxu0 0.0
    %12804 = vmatprep.subr.mxu0 0.0
    %12805 = vmatpush1.msra.mxu0 0.0
    %12806 = vmatprep.subr.mxu0 0.0
    %12807 = vmatpush1.msra.mxu0 0.0
    %12808 = vmatprep.subr.mxu0 0.0
    %12809 = vmatpush1.msra.mxu0 0.0
    %12810 = vmatprep.subr.mxu0 0.0
    %12811 = vmatpush1.msra.mxu0 0.0
    %12812 = vmatprep.subr.mxu0 0.0
    %12813 = vmatpush1.msra.mxu0 0.0
    %12814 = vmatprep.subr.mxu0 0.0
    %12815 = vmatpush1.msra.mxu0 %v12786
    %12816 = vmatprep.subr.mxu0 0.0
    %12817 = vmatpush1.msra.mxu0 %v12785
    %12818 = vmatprep.subr.mxu0 0.0
    %12819 = vmatpush1.msra.mxu0 %v12784
    %12820 = vmatprep.subr.mxu0 0.0
    %12821 = vmatpush1.msra.mxu0 %v12783
    %12822 = vmatprep.subr.mxu0 0.0
    %12823 = vmatpush1.msra.mxu0 %v12782
    %12824 = vmatprep.subr.mxu0 0.0
    %12825 = vmatpush1.msra.mxu0 %v12781
    %12826 = vmatprep.subr.mxu0 0.0
    %12827 = vmatpush1.msra.mxu0 %v12780
    %12828 = vmatprep.subr.mxu0 0.0
    %12829 = vmatpush1.msra.mxu0 %v12779
    %12830 = vmatprep.subr.mxu0 0.0
    %12831 = vmatpush2.msra.mxu0 0.0
    %12832 = vmatprep.subr.mxu0 0.0
    %12833 = vmatpush2.msra.mxu0 0.0
    %12834 = vmatprep.subr.mxu0 0.0
    %12835 = vmatpush2.msra.mxu0 0.0
    %12836 = vmatprep.subr.mxu0 0.0
    %12837 = vmatpush2.msra.mxu0 0.0
    %12838 = vmatprep.subr.mxu0 0.0
    %12839 = vmatpush2.msra.mxu0 0.0
    %12840 = vmatprep.subr.mxu0 0.0
    %12841 = vmatpush2.msra.mxu0 0.0
    %12842 = vmatprep.subr.mxu0 0.0
    %12843 = vmatpush2.msra.mxu0 0.0
    %12844 = vmatprep.subr.mxu0 0.0
    %12845 = vmatpush2.msra.mxu0 0.0
    %12846 = vmatprep.subr.mxu0 0.0
    %12847 = vmatpush2.msra.mxu0 0.0
    %12848 = vmatprep.subr.mxu0 0.0
    %12849 = vmatpush2.msra.mxu0 0.0
    %12850 = vmatprep.subr.mxu0 0.0
    %12851 = vmatpush2.msra.mxu0 0.0
    %12852 = vmatprep.subr.mxu0 0.0
    %12853 = vmatpush2.msra.mxu0 0.0
    %12854 = vmatprep.subr.mxu0 0.0
    %12855 = vmatpush2.msra.mxu0 0.0
    %12856 = vmatprep.subr.mxu0 0.0
    %12857 = vmatpush2.msra.mxu0 0.0
    %12858 = vmatprep.subr.mxu0 0.0
    %12859 = vmatpush2.msra.mxu0 0.0
    %12860 = vmatprep.subr.mxu0 0.0
    %12861 = vmatpush2.msra.mxu0 0.0
    %12862 = vmatprep.mubr.f32.mxu0 0.0
    %12863 = vmatmul.mubr.f32.gmra.mxu0 %v12796
    %v12864 = vpop.f32.mrf.mxu0
    %v12865 = vadd.f32 %v12792, %v12864
    %v12866 = vpop.f32.mrf.mxu0
    %12867 = vdwg.mxu0
    %vm12868 = vcmask 25600
    %12869 = vst.msk [vmem:[#allocation3] sm:$0x3] %vm12868, %v12865
    // Predicated region
    $region54: #{tpu_custom_call.1} parent=1 // pred_check
      _
    $region55: #{tpu_custom_call.1} parent=1 // pred_check_branch
      %12871 = sbr.rel (0) target = $region57
    $region56: #{tpu_custom_call.1} parent=1 // pred_region
      %s12873 = ssub.s32 32, 32
      %12874 = vsyncadd [#allocation4], %s12873
      %s12876 = sshll.u32 [#allocation3], 4
      %s12877 = int_to_ptr.vmem [resolvable:$true] %s12876
      %12879 = dma.vmem_to_hbm [thread:$0]  %s12877, 32, %s13, [#allocation4]
    $region57: #{tpu_custom_call.1} parent=1 // pred_fallthru
      _
    // Predicated region
    $region58: #{tpu_custom_call.1} parent=1 // pred_check
      _
    $region59: #{tpu_custom_call.1} parent=1 // pred_check_branch
      %12881 = sbr.rel (0) target = $region61
    $region60: #{tpu_custom_call.1} parent=1 // pred_region
      %12882 = dma.done [#allocation4], 32
    $region61: #{tpu_custom_call.1} parent=1 // pred_fallthru
      _
    %12883 = vsyncpa [#allocation4], 1

</llo_original>
